<compile_context>
chip_gen: v7x
topology: tpu7x:2x2x1
jax: 0.10.0
libtpu: 0.0.40
codegen_flags: <defaults>
</compile_context>

<pallas_src>
import jax
import jax.numpy as jnp
from jax.experimental import pallas as pl
from jax.experimental.pallas import tpu as pltpu

SELU_ALPHA = 1.6732632423543772848170429916717
SELU_SCALE = 1.0507009873554804934193349852946
BN_EPS = 1e-5

LAYER_5x5_SIM_15 = 3
LAYER_5x5_SIM_31 = 7
LAYER_5x5_SIM_63 = 15
LAYER_7x7_SIM_127 = 21

_BRANCH_DEFS = (
    ("3x3", (3,)),
    ("5x5", (5,)),
    ("7x7", (7,)),
    ("15x15", (5,) * LAYER_5x5_SIM_15),
    ("31x31", (5,) * LAYER_5x5_SIM_31),
    ("63x63", (5,) * LAYER_5x5_SIM_63),
    ("127x127", (7,) * LAYER_7x7_SIM_127),
)
BRANCHES = tuple(name for name, _ in _BRANCH_DEFS)


# ---------------------------------------------------------------------------
# Fused per-branch kernel: conv chain + BatchNorm(train) + SELU epilogue
# ---------------------------------------------------------------------------
def _make_branch_kernel(B, H, W, C, K, L):
    WC = W * C
    BH = B * H
    p = K // 2
    inv_n = 1.0 / float(B * H * W)

    def kernel(x_ref, m_ref, b_ref, g_ref, be_ref, gsum_ref, o_ref, xs_ref):
        layer = pl.program_id(0)

        # Stage the lane-dense channels-last input into the zero-padded VMEM
        # activation scratch once; the halo rows stay zero for all layers.
        @pl.when(layer == 0)
        def _():
            xs_ref[...] = jnp.zeros(xs_ref.shape, xs_ref.dtype)
            xs_ref[:, p:p + H, :] = x_ref[...].astype(xs_ref.dtype)

        # Conv layer `layer`: sum over kh of (row-shifted slab) @ banded
        # (WC, WC) weight matrix.  Contraction depth = W*C (=128 here), so the
        # MXU is well utilized and the accumulator is 4 dense vregs.
        acc = jnp.zeros((BH, WC), jnp.float32)
        for kh in range(K):                                  # static unroll
            slab = xs_ref[:, kh:kh + H, :].reshape(BH, WC)
            acc = acc + jnp.dot(slab, m_ref[0, kh],
                                preferred_element_type=jnp.float32)
        acc = acc + b_ref[0].astype(jnp.float32)             # (1, WC) broadcast

        @pl.when(layer != L - 1)
        def _():
            # Layer output goes back into the VMEM-resident activation
            # interior; never touches HBM between layers.
            xs_ref[:, p:p + H, :] = acc.reshape(B, H, WC).astype(xs_ref.dtype)

        @pl.when(layer == L - 1)
        def _():
            # Fused training-mode BatchNorm2d + SELU, staying lane-dense.
            # Per-channel statistics: sublane reduce to (1, WC), then a
            # (1, WC) @ (WC, WC) group-sum matmul both reduces over the W
            # lanes of each channel and re-broadcasts the result per lane
            # (keeps the cross-lane reduction on the MXU, no sparse relayout).
            col_sum = jnp.sum(acc, axis=0, keepdims=True)                # (1, WC)
            mean = jnp.dot(col_sum, gsum_ref[...],
                           preferred_element_type=jnp.float32) * inv_n
            d = acc - mean
            col_sq = jnp.sum(d * d, axis=0, keepdims=True)
            var = jnp.dot(col_sq, gsum_ref[...],
                          preferred_element_type=jnp.float32) * inv_n
            scale = g_ref[...].astype(jnp.float32) * jax.lax.rsqrt(var + BN_EPS)
            z = d * scale + be_ref[...].astype(jnp.float32)
            neg = SELU_ALPHA * (jnp.exp(jnp.minimum(z, 0.0)) - 1.0)
            o_ref[...] = (SELU_SCALE * jnp.where(z > 0.0, z, neg)).astype(o_ref.dtype)

    return kernel


def _branch_forward(x_bh_wc, M, bias_wc, gamma_wc, beta_wc, gmat, *, W, C):
    """Run one fully fused branch.

    x_bh_wc : (B, H, W*C)      lane-dense channels-last input
    M       : (L, K, W*C, W*C) banded per-layer conv matrices
    bias_wc : (L, 1, W*C)
    gamma_wc/beta_wc : (1, W*C)
    gmat    : (W*C, W*C)       per-channel group-sum matrix (float32)
    returns : (B*H, W*C)
    """
    B, H, WC = x_bh_wc.shape
    L, K = M.shape[0], M.shape[1]
    p = K // 2
    dtype = x_bh_wc.dtype

    kernel = _make_branch_kernel(B, H, W, C, K, L)
    return pl.pallas_call(
        kernel,
        out_shape=jax.ShapeDtypeStruct((B * H, WC), dtype),
        grid_spec=pltpu.PrefetchScalarGridSpec(
            num_scalar_prefetch=0,
            grid=(L,),                                             # layer chain
            in_specs=[
                pl.BlockSpec((B, H, WC), lambda l: (0, 0, 0)),         # input (resident)
                pl.BlockSpec((1, K, WC, WC), lambda l: (l, 0, 0, 0)),  # per-layer weights (streamed)
                pl.BlockSpec((1, 1, WC), lambda l: (l, 0, 0)),         # per-layer bias
                pl.BlockSpec((1, WC), lambda l: (0, 0)),               # gamma
                pl.BlockSpec((1, WC), lambda l: (0, 0)),               # beta
                pl.BlockSpec((WC, WC), lambda l: (0, 0)),              # group-sum matrix
            ],
            out_specs=pl.BlockSpec((B * H, WC), lambda l: (0, 0)),
            scratch_shapes=[pltpu.VMEM((B, H + 2 * p, WC), dtype)],    # resident activation
        ),
        compiler_params=pltpu.CompilerParams(
            # The layer axis carries the activation -> must stay sequential.
            # TODO(synk): for v7x megacore, fuse all 7 branches into one call
            # with a leading "parallel" branch axis (needs depth padding).
            dimension_semantics=("arbitrary",),
        ),
    )(x_bh_wc, M, bias_wc, gamma_wc, beta_wc, gmat)


# ---------------------------------------------------------------------------
# Parameter init (PyTorch Conv2d layout + defaults) and one-time packing to
# the lane-dense banded-GEMM form consumed by the kernels.
# ---------------------------------------------------------------------------
def _init_conv_torch(key, K, C, dtype):
    k_w, k_b = jax.random.split(key)
    fan_in = C * K * K
    bound = 1.0 / (fan_in ** 0.5)
    w = jax.random.uniform(k_w, (C, C, K, K), jnp.float32, -bound, bound).astype(dtype)
    b = jax.random.uniform(k_b, (C,), jnp.float32, -bound, bound).astype(dtype)
    return w, b


def init_params(key, feature_number, dtype=jnp.float32):
    """Parameters in PyTorch layout: Conv2d weight (C_out, C_in, K, K)."""
    C = feature_number
    params = {}
    for name, ksizes in _BRANCH_DEFS:
        convs = []
        for K in ksizes:
            key, sub = jax.random.split(key)
            convs.append(_init_conv_torch(sub, K, C, dtype))
        params[name] = {
            "convs": convs,
            "gamma": jnp.ones((C,), dtype),     # BatchNorm2d affine defaults
            "beta": jnp.zeros((C,), dtype),
        }
    return params


def _conv_to_banded(w_torch, bias, W):
    """(C_out, C_in, K, K) conv weight -> K banded (W*C, W*C) matrices.

    M[kh, w_in*C + ci, w_out*C + co] = weight[co, ci, kh, kw]
        with kw = w_in - w_out + K//2   (zero outside the band)
    so that `row_shifted_activation @ M[kh]`, summed over kh, is exactly the
    same-padded stride-1 conv in the (w, c)-flattened lane layout.
    """
    C_out, C_in, K, _ = w_torch.shape
    p = K // 2
    w_t = jnp.transpose(w_torch, (2, 3, 1, 0))          # (kh, kw, ci, co)
    w_in = jnp.arange(W)[:, None]
    w_out = jnp.arange(W)[None, :]
    shift = jnp.arange(K)[:, None, None] - p            # kw - p
    # S[kw, w_in, w_out] = 1  iff  w_out == w_in - (kw - p)
    S = (w_out[None] == (w_in[None] - shift)).astype(w_t.dtype)
    M = jnp.einsum("wab,hwcd->hacbd", S, w_t)           # (kh, w_in, ci, w_out, co)
    M = M.reshape(K, W * C_in, W * C_out)
    bias_wc = jnp.tile(bias, W).reshape(1, W * C_out)
    return M, bias_wc


def pack_params(params, width):
    packed = {}
    for name in BRANCHES:
        bp = params[name]
        Ms, bs = [], []
        for (w, b) in bp["convs"]:
            M, b_wc = _conv_to_banded(w, b, width)
            Ms.append(M)
            bs.append(b_wc)
        C = bp["gamma"].shape[0]
        packed[name] = {
            "M": jnp.stack(Ms),                          # (L, K, W*C, W*C)
            "bias": jnp.stack(bs),                       # (L, 1, W*C)
            "gamma_wc": jnp.tile(bp["gamma"], width).reshape(1, width * C),
            "beta_wc": jnp.tile(bp["beta"], width).reshape(1, width * C),
        }
    return packed


# ---------------------------------------------------------------------------
# Forward pass
# ---------------------------------------------------------------------------
@jax.jit
def cnn_feature_extraction_forward(x_nchw, packed_params):
    """x_nchw: (B, C, H, W) -> (B, C, H, W, 7), matching the torch module."""
    B, C, H, W = x_nchw.shape
    WC = W * C
    # One relayout in: NCHW -> (B, H, W*C) lane-dense channels-last.
    x = jnp.transpose(x_nchw, (0, 2, 3, 1)).reshape(B, H, WC)
    lane = jnp.arange(WC)
    gmat = (lane[:, None] % C == lane[None, :] % C).astype(jnp.float32)

    outs = []
    for name in BRANCHES:
        bp = packed_params[name]
        y = _branch_forward(x, bp["M"], bp["bias"], bp["gamma_wc"],
                            bp["beta_wc"], gmat, W=W, C=C)
        outs.append(y.reshape(B, H, W, C))
    # One stack + one transpose back to NCHW(+stack dim), done exactly once.
    stacked = jnp.stack(outs, axis=-1)                   # (B, H, W, C, 7)
    return jnp.transpose(stacked, (0, 3, 1, 2, 4))       # (B, C, H, W, 7)


# ---------------------------------------------------------------------------
# Pure-XLA reference (lax.conv + BatchNorm(train) + SELU) for self-checking
# ---------------------------------------------------------------------------
@jax.jit
def _reference_forward(x_nchw, params):
    dn = ("NCHW", "OIHW", "NCHW")
    outs = []
    for name in BRANCHES:
        bp = params[name]
        h = x_nchw
        for (w, b) in bp["convs"]:
            k = w.shape[-1]
            pd = k // 2
            h = jax.lax.conv_general_dilated(
                h, w, window_strides=(1, 1), padding=((pd, pd), (pd, pd)),
                dimension_numbers=dn, precision=jax.lax.Precision.HIGHEST,
            ) + b[None, :, None, None]
        mean = jnp.mean(h, axis=(0, 2, 3), keepdims=True)
        var = jnp.mean((h - mean) ** 2, axis=(0, 2, 3), keepdims=True)
        z = (h - mean) * jax.lax.rsqrt(var + BN_EPS)
        z = z * bp["gamma"][None, :, None, None] + bp["beta"][None, :, None, None]
        a = SELU_SCALE * jnp.where(
            z > 0, z, SELU_ALPHA * (jnp.exp(jnp.minimum(z, 0.0)) - 1.0))
        outs.append(a)
    return jnp.stack(outs, axis=4)


# ---------------------------------------------------------------------------
if __name__ == "__main__":
    batch_size = 2
    feature_number = 8      # W * C = 128 -> exactly one dense lane group
    height = 16
    width = 16
    cnn_conv_stride = 1     # TODO(synk): stride != 1 not implemented.
    dtype = jnp.float32

    key = jax.random.PRNGKey(0)
    k_x, k_p = jax.random.split(key)
    x = jax.random.normal(
        k_x, (batch_size, feature_number, height, width), dtype=dtype)

    params = init_params(k_p, feature_number, dtype=dtype)  # torch-layout params
    packed = pack_params(params, width)                     # one-time weight prepack

    out = cnn_feature_extraction_forward(x, packed)
    out = jax.block_until_ready(out)

    expected_shape = (batch_size, feature_number, height, width, 7)
    assert out.shape == expected_shape, (out.shape, expected_shape)
    assert out.dtype == dtype
    assert bool(jnp.all(jnp.isfinite(out)))

    # Self-check against a pure-XLA reference of the same forward pass.
    ref = jax.block_until_ready(_reference_forward(x, params))
    max_err = float(jnp.max(jnp.abs(out - ref)))
    assert max_err < 5e-2, f"mismatch vs reference: max abs err = {max_err}"

    print("KERNEL_OK")
</pallas_src>

<mosaic_0001>
module attributes {stable_mosaic.version = 11 : i64} {
  func.func @kernel(%arg0: i32, %arg1: memref<2x16x128xf32, #tpu.memory_space<vmem>>, %arg2: memref<1x3x128x128xf32, #tpu.memory_space<vmem>>, %arg3: memref<1x1x128xf32, #tpu.memory_space<vmem>>, %arg4: memref<1x128xf32, #tpu.memory_space<vmem>>, %arg5: memref<1x128xf32, #tpu.memory_space<vmem>>, %arg6: memref<128x128xf32, #tpu.memory_space<vmem>>, %arg7: memref<32x128xf32, #tpu.memory_space<vmem>>, %arg8: memref<2x18x128xf32, #tpu.memory_space<vmem>>) attributes {dimension_semantics = [#tpu.dimension_semantics<arbitrary>], iteration_bounds = array<i64: 1>, scalar_prefetch = 0 : i64, scratch_operands = 1 : i64, tpu.core_type = #tpu.core_type<tc>, window_params = [{pipeline_mode = #tpu.pipeline_mode<synchronous>, transform_indices = @transform_0, window_bounds = array<i64: 2, 16, 128>}, {transform_indices = @transform_1, window_bounds = array<i64: 1, 3, 128, 128>}, {transform_indices = @transform_2, window_bounds = array<i64: 1, 1, 128>}, {pipeline_mode = #tpu.pipeline_mode<synchronous>, transform_indices = @transform_3, window_bounds = array<i64: 1, 128>}, {pipeline_mode = #tpu.pipeline_mode<synchronous>, transform_indices = @transform_4, window_bounds = array<i64: 1, 128>}, {pipeline_mode = #tpu.pipeline_mode<synchronous>, transform_indices = @transform_5, window_bounds = array<i64: 128, 128>}, {pipeline_mode = #tpu.pipeline_mode<synchronous>, transform_indices = @transform_6, window_bounds = array<i64: 32, 128>}]} {
    %c0_i32 = arith.constant 0 : i32
    %0 = arith.cmpi eq, %arg0, %c0_i32 : i32
    %1 = arith.extui %0 : i1 to i32
    %c0_i32_0 = arith.constant 0 : i32
    %2 = arith.cmpi ne, %1, %c0_i32_0 : i32
    scf.if %2 {
      %cst_29 = arith.constant 0.000000e+00 : f32
      %32 = vector.broadcast %cst_29 : f32 to vector<2x18x128xf32>
      %c0_30 = arith.constant 0 : index
      %c0_31 = arith.constant 0 : index
      %c0_32 = arith.constant 0 : index
      %33 = vector.load %arg8[%c0_30, %c0_31, %c0_32] : memref<2x18x128xf32, #tpu.memory_space<vmem>>, vector<2x18x128xf32>
      tpu.vector_store %arg8[%c0_30, %c0_31, %c0_32], %32 {strides = array<i32>} : memref<2x18x128xf32, #tpu.memory_space<vmem>>, vector<2x18x128xf32>,
      %c0_33 = arith.constant 0 : index
      %c0_34 = arith.constant 0 : index
      %c0_35 = arith.constant 0 : index
      %34 = vector.load %arg1[%c0_33, %c0_34, %c0_35] : memref<2x16x128xf32, #tpu.memory_space<vmem>>, vector<2x16x128xf32>
      %c0_36 = arith.constant 0 : index
      %c1_37 = arith.constant 1 : index
      %c0_38 = arith.constant 0 : index
      %35 = vector.load %arg8[%c0_36, %c1_37, %c0_38] : memref<2x18x128xf32, #tpu.memory_space<vmem>>, vector<2x16x128xf32>
      tpu.vector_store %arg8[%c0_36, %c1_37, %c0_38], %34 {strides = array<i32>} : memref<2x18x128xf32, #tpu.memory_space<vmem>>, vector<2x16x128xf32>,
    } else {
    }
    %cst = arith.constant 0.000000e+00 : f32
    %3 = vector.broadcast %cst : f32 to vector<32x128xf32>
    %c0 = arith.constant 0 : index
    %c0_1 = arith.constant 0 : index
    %c0_2 = arith.constant 0 : index
    %4 = vector.load %arg8[%c0, %c0_1, %c0_2] : memref<2x18x128xf32, #tpu.memory_space<vmem>>, vector<2x16x128xf32>
    %5 = vector.shape_cast %4 : vector<2x16x128xf32> to vector<32x128xf32>
    %c0_3 = arith.constant 0 : index
    %c0_4 = arith.constant 0 : index
    %c0_5 = arith.constant 0 : index
    %c0_6 = arith.constant 0 : index
    %6 = vector.load %arg2[%c0_3, %c0_4, %c0_5, %c0_6] : memref<1x3x128x128xf32, #tpu.memory_space<vmem>>, vector<1x1x128x128xf32>
    %7 = vector.shape_cast %6 : vector<1x1x128x128xf32> to vector<128x128xf32>
    %cst_7 = arith.constant dense<0.000000e+00> : vector<32x128xf32>
    %8 = tpu.matmul %5, %7, %cst_7 {dimension_numbers = #tpu.dot_dimension_numbers<[1], [0], [0], [1], [0, 0, 1, 1], [], []>} : vector<32x128xf32>, vector<128x128xf32>, vector<32x128xf32> -> vector<32x128xf32>
    %9 = arith.addf %3, %8 : vector<32x128xf32>
    %c0_8 = arith.constant 0 : index
    %c1 = arith.constant 1 : index
    %c0_9 = arith.constant 0 : index
    %10 = vector.load %arg8[%c0_8, %c1, %c0_9] : memref<2x18x128xf32, #tpu.memory_space<vmem>>, vector<2x16x128xf32>
    %11 = vector.shape_cast %10 : vector<2x16x128xf32> to vector<32x128xf32>
    %c0_10 = arith.constant 0 : index
    %c1_11 = arith.constant 1 : index
    %c0_12 = arith.constant 0 : index
    %c0_13 = arith.constant 0 : index
    %12 = vector.load %arg2[%c0_10, %c1_11, %c0_12, %c0_13] : memref<1x3x128x128xf32, #tpu.memory_space<vmem>>, vector<1x1x128x128xf32>
    %13 = vector.shape_cast %12 : vector<1x1x128x128xf32> to vector<128x128xf32>
    %cst_14 = arith.constant dense<0.000000e+00> : vector<32x128xf32>
    %14 = tpu.matmul %11, %13, %cst_14 {dimension_numbers = #tpu.dot_dimension_numbers<[1], [0], [0], [1], [0, 0, 1, 1], [], []>} : vector<32x128xf32>, vector<128x128xf32>, vector<32x128xf32> -> vector<32x128xf32>
    %15 = arith.addf %9, %14 : vector<32x128xf32>
    %c0_15 = arith.constant 0 : index
    %c2 = arith.constant 2 : index
    %c0_16 = arith.constant 0 : index
    %16 = vector.load %arg8[%c0_15, %c2, %c0_16] : memref<2x18x128xf32, #tpu.memory_space<vmem>>, vector<2x16x128xf32>
    %17 = vector.shape_cast %16 : vector<2x16x128xf32> to vector<32x128xf32>
    %c0_17 = arith.constant 0 : index
    %c2_18 = arith.constant 2 : index
    %c0_19 = arith.constant 0 : index
    %c0_20 = arith.constant 0 : index
    %18 = vector.load %arg2[%c0_17, %c2_18, %c0_19, %c0_20] : memref<1x3x128x128xf32, #tpu.memory_space<vmem>>, vector<1x1x128x128xf32>
    %19 = vector.shape_cast %18 : vector<1x1x128x128xf32> to vector<128x128xf32>
    %cst_21 = arith.constant dense<0.000000e+00> : vector<32x128xf32>
    %20 = tpu.matmul %17, %19, %cst_21 {dimension_numbers = #tpu.dot_dimension_numbers<[1], [0], [0], [1], [0, 0, 1, 1], [], []>} : vector<32x128xf32>, vector<128x128xf32>, vector<32x128xf32> -> vector<32x128xf32>
    %21 = arith.addf %15, %20 : vector<32x128xf32>
    %c0_22 = arith.constant 0 : index
    %c0_23 = arith.constant 0 : index
    %c0_24 = arith.constant 0 : index
    %22 = vector.load %arg3[%c0_22, %c0_23, %c0_24] : memref<1x1x128xf32, #tpu.memory_space<vmem>>, vector<1x1x128xf32>
    %23 = vector.shape_cast %22 : vector<1x1x128xf32> to vector<1x128xf32>
    %24 = vector.broadcast %23 : vector<1x128xf32> to vector<32x128xf32>
    %25 = arith.addf %21, %24 : vector<32x128xf32>
    %c0_i32_25 = arith.constant 0 : i32
    %26 = arith.cmpi ne, %arg0, %c0_i32_25 : i32
    %27 = arith.extui %26 : i1 to i32
    %c0_i32_26 = arith.constant 0 : i32
    %28 = arith.cmpi ne, %27, %c0_i32_26 : i32
    scf.if %28 {
      %32 = vector.shape_cast %25 : vector<32x128xf32> to vector<2x16x128xf32>
      %c0_29 = arith.constant 0 : index
      %c1_30 = arith.constant 1 : index
      %c0_31 = arith.constant 0 : index
      %33 = vector.load %arg8[%c0_29, %c1_30, %c0_31] : memref<2x18x128xf32, #tpu.memory_space<vmem>>, vector<2x16x128xf32>
      tpu.vector_store %arg8[%c0_29, %c1_30, %c0_31], %32 {strides = array<i32>} : memref<2x18x128xf32, #tpu.memory_space<vmem>>, vector<2x16x128xf32>,
    } else {
    }
    %c0_i32_27 = arith.constant 0 : i32
    %29 = arith.cmpi eq, %arg0, %c0_i32_27 : i32
    %30 = arith.extui %29 : i1 to i32
    %c0_i32_28 = arith.constant 0 : i32
    %31 = arith.cmpi ne, %30, %c0_i32_28 : i32
    scf.if %31 {
      %cst_29 = arith.constant dense<0.000000e+00> : vector<128xf32>
      %32 = vector.multi_reduction <add>, %25, %cst_29 [0] : vector<32x128xf32> to vector<128xf32>
      %33 = vector.shape_cast %32 : vector<128xf32> to vector<1x128xf32>
      %c0_30 = arith.constant 0 : index
      %c0_31 = arith.constant 0 : index
      %34 = vector.load %arg6[%c0_30, %c0_31] : memref<128x128xf32, #tpu.memory_space<vmem>>, vector<128x128xf32>
      %cst_32 = arith.constant dense<0.000000e+00> : vector<1x128xf32>
      %35 = tpu.matmul %33, %34, %cst_32 {dimension_numbers = #tpu.dot_dimension_numbers<[1], [0], [0], [1], [0, 0, 1, 1], [], []>} : vector<1x128xf32>, vector<128x128xf32>, vector<1x128xf32> -> vector<1x128xf32>
      %cst_33 = arith.constant 0.001953125 : f32
      %36 = vector.broadcast %cst_33 : f32 to vector<1x128xf32>
      %37 = arith.mulf %35, %36 : vector<1x128xf32>
      %38 = vector.broadcast %37 : vector<1x128xf32> to vector<32x128xf32>
      %39 = arith.subf %25, %38 : vector<32x128xf32>
      %40 = arith.mulf %39, %39 : vector<32x128xf32>
      %cst_34 = arith.constant dense<0.000000e+00> : vector<128xf32>
      %41 = vector.multi_reduction <add>, %40, %cst_34 [0] : vector<32x128xf32> to vector<128xf32>
      %42 = vector.shape_cast %41 : vector<128xf32> to vector<1x128xf32>
      %c0_35 = arith.constant 0 : index
      %c0_36 = arith.constant 0 : index
      %43 = vector.load %arg6[%c0_35, %c0_36] : memref<128x128xf32, #tpu.memory_space<vmem>>, vector<128x128xf32>
      %cst_37 = arith.constant dense<0.000000e+00> : vector<1x128xf32>
      %44 = tpu.matmul %42, %43, %cst_37 {dimension_numbers = #tpu.dot_dimension_numbers<[1], [0], [0], [1], [0, 0, 1, 1], [], []>} : vector<1x128xf32>, vector<128x128xf32>, vector<1x128xf32> -> vector<1x128xf32>
      %cst_38 = arith.constant 0.001953125 : f32
      %45 = vector.broadcast %cst_38 : f32 to vector<1x128xf32>
      %46 = arith.mulf %44, %45 : vector<1x128xf32>
      %c0_39 = arith.constant 0 : index
      %c0_40 = arith.constant 0 : index
      %47 = vector.load %arg4[%c0_39, %c0_40] : memref<1x128xf32, #tpu.memory_space<vmem>>, vector<1x128xf32>
      %cst_41 = arith.constant 9.99999974E-6 : f32
      %48 = vector.broadcast %cst_41 : f32 to vector<1x128xf32>
      %49 = arith.addf %46, %48 : vector<1x128xf32>
      %50 = math.rsqrt %49 : vector<1x128xf32>
      %51 = arith.mulf %47, %50 : vector<1x128xf32>
      %52 = vector.broadcast %51 : vector<1x128xf32> to vector<32x128xf32>
      %53 = arith.mulf %39, %52 : vector<32x128xf32>
      %c0_42 = arith.constant 0 : index
      %c0_43 = arith.constant 0 : index
      %54 = vector.load %arg5[%c0_42, %c0_43] : memref<1x128xf32, #tpu.memory_space<vmem>>, vector<1x128xf32>
      %55 = vector.broadcast %54 : vector<1x128xf32> to vector<32x128xf32>
      %56 = arith.addf %53, %55 : vector<32x128xf32>
      %cst_44 = arith.constant 0.000000e+00 : f32
      %57 = vector.broadcast %cst_44 : f32 to vector<32x128xf32>
      %58 = arith.minimumf %56, %57 : vector<32x128xf32>
      %59 = math.exp %58 : vector<32x128xf32>
      %cst_45 = arith.constant 1.000000e+00 : f32
      %60 = vector.broadcast %cst_45 : f32 to vector<32x128xf32>
      %61 = arith.subf %59, %60 : vector<32x128xf32>
      %cst_46 = arith.constant 1.67326319 : f32
      %62 = vector.broadcast %cst_46 : f32 to vector<32x128xf32>
      %63 = arith.mulf %62, %61 : vector<32x128xf32>
      %cst_47 = arith.constant 0.000000e+00 : f32
      %64 = vector.broadcast %cst_47 : f32 to vector<32x128xf32>
      %65 = arith.cmpf ogt, %56, %64 : vector<32x128xf32>
      %66 = arith.select %65, %56, %63 : vector<32x128xi1>, vector<32x128xf32>
      %cst_48 = arith.constant 1.05070102 : f32
      %67 = vector.broadcast %cst_48 : f32 to vector<32x128xf32>
      %68 = arith.mulf %67, %66 : vector<32x128xf32>
      %c0_49 = arith.constant 0 : index
      %c0_50 = arith.constant 0 : index
      %69 = vector.load %arg7[%c0_49, %c0_50] : memref<32x128xf32, #tpu.memory_space<vmem>>, vector<32x128xf32>
      tpu.vector_store %arg7[%c0_49, %c0_50], %68 {strides = array<i32>} : memref<32x128xf32, #tpu.memory_space<vmem>>, vector<32x128xf32>,
    } else {
    }
    return
  }
  func.func @transform_0(%arg0: i32) -> (i32, i32, i32) {
    %c0_i32 = arith.constant 0 : i32
    %c0_i32_0 = arith.constant 0 : i32
    %c0_i32_1 = arith.constant 0 : i32
    %c0_i32_2 = arith.constant 0 : i32
    return %c0_i32, %c0_i32_0, %c0_i32_1 : i32, i32, i32
  }
  func.func @transform_1(%arg0: i32) -> (i32, i32, i32, i32) {
    %c0_i32 = arith.constant 0 : i32
    %c0_i32_0 = arith.constant 0 : i32
    %c0_i32_1 = arith.constant 0 : i32
    %c0_i32_2 = arith.constant 0 : i32
    return %arg0, %c0_i32, %c0_i32_0, %c0_i32_1 : i32, i32, i32, i32
  }
  func.func @transform_2(%arg0: i32) -> (i32, i32, i32) {
    %c0_i32 = arith.constant 0 : i32
    %c0_i32_0 = arith.constant 0 : i32
    %c0_i32_1 = arith.constant 0 : i32
    return %arg0, %c0_i32, %c0_i32_0 : i32, i32, i32
  }
  func.func @transform_3(%arg0: i32) -> (i32, i32) {
    %c0_i32 = arith.constant 0 : i32
    %c0_i32_0 = arith.constant 0 : i32
    %c0_i32_1 = arith.constant 0 : i32
    return %c0_i32, %c0_i32_0 : i32, i32
  }
  func.func @transform_4(%arg0: i32) -> (i32, i32) {
    %c0_i32 = arith.constant 0 : i32
    %c0_i32_0 = arith.constant 0 : i32
    %c0_i32_1 = arith.constant 0 : i32
    return %c0_i32, %c0_i32_0 : i32, i32
  }
  func.func @transform_5(%arg0: i32) -> (i32, i32) {
    %c0_i32 = arith.constant 0 : i32
    %c0_i32_0 = arith.constant 0 : i32
    %c0_i32_1 = arith.constant 0 : i32
    return %c0_i32, %c0_i32_0 : i32, i32
  }
  func.func @transform_6(%arg0: i32) -> (i32, i32) {
    %c0_i32 = arith.constant 0 : i32
    %c0_i32_0 = arith.constant 0 : i32
    %c0_i32_1 = arith.constant 0 : i32
    return %c0_i32, %c0_i32_0 : i32, i32
  }
}

module attributes {stable_mosaic.version = 11 : i64} {
  func.func @kernel(%arg0: i32, %arg1: memref<2x16x128xf32, #tpu.memory_space<vmem>>, %arg2: memref<1x5x128x128xf32, #tpu.memory_space<vmem>>, %arg3: memref<1x1x128xf32, #tpu.memory_space<vmem>>, %arg4: memref<1x128xf32, #tpu.memory_space<vmem>>, %arg5: memref<1x128xf32, #tpu.memory_space<vmem>>, %arg6: memref<128x128xf32, #tpu.memory_space<vmem>>, %arg7: memref<32x128xf32, #tpu.memory_space<vmem>>, %arg8: memref<2x20x128xf32, #tpu.memory_space<vmem>>) attributes {dimension_semantics = [#tpu.dimension_semantics<arbitrary>], iteration_bounds = array<i64: 1>, scalar_prefetch = 0 : i64, scratch_operands = 1 : i64, tpu.core_type = #tpu.core_type<tc>, window_params = [{pipeline_mode = #tpu.pipeline_mode<synchronous>, transform_indices = @transform_0, window_bounds = array<i64: 2, 16, 128>}, {transform_indices = @transform_1, window_bounds = array<i64: 1, 5, 128, 128>}, {transform_indices = @transform_2, window_bounds = array<i64: 1, 1, 128>}, {pipeline_mode = #tpu.pipeline_mode<synchronous>, transform_indices = @transform_3, window_bounds = array<i64: 1, 128>}, {pipeline_mode = #tpu.pipeline_mode<synchronous>, transform_indices = @transform_4, window_bounds = array<i64: 1, 128>}, {pipeline_mode = #tpu.pipeline_mode<synchronous>, transform_indices = @transform_5, window_bounds = array<i64: 128, 128>}, {pipeline_mode = #tpu.pipeline_mode<synchronous>, transform_indices = @transform_6, window_bounds = array<i64: 32, 128>}]} {
    %c0_i32 = arith.constant 0 : i32
    %0 = arith.cmpi eq, %arg0, %c0_i32 : i32
    %1 = arith.extui %0 : i1 to i32
    %c0_i32_0 = arith.constant 0 : i32
    %2 = arith.cmpi ne, %1, %c0_i32_0 : i32
    scf.if %2 {
      %cst_43 = arith.constant 0.000000e+00 : f32
      %44 = vector.broadcast %cst_43 : f32 to vector<2x20x128xf32>
      %c0_44 = arith.constant 0 : index
      %c0_45 = arith.constant 0 : index
      %c0_46 = arith.constant 0 : index
      %45 = vector.load %arg8[%c0_44, %c0_45, %c0_46] : memref<2x20x128xf32, #tpu.memory_space<vmem>>, vector<2x20x128xf32>
      tpu.vector_store %arg8[%c0_44, %c0_45, %c0_46], %44 {strides = array<i32>} : memref<2x20x128xf32, #tpu.memory_space<vmem>>, vector<2x20x128xf32>,
      %c0_47 = arith.constant 0 : index
      %c0_48 = arith.constant 0 : index
      %c0_49 = arith.constant 0 : index
      %46 = vector.load %arg1[%c0_47, %c0_48, %c0_49] : memref<2x16x128xf32, #tpu.memory_space<vmem>>, vector<2x16x128xf32>
      %c0_50 = arith.constant 0 : index
      %c2_51 = arith.constant 2 : index
      %c0_52 = arith.constant 0 : index
      %47 = vector.load %arg8[%c0_50, %c2_51, %c0_52] : memref<2x20x128xf32, #tpu.memory_space<vmem>>, vector<2x16x128xf32>
      tpu.vector_store %arg8[%c0_50, %c2_51, %c0_52], %46 {strides = array<i32>} : memref<2x20x128xf32, #tpu.memory_space<vmem>>, vector<2x16x128xf32>,
    } else {
    }
    %cst = arith.constant 0.000000e+00 : f32
    %3 = vector.broadcast %cst : f32 to vector<32x128xf32>
    %c0 = arith.constant 0 : index
    %c0_1 = arith.constant 0 : index
    %c0_2 = arith.constant 0 : index
    %4 = vector.load %arg8[%c0, %c0_1, %c0_2] : memref<2x20x128xf32, #tpu.memory_space<vmem>>, vector<2x16x128xf32>
    %5 = vector.shape_cast %4 : vector<2x16x128xf32> to vector<32x128xf32>
    %c0_3 = arith.constant 0 : index
    %c0_4 = arith.constant 0 : index
    %c0_5 = arith.constant 0 : index
    %c0_6 = arith.constant 0 : index
    %6 = vector.load %arg2[%c0_3, %c0_4, %c0_5, %c0_6] : memref<1x5x128x128xf32, #tpu.memory_space<vmem>>, vector<1x1x128x128xf32>
    %7 = vector.shape_cast %6 : vector<1x1x128x128xf32> to vector<128x128xf32>
    %cst_7 = arith.constant dense<0.000000e+00> : vector<32x128xf32>
    %8 = tpu.matmul %5, %7, %cst_7 {dimension_numbers = #tpu.dot_dimension_numbers<[1], [0], [0], [1], [0, 0, 1, 1], [], []>} : vector<32x128xf32>, vector<128x128xf32>, vector<32x128xf32> -> vector<32x128xf32>
    %9 = arith.addf %3, %8 : vector<32x128xf32>
    %c0_8 = arith.constant 0 : index
    %c1 = arith.constant 1 : index
    %c0_9 = arith.constant 0 : index
    %10 = vector.load %arg8[%c0_8, %c1, %c0_9] : memref<2x20x128xf32, #tpu.memory_space<vmem>>, vector<2x16x128xf32>
    %11 = vector.shape_cast %10 : vector<2x16x128xf32> to vector<32x128xf32>
    %c0_10 = arith.constant 0 : index
    %c1_11 = arith.constant 1 : index
    %c0_12 = arith.constant 0 : index
    %c0_13 = arith.constant 0 : index
    %12 = vector.load %arg2[%c0_10, %c1_11, %c0_12, %c0_13] : memref<1x5x128x128xf32, #tpu.memory_space<vmem>>, vector<1x1x128x128xf32>
    %13 = vector.shape_cast %12 : vector<1x1x128x128xf32> to vector<128x128xf32>
    %cst_14 = arith.constant dense<0.000000e+00> : vector<32x128xf32>
    %14 = tpu.matmul %11, %13, %cst_14 {dimension_numbers = #tpu.dot_dimension_numbers<[1], [0], [0], [1], [0, 0, 1, 1], [], []>} : vector<32x128xf32>, vector<128x128xf32>, vector<32x128xf32> -> vector<32x128xf32>
    %15 = arith.addf %9, %14 : vector<32x128xf32>
    %c0_15 = arith.constant 0 : index
    %c2 = arith.constant 2 : index
    %c0_16 = arith.constant 0 : index
    %16 = vector.load %arg8[%c0_15, %c2, %c0_16] : memref<2x20x128xf32, #tpu.memory_space<vmem>>, vector<2x16x128xf32>
    %17 = vector.shape_cast %16 : vector<2x16x128xf32> to vector<32x128xf32>
    %c0_17 = arith.constant 0 : index
    %c2_18 = arith.constant 2 : index
    %c0_19 = arith.constant 0 : index
    %c0_20 = arith.constant 0 : index
    %18 = vector.load %arg2[%c0_17, %c2_18, %c0_19, %c0_20] : memref<1x5x128x128xf32, #tpu.memory_space<vmem>>, vector<1x1x128x128xf32>
    %19 = vector.shape_cast %18 : vector<1x1x128x128xf32> to vector<128x128xf32>
    %cst_21 = arith.constant dense<0.000000e+00> : vector<32x128xf32>
    %20 = tpu.matmul %17, %19, %cst_21 {dimension_numbers = #tpu.dot_dimension_numbers<[1], [0], [0], [1], [0, 0, 1, 1], [], []>} : vector<32x128xf32>, vector<128x128xf32>, vector<32x128xf32> -> vector<32x128xf32>
    %21 = arith.addf %15, %20 : vector<32x128xf32>
    %c0_22 = arith.constant 0 : index
    %c3 = arith.constant 3 : index
    %c0_23 = arith.constant 0 : index
    %22 = vector.load %arg8[%c0_22, %c3, %c0_23] : memref<2x20x128xf32, #tpu.memory_space<vmem>>, vector<2x16x128xf32>
    %23 = vector.shape_cast %22 : vector<2x16x128xf32> to vector<32x128xf32>
    %c0_24 = arith.constant 0 : index
    %c3_25 = arith.constant 3 : index
    %c0_26 = arith.constant 0 : index
    %c0_27 = arith.constant 0 : index
    %24 = vector.load %arg2[%c0_24, %c3_25, %c0_26, %c0_27] : memref<1x5x128x128xf32, #tpu.memory_space<vmem>>, vector<1x1x128x128xf32>
    %25 = vector.shape_cast %24 : vector<1x1x128x128xf32> to vector<128x128xf32>
    %cst_28 = arith.constant dense<0.000000e+00> : vector<32x128xf32>
    %26 = tpu.matmul %23, %25, %cst_28 {dimension_numbers = #tpu.dot_dimension_numbers<[1], [0], [0], [1], [0, 0, 1, 1], [], []>} : vector<32x128xf32>, vector<128x128xf32>, vector<32x128xf32> -> vector<32x128xf32>
    %27 = arith.addf %21, %26 : vector<32x128xf32>
    %c0_29 = arith.constant 0 : index
    %c4 = arith.constant 4 : index
    %c0_30 = arith.constant 0 : index
    %28 = vector.load %arg8[%c0_29, %c4, %c0_30] : memref<2x20x128xf32, #tpu.memory_space<vmem>>, vector<2x16x128xf32>
    %29 = vector.shape_cast %28 : vector<2x16x128xf32> to vector<32x128xf32>
    %c0_31 = arith.constant 0 : index
    %c4_32 = arith.constant 4 : index
    %c0_33 = arith.constant 0 : index
    %c0_34 = arith.constant 0 : index
    %30 = vector.load %arg2[%c0_31, %c4_32, %c0_33, %c0_34] : memref<1x5x128x128xf32, #tpu.memory_space<vmem>>, vector<1x1x128x128xf32>
    %31 = vector.shape_cast %30 : vector<1x1x128x128xf32> to vector<128x128xf32>
    %cst_35 = arith.constant dense<0.000000e+00> : vector<32x128xf32>
    %32 = tpu.matmul %29, %31, %cst_35 {dimension_numbers = #tpu.dot_dimension_numbers<[1], [0], [0], [1], [0, 0, 1, 1], [], []>} : vector<32x128xf32>, vector<128x128xf32>, vector<32x128xf32> -> vector<32x128xf32>
    %33 = arith.addf %27, %32 : vector<32x128xf32>
    %c0_36 = arith.constant 0 : index
    %c0_37 = arith.constant 0 : index
    %c0_38 = arith.constant 0 : index
    %34 = vector.load %arg3[%c0_36, %c0_37, %c0_38] : memref<1x1x128xf32, #tpu.memory_space<vmem>>, vector<1x1x128xf32>
    %35 = vector.shape_cast %34 : vector<1x1x128xf32> to vector<1x128xf32>
    %36 = vector.broadcast %35 : vector<1x128xf32> to vector<32x128xf32>
    %37 = arith.addf %33, %36 : vector<32x128xf32>
    %c0_i32_39 = arith.constant 0 : i32
    %38 = arith.cmpi ne, %arg0, %c0_i32_39 : i32
    %39 = arith.extui %38 : i1 to i32
    %c0_i32_40 = arith.constant 0 : i32
    %40 = arith.cmpi ne, %39, %c0_i32_40 : i32
    scf.if %40 {
      %44 = vector.shape_cast %37 : vector<32x128xf32> to vector<2x16x128xf32>
      %c0_43 = arith.constant 0 : index
      %c2_44 = arith.constant 2 : index
      %c0_45 = arith.constant 0 : index
      %45 = vector.load %arg8[%c0_43, %c2_44, %c0_45] : memref<2x20x128xf32, #tpu.memory_space<vmem>>, vector<2x16x128xf32>
      tpu.vector_store %arg8[%c0_43, %c2_44, %c0_45], %44 {strides = array<i32>} : memref<2x20x128xf32, #tpu.memory_space<vmem>>, vector<2x16x128xf32>,
    } else {
    }
    %c0_i32_41 = arith.constant 0 : i32
    %41 = arith.cmpi eq, %arg0, %c0_i32_41 : i32
    %42 = arith.extui %41 : i1 to i32
    %c0_i32_42 = arith.constant 0 : i32
    %43 = arith.cmpi ne, %42, %c0_i32_42 : i32
    scf.if %43 {
      %cst_43 = arith.constant dense<0.000000e+00> : vector<128xf32>
      %44 = vector.multi_reduction <add>, %37, %cst_43 [0] : vector<32x128xf32> to vector<128xf32>
      %45 = vector.shape_cast %44 : vector<128xf32> to vector<1x128xf32>
      %c0_44 = arith.constant 0 : index
      %c0_45 = arith.constant 0 : index
      %46 = vector.load %arg6[%c0_44, %c0_45] : memref<128x128xf32, #tpu.memory_space<vmem>>, vector<128x128xf32>
      %cst_46 = arith.constant dense<0.000000e+00> : vector<1x128xf32>
      %47 = tpu.matmul %45, %46, %cst_46 {dimension_numbers = #tpu.dot_dimension_numbers<[1], [0], [0], [1], [0, 0, 1, 1], [], []>} : vector<1x128xf32>, vector<128x128xf32>, vector<1x128xf32> -> vector<1x128xf32>
      %cst_47 = arith.constant 0.001953125 : f32
      %48 = vector.broadcast %cst_47 : f32 to vector<1x128xf32>
      %49 = arith.mulf %47, %48 : vector<1x128xf32>
      %50 = vector.broadcast %49 : vector<1x128xf32> to vector<32x128xf32>
      %51 = arith.subf %37, %50 : vector<32x128xf32>
      %52 = arith.mulf %51, %51 : vector<32x128xf32>
      %cst_48 = arith.constant dense<0.000000e+00> : vector<128xf32>
      %53 = vector.multi_reduction <add>, %52, %cst_48 [0] : vector<32x128xf32> to vector<128xf32>
      %54 = vector.shape_cast %53 : vector<128xf32> to vector<1x128xf32>
      %c0_49 = arith.constant 0 : index
      %c0_50 = arith.constant 0 : index
      %55 = vector.load %arg6[%c0_49, %c0_50] : memref<128x128xf32, #tpu.memory_space<vmem>>, vector<128x128xf32>
      %cst_51 = arith.constant dense<0.000000e+00> : vector<1x128xf32>
      %56 = tpu.matmul %54, %55, %cst_51 {dimension_numbers = #tpu.dot_dimension_numbers<[1], [0], [0], [1], [0, 0, 1, 1], [], []>} : vector<1x128xf32>, vector<128x128xf32>, vector<1x128xf32> -> vector<1x128xf32>
      %cst_52 = arith.constant 0.001953125 : f32
      %57 = vector.broadcast %cst_52 : f32 to vector<1x128xf32>
      %58 = arith.mulf %56, %57 : vector<1x128xf32>
      %c0_53 = arith.constant 0 : index
      %c0_54 = arith.constant 0 : index
      %59 = vector.load %arg4[%c0_53, %c0_54] : memref<1x128xf32, #tpu.memory_space<vmem>>, vector<1x128xf32>
      %cst_55 = arith.constant 9.99999974E-6 : f32
      %60 = vector.broadcast %cst_55 : f32 to vector<1x128xf32>
      %61 = arith.addf %58, %60 : vector<1x128xf32>
      %62 = math.rsqrt %61 : vector<1x128xf32>
      %63 = arith.mulf %59, %62 : vector<1x128xf32>
      %64 = vector.broadcast %63 : vector<1x128xf32> to vector<32x128xf32>
      %65 = arith.mulf %51, %64 : vector<32x128xf32>
      %c0_56 = arith.constant 0 : index
      %c0_57 = arith.constant 0 : index
      %66 = vector.load %arg5[%c0_56, %c0_57] : memref<1x128xf32, #tpu.memory_space<vmem>>, vector<1x128xf32>
      %67 = vector.broadcast %66 : vector<1x128xf32> to vector<32x128xf32>
      %68 = arith.addf %65, %67 : vector<32x128xf32>
      %cst_58 = arith.constant 0.000000e+00 : f32
      %69 = vector.broadcast %cst_58 : f32 to vector<32x128xf32>
      %70 = arith.minimumf %68, %69 : vector<32x128xf32>
      %71 = math.exp %70 : vector<32x128xf32>
      %cst_59 = arith.constant 1.000000e+00 : f32
      %72 = vector.broadcast %cst_59 : f32 to vector<32x128xf32>
      %73 = arith.subf %71, %72 : vector<32x128xf32>
      %cst_60 = arith.constant 1.67326319 : f32
      %74 = vector.broadcast %cst_60 : f32 to vector<32x128xf32>
      %75 = arith.mulf %74, %73 : vector<32x128xf32>
      %cst_61 = arith.constant 0.000000e+00 : f32
      %76 = vector.broadcast %cst_61 : f32 to vector<32x128xf32>
      %77 = arith.cmpf ogt, %68, %76 : vector<32x128xf32>
      %78 = arith.select %77, %68, %75 : vector<32x128xi1>, vector<32x128xf32>
      %cst_62 = arith.constant 1.05070102 : f32
      %79 = vector.broadcast %cst_62 : f32 to vector<32x128xf32>
      %80 = arith.mulf %79, %78 : vector<32x128xf32>
      %c0_63 = arith.constant 0 : index
      %c0_64 = arith.constant 0 : index
      %81 = vector.load %arg7[%c0_63, %c0_64] : memref<32x128xf32, #tpu.memory_space<vmem>>, vector<32x128xf32>
      tpu.vector_store %arg7[%c0_63, %c0_64], %80 {strides = array<i32>} : memref<32x128xf32, #tpu.memory_space<vmem>>, vector<32x128xf32>,
    } else {
    }
    return
  }
  func.func @transform_0(%arg0: i32) -> (i32, i32, i32) {
    %c0_i32 = arith.constant 0 : i32
    %c0_i32_0 = arith.constant 0 : i32
    %c0_i32_1 = arith.constant 0 : i32
    %c0_i32_2 = arith.constant 0 : i32
    return %c0_i32, %c0_i32_0, %c0_i32_1 : i32, i32, i32
  }
  func.func @transform_1(%arg0: i32) -> (i32, i32, i32, i32) {
    %c0_i32 = arith.constant 0 : i32
    %c0_i32_0 = arith.constant 0 : i32
    %c0_i32_1 = arith.constant 0 : i32
    %c0_i32_2 = arith.constant 0 : i32
    return %arg0, %c0_i32, %c0_i32_0, %c0_i32_1 : i32, i32, i32, i32
  }
  func.func @transform_2(%arg0: i32) -> (i32, i32, i32) {
    %c0_i32 = arith.constant 0 : i32
    %c0_i32_0 = arith.constant 0 : i32
    %c0_i32_1 = arith.constant 0 : i32
    return %arg0, %c0_i32, %c0_i32_0 : i32, i32, i32
  }
  func.func @transform_3(%arg0: i32) -> (i32, i32) {
    %c0_i32 = arith.constant 0 : i32
    %c0_i32_0 = arith.constant 0 : i32
    %c0_i32_1 = arith.constant 0 : i32
    return %c0_i32, %c0_i32_0 : i32, i32
  }
  func.func @transform_4(%arg0: i32) -> (i32, i32) {
    %c0_i32 = arith.constant 0 : i32
    %c0_i32_0 = arith.constant 0 : i32
    %c0_i32_1 = arith.constant 0 : i32
    return %c0_i32, %c0_i32_0 : i32, i32
  }
  func.func @transform_5(%arg0: i32) -> (i32, i32) {
    %c0_i32 = arith.constant 0 : i32
    %c0_i32_0 = arith.constant 0 : i32
    %c0_i32_1 = arith.constant 0 : i32
    return %c0_i32, %c0_i32_0 : i32, i32
  }
  func.func @transform_6(%arg0: i32) -> (i32, i32) {
    %c0_i32 = arith.constant 0 : i32
    %c0_i32_0 = arith.constant 0 : i32
    %c0_i32_1 = arith.constant 0 : i32
    return %c0_i32, %c0_i32_0 : i32, i32
  }
}

module attributes {stable_mosaic.version = 11 : i64} {
  func.func @kernel(%arg0: i32, %arg1: memref<2x16x128xf32, #tpu.memory_space<vmem>>, %arg2: memref<1x7x128x128xf32, #tpu.memory_space<vmem>>, %arg3: memref<1x1x128xf32, #tpu.memory_space<vmem>>, %arg4: memref<1x128xf32, #tpu.memory_space<vmem>>, %arg5: memref<1x128xf32, #tpu.memory_space<vmem>>, %arg6: memref<128x128xf32, #tpu.memory_space<vmem>>, %arg7: memref<32x128xf32, #tpu.memory_space<vmem>>, %arg8: memref<2x22x128xf32, #tpu.memory_space<vmem>>) attributes {dimension_semantics = [#tpu.dimension_semantics<arbitrary>], iteration_bounds = array<i64: 1>, scalar_prefetch = 0 : i64, scratch_operands = 1 : i64, tpu.core_type = #tpu.core_type<tc>, window_params = [{pipeline_mode = #tpu.pipeline_mode<synchronous>, transform_indices = @transform_0, window_bounds = array<i64: 2, 16, 128>}, {transform_indices = @transform_1, window_bounds = array<i64: 1, 7, 128, 128>}, {transform_indices = @transform_2, window_bounds = array<i64: 1, 1, 128>}, {pipeline_mode = #tpu.pipeline_mode<synchronous>, transform_indices = @transform_3, window_bounds = array<i64: 1, 128>}, {pipeline_mode = #tpu.pipeline_mode<synchronous>, transform_indices = @transform_4, window_bounds = array<i64: 1, 128>}, {pipeline_mode = #tpu.pipeline_mode<synchronous>, transform_indices = @transform_5, window_bounds = array<i64: 128, 128>}, {pipeline_mode = #tpu.pipeline_mode<synchronous>, transform_indices = @transform_6, window_bounds = array<i64: 32, 128>}]} {
    %c0_i32 = arith.constant 0 : i32
    %0 = arith.cmpi eq, %arg0, %c0_i32 : i32
    %1 = arith.extui %0 : i1 to i32
    %c0_i32_0 = arith.constant 0 : i32
    %2 = arith.cmpi ne, %1, %c0_i32_0 : i32
    scf.if %2 {
      %cst_57 = arith.constant 0.000000e+00 : f32
      %56 = vector.broadcast %cst_57 : f32 to vector<2x22x128xf32>
      %c0_58 = arith.constant 0 : index
      %c0_59 = arith.constant 0 : index
      %c0_60 = arith.constant 0 : index
      %57 = vector.load %arg8[%c0_58, %c0_59, %c0_60] : memref<2x22x128xf32, #tpu.memory_space<vmem>>, vector<2x22x128xf32>
      tpu.vector_store %arg8[%c0_58, %c0_59, %c0_60], %56 {strides = array<i32>} : memref<2x22x128xf32, #tpu.memory_space<vmem>>, vector<2x22x128xf32>,
      %c0_61 = arith.constant 0 : index
      %c0_62 = arith.constant 0 : index
      %c0_63 = arith.constant 0 : index
      %58 = vector.load %arg1[%c0_61, %c0_62, %c0_63] : memref<2x16x128xf32, #tpu.memory_space<vmem>>, vector<2x16x128xf32>
      %c0_64 = arith.constant 0 : index
      %c3_65 = arith.constant 3 : index
      %c0_66 = arith.constant 0 : index
      %59 = vector.load %arg8[%c0_64, %c3_65, %c0_66] : memref<2x22x128xf32, #tpu.memory_space<vmem>>, vector<2x16x128xf32>
      tpu.vector_store %arg8[%c0_64, %c3_65, %c0_66], %58 {strides = array<i32>} : memref<2x22x128xf32, #tpu.memory_space<vmem>>, vector<2x16x128xf32>,
    } else {
    }
    %cst = arith.constant 0.000000e+00 : f32
    %3 = vector.broadcast %cst : f32 to vector<32x128xf32>
    %c0 = arith.constant 0 : index
    %c0_1 = arith.constant 0 : index
    %c0_2 = arith.constant 0 : index
    %4 = vector.load %arg8[%c0, %c0_1, %c0_2] : memref<2x22x128xf32, #tpu.memory_space<vmem>>, vector<2x16x128xf32>
    %5 = vector.shape_cast %4 : vector<2x16x128xf32> to vector<32x128xf32>
    %c0_3 = arith.constant 0 : index
    %c0_4 = arith.constant 0 : index
    %c0_5 = arith.constant 0 : index
    %c0_6 = arith.constant 0 : index
    %6 = vector.load %arg2[%c0_3, %c0_4, %c0_5, %c0_6] : memref<1x7x128x128xf32, #tpu.memory_space<vmem>>, vector<1x1x128x128xf32>
    %7 = vector.shape_cast %6 : vector<1x1x128x128xf32> to vector<128x128xf32>
    %cst_7 = arith.constant dense<0.000000e+00> : vector<32x128xf32>
    %8 = tpu.matmul %5, %7, %cst_7 {dimension_numbers = #tpu.dot_dimension_numbers<[1], [0], [0], [1], [0, 0, 1, 1], [], []>} : vector<32x128xf32>, vector<128x128xf32>, vector<32x128xf32> -> vector<32x128xf32>
    %9 = arith.addf %3, %8 : vector<32x128xf32>
    %c0_8 = arith.constant 0 : index
    %c1 = arith.constant 1 : index
    %c0_9 = arith.constant 0 : index
    %10 = vector.load %arg8[%c0_8, %c1, %c0_9] : memref<2x22x128xf32, #tpu.memory_space<vmem>>, vector<2x16x128xf32>
    %11 = vector.shape_cast %10 : vector<2x16x128xf32> to vector<32x128xf32>
    %c0_10 = arith.constant 0 : index
    %c1_11 = arith.constant 1 : index
    %c0_12 = arith.constant 0 : index
    %c0_13 = arith.constant 0 : index
    %12 = vector.load %arg2[%c0_10, %c1_11, %c0_12, %c0_13] : memref<1x7x128x128xf32, #tpu.memory_space<vmem>>, vector<1x1x128x128xf32>
    %13 = vector.shape_cast %12 : vector<1x1x128x128xf32> to vector<128x128xf32>
    %cst_14 = arith.constant dense<0.000000e+00> : vector<32x128xf32>
    %14 = tpu.matmul %11, %13, %cst_14 {dimension_numbers = #tpu.dot_dimension_numbers<[1], [0], [0], [1], [0, 0, 1, 1], [], []>} : vector<32x128xf32>, vector<128x128xf32>, vector<32x128xf32> -> vector<32x128xf32>
    %15 = arith.addf %9, %14 : vector<32x128xf32>
    %c0_15 = arith.constant 0 : index
    %c2 = arith.constant 2 : index
    %c0_16 = arith.constant 0 : index
    %16 = vector.load %arg8[%c0_15, %c2, %c0_16] : memref<2x22x128xf32, #tpu.memory_space<vmem>>, vector<2x16x128xf32>
    %17 = vector.shape_cast %16 : vector<2x16x128xf32> to vector<32x128xf32>
    %c0_17 = arith.constant 0 : index
    %c2_18 = arith.constant 2 : index
    %c0_19 = arith.constant 0 : index
    %c0_20 = arith.constant 0 : index
    %18 = vector.load %arg2[%c0_17, %c2_18, %c0_19, %c0_20] : memref<1x7x128x128xf32, #tpu.memory_space<vmem>>, vector<1x1x128x128xf32>
    %19 = vector.shape_cast %18 : vector<1x1x128x128xf32> to vector<128x128xf32>
    %cst_21 = arith.constant dense<0.000000e+00> : vector<32x128xf32>
    %20 = tpu.matmul %17, %19, %cst_21 {dimension_numbers = #tpu.dot_dimension_numbers<[1], [0], [0], [1], [0, 0, 1, 1], [], []>} : vector<32x128xf32>, vector<128x128xf32>, vector<32x128xf32> -> vector<32x128xf32>
    %21 = arith.addf %15, %20 : vector<32x128xf32>
    %c0_22 = arith.constant 0 : index
    %c3 = arith.constant 3 : index
    %c0_23 = arith.constant 0 : index
    %22 = vector.load %arg8[%c0_22, %c3, %c0_23] : memref<2x22x128xf32, #tpu.memory_space<vmem>>, vector<2x16x128xf32>
    %23 = vector.shape_cast %22 : vector<2x16x128xf32> to vector<32x128xf32>
    %c0_24 = arith.constant 0 : index
    %c3_25 = arith.constant 3 : index
    %c0_26 = arith.constant 0 : index
    %c0_27 = arith.constant 0 : index
    %24 = vector.load %arg2[%c0_24, %c3_25, %c0_26, %c0_27] : memref<1x7x128x128xf32, #tpu.memory_space<vmem>>, vector<1x1x128x128xf32>
    %25 = vector.shape_cast %24 : vector<1x1x128x128xf32> to vector<128x128xf32>
    %cst_28 = arith.constant dense<0.000000e+00> : vector<32x128xf32>
    %26 = tpu.matmul %23, %25, %cst_28 {dimension_numbers = #tpu.dot_dimension_numbers<[1], [0], [0], [1], [0, 0, 1, 1], [], []>} : vector<32x128xf32>, vector<128x128xf32>, vector<32x128xf32> -> vector<32x128xf32>
    %27 = arith.addf %21, %26 : vector<32x128xf32>
    %c0_29 = arith.constant 0 : index
    %c4 = arith.constant 4 : index
    %c0_30 = arith.constant 0 : index
    %28 = vector.load %arg8[%c0_29, %c4, %c0_30] : memref<2x22x128xf32, #tpu.memory_space<vmem>>, vector<2x16x128xf32>
    %29 = vector.shape_cast %28 : vector<2x16x128xf32> to vector<32x128xf32>
    %c0_31 = arith.constant 0 : index
    %c4_32 = arith.constant 4 : index
    %c0_33 = arith.constant 0 : index
    %c0_34 = arith.constant 0 : index
    %30 = vector.load %arg2[%c0_31, %c4_32, %c0_33, %c0_34] : memref<1x7x128x128xf32, #tpu.memory_space<vmem>>, vector<1x1x128x128xf32>
    %31 = vector.shape_cast %30 : vector<1x1x128x128xf32> to vector<128x128xf32>
    %cst_35 = arith.constant dense<0.000000e+00> : vector<32x128xf32>
    %32 = tpu.matmul %29, %31, %cst_35 {dimension_numbers = #tpu.dot_dimension_numbers<[1], [0], [0], [1], [0, 0, 1, 1], [], []>} : vector<32x128xf32>, vector<128x128xf32>, vector<32x128xf32> -> vector<32x128xf32>
    %33 = arith.addf %27, %32 : vector<32x128xf32>
    %c0_36 = arith.constant 0 : index
    %c5 = arith.constant 5 : index
    %c0_37 = arith.constant 0 : index
    %34 = vector.load %arg8[%c0_36, %c5, %c0_37] : memref<2x22x128xf32, #tpu.memory_space<vmem>>, vector<2x16x128xf32>
    %35 = vector.shape_cast %34 : vector<2x16x128xf32> to vector<32x128xf32>
    %c0_38 = arith.constant 0 : index
    %c5_39 = arith.constant 5 : index
    %c0_40 = arith.constant 0 : index
    %c0_41 = arith.constant 0 : index
    %36 = vector.load %arg2[%c0_38, %c5_39, %c0_40, %c0_41] : memref<1x7x128x128xf32, #tpu.memory_space<vmem>>, vector<1x1x128x128xf32>
    %37 = vector.shape_cast %36 : vector<1x1x128x128xf32> to vector<128x128xf32>
    %cst_42 = arith.constant dense<0.000000e+00> : vector<32x128xf32>
    %38 = tpu.matmul %35, %37, %cst_42 {dimension_numbers = #tpu.dot_dimension_numbers<[1], [0], [0], [1], [0, 0, 1, 1], [], []>} : vector<32x128xf32>, vector<128x128xf32>, vector<32x128xf32> -> vector<32x128xf32>
    %39 = arith.addf %33, %38 : vector<32x128xf32>
    %c0_43 = arith.constant 0 : index
    %c6 = arith.constant 6 : index
    %c0_44 = arith.constant 0 : index
    %40 = vector.load %arg8[%c0_43, %c6, %c0_44] : memref<2x22x128xf32, #tpu.memory_space<vmem>>, vector<2x16x128xf32>
    %41 = vector.shape_cast %40 : vector<2x16x128xf32> to vector<32x128xf32>
    %c0_45 = arith.constant 0 : index
    %c6_46 = arith.constant 6 : index
    %c0_47 = arith.constant 0 : index
    %c0_48 = arith.constant 0 : index
    %42 = vector.load %arg2[%c0_45, %c6_46, %c0_47, %c0_48] : memref<1x7x128x128xf32, #tpu.memory_space<vmem>>, vector<1x1x128x128xf32>
    %43 = vector.shape_cast %42 : vector<1x1x128x128xf32> to vector<128x128xf32>
    %cst_49 = arith.constant dense<0.000000e+00> : vector<32x128xf32>
    %44 = tpu.matmul %41, %43, %cst_49 {dimension_numbers = #tpu.dot_dimension_numbers<[1], [0], [0], [1], [0, 0, 1, 1], [], []>} : vector<32x128xf32>, vector<128x128xf32>, vector<32x128xf32> -> vector<32x128xf32>
    %45 = arith.addf %39, %44 : vector<32x128xf32>
    %c0_50 = arith.constant 0 : index
    %c0_51 = arith.constant 0 : index
    %c0_52 = arith.constant 0 : index
    %46 = vector.load %arg3[%c0_50, %c0_51, %c0_52] : memref<1x1x128xf32, #tpu.memory_space<vmem>>, vector<1x1x128xf32>
    %47 = vector.shape_cast %46 : vector<1x1x128xf32> to vector<1x128xf32>
    %48 = vector.broadcast %47 : vector<1x128xf32> to vector<32x128xf32>
    %49 = arith.addf %45, %48 : vector<32x128xf32>
    %c0_i32_53 = arith.constant 0 : i32
    %50 = arith.cmpi ne, %arg0, %c0_i32_53 : i32
    %51 = arith.extui %50 : i1 to i32
    %c0_i32_54 = arith.constant 0 : i32
    %52 = arith.cmpi ne, %51, %c0_i32_54 : i32
    scf.if %52 {
      %56 = vector.shape_cast %49 : vector<32x128xf32> to vector<2x16x128xf32>
      %c0_57 = arith.constant 0 : index
      %c3_58 = arith.constant 3 : index
      %c0_59 = arith.constant 0 : index
      %57 = vector.load %arg8[%c0_57, %c3_58, %c0_59] : memref<2x22x128xf32, #tpu.memory_space<vmem>>, vector<2x16x128xf32>
      tpu.vector_store %arg8[%c0_57, %c3_58, %c0_59], %56 {strides = array<i32>} : memref<2x22x128xf32, #tpu.memory_space<vmem>>, vector<2x16x128xf32>,
    } else {
    }
    %c0_i32_55 = arith.constant 0 : i32
    %53 = arith.cmpi eq, %arg0, %c0_i32_55 : i32
    %54 = arith.extui %53 : i1 to i32
    %c0_i32_56 = arith.constant 0 : i32
    %55 = arith.cmpi ne, %54, %c0_i32_56 : i32
    scf.if %55 {
      %cst_57 = arith.constant dense<0.000000e+00> : vector<128xf32>
      %56 = vector.multi_reduction <add>, %49, %cst_57 [0] : vector<32x128xf32> to vector<128xf32>
      %57 = vector.shape_cast %56 : vector<128xf32> to vector<1x128xf32>
      %c0_58 = arith.constant 0 : index
      %c0_59 = arith.constant 0 : index
      %58 = vector.load %arg6[%c0_58, %c0_59] : memref<128x128xf32, #tpu.memory_space<vmem>>, vector<128x128xf32>
      %cst_60 = arith.constant dense<0.000000e+00> : vector<1x128xf32>
      %59 = tpu.matmul %57, %58, %cst_60 {dimension_numbers = #tpu.dot_dimension_numbers<[1], [0], [0], [1], [0, 0, 1, 1], [], []>} : vector<1x128xf32>, vector<128x128xf32>, vector<1x128xf32> -> vector<1x128xf32>
      %cst_61 = arith.constant 0.001953125 : f32
      %60 = vector.broadcast %cst_61 : f32 to vector<1x128xf32>
      %61 = arith.mulf %59, %60 : vector<1x128xf32>
      %62 = vector.broadcast %61 : vector<1x128xf32> to vector<32x128xf32>
      %63 = arith.subf %49, %62 : vector<32x128xf32>
      %64 = arith.mulf %63, %63 : vector<32x128xf32>
      %cst_62 = arith.constant dense<0.000000e+00> : vector<128xf32>
      %65 = vector.multi_reduction <add>, %64, %cst_62 [0] : vector<32x128xf32> to vector<128xf32>
      %66 = vector.shape_cast %65 : vector<128xf32> to vector<1x128xf32>
      %c0_63 = arith.constant 0 : index
      %c0_64 = arith.constant 0 : index
      %67 = vector.load %arg6[%c0_63, %c0_64] : memref<128x128xf32, #tpu.memory_space<vmem>>, vector<128x128xf32>
      %cst_65 = arith.constant dense<0.000000e+00> : vector<1x128xf32>
      %68 = tpu.matmul %66, %67, %cst_65 {dimension_numbers = #tpu.dot_dimension_numbers<[1], [0], [0], [1], [0, 0, 1, 1], [], []>} : vector<1x128xf32>, vector<128x128xf32>, vector<1x128xf32> -> vector<1x128xf32>
      %cst_66 = arith.constant 0.001953125 : f32
      %69 = vector.broadcast %cst_66 : f32 to vector<1x128xf32>
      %70 = arith.mulf %68, %69 : vector<1x128xf32>
      %c0_67 = arith.constant 0 : index
      %c0_68 = arith.constant 0 : index
      %71 = vector.load %arg4[%c0_67, %c0_68] : memref<1x128xf32, #tpu.memory_space<vmem>>, vector<1x128xf32>
      %cst_69 = arith.constant 9.99999974E-6 : f32
      %72 = vector.broadcast %cst_69 : f32 to vector<1x128xf32>
      %73 = arith.addf %70, %72 : vector<1x128xf32>
      %74 = math.rsqrt %73 : vector<1x128xf32>
      %75 = arith.mulf %71, %74 : vector<1x128xf32>
      %76 = vector.broadcast %75 : vector<1x128xf32> to vector<32x128xf32>
      %77 = arith.mulf %63, %76 : vector<32x128xf32>
      %c0_70 = arith.constant 0 : index
      %c0_71 = arith.constant 0 : index
      %78 = vector.load %arg5[%c0_70, %c0_71] : memref<1x128xf32, #tpu.memory_space<vmem>>, vector<1x128xf32>
      %79 = vector.broadcast %78 : vector<1x128xf32> to vector<32x128xf32>
      %80 = arith.addf %77, %79 : vector<32x128xf32>
      %cst_72 = arith.constant 0.000000e+00 : f32
      %81 = vector.broadcast %cst_72 : f32 to vector<32x128xf32>
      %82 = arith.minimumf %80, %81 : vector<32x128xf32>
      %83 = math.exp %82 : vector<32x128xf32>
      %cst_73 = arith.constant 1.000000e+00 : f32
      %84 = vector.broadcast %cst_73 : f32 to vector<32x128xf32>
      %85 = arith.subf %83, %84 : vector<32x128xf32>
      %cst_74 = arith.constant 1.67326319 : f32
      %86 = vector.broadcast %cst_74 : f32 to vector<32x128xf32>
      %87 = arith.mulf %86, %85 : vector<32x128xf32>
      %cst_75 = arith.constant 0.000000e+00 : f32
      %88 = vector.broadcast %cst_75 : f32 to vector<32x128xf32>
      %89 = arith.cmpf ogt, %80, %88 : vector<32x128xf32>
      %90 = arith.select %89, %80, %87 : vector<32x128xi1>, vector<32x128xf32>
      %cst_76 = arith.constant 1.05070102 : f32
      %91 = vector.broadcast %cst_76 : f32 to vector<32x128xf32>
      %92 = arith.mulf %91, %90 : vector<32x128xf32>
      %c0_77 = arith.constant 0 : index
      %c0_78 = arith.constant 0 : index
      %93 = vector.load %arg7[%c0_77, %c0_78] : memref<32x128xf32, #tpu.memory_space<vmem>>, vector<32x128xf32>
      tpu.vector_store %arg7[%c0_77, %c0_78], %92 {strides = array<i32>} : memref<32x128xf32, #tpu.memory_space<vmem>>, vector<32x128xf32>,
    } else {
    }
    return
  }
  func.func @transform_0(%arg0: i32) -> (i32, i32, i32) {
    %c0_i32 = arith.constant 0 : i32
    %c0_i32_0 = arith.constant 0 : i32
    %c0_i32_1 = arith.constant 0 : i32
    %c0_i32_2 = arith.constant 0 : i32
    return %c0_i32, %c0_i32_0, %c0_i32_1 : i32, i32, i32
  }
  func.func @transform_1(%arg0: i32) -> (i32, i32, i32, i32) {
    %c0_i32 = arith.constant 0 : i32
    %c0_i32_0 = arith.constant 0 : i32
    %c0_i32_1 = arith.constant 0 : i32
    %c0_i32_2 = arith.constant 0 : i32
    return %arg0, %c0_i32, %c0_i32_0, %c0_i32_1 : i32, i32, i32, i32
  }
  func.func @transform_2(%arg0: i32) -> (i32, i32, i32) {
    %c0_i32 = arith.constant 0 : i32
    %c0_i32_0 = arith.constant 0 : i32
    %c0_i32_1 = arith.constant 0 : i32
    return %arg0, %c0_i32, %c0_i32_0 : i32, i32, i32
  }
  func.func @transform_3(%arg0: i32) -> (i32, i32) {
    %c0_i32 = arith.constant 0 : i32
    %c0_i32_0 = arith.constant 0 : i32
    %c0_i32_1 = arith.constant 0 : i32
    return %c0_i32, %c0_i32_0 : i32, i32
  }
  func.func @transform_4(%arg0: i32) -> (i32, i32) {
    %c0_i32 = arith.constant 0 : i32
    %c0_i32_0 = arith.constant 0 : i32
    %c0_i32_1 = arith.constant 0 : i32
    return %c0_i32, %c0_i32_0 : i32, i32
  }
  func.func @transform_5(%arg0: i32) -> (i32, i32) {
    %c0_i32 = arith.constant 0 : i32
    %c0_i32_0 = arith.constant 0 : i32
    %c0_i32_1 = arith.constant 0 : i32
    return %c0_i32, %c0_i32_0 : i32, i32
  }
  func.func @transform_6(%arg0: i32) -> (i32, i32) {
    %c0_i32 = arith.constant 0 : i32
    %c0_i32_0 = arith.constant 0 : i32
    %c0_i32_1 = arith.constant 0 : i32
    return %c0_i32, %c0_i32_0 : i32, i32
  }
}

module attributes {stable_mosaic.version = 11 : i64} {
  func.func @kernel(%arg0: i32, %arg1: memref<2x16x128xf32, #tpu.memory_space<vmem>>, %arg2: memref<1x5x128x128xf32, #tpu.memory_space<vmem>>, %arg3: memref<1x1x128xf32, #tpu.memory_space<vmem>>, %arg4: memref<1x128xf32, #tpu.memory_space<vmem>>, %arg5: memref<1x128xf32, #tpu.memory_space<vmem>>, %arg6: memref<128x128xf32, #tpu.memory_space<vmem>>, %arg7: memref<32x128xf32, #tpu.memory_space<vmem>>, %arg8: memref<2x20x128xf32, #tpu.memory_space<vmem>>) attributes {dimension_semantics = [#tpu.dimension_semantics<arbitrary>], iteration_bounds = array<i64: 3>, scalar_prefetch = 0 : i64, scratch_operands = 1 : i64, tpu.core_type = #tpu.core_type<tc>, window_params = [{pipeline_mode = #tpu.pipeline_mode<synchronous>, transform_indices = @transform_0, window_bounds = array<i64: 2, 16, 128>}, {transform_indices = @transform_1, window_bounds = array<i64: 1, 5, 128, 128>}, {transform_indices = @transform_2, window_bounds = array<i64: 1, 1, 128>}, {pipeline_mode = #tpu.pipeline_mode<synchronous>, transform_indices = @transform_3, window_bounds = array<i64: 1, 128>}, {pipeline_mode = #tpu.pipeline_mode<synchronous>, transform_indices = @transform_4, window_bounds = array<i64: 1, 128>}, {pipeline_mode = #tpu.pipeline_mode<synchronous>, transform_indices = @transform_5, window_bounds = array<i64: 128, 128>}, {pipeline_mode = #tpu.pipeline_mode<synchronous>, transform_indices = @transform_6, window_bounds = array<i64: 32, 128>}]} {
    %c0_i32 = arith.constant 0 : i32
    %0 = arith.cmpi eq, %arg0, %c0_i32 : i32
    %1 = arith.extui %0 : i1 to i32
    %c0_i32_0 = arith.constant 0 : i32
    %2 = arith.cmpi ne, %1, %c0_i32_0 : i32
    scf.if %2 {
      %cst_42 = arith.constant 0.000000e+00 : f32
      %44 = vector.broadcast %cst_42 : f32 to vector<2x20x128xf32>
      %c0_43 = arith.constant 0 : index
      %c0_44 = arith.constant 0 : index
      %c0_45 = arith.constant 0 : index
      %45 = vector.load %arg8[%c0_43, %c0_44, %c0_45] : memref<2x20x128xf32, #tpu.memory_space<vmem>>, vector<2x20x128xf32>
      tpu.vector_store %arg8[%c0_43, %c0_44, %c0_45], %44 {strides = array<i32>} : memref<2x20x128xf32, #tpu.memory_space<vmem>>, vector<2x20x128xf32>,
      %c0_46 = arith.constant 0 : index
      %c0_47 = arith.constant 0 : index
      %c0_48 = arith.constant 0 : index
      %46 = vector.load %arg1[%c0_46, %c0_47, %c0_48] : memref<2x16x128xf32, #tpu.memory_space<vmem>>, vector<2x16x128xf32>
      %c0_49 = arith.constant 0 : index
      %c2_50 = arith.constant 2 : index
      %c0_51 = arith.constant 0 : index
      %47 = vector.load %arg8[%c0_49, %c2_50, %c0_51] : memref<2x20x128xf32, #tpu.memory_space<vmem>>, vector<2x16x128xf32>
      tpu.vector_store %arg8[%c0_49, %c2_50, %c0_51], %46 {strides = array<i32>} : memref<2x20x128xf32, #tpu.memory_space<vmem>>, vector<2x16x128xf32>,
    } else {
    }
    %cst = arith.constant 0.000000e+00 : f32
    %3 = vector.broadcast %cst : f32 to vector<32x128xf32>
    %c0 = arith.constant 0 : index
    %c0_1 = arith.constant 0 : index
    %c0_2 = arith.constant 0 : index
    %4 = vector.load %arg8[%c0, %c0_1, %c0_2] : memref<2x20x128xf32, #tpu.memory_space<vmem>>, vector<2x16x128xf32>
    %5 = vector.shape_cast %4 : vector<2x16x128xf32> to vector<32x128xf32>
    %c0_3 = arith.constant 0 : index
    %c0_4 = arith.constant 0 : index
    %c0_5 = arith.constant 0 : index
    %c0_6 = arith.constant 0 : index
    %6 = vector.load %arg2[%c0_3, %c0_4, %c0_5, %c0_6] : memref<1x5x128x128xf32, #tpu.memory_space<vmem>>, vector<1x1x128x128xf32>
    %7 = vector.shape_cast %6 : vector<1x1x128x128xf32> to vector<128x128xf32>
    %cst_7 = arith.constant dense<0.000000e+00> : vector<32x128xf32>
    %8 = tpu.matmul %5, %7, %cst_7 {dimension_numbers = #tpu.dot_dimension_numbers<[1], [0], [0], [1], [0, 0, 1, 1], [], []>} : vector<32x128xf32>, vector<128x128xf32>, vector<32x128xf32> -> vector<32x128xf32>
    %9 = arith.addf %3, %8 : vector<32x128xf32>
    %c0_8 = arith.constant 0 : index
    %c1 = arith.constant 1 : index
    %c0_9 = arith.constant 0 : index
    %10 = vector.load %arg8[%c0_8, %c1, %c0_9] : memref<2x20x128xf32, #tpu.memory_space<vmem>>, vector<2x16x128xf32>
    %11 = vector.shape_cast %10 : vector<2x16x128xf32> to vector<32x128xf32>
    %c0_10 = arith.constant 0 : index
    %c1_11 = arith.constant 1 : index
    %c0_12 = arith.constant 0 : index
    %c0_13 = arith.constant 0 : index
    %12 = vector.load %arg2[%c0_10, %c1_11, %c0_12, %c0_13] : memref<1x5x128x128xf32, #tpu.memory_space<vmem>>, vector<1x1x128x128xf32>
    %13 = vector.shape_cast %12 : vector<1x1x128x128xf32> to vector<128x128xf32>
    %cst_14 = arith.constant dense<0.000000e+00> : vector<32x128xf32>
    %14 = tpu.matmul %11, %13, %cst_14 {dimension_numbers = #tpu.dot_dimension_numbers<[1], [0], [0], [1], [0, 0, 1, 1], [], []>} : vector<32x128xf32>, vector<128x128xf32>, vector<32x128xf32> -> vector<32x128xf32>
    %15 = arith.addf %9, %14 : vector<32x128xf32>
    %c0_15 = arith.constant 0 : index
    %c2 = arith.constant 2 : index
    %c0_16 = arith.constant 0 : index
    %16 = vector.load %arg8[%c0_15, %c2, %c0_16] : memref<2x20x128xf32, #tpu.memory_space<vmem>>, vector<2x16x128xf32>
    %17 = vector.shape_cast %16 : vector<2x16x128xf32> to vector<32x128xf32>
    %c0_17 = arith.constant 0 : index
    %c2_18 = arith.constant 2 : index
    %c0_19 = arith.constant 0 : index
    %c0_20 = arith.constant 0 : index
    %18 = vector.load %arg2[%c0_17, %c2_18, %c0_19, %c0_20] : memref<1x5x128x128xf32, #tpu.memory_space<vmem>>, vector<1x1x128x128xf32>
    %19 = vector.shape_cast %18 : vector<1x1x128x128xf32> to vector<128x128xf32>
    %cst_21 = arith.constant dense<0.000000e+00> : vector<32x128xf32>
    %20 = tpu.matmul %17, %19, %cst_21 {dimension_numbers = #tpu.dot_dimension_numbers<[1], [0], [0], [1], [0, 0, 1, 1], [], []>} : vector<32x128xf32>, vector<128x128xf32>, vector<32x128xf32> -> vector<32x128xf32>
    %21 = arith.addf %15, %20 : vector<32x128xf32>
    %c0_22 = arith.constant 0 : index
    %c3 = arith.constant 3 : index
    %c0_23 = arith.constant 0 : index
    %22 = vector.load %arg8[%c0_22, %c3, %c0_23] : memref<2x20x128xf32, #tpu.memory_space<vmem>>, vector<2x16x128xf32>
    %23 = vector.shape_cast %22 : vector<2x16x128xf32> to vector<32x128xf32>
    %c0_24 = arith.constant 0 : index
    %c3_25 = arith.constant 3 : index
    %c0_26 = arith.constant 0 : index
    %c0_27 = arith.constant 0 : index
    %24 = vector.load %arg2[%c0_24, %c3_25, %c0_26, %c0_27] : memref<1x5x128x128xf32, #tpu.memory_space<vmem>>, vector<1x1x128x128xf32>
    %25 = vector.shape_cast %24 : vector<1x1x128x128xf32> to vector<128x128xf32>
    %cst_28 = arith.constant dense<0.000000e+00> : vector<32x128xf32>
    %26 = tpu.matmul %23, %25, %cst_28 {dimension_numbers = #tpu.dot_dimension_numbers<[1], [0], [0], [1], [0, 0, 1, 1], [], []>} : vector<32x128xf32>, vector<128x128xf32>, vector<32x128xf32> -> vector<32x128xf32>
    %27 = arith.addf %21, %26 : vector<32x128xf32>
    %c0_29 = arith.constant 0 : index
    %c4 = arith.constant 4 : index
    %c0_30 = arith.constant 0 : index
    %28 = vector.load %arg8[%c0_29, %c4, %c0_30] : memref<2x20x128xf32, #tpu.memory_space<vmem>>, vector<2x16x128xf32>
    %29 = vector.shape_cast %28 : vector<2x16x128xf32> to vector<32x128xf32>
    %c0_31 = arith.constant 0 : index
    %c4_32 = arith.constant 4 : index
    %c0_33 = arith.constant 0 : index
    %c0_34 = arith.constant 0 : index
    %30 = vector.load %arg2[%c0_31, %c4_32, %c0_33, %c0_34] : memref<1x5x128x128xf32, #tpu.memory_space<vmem>>, vector<1x1x128x128xf32>
    %31 = vector.shape_cast %30 : vector<1x1x128x128xf32> to vector<128x128xf32>
    %cst_35 = arith.constant dense<0.000000e+00> : vector<32x128xf32>
    %32 = tpu.matmul %29, %31, %cst_35 {dimension_numbers = #tpu.dot_dimension_numbers<[1], [0], [0], [1], [0, 0, 1, 1], [], []>} : vector<32x128xf32>, vector<128x128xf32>, vector<32x128xf32> -> vector<32x128xf32>
    %33 = arith.addf %27, %32 : vector<32x128xf32>
    %c0_36 = arith.constant 0 : index
    %c0_37 = arith.constant 0 : index
    %c0_38 = arith.constant 0 : index
    %34 = vector.load %arg3[%c0_36, %c0_37, %c0_38] : memref<1x1x128xf32, #tpu.memory_space<vmem>>, vector<1x1x128xf32>
    %35 = vector.shape_cast %34 : vector<1x1x128xf32> to vector<1x128xf32>
    %36 = vector.broadcast %35 : vector<1x128xf32> to vector<32x128xf32>
    %37 = arith.addf %33, %36 : vector<32x128xf32>
    %c2_i32 = arith.constant 2 : i32
    %38 = arith.cmpi ne, %arg0, %c2_i32 : i32
    %39 = arith.extui %38 : i1 to i32
    %c0_i32_39 = arith.constant 0 : i32
    %40 = arith.cmpi ne, %39, %c0_i32_39 : i32
    scf.if %40 {
      %44 = vector.shape_cast %37 : vector<32x128xf32> to vector<2x16x128xf32>
      %c0_42 = arith.constant 0 : index
      %c2_43 = arith.constant 2 : index
      %c0_44 = arith.constant 0 : index
      %45 = vector.load %arg8[%c0_42, %c2_43, %c0_44] : memref<2x20x128xf32, #tpu.memory_space<vmem>>, vector<2x16x128xf32>
      tpu.vector_store %arg8[%c0_42, %c2_43, %c0_44], %44 {strides = array<i32>} : memref<2x20x128xf32, #tpu.memory_space<vmem>>, vector<2x16x128xf32>,
    } else {
    }
    %c2_i32_40 = arith.constant 2 : i32
    %41 = arith.cmpi eq, %arg0, %c2_i32_40 : i32
    %42 = arith.extui %41 : i1 to i32
    %c0_i32_41 = arith.constant 0 : i32
    %43 = arith.cmpi ne, %42, %c0_i32_41 : i32
    scf.if %43 {
      %cst_42 = arith.constant dense<0.000000e+00> : vector<128xf32>
      %44 = vector.multi_reduction <add>, %37, %cst_42 [0] : vector<32x128xf32> to vector<128xf32>
      %45 = vector.shape_cast %44 : vector<128xf32> to vector<1x128xf32>
      %c0_43 = arith.constant 0 : index
      %c0_44 = arith.constant 0 : index
      %46 = vector.load %arg6[%c0_43, %c0_44] : memref<128x128xf32, #tpu.memory_space<vmem>>, vector<128x128xf32>
      %cst_45 = arith.constant dense<0.000000e+00> : vector<1x128xf32>
      %47 = tpu.matmul %45, %46, %cst_45 {dimension_numbers = #tpu.dot_dimension_numbers<[1], [0], [0], [1], [0, 0, 1, 1], [], []>} : vector<1x128xf32>, vector<128x128xf32>, vector<1x128xf32> -> vector<1x128xf32>
      %cst_46 = arith.constant 0.001953125 : f32
      %48 = vector.broadcast %cst_46 : f32 to vector<1x128xf32>
      %49 = arith.mulf %47, %48 : vector<1x128xf32>
      %50 = vector.broadcast %49 : vector<1x128xf32> to vector<32x128xf32>
      %51 = arith.subf %37, %50 : vector<32x128xf32>
      %52 = arith.mulf %51, %51 : vector<32x128xf32>
      %cst_47 = arith.constant dense<0.000000e+00> : vector<128xf32>
      %53 = vector.multi_reduction <add>, %52, %cst_47 [0] : vector<32x128xf32> to vector<128xf32>
      %54 = vector.shape_cast %53 : vector<128xf32> to vector<1x128xf32>
      %c0_48 = arith.constant 0 : index
      %c0_49 = arith.constant 0 : index
      %55 = vector.load %arg6[%c0_48, %c0_49] : memref<128x128xf32, #tpu.memory_space<vmem>>, vector<128x128xf32>
      %cst_50 = arith.constant dense<0.000000e+00> : vector<1x128xf32>
      %56 = tpu.matmul %54, %55, %cst_50 {dimension_numbers = #tpu.dot_dimension_numbers<[1], [0], [0], [1], [0, 0, 1, 1], [], []>} : vector<1x128xf32>, vector<128x128xf32>, vector<1x128xf32> -> vector<1x128xf32>
      %cst_51 = arith.constant 0.001953125 : f32
      %57 = vector.broadcast %cst_51 : f32 to vector<1x128xf32>
      %58 = arith.mulf %56, %57 : vector<1x128xf32>
      %c0_52 = arith.constant 0 : index
      %c0_53 = arith.constant 0 : index
      %59 = vector.load %arg4[%c0_52, %c0_53] : memref<1x128xf32, #tpu.memory_space<vmem>>, vector<1x128xf32>
      %cst_54 = arith.constant 9.99999974E-6 : f32
      %60 = vector.broadcast %cst_54 : f32 to vector<1x128xf32>
      %61 = arith.addf %58, %60 : vector<1x128xf32>
      %62 = math.rsqrt %61 : vector<1x128xf32>
      %63 = arith.mulf %59, %62 : vector<1x128xf32>
      %64 = vector.broadcast %63 : vector<1x128xf32> to vector<32x128xf32>
      %65 = arith.mulf %51, %64 : vector<32x128xf32>
      %c0_55 = arith.constant 0 : index
      %c0_56 = arith.constant 0 : index
      %66 = vector.load %arg5[%c0_55, %c0_56] : memref<1x128xf32, #tpu.memory_space<vmem>>, vector<1x128xf32>
      %67 = vector.broadcast %66 : vector<1x128xf32> to vector<32x128xf32>
      %68 = arith.addf %65, %67 : vector<32x128xf32>
      %cst_57 = arith.constant 0.000000e+00 : f32
      %69 = vector.broadcast %cst_57 : f32 to vector<32x128xf32>
      %70 = arith.minimumf %68, %69 : vector<32x128xf32>
      %71 = math.exp %70 : vector<32x128xf32>
      %cst_58 = arith.constant 1.000000e+00 : f32
      %72 = vector.broadcast %cst_58 : f32 to vector<32x128xf32>
      %73 = arith.subf %71, %72 : vector<32x128xf32>
      %cst_59 = arith.constant 1.67326319 : f32
      %74 = vector.broadcast %cst_59 : f32 to vector<32x128xf32>
      %75 = arith.mulf %74, %73 : vector<32x128xf32>
      %cst_60 = arith.constant 0.000000e+00 : f32
      %76 = vector.broadcast %cst_60 : f32 to vector<32x128xf32>
      %77 = arith.cmpf ogt, %68, %76 : vector<32x128xf32>
      %78 = arith.select %77, %68, %75 : vector<32x128xi1>, vector<32x128xf32>
      %cst_61 = arith.constant 1.05070102 : f32
      %79 = vector.broadcast %cst_61 : f32 to vector<32x128xf32>
      %80 = arith.mulf %79, %78 : vector<32x128xf32>
      %c0_62 = arith.constant 0 : index
      %c0_63 = arith.constant 0 : index
      %81 = vector.load %arg7[%c0_62, %c0_63] : memref<32x128xf32, #tpu.memory_space<vmem>>, vector<32x128xf32>
      tpu.vector_store %arg7[%c0_62, %c0_63], %80 {strides = array<i32>} : memref<32x128xf32, #tpu.memory_space<vmem>>, vector<32x128xf32>,
    } else {
    }
    return
  }
  func.func @transform_0(%arg0: i32) -> (i32, i32, i32) {
    %c0_i32 = arith.constant 0 : i32
    %c0_i32_0 = arith.constant 0 : i32
    %c0_i32_1 = arith.constant 0 : i32
    %c0_i32_2 = arith.constant 0 : i32
    return %c0_i32, %c0_i32_0, %c0_i32_1 : i32, i32, i32
  }
  func.func @transform_1(%arg0: i32) -> (i32, i32, i32, i32) {
    %c0_i32 = arith.constant 0 : i32
    %c0_i32_0 = arith.constant 0 : i32
    %c0_i32_1 = arith.constant 0 : i32
    %c0_i32_2 = arith.constant 0 : i32
    return %arg0, %c0_i32, %c0_i32_0, %c0_i32_1 : i32, i32, i32, i32
  }
  func.func @transform_2(%arg0: i32) -> (i32, i32, i32) {
    %c0_i32 = arith.constant 0 : i32
    %c0_i32_0 = arith.constant 0 : i32
    %c0_i32_1 = arith.constant 0 : i32
    return %arg0, %c0_i32, %c0_i32_0 : i32, i32, i32
  }
  func.func @transform_3(%arg0: i32) -> (i32, i32) {
    %c0_i32 = arith.constant 0 : i32
    %c0_i32_0 = arith.constant 0 : i32
    %c0_i32_1 = arith.constant 0 : i32
    return %c0_i32, %c0_i32_0 : i32, i32
  }
  func.func @transform_4(%arg0: i32) -> (i32, i32) {
    %c0_i32 = arith.constant 0 : i32
    %c0_i32_0 = arith.constant 0 : i32
    %c0_i32_1 = arith.constant 0 : i32
    return %c0_i32, %c0_i32_0 : i32, i32
  }
  func.func @transform_5(%arg0: i32) -> (i32, i32) {
    %c0_i32 = arith.constant 0 : i32
    %c0_i32_0 = arith.constant 0 : i32
    %c0_i32_1 = arith.constant 0 : i32
    return %c0_i32, %c0_i32_0 : i32, i32
  }
  func.func @transform_6(%arg0: i32) -> (i32, i32) {
    %c0_i32 = arith.constant 0 : i32
    %c0_i32_0 = arith.constant 0 : i32
    %c0_i32_1 = arith.constant 0 : i32
    return %c0_i32, %c0_i32_0 : i32, i32
  }
}

module attributes {stable_mosaic.version = 11 : i64} {
  func.func @kernel(%arg0: i32, %arg1: memref<2x16x128xf32, #tpu.memory_space<vmem>>, %arg2: memref<1x5x128x128xf32, #tpu.memory_space<vmem>>, %arg3: memref<1x1x128xf32, #tpu.memory_space<vmem>>, %arg4: memref<1x128xf32, #tpu.memory_space<vmem>>, %arg5: memref<1x128xf32, #tpu.memory_space<vmem>>, %arg6: memref<128x128xf32, #tpu.memory_space<vmem>>, %arg7: memref<32x128xf32, #tpu.memory_space<vmem>>, %arg8: memref<2x20x128xf32, #tpu.memory_space<vmem>>) attributes {dimension_semantics = [#tpu.dimension_semantics<arbitrary>], iteration_bounds = array<i64: 7>, scalar_prefetch = 0 : i64, scratch_operands = 1 : i64, tpu.core_type = #tpu.core_type<tc>, window_params = [{pipeline_mode = #tpu.pipeline_mode<synchronous>, transform_indices = @transform_0, window_bounds = array<i64: 2, 16, 128>}, {transform_indices = @transform_1, window_bounds = array<i64: 1, 5, 128, 128>}, {transform_indices = @transform_2, window_bounds = array<i64: 1, 1, 128>}, {pipeline_mode = #tpu.pipeline_mode<synchronous>, transform_indices = @transform_3, window_bounds = array<i64: 1, 128>}, {pipeline_mode = #tpu.pipeline_mode<synchronous>, transform_indices = @transform_4, window_bounds = array<i64: 1, 128>}, {pipeline_mode = #tpu.pipeline_mode<synchronous>, transform_indices = @transform_5, window_bounds = array<i64: 128, 128>}, {pipeline_mode = #tpu.pipeline_mode<synchronous>, transform_indices = @transform_6, window_bounds = array<i64: 32, 128>}]} {
    %c0_i32 = arith.constant 0 : i32
    %0 = arith.cmpi eq, %arg0, %c0_i32 : i32
    %1 = arith.extui %0 : i1 to i32
    %c0_i32_0 = arith.constant 0 : i32
    %2 = arith.cmpi ne, %1, %c0_i32_0 : i32
    scf.if %2 {
      %cst_42 = arith.constant 0.000000e+00 : f32
      %44 = vector.broadcast %cst_42 : f32 to vector<2x20x128xf32>
      %c0_43 = arith.constant 0 : index
      %c0_44 = arith.constant 0 : index
      %c0_45 = arith.constant 0 : index
      %45 = vector.load %arg8[%c0_43, %c0_44, %c0_45] : memref<2x20x128xf32, #tpu.memory_space<vmem>>, vector<2x20x128xf32>
      tpu.vector_store %arg8[%c0_43, %c0_44, %c0_45], %44 {strides = array<i32>} : memref<2x20x128xf32, #tpu.memory_space<vmem>>, vector<2x20x128xf32>,
      %c0_46 = arith.constant 0 : index
      %c0_47 = arith.constant 0 : index
      %c0_48 = arith.constant 0 : index
      %46 = vector.load %arg1[%c0_46, %c0_47, %c0_48] : memref<2x16x128xf32, #tpu.memory_space<vmem>>, vector<2x16x128xf32>
      %c0_49 = arith.constant 0 : index
      %c2_50 = arith.constant 2 : index
      %c0_51 = arith.constant 0 : index
      %47 = vector.load %arg8[%c0_49, %c2_50, %c0_51] : memref<2x20x128xf32, #tpu.memory_space<vmem>>, vector<2x16x128xf32>
      tpu.vector_store %arg8[%c0_49, %c2_50, %c0_51], %46 {strides = array<i32>} : memref<2x20x128xf32, #tpu.memory_space<vmem>>, vector<2x16x128xf32>,
    } else {
    }
    %cst = arith.constant 0.000000e+00 : f32
    %3 = vector.broadcast %cst : f32 to vector<32x128xf32>
    %c0 = arith.constant 0 : index
    %c0_1 = arith.constant 0 : index
    %c0_2 = arith.constant 0 : index
    %4 = vector.load %arg8[%c0, %c0_1, %c0_2] : memref<2x20x128xf32, #tpu.memory_space<vmem>>, vector<2x16x128xf32>
    %5 = vector.shape_cast %4 : vector<2x16x128xf32> to vector<32x128xf32>
    %c0_3 = arith.constant 0 : index
    %c0_4 = arith.constant 0 : index
    %c0_5 = arith.constant 0 : index
    %c0_6 = arith.constant 0 : index
    %6 = vector.load %arg2[%c0_3, %c0_4, %c0_5, %c0_6] : memref<1x5x128x128xf32, #tpu.memory_space<vmem>>, vector<1x1x128x128xf32>
    %7 = vector.shape_cast %6 : vector<1x1x128x128xf32> to vector<128x128xf32>
    %cst_7 = arith.constant dense<0.000000e+00> : vector<32x128xf32>
    %8 = tpu.matmul %5, %7, %cst_7 {dimension_numbers = #tpu.dot_dimension_numbers<[1], [0], [0], [1], [0, 0, 1, 1], [], []>} : vector<32x128xf32>, vector<128x128xf32>, vector<32x128xf32> -> vector<32x128xf32>
    %9 = arith.addf %3, %8 : vector<32x128xf32>
    %c0_8 = arith.constant 0 : index
    %c1 = arith.constant 1 : index
    %c0_9 = arith.constant 0 : index
    %10 = vector.load %arg8[%c0_8, %c1, %c0_9] : memref<2x20x128xf32, #tpu.memory_space<vmem>>, vector<2x16x128xf32>
    %11 = vector.shape_cast %10 : vector<2x16x128xf32> to vector<32x128xf32>
    %c0_10 = arith.constant 0 : index
    %c1_11 = arith.constant 1 : index
    %c0_12 = arith.constant 0 : index
    %c0_13 = arith.constant 0 : index
    %12 = vector.load %arg2[%c0_10, %c1_11, %c0_12, %c0_13] : memref<1x5x128x128xf32, #tpu.memory_space<vmem>>, vector<1x1x128x128xf32>
    %13 = vector.shape_cast %12 : vector<1x1x128x128xf32> to vector<128x128xf32>
    %cst_14 = arith.constant dense<0.000000e+00> : vector<32x128xf32>
    %14 = tpu.matmul %11, %13, %cst_14 {dimension_numbers = #tpu.dot_dimension_numbers<[1], [0], [0], [1], [0, 0, 1, 1], [], []>} : vector<32x128xf32>, vector<128x128xf32>, vector<32x128xf32> -> vector<32x128xf32>
    %15 = arith.addf %9, %14 : vector<32x128xf32>
    %c0_15 = arith.constant 0 : index
    %c2 = arith.constant 2 : index
    %c0_16 = arith.constant 0 : index
    %16 = vector.load %arg8[%c0_15, %c2, %c0_16] : memref<2x20x128xf32, #tpu.memory_space<vmem>>, vector<2x16x128xf32>
    %17 = vector.shape_cast %16 : vector<2x16x128xf32> to vector<32x128xf32>
    %c0_17 = arith.constant 0 : index
    %c2_18 = arith.constant 2 : index
    %c0_19 = arith.constant 0 : index
    %c0_20 = arith.constant 0 : index
    %18 = vector.load %arg2[%c0_17, %c2_18, %c0_19, %c0_20] : memref<1x5x128x128xf32, #tpu.memory_space<vmem>>, vector<1x1x128x128xf32>
    %19 = vector.shape_cast %18 : vector<1x1x128x128xf32> to vector<128x128xf32>
    %cst_21 = arith.constant dense<0.000000e+00> : vector<32x128xf32>
    %20 = tpu.matmul %17, %19, %cst_21 {dimension_numbers = #tpu.dot_dimension_numbers<[1], [0], [0], [1], [0, 0, 1, 1], [], []>} : vector<32x128xf32>, vector<128x128xf32>, vector<32x128xf32> -> vector<32x128xf32>
    %21 = arith.addf %15, %20 : vector<32x128xf32>
    %c0_22 = arith.constant 0 : index
    %c3 = arith.constant 3 : index
    %c0_23 = arith.constant 0 : index
    %22 = vector.load %arg8[%c0_22, %c3, %c0_23] : memref<2x20x128xf32, #tpu.memory_space<vmem>>, vector<2x16x128xf32>
    %23 = vector.shape_cast %22 : vector<2x16x128xf32> to vector<32x128xf32>
    %c0_24 = arith.constant 0 : index
    %c3_25 = arith.constant 3 : index
    %c0_26 = arith.constant 0 : index
    %c0_27 = arith.constant 0 : index
    %24 = vector.load %arg2[%c0_24, %c3_25, %c0_26, %c0_27] : memref<1x5x128x128xf32, #tpu.memory_space<vmem>>, vector<1x1x128x128xf32>
    %25 = vector.shape_cast %24 : vector<1x1x128x128xf32> to vector<128x128xf32>
    %cst_28 = arith.constant dense<0.000000e+00> : vector<32x128xf32>
    %26 = tpu.matmul %23, %25, %cst_28 {dimension_numbers = #tpu.dot_dimension_numbers<[1], [0], [0], [1], [0, 0, 1, 1], [], []>} : vector<32x128xf32>, vector<128x128xf32>, vector<32x128xf32> -> vector<32x128xf32>
    %27 = arith.addf %21, %26 : vector<32x128xf32>
    %c0_29 = arith.constant 0 : index
    %c4 = arith.constant 4 : index
    %c0_30 = arith.constant 0 : index
    %28 = vector.load %arg8[%c0_29, %c4, %c0_30] : memref<2x20x128xf32, #tpu.memory_space<vmem>>, vector<2x16x128xf32>
    %29 = vector.shape_cast %28 : vector<2x16x128xf32> to vector<32x128xf32>
    %c0_31 = arith.constant 0 : index
    %c4_32 = arith.constant 4 : index
    %c0_33 = arith.constant 0 : index
    %c0_34 = arith.constant 0 : index
    %30 = vector.load %arg2[%c0_31, %c4_32, %c0_33, %c0_34] : memref<1x5x128x128xf32, #tpu.memory_space<vmem>>, vector<1x1x128x128xf32>
    %31 = vector.shape_cast %30 : vector<1x1x128x128xf32> to vector<128x128xf32>
    %cst_35 = arith.constant dense<0.000000e+00> : vector<32x128xf32>
    %32 = tpu.matmul %29, %31, %cst_35 {dimension_numbers = #tpu.dot_dimension_numbers<[1], [0], [0], [1], [0, 0, 1, 1], [], []>} : vector<32x128xf32>, vector<128x128xf32>, vector<32x128xf32> -> vector<32x128xf32>
    %33 = arith.addf %27, %32 : vector<32x128xf32>
    %c0_36 = arith.constant 0 : index
    %c0_37 = arith.constant 0 : index
    %c0_38 = arith.constant 0 : index
    %34 = vector.load %arg3[%c0_36, %c0_37, %c0_38] : memref<1x1x128xf32, #tpu.memory_space<vmem>>, vector<1x1x128xf32>
    %35 = vector.shape_cast %34 : vector<1x1x128xf32> to vector<1x128xf32>
    %36 = vector.broadcast %35 : vector<1x128xf32> to vector<32x128xf32>
    %37 = arith.addf %33, %36 : vector<32x128xf32>
    %c6_i32 = arith.constant 6 : i32
    %38 = arith.cmpi ne, %arg0, %c6_i32 : i32
    %39 = arith.extui %38 : i1 to i32
    %c0_i32_39 = arith.constant 0 : i32
    %40 = arith.cmpi ne, %39, %c0_i32_39 : i32
    scf.if %40 {
      %44 = vector.shape_cast %37 : vector<32x128xf32> to vector<2x16x128xf32>
      %c0_42 = arith.constant 0 : index
      %c2_43 = arith.constant 2 : index
      %c0_44 = arith.constant 0 : index
      %45 = vector.load %arg8[%c0_42, %c2_43, %c0_44] : memref<2x20x128xf32, #tpu.memory_space<vmem>>, vector<2x16x128xf32>
      tpu.vector_store %arg8[%c0_42, %c2_43, %c0_44], %44 {strides = array<i32>} : memref<2x20x128xf32, #tpu.memory_space<vmem>>, vector<2x16x128xf32>,
    } else {
    }
    %c6_i32_40 = arith.constant 6 : i32
    %41 = arith.cmpi eq, %arg0, %c6_i32_40 : i32
    %42 = arith.extui %41 : i1 to i32
    %c0_i32_41 = arith.constant 0 : i32
    %43 = arith.cmpi ne, %42, %c0_i32_41 : i32
    scf.if %43 {
      %cst_42 = arith.constant dense<0.000000e+00> : vector<128xf32>
      %44 = vector.multi_reduction <add>, %37, %cst_42 [0] : vector<32x128xf32> to vector<128xf32>
      %45 = vector.shape_cast %44 : vector<128xf32> to vector<1x128xf32>
      %c0_43 = arith.constant 0 : index
      %c0_44 = arith.constant 0 : index
      %46 = vector.load %arg6[%c0_43, %c0_44] : memref<128x128xf32, #tpu.memory_space<vmem>>, vector<128x128xf32>
      %cst_45 = arith.constant dense<0.000000e+00> : vector<1x128xf32>
      %47 = tpu.matmul %45, %46, %cst_45 {dimension_numbers = #tpu.dot_dimension_numbers<[1], [0], [0], [1], [0, 0, 1, 1], [], []>} : vector<1x128xf32>, vector<128x128xf32>, vector<1x128xf32> -> vector<1x128xf32>
      %cst_46 = arith.constant 0.001953125 : f32
      %48 = vector.broadcast %cst_46 : f32 to vector<1x128xf32>
      %49 = arith.mulf %47, %48 : vector<1x128xf32>
      %50 = vector.broadcast %49 : vector<1x128xf32> to vector<32x128xf32>
      %51 = arith.subf %37, %50 : vector<32x128xf32>
      %52 = arith.mulf %51, %51 : vector<32x128xf32>
      %cst_47 = arith.constant dense<0.000000e+00> : vector<128xf32>
      %53 = vector.multi_reduction <add>, %52, %cst_47 [0] : vector<32x128xf32> to vector<128xf32>
      %54 = vector.shape_cast %53 : vector<128xf32> to vector<1x128xf32>
      %c0_48 = arith.constant 0 : index
      %c0_49 = arith.constant 0 : index
      %55 = vector.load %arg6[%c0_48, %c0_49] : memref<128x128xf32, #tpu.memory_space<vmem>>, vector<128x128xf32>
      %cst_50 = arith.constant dense<0.000000e+00> : vector<1x128xf32>
      %56 = tpu.matmul %54, %55, %cst_50 {dimension_numbers = #tpu.dot_dimension_numbers<[1], [0], [0], [1], [0, 0, 1, 1], [], []>} : vector<1x128xf32>, vector<128x128xf32>, vector<1x128xf32> -> vector<1x128xf32>
      %cst_51 = arith.constant 0.001953125 : f32
      %57 = vector.broadcast %cst_51 : f32 to vector<1x128xf32>
      %58 = arith.mulf %56, %57 : vector<1x128xf32>
      %c0_52 = arith.constant 0 : index
      %c0_53 = arith.constant 0 : index
      %59 = vector.load %arg4[%c0_52, %c0_53] : memref<1x128xf32, #tpu.memory_space<vmem>>, vector<1x128xf32>
      %cst_54 = arith.constant 9.99999974E-6 : f32
      %60 = vector.broadcast %cst_54 : f32 to vector<1x128xf32>
      %61 = arith.addf %58, %60 : vector<1x128xf32>
      %62 = math.rsqrt %61 : vector<1x128xf32>
      %63 = arith.mulf %59, %62 : vector<1x128xf32>
      %64 = vector.broadcast %63 : vector<1x128xf32> to vector<32x128xf32>
      %65 = arith.mulf %51, %64 : vector<32x128xf32>
      %c0_55 = arith.constant 0 : index
      %c0_56 = arith.constant 0 : index
      %66 = vector.load %arg5[%c0_55, %c0_56] : memref<1x128xf32, #tpu.memory_space<vmem>>, vector<1x128xf32>
      %67 = vector.broadcast %66 : vector<1x128xf32> to vector<32x128xf32>
      %68 = arith.addf %65, %67 : vector<32x128xf32>
      %cst_57 = arith.constant 0.000000e+00 : f32
      %69 = vector.broadcast %cst_57 : f32 to vector<32x128xf32>
      %70 = arith.minimumf %68, %69 : vector<32x128xf32>
      %71 = math.exp %70 : vector<32x128xf32>
      %cst_58 = arith.constant 1.000000e+00 : f32
      %72 = vector.broadcast %cst_58 : f32 to vector<32x128xf32>
      %73 = arith.subf %71, %72 : vector<32x128xf32>
      %cst_59 = arith.constant 1.67326319 : f32
      %74 = vector.broadcast %cst_59 : f32 to vector<32x128xf32>
      %75 = arith.mulf %74, %73 : vector<32x128xf32>
      %cst_60 = arith.constant 0.000000e+00 : f32
      %76 = vector.broadcast %cst_60 : f32 to vector<32x128xf32>
      %77 = arith.cmpf ogt, %68, %76 : vector<32x128xf32>
      %78 = arith.select %77, %68, %75 : vector<32x128xi1>, vector<32x128xf32>
      %cst_61 = arith.constant 1.05070102 : f32
      %79 = vector.broadcast %cst_61 : f32 to vector<32x128xf32>
      %80 = arith.mulf %79, %78 : vector<32x128xf32>
      %c0_62 = arith.constant 0 : index
      %c0_63 = arith.constant 0 : index
      %81 = vector.load %arg7[%c0_62, %c0_63] : memref<32x128xf32, #tpu.memory_space<vmem>>, vector<32x128xf32>
      tpu.vector_store %arg7[%c0_62, %c0_63], %80 {strides = array<i32>} : memref<32x128xf32, #tpu.memory_space<vmem>>, vector<32x128xf32>,
    } else {
    }
    return
  }
  func.func @transform_0(%arg0: i32) -> (i32, i32, i32) {
    %c0_i32 = arith.constant 0 : i32
    %c0_i32_0 = arith.constant 0 : i32
    %c0_i32_1 = arith.constant 0 : i32
    %c0_i32_2 = arith.constant 0 : i32
    return %c0_i32, %c0_i32_0, %c0_i32_1 : i32, i32, i32
  }
  func.func @transform_1(%arg0: i32) -> (i32, i32, i32, i32) {
    %c0_i32 = arith.constant 0 : i32
    %c0_i32_0 = arith.constant 0 : i32
    %c0_i32_1 = arith.constant 0 : i32
    %c0_i32_2 = arith.constant 0 : i32
    return %arg0, %c0_i32, %c0_i32_0, %c0_i32_1 : i32, i32, i32, i32
  }
  func.func @transform_2(%arg0: i32) -> (i32, i32, i32) {
    %c0_i32 = arith.constant 0 : i32
    %c0_i32_0 = arith.constant 0 : i32
    %c0_i32_1 = arith.constant 0 : i32
    return %arg0, %c0_i32, %c0_i32_0 : i32, i32, i32
  }
  func.func @transform_3(%arg0: i32) -> (i32, i32) {
    %c0_i32 = arith.constant 0 : i32
    %c0_i32_0 = arith.constant 0 : i32
    %c0_i32_1 = arith.constant 0 : i32
    return %c0_i32, %c0_i32_0 : i32, i32
  }
  func.func @transform_4(%arg0: i32) -> (i32, i32) {
    %c0_i32 = arith.constant 0 : i32
    %c0_i32_0 = arith.constant 0 : i32
    %c0_i32_1 = arith.constant 0 : i32
    return %c0_i32, %c0_i32_0 : i32, i32
  }
  func.func @transform_5(%arg0: i32) -> (i32, i32) {
    %c0_i32 = arith.constant 0 : i32
    %c0_i32_0 = arith.constant 0 : i32
    %c0_i32_1 = arith.constant 0 : i32
    return %c0_i32, %c0_i32_0 : i32, i32
  }
  func.func @transform_6(%arg0: i32) -> (i32, i32) {
    %c0_i32 = arith.constant 0 : i32
    %c0_i32_0 = arith.constant 0 : i32
    %c0_i32_1 = arith.constant 0 : i32
    return %c0_i32, %c0_i32_0 : i32, i32
  }
}

module attributes {stable_mosaic.version = 11 : i64} {
  func.func @kernel(%arg0: i32, %arg1: memref<2x16x128xf32, #tpu.memory_space<vmem>>, %arg2: memref<1x5x128x128xf32, #tpu.memory_space<vmem>>, %arg3: memref<1x1x128xf32, #tpu.memory_space<vmem>>, %arg4: memref<1x128xf32, #tpu.memory_space<vmem>>, %arg5: memref<1x128xf32, #tpu.memory_space<vmem>>, %arg6: memref<128x128xf32, #tpu.memory_space<vmem>>, %arg7: memref<32x128xf32, #tpu.memory_space<vmem>>, %arg8: memref<2x20x128xf32, #tpu.memory_space<vmem>>) attributes {dimension_semantics = [#tpu.dimension_semantics<arbitrary>], iteration_bounds = array<i64: 15>, scalar_prefetch = 0 : i64, scratch_operands = 1 : i64, tpu.core_type = #tpu.core_type<tc>, window_params = [{pipeline_mode = #tpu.pipeline_mode<synchronous>, transform_indices = @transform_0, window_bounds = array<i64: 2, 16, 128>}, {transform_indices = @transform_1, window_bounds = array<i64: 1, 5, 128, 128>}, {transform_indices = @transform_2, window_bounds = array<i64: 1, 1, 128>}, {pipeline_mode = #tpu.pipeline_mode<synchronous>, transform_indices = @transform_3, window_bounds = array<i64: 1, 128>}, {pipeline_mode = #tpu.pipeline_mode<synchronous>, transform_indices = @transform_4, window_bounds = array<i64: 1, 128>}, {pipeline_mode = #tpu.pipeline_mode<synchronous>, transform_indices = @transform_5, window_bounds = array<i64: 128, 128>}, {pipeline_mode = #tpu.pipeline_mode<synchronous>, transform_indices = @transform_6, window_bounds = array<i64: 32, 128>}]} {
    %c0_i32 = arith.constant 0 : i32
    %0 = arith.cmpi eq, %arg0, %c0_i32 : i32
    %1 = arith.extui %0 : i1 to i32
    %c0_i32_0 = arith.constant 0 : i32
    %2 = arith.cmpi ne, %1, %c0_i32_0 : i32
    scf.if %2 {
      %cst_42 = arith.constant 0.000000e+00 : f32
      %44 = vector.broadcast %cst_42 : f32 to vector<2x20x128xf32>
      %c0_43 = arith.constant 0 : index
      %c0_44 = arith.constant 0 : index
      %c0_45 = arith.constant 0 : index
      %45 = vector.load %arg8[%c0_43, %c0_44, %c0_45] : memref<2x20x128xf32, #tpu.memory_space<vmem>>, vector<2x20x128xf32>
      tpu.vector_store %arg8[%c0_43, %c0_44, %c0_45], %44 {strides = array<i32>} : memref<2x20x128xf32, #tpu.memory_space<vmem>>, vector<2x20x128xf32>,
      %c0_46 = arith.constant 0 : index
      %c0_47 = arith.constant 0 : index
      %c0_48 = arith.constant 0 : index
      %46 = vector.load %arg1[%c0_46, %c0_47, %c0_48] : memref<2x16x128xf32, #tpu.memory_space<vmem>>, vector<2x16x128xf32>
      %c0_49 = arith.constant 0 : index
      %c2_50 = arith.constant 2 : index
      %c0_51 = arith.constant 0 : index
      %47 = vector.load %arg8[%c0_49, %c2_50, %c0_51] : memref<2x20x128xf32, #tpu.memory_space<vmem>>, vector<2x16x128xf32>
      tpu.vector_store %arg8[%c0_49, %c2_50, %c0_51], %46 {strides = array<i32>} : memref<2x20x128xf32, #tpu.memory_space<vmem>>, vector<2x16x128xf32>,
    } else {
    }
    %cst = arith.constant 0.000000e+00 : f32
    %3 = vector.broadcast %cst : f32 to vector<32x128xf32>
    %c0 = arith.constant 0 : index
    %c0_1 = arith.constant 0 : index
    %c0_2 = arith.constant 0 : index
    %4 = vector.load %arg8[%c0, %c0_1, %c0_2] : memref<2x20x128xf32, #tpu.memory_space<vmem>>, vector<2x16x128xf32>
    %5 = vector.shape_cast %4 : vector<2x16x128xf32> to vector<32x128xf32>
    %c0_3 = arith.constant 0 : index
    %c0_4 = arith.constant 0 : index
    %c0_5 = arith.constant 0 : index
    %c0_6 = arith.constant 0 : index
    %6 = vector.load %arg2[%c0_3, %c0_4, %c0_5, %c0_6] : memref<1x5x128x128xf32, #tpu.memory_space<vmem>>, vector<1x1x128x128xf32>
    %7 = vector.shape_cast %6 : vector<1x1x128x128xf32> to vector<128x128xf32>
    %cst_7 = arith.constant dense<0.000000e+00> : vector<32x128xf32>
    %8 = tpu.matmul %5, %7, %cst_7 {dimension_numbers = #tpu.dot_dimension_numbers<[1], [0], [0], [1], [0, 0, 1, 1], [], []>} : vector<32x128xf32>, vector<128x128xf32>, vector<32x128xf32> -> vector<32x128xf32>
    %9 = arith.addf %3, %8 : vector<32x128xf32>
    %c0_8 = arith.constant 0 : index
    %c1 = arith.constant 1 : index
    %c0_9 = arith.constant 0 : index
    %10 = vector.load %arg8[%c0_8, %c1, %c0_9] : memref<2x20x128xf32, #tpu.memory_space<vmem>>, vector<2x16x128xf32>
    %11 = vector.shape_cast %10 : vector<2x16x128xf32> to vector<32x128xf32>
    %c0_10 = arith.constant 0 : index
    %c1_11 = arith.constant 1 : index
    %c0_12 = arith.constant 0 : index
    %c0_13 = arith.constant 0 : index
    %12 = vector.load %arg2[%c0_10, %c1_11, %c0_12, %c0_13] : memref<1x5x128x128xf32, #tpu.memory_space<vmem>>, vector<1x1x128x128xf32>
    %13 = vector.shape_cast %12 : vector<1x1x128x128xf32> to vector<128x128xf32>
    %cst_14 = arith.constant dense<0.000000e+00> : vector<32x128xf32>
    %14 = tpu.matmul %11, %13, %cst_14 {dimension_numbers = #tpu.dot_dimension_numbers<[1], [0], [0], [1], [0, 0, 1, 1], [], []>} : vector<32x128xf32>, vector<128x128xf32>, vector<32x128xf32> -> vector<32x128xf32>
    %15 = arith.addf %9, %14 : vector<32x128xf32>
    %c0_15 = arith.constant 0 : index
    %c2 = arith.constant 2 : index
    %c0_16 = arith.constant 0 : index
    %16 = vector.load %arg8[%c0_15, %c2, %c0_16] : memref<2x20x128xf32, #tpu.memory_space<vmem>>, vector<2x16x128xf32>
    %17 = vector.shape_cast %16 : vector<2x16x128xf32> to vector<32x128xf32>
    %c0_17 = arith.constant 0 : index
    %c2_18 = arith.constant 2 : index
    %c0_19 = arith.constant 0 : index
    %c0_20 = arith.constant 0 : index
    %18 = vector.load %arg2[%c0_17, %c2_18, %c0_19, %c0_20] : memref<1x5x128x128xf32, #tpu.memory_space<vmem>>, vector<1x1x128x128xf32>
    %19 = vector.shape_cast %18 : vector<1x1x128x128xf32> to vector<128x128xf32>
    %cst_21 = arith.constant dense<0.000000e+00> : vector<32x128xf32>
    %20 = tpu.matmul %17, %19, %cst_21 {dimension_numbers = #tpu.dot_dimension_numbers<[1], [0], [0], [1], [0, 0, 1, 1], [], []>} : vector<32x128xf32>, vector<128x128xf32>, vector<32x128xf32> -> vector<32x128xf32>
    %21 = arith.addf %15, %20 : vector<32x128xf32>
    %c0_22 = arith.constant 0 : index
    %c3 = arith.constant 3 : index
    %c0_23 = arith.constant 0 : index
    %22 = vector.load %arg8[%c0_22, %c3, %c0_23] : memref<2x20x128xf32, #tpu.memory_space<vmem>>, vector<2x16x128xf32>
    %23 = vector.shape_cast %22 : vector<2x16x128xf32> to vector<32x128xf32>
    %c0_24 = arith.constant 0 : index
    %c3_25 = arith.constant 3 : index
    %c0_26 = arith.constant 0 : index
    %c0_27 = arith.constant 0 : index
    %24 = vector.load %arg2[%c0_24, %c3_25, %c0_26, %c0_27] : memref<1x5x128x128xf32, #tpu.memory_space<vmem>>, vector<1x1x128x128xf32>
    %25 = vector.shape_cast %24 : vector<1x1x128x128xf32> to vector<128x128xf32>
    %cst_28 = arith.constant dense<0.000000e+00> : vector<32x128xf32>
    %26 = tpu.matmul %23, %25, %cst_28 {dimension_numbers = #tpu.dot_dimension_numbers<[1], [0], [0], [1], [0, 0, 1, 1], [], []>} : vector<32x128xf32>, vector<128x128xf32>, vector<32x128xf32> -> vector<32x128xf32>
    %27 = arith.addf %21, %26 : vector<32x128xf32>
    %c0_29 = arith.constant 0 : index
    %c4 = arith.constant 4 : index
    %c0_30 = arith.constant 0 : index
    %28 = vector.load %arg8[%c0_29, %c4, %c0_30] : memref<2x20x128xf32, #tpu.memory_space<vmem>>, vector<2x16x128xf32>
    %29 = vector.shape_cast %28 : vector<2x16x128xf32> to vector<32x128xf32>
    %c0_31 = arith.constant 0 : index
    %c4_32 = arith.constant 4 : index
    %c0_33 = arith.constant 0 : index
    %c0_34 = arith.constant 0 : index
    %30 = vector.load %arg2[%c0_31, %c4_32, %c0_33, %c0_34] : memref<1x5x128x128xf32, #tpu.memory_space<vmem>>, vector<1x1x128x128xf32>
    %31 = vector.shape_cast %30 : vector<1x1x128x128xf32> to vector<128x128xf32>
    %cst_35 = arith.constant dense<0.000000e+00> : vector<32x128xf32>
    %32 = tpu.matmul %29, %31, %cst_35 {dimension_numbers = #tpu.dot_dimension_numbers<[1], [0], [0], [1], [0, 0, 1, 1], [], []>} : vector<32x128xf32>, vector<128x128xf32>, vector<32x128xf32> -> vector<32x128xf32>
    %33 = arith.addf %27, %32 : vector<32x128xf32>
    %c0_36 = arith.constant 0 : index
    %c0_37 = arith.constant 0 : index
    %c0_38 = arith.constant 0 : index
    %34 = vector.load %arg3[%c0_36, %c0_37, %c0_38] : memref<1x1x128xf32, #tpu.memory_space<vmem>>, vector<1x1x128xf32>
    %35 = vector.shape_cast %34 : vector<1x1x128xf32> to vector<1x128xf32>
    %36 = vector.broadcast %35 : vector<1x128xf32> to vector<32x128xf32>
    %37 = arith.addf %33, %36 : vector<32x128xf32>
    %c14_i32 = arith.constant 14 : i32
    %38 = arith.cmpi ne, %arg0, %c14_i32 : i32
    %39 = arith.extui %38 : i1 to i32
    %c0_i32_39 = arith.constant 0 : i32
    %40 = arith.cmpi ne, %39, %c0_i32_39 : i32
    scf.if %40 {
      %44 = vector.shape_cast %37 : vector<32x128xf32> to vector<2x16x128xf32>
      %c0_42 = arith.constant 0 : index
      %c2_43 = arith.constant 2 : index
      %c0_44 = arith.constant 0 : index
      %45 = vector.load %arg8[%c0_42, %c2_43, %c0_44] : memref<2x20x128xf32, #tpu.memory_space<vmem>>, vector<2x16x128xf32>
      tpu.vector_store %arg8[%c0_42, %c2_43, %c0_44], %44 {strides = array<i32>} : memref<2x20x128xf32, #tpu.memory_space<vmem>>, vector<2x16x128xf32>,
    } else {
    }
    %c14_i32_40 = arith.constant 14 : i32
    %41 = arith.cmpi eq, %arg0, %c14_i32_40 : i32
    %42 = arith.extui %41 : i1 to i32
    %c0_i32_41 = arith.constant 0 : i32
    %43 = arith.cmpi ne, %42, %c0_i32_41 : i32
    scf.if %43 {
      %cst_42 = arith.constant dense<0.000000e+00> : vector<128xf32>
      %44 = vector.multi_reduction <add>, %37, %cst_42 [0] : vector<32x128xf32> to vector<128xf32>
      %45 = vector.shape_cast %44 : vector<128xf32> to vector<1x128xf32>
      %c0_43 = arith.constant 0 : index
      %c0_44 = arith.constant 0 : index
      %46 = vector.load %arg6[%c0_43, %c0_44] : memref<128x128xf32, #tpu.memory_space<vmem>>, vector<128x128xf32>
      %cst_45 = arith.constant dense<0.000000e+00> : vector<1x128xf32>
      %47 = tpu.matmul %45, %46, %cst_45 {dimension_numbers = #tpu.dot_dimension_numbers<[1], [0], [0], [1], [0, 0, 1, 1], [], []>} : vector<1x128xf32>, vector<128x128xf32>, vector<1x128xf32> -> vector<1x128xf32>
      %cst_46 = arith.constant 0.001953125 : f32
      %48 = vector.broadcast %cst_46 : f32 to vector<1x128xf32>
      %49 = arith.mulf %47, %48 : vector<1x128xf32>
      %50 = vector.broadcast %49 : vector<1x128xf32> to vector<32x128xf32>
      %51 = arith.subf %37, %50 : vector<32x128xf32>
      %52 = arith.mulf %51, %51 : vector<32x128xf32>
      %cst_47 = arith.constant dense<0.000000e+00> : vector<128xf32>
      %53 = vector.multi_reduction <add>, %52, %cst_47 [0] : vector<32x128xf32> to vector<128xf32>
      %54 = vector.shape_cast %53 : vector<128xf32> to vector<1x128xf32>
      %c0_48 = arith.constant 0 : index
      %c0_49 = arith.constant 0 : index
      %55 = vector.load %arg6[%c0_48, %c0_49] : memref<128x128xf32, #tpu.memory_space<vmem>>, vector<128x128xf32>
      %cst_50 = arith.constant dense<0.000000e+00> : vector<1x128xf32>
      %56 = tpu.matmul %54, %55, %cst_50 {dimension_numbers = #tpu.dot_dimension_numbers<[1], [0], [0], [1], [0, 0, 1, 1], [], []>} : vector<1x128xf32>, vector<128x128xf32>, vector<1x128xf32> -> vector<1x128xf32>
      %cst_51 = arith.constant 0.001953125 : f32
      %57 = vector.broadcast %cst_51 : f32 to vector<1x128xf32>
      %58 = arith.mulf %56, %57 : vector<1x128xf32>
      %c0_52 = arith.constant 0 : index
      %c0_53 = arith.constant 0 : index
      %59 = vector.load %arg4[%c0_52, %c0_53] : memref<1x128xf32, #tpu.memory_space<vmem>>, vector<1x128xf32>
      %cst_54 = arith.constant 9.99999974E-6 : f32
      %60 = vector.broadcast %cst_54 : f32 to vector<1x128xf32>
      %61 = arith.addf %58, %60 : vector<1x128xf32>
      %62 = math.rsqrt %61 : vector<1x128xf32>
      %63 = arith.mulf %59, %62 : vector<1x128xf32>
      %64 = vector.broadcast %63 : vector<1x128xf32> to vector<32x128xf32>
      %65 = arith.mulf %51, %64 : vector<32x128xf32>
      %c0_55 = arith.constant 0 : index
      %c0_56 = arith.constant 0 : index
      %66 = vector.load %arg5[%c0_55, %c0_56] : memref<1x128xf32, #tpu.memory_space<vmem>>, vector<1x128xf32>
      %67 = vector.broadcast %66 : vector<1x128xf32> to vector<32x128xf32>
      %68 = arith.addf %65, %67 : vector<32x128xf32>
      %cst_57 = arith.constant 0.000000e+00 : f32
      %69 = vector.broadcast %cst_57 : f32 to vector<32x128xf32>
      %70 = arith.minimumf %68, %69 : vector<32x128xf32>
      %71 = math.exp %70 : vector<32x128xf32>
      %cst_58 = arith.constant 1.000000e+00 : f32
      %72 = vector.broadcast %cst_58 : f32 to vector<32x128xf32>
      %73 = arith.subf %71, %72 : vector<32x128xf32>
      %cst_59 = arith.constant 1.67326319 : f32
      %74 = vector.broadcast %cst_59 : f32 to vector<32x128xf32>
      %75 = arith.mulf %74, %73 : vector<32x128xf32>
      %cst_60 = arith.constant 0.000000e+00 : f32
      %76 = vector.broadcast %cst_60 : f32 to vector<32x128xf32>
      %77 = arith.cmpf ogt, %68, %76 : vector<32x128xf32>
      %78 = arith.select %77, %68, %75 : vector<32x128xi1>, vector<32x128xf32>
      %cst_61 = arith.constant 1.05070102 : f32
      %79 = vector.broadcast %cst_61 : f32 to vector<32x128xf32>
      %80 = arith.mulf %79, %78 : vector<32x128xf32>
      %c0_62 = arith.constant 0 : index
      %c0_63 = arith.constant 0 : index
      %81 = vector.load %arg7[%c0_62, %c0_63] : memref<32x128xf32, #tpu.memory_space<vmem>>, vector<32x128xf32>
      tpu.vector_store %arg7[%c0_62, %c0_63], %80 {strides = array<i32>} : memref<32x128xf32, #tpu.memory_space<vmem>>, vector<32x128xf32>,
    } else {
    }
    return
  }
  func.func @transform_0(%arg0: i32) -> (i32, i32, i32) {
    %c0_i32 = arith.constant 0 : i32
    %c0_i32_0 = arith.constant 0 : i32
    %c0_i32_1 = arith.constant 0 : i32
    %c0_i32_2 = arith.constant 0 : i32
    return %c0_i32, %c0_i32_0, %c0_i32_1 : i32, i32, i32
  }
  func.func @transform_1(%arg0: i32) -> (i32, i32, i32, i32) {
    %c0_i32 = arith.constant 0 : i32
    %c0_i32_0 = arith.constant 0 : i32
    %c0_i32_1 = arith.constant 0 : i32
    %c0_i32_2 = arith.constant 0 : i32
    return %arg0, %c0_i32, %c0_i32_0, %c0_i32_1 : i32, i32, i32, i32
  }
  func.func @transform_2(%arg0: i32) -> (i32, i32, i32) {
    %c0_i32 = arith.constant 0 : i32
    %c0_i32_0 = arith.constant 0 : i32
    %c0_i32_1 = arith.constant 0 : i32
    return %arg0, %c0_i32, %c0_i32_0 : i32, i32, i32
  }
  func.func @transform_3(%arg0: i32) -> (i32, i32) {
    %c0_i32 = arith.constant 0 : i32
    %c0_i32_0 = arith.constant 0 : i32
    %c0_i32_1 = arith.constant 0 : i32
    return %c0_i32, %c0_i32_0 : i32, i32
  }
  func.func @transform_4(%arg0: i32) -> (i32, i32) {
    %c0_i32 = arith.constant 0 : i32
    %c0_i32_0 = arith.constant 0 : i32
    %c0_i32_1 = arith.constant 0 : i32
    return %c0_i32, %c0_i32_0 : i32, i32
  }
  func.func @transform_5(%arg0: i32) -> (i32, i32) {
    %c0_i32 = arith.constant 0 : i32
    %c0_i32_0 = arith.constant 0 : i32
    %c0_i32_1 = arith.constant 0 : i32
    return %c0_i32, %c0_i32_0 : i32, i32
  }
  func.func @transform_6(%arg0: i32) -> (i32, i32) {
    %c0_i32 = arith.constant 0 : i32
    %c0_i32_0 = arith.constant 0 : i32
    %c0_i32_1 = arith.constant 0 : i32
    return %c0_i32, %c0_i32_0 : i32, i32
  }
}

module attributes {stable_mosaic.version = 11 : i64} {
  func.func @kernel(%arg0: i32, %arg1: memref<2x16x128xf32, #tpu.memory_space<vmem>>, %arg2: memref<1x7x128x128xf32, #tpu.memory_space<vmem>>, %arg3: memref<1x1x128xf32, #tpu.memory_space<vmem>>, %arg4: memref<1x128xf32, #tpu.memory_space<vmem>>, %arg5: memref<1x128xf32, #tpu.memory_space<vmem>>, %arg6: memref<128x128xf32, #tpu.memory_space<vmem>>, %arg7: memref<32x128xf32, #tpu.memory_space<vmem>>, %arg8: memref<2x22x128xf32, #tpu.memory_space<vmem>>) attributes {dimension_semantics = [#tpu.dimension_semantics<arbitrary>], iteration_bounds = array<i64: 21>, scalar_prefetch = 0 : i64, scratch_operands = 1 : i64, tpu.core_type = #tpu.core_type<tc>, window_params = [{pipeline_mode = #tpu.pipeline_mode<synchronous>, transform_indices = @transform_0, window_bounds = array<i64: 2, 16, 128>}, {transform_indices = @transform_1, window_bounds = array<i64: 1, 7, 128, 128>}, {transform_indices = @transform_2, window_bounds = array<i64: 1, 1, 128>}, {pipeline_mode = #tpu.pipeline_mode<synchronous>, transform_indices = @transform_3, window_bounds = array<i64: 1, 128>}, {pipeline_mode = #tpu.pipeline_mode<synchronous>, transform_indices = @transform_4, window_bounds = array<i64: 1, 128>}, {pipeline_mode = #tpu.pipeline_mode<synchronous>, transform_indices = @transform_5, window_bounds = array<i64: 128, 128>}, {pipeline_mode = #tpu.pipeline_mode<synchronous>, transform_indices = @transform_6, window_bounds = array<i64: 32, 128>}]} {
    %c0_i32 = arith.constant 0 : i32
    %0 = arith.cmpi eq, %arg0, %c0_i32 : i32
    %1 = arith.extui %0 : i1 to i32
    %c0_i32_0 = arith.constant 0 : i32
    %2 = arith.cmpi ne, %1, %c0_i32_0 : i32
    scf.if %2 {
      %cst_56 = arith.constant 0.000000e+00 : f32
      %56 = vector.broadcast %cst_56 : f32 to vector<2x22x128xf32>
      %c0_57 = arith.constant 0 : index
      %c0_58 = arith.constant 0 : index
      %c0_59 = arith.constant 0 : index
      %57 = vector.load %arg8[%c0_57, %c0_58, %c0_59] : memref<2x22x128xf32, #tpu.memory_space<vmem>>, vector<2x22x128xf32>
      tpu.vector_store %arg8[%c0_57, %c0_58, %c0_59], %56 {strides = array<i32>} : memref<2x22x128xf32, #tpu.memory_space<vmem>>, vector<2x22x128xf32>,
      %c0_60 = arith.constant 0 : index
      %c0_61 = arith.constant 0 : index
      %c0_62 = arith.constant 0 : index
      %58 = vector.load %arg1[%c0_60, %c0_61, %c0_62] : memref<2x16x128xf32, #tpu.memory_space<vmem>>, vector<2x16x128xf32>
      %c0_63 = arith.constant 0 : index
      %c3_64 = arith.constant 3 : index
      %c0_65 = arith.constant 0 : index
      %59 = vector.load %arg8[%c0_63, %c3_64, %c0_65] : memref<2x22x128xf32, #tpu.memory_space<vmem>>, vector<2x16x128xf32>
      tpu.vector_store %arg8[%c0_63, %c3_64, %c0_65], %58 {strides = array<i32>} : memref<2x22x128xf32, #tpu.memory_space<vmem>>, vector<2x16x128xf32>,
    } else {
    }
    %cst = arith.constant 0.000000e+00 : f32
    %3 = vector.broadcast %cst : f32 to vector<32x128xf32>
    %c0 = arith.constant 0 : index
    %c0_1 = arith.constant 0 : index
    %c0_2 = arith.constant 0 : index
    %4 = vector.load %arg8[%c0, %c0_1, %c0_2] : memref<2x22x128xf32, #tpu.memory_space<vmem>>, vector<2x16x128xf32>
    %5 = vector.shape_cast %4 : vector<2x16x128xf32> to vector<32x128xf32>
    %c0_3 = arith.constant 0 : index
    %c0_4 = arith.constant 0 : index
    %c0_5 = arith.constant 0 : index
    %c0_6 = arith.constant 0 : index
    %6 = vector.load %arg2[%c0_3, %c0_4, %c0_5, %c0_6] : memref<1x7x128x128xf32, #tpu.memory_space<vmem>>, vector<1x1x128x128xf32>
    %7 = vector.shape_cast %6 : vector<1x1x128x128xf32> to vector<128x128xf32>
    %cst_7 = arith.constant dense<0.000000e+00> : vector<32x128xf32>
    %8 = tpu.matmul %5, %7, %cst_7 {dimension_numbers = #tpu.dot_dimension_numbers<[1], [0], [0], [1], [0, 0, 1, 1], [], []>} : vector<32x128xf32>, vector<128x128xf32>, vector<32x128xf32> -> vector<32x128xf32>
    %9 = arith.addf %3, %8 : vector<32x128xf32>
    %c0_8 = arith.constant 0 : index
    %c1 = arith.constant 1 : index
    %c0_9 = arith.constant 0 : index
    %10 = vector.load %arg8[%c0_8, %c1, %c0_9] : memref<2x22x128xf32, #tpu.memory_space<vmem>>, vector<2x16x128xf32>
    %11 = vector.shape_cast %10 : vector<2x16x128xf32> to vector<32x128xf32>
    %c0_10 = arith.constant 0 : index
    %c1_11 = arith.constant 1 : index
    %c0_12 = arith.constant 0 : index
    %c0_13 = arith.constant 0 : index
    %12 = vector.load %arg2[%c0_10, %c1_11, %c0_12, %c0_13] : memref<1x7x128x128xf32, #tpu.memory_space<vmem>>, vector<1x1x128x128xf32>
    %13 = vector.shape_cast %12 : vector<1x1x128x128xf32> to vector<128x128xf32>
    %cst_14 = arith.constant dense<0.000000e+00> : vector<32x128xf32>
    %14 = tpu.matmul %11, %13, %cst_14 {dimension_numbers = #tpu.dot_dimension_numbers<[1], [0], [0], [1], [0, 0, 1, 1], [], []>} : vector<32x128xf32>, vector<128x128xf32>, vector<32x128xf32> -> vector<32x128xf32>
    %15 = arith.addf %9, %14 : vector<32x128xf32>
    %c0_15 = arith.constant 0 : index
    %c2 = arith.constant 2 : index
    %c0_16 = arith.constant 0 : index
    %16 = vector.load %arg8[%c0_15, %c2, %c0_16] : memref<2x22x128xf32, #tpu.memory_space<vmem>>, vector<2x16x128xf32>
    %17 = vector.shape_cast %16 : vector<2x16x128xf32> to vector<32x128xf32>
    %c0_17 = arith.constant 0 : index
    %c2_18 = arith.constant 2 : index
    %c0_19 = arith.constant 0 : index
    %c0_20 = arith.constant 0 : index
    %18 = vector.load %arg2[%c0_17, %c2_18, %c0_19, %c0_20] : memref<1x7x128x128xf32, #tpu.memory_space<vmem>>, vector<1x1x128x128xf32>
    %19 = vector.shape_cast %18 : vector<1x1x128x128xf32> to vector<128x128xf32>
    %cst_21 = arith.constant dense<0.000000e+00> : vector<32x128xf32>
    %20 = tpu.matmul %17, %19, %cst_21 {dimension_numbers = #tpu.dot_dimension_numbers<[1], [0], [0], [1], [0, 0, 1, 1], [], []>} : vector<32x128xf32>, vector<128x128xf32>, vector<32x128xf32> -> vector<32x128xf32>
    %21 = arith.addf %15, %20 : vector<32x128xf32>
    %c0_22 = arith.constant 0 : index
    %c3 = arith.constant 3 : index
    %c0_23 = arith.constant 0 : index
    %22 = vector.load %arg8[%c0_22, %c3, %c0_23] : memref<2x22x128xf32, #tpu.memory_space<vmem>>, vector<2x16x128xf32>
    %23 = vector.shape_cast %22 : vector<2x16x128xf32> to vector<32x128xf32>
    %c0_24 = arith.constant 0 : index
    %c3_25 = arith.constant 3 : index
    %c0_26 = arith.constant 0 : index
    %c0_27 = arith.constant 0 : index
    %24 = vector.load %arg2[%c0_24, %c3_25, %c0_26, %c0_27] : memref<1x7x128x128xf32, #tpu.memory_space<vmem>>, vector<1x1x128x128xf32>
    %25 = vector.shape_cast %24 : vector<1x1x128x128xf32> to vector<128x128xf32>
    %cst_28 = arith.constant dense<0.000000e+00> : vector<32x128xf32>
    %26 = tpu.matmul %23, %25, %cst_28 {dimension_numbers = #tpu.dot_dimension_numbers<[1], [0], [0], [1], [0, 0, 1, 1], [], []>} : vector<32x128xf32>, vector<128x128xf32>, vector<32x128xf32> -> vector<32x128xf32>
    %27 = arith.addf %21, %26 : vector<32x128xf32>
    %c0_29 = arith.constant 0 : index
    %c4 = arith.constant 4 : index
    %c0_30 = arith.constant 0 : index
    %28 = vector.load %arg8[%c0_29, %c4, %c0_30] : memref<2x22x128xf32, #tpu.memory_space<vmem>>, vector<2x16x128xf32>
    %29 = vector.shape_cast %28 : vector<2x16x128xf32> to vector<32x128xf32>
    %c0_31 = arith.constant 0 : index
    %c4_32 = arith.constant 4 : index
    %c0_33 = arith.constant 0 : index
    %c0_34 = arith.constant 0 : index
    %30 = vector.load %arg2[%c0_31, %c4_32, %c0_33, %c0_34] : memref<1x7x128x128xf32, #tpu.memory_space<vmem>>, vector<1x1x128x128xf32>
    %31 = vector.shape_cast %30 : vector<1x1x128x128xf32> to vector<128x128xf32>
    %cst_35 = arith.constant dense<0.000000e+00> : vector<32x128xf32>
    %32 = tpu.matmul %29, %31, %cst_35 {dimension_numbers = #tpu.dot_dimension_numbers<[1], [0], [0], [1], [0, 0, 1, 1], [], []>} : vector<32x128xf32>, vector<128x128xf32>, vector<32x128xf32> -> vector<32x128xf32>
    %33 = arith.addf %27, %32 : vector<32x128xf32>
    %c0_36 = arith.constant 0 : index
    %c5 = arith.constant 5 : index
    %c0_37 = arith.constant 0 : index
    %34 = vector.load %arg8[%c0_36, %c5, %c0_37] : memref<2x22x128xf32, #tpu.memory_space<vmem>>, vector<2x16x128xf32>
    %35 = vector.shape_cast %34 : vector<2x16x128xf32> to vector<32x128xf32>
    %c0_38 = arith.constant 0 : index
    %c5_39 = arith.constant 5 : index
    %c0_40 = arith.constant 0 : index
    %c0_41 = arith.constant 0 : index
    %36 = vector.load %arg2[%c0_38, %c5_39, %c0_40, %c0_41] : memref<1x7x128x128xf32, #tpu.memory_space<vmem>>, vector<1x1x128x128xf32>
    %37 = vector.shape_cast %36 : vector<1x1x128x128xf32> to vector<128x128xf32>
    %cst_42 = arith.constant dense<0.000000e+00> : vector<32x128xf32>
    %38 = tpu.matmul %35, %37, %cst_42 {dimension_numbers = #tpu.dot_dimension_numbers<[1], [0], [0], [1], [0, 0, 1, 1], [], []>} : vector<32x128xf32>, vector<128x128xf32>, vector<32x128xf32> -> vector<32x128xf32>
    %39 = arith.addf %33, %38 : vector<32x128xf32>
    %c0_43 = arith.constant 0 : index
    %c6 = arith.constant 6 : index
    %c0_44 = arith.constant 0 : index
    %40 = vector.load %arg8[%c0_43, %c6, %c0_44] : memref<2x22x128xf32, #tpu.memory_space<vmem>>, vector<2x16x128xf32>
    %41 = vector.shape_cast %40 : vector<2x16x128xf32> to vector<32x128xf32>
    %c0_45 = arith.constant 0 : index
    %c6_46 = arith.constant 6 : index
    %c0_47 = arith.constant 0 : index
    %c0_48 = arith.constant 0 : index
    %42 = vector.load %arg2[%c0_45, %c6_46, %c0_47, %c0_48] : memref<1x7x128x128xf32, #tpu.memory_space<vmem>>, vector<1x1x128x128xf32>
    %43 = vector.shape_cast %42 : vector<1x1x128x128xf32> to vector<128x128xf32>
    %cst_49 = arith.constant dense<0.000000e+00> : vector<32x128xf32>
    %44 = tpu.matmul %41, %43, %cst_49 {dimension_numbers = #tpu.dot_dimension_numbers<[1], [0], [0], [1], [0, 0, 1, 1], [], []>} : vector<32x128xf32>, vector<128x128xf32>, vector<32x128xf32> -> vector<32x128xf32>
    %45 = arith.addf %39, %44 : vector<32x128xf32>
    %c0_50 = arith.constant 0 : index
    %c0_51 = arith.constant 0 : index
    %c0_52 = arith.constant 0 : index
    %46 = vector.load %arg3[%c0_50, %c0_51, %c0_52] : memref<1x1x128xf32, #tpu.memory_space<vmem>>, vector<1x1x128xf32>
    %47 = vector.shape_cast %46 : vector<1x1x128xf32> to vector<1x128xf32>
    %48 = vector.broadcast %47 : vector<1x128xf32> to vector<32x128xf32>
    %49 = arith.addf %45, %48 : vector<32x128xf32>
    %c20_i32 = arith.constant 20 : i32
    %50 = arith.cmpi ne, %arg0, %c20_i32 : i32
    %51 = arith.extui %50 : i1 to i32
    %c0_i32_53 = arith.constant 0 : i32
    %52 = arith.cmpi ne, %51, %c0_i32_53 : i32
    scf.if %52 {
      %56 = vector.shape_cast %49 : vector<32x128xf32> to vector<2x16x128xf32>
      %c0_56 = arith.constant 0 : index
      %c3_57 = arith.constant 3 : index
      %c0_58 = arith.constant 0 : index
      %57 = vector.load %arg8[%c0_56, %c3_57, %c0_58] : memref<2x22x128xf32, #tpu.memory_space<vmem>>, vector<2x16x128xf32>
      tpu.vector_store %arg8[%c0_56, %c3_57, %c0_58], %56 {strides = array<i32>} : memref<2x22x128xf32, #tpu.memory_space<vmem>>, vector<2x16x128xf32>,
    } else {
    }
    %c20_i32_54 = arith.constant 20 : i32
    %53 = arith.cmpi eq, %arg0, %c20_i32_54 : i32
    %54 = arith.extui %53 : i1 to i32
    %c0_i32_55 = arith.constant 0 : i32
    %55 = arith.cmpi ne, %54, %c0_i32_55 : i32
    scf.if %55 {
      %cst_56 = arith.constant dense<0.000000e+00> : vector<128xf32>
      %56 = vector.multi_reduction <add>, %49, %cst_56 [0] : vector<32x128xf32> to vector<128xf32>
      %57 = vector.shape_cast %56 : vector<128xf32> to vector<1x128xf32>
      %c0_57 = arith.constant 0 : index
      %c0_58 = arith.constant 0 : index
      %58 = vector.load %arg6[%c0_57, %c0_58] : memref<128x128xf32, #tpu.memory_space<vmem>>, vector<128x128xf32>
      %cst_59 = arith.constant dense<0.000000e+00> : vector<1x128xf32>
      %59 = tpu.matmul %57, %58, %cst_59 {dimension_numbers = #tpu.dot_dimension_numbers<[1], [0], [0], [1], [0, 0, 1, 1], [], []>} : vector<1x128xf32>, vector<128x128xf32>, vector<1x128xf32> -> vector<1x128xf32>
      %cst_60 = arith.constant 0.001953125 : f32
      %60 = vector.broadcast %cst_60 : f32 to vector<1x128xf32>
      %61 = arith.mulf %59, %60 : vector<1x128xf32>
      %62 = vector.broadcast %61 : vector<1x128xf32> to vector<32x128xf32>
      %63 = arith.subf %49, %62 : vector<32x128xf32>
      %64 = arith.mulf %63, %63 : vector<32x128xf32>
      %cst_61 = arith.constant dense<0.000000e+00> : vector<128xf32>
      %65 = vector.multi_reduction <add>, %64, %cst_61 [0] : vector<32x128xf32> to vector<128xf32>
      %66 = vector.shape_cast %65 : vector<128xf32> to vector<1x128xf32>
      %c0_62 = arith.constant 0 : index
      %c0_63 = arith.constant 0 : index
      %67 = vector.load %arg6[%c0_62, %c0_63] : memref<128x128xf32, #tpu.memory_space<vmem>>, vector<128x128xf32>
      %cst_64 = arith.constant dense<0.000000e+00> : vector<1x128xf32>
      %68 = tpu.matmul %66, %67, %cst_64 {dimension_numbers = #tpu.dot_dimension_numbers<[1], [0], [0], [1], [0, 0, 1, 1], [], []>} : vector<1x128xf32>, vector<128x128xf32>, vector<1x128xf32> -> vector<1x128xf32>
      %cst_65 = arith.constant 0.001953125 : f32
      %69 = vector.broadcast %cst_65 : f32 to vector<1x128xf32>
      %70 = arith.mulf %68, %69 : vector<1x128xf32>
      %c0_66 = arith.constant 0 : index
      %c0_67 = arith.constant 0 : index
      %71 = vector.load %arg4[%c0_66, %c0_67] : memref<1x128xf32, #tpu.memory_space<vmem>>, vector<1x128xf32>
      %cst_68 = arith.constant 9.99999974E-6 : f32
      %72 = vector.broadcast %cst_68 : f32 to vector<1x128xf32>
      %73 = arith.addf %70, %72 : vector<1x128xf32>
      %74 = math.rsqrt %73 : vector<1x128xf32>
      %75 = arith.mulf %71, %74 : vector<1x128xf32>
      %76 = vector.broadcast %75 : vector<1x128xf32> to vector<32x128xf32>
      %77 = arith.mulf %63, %76 : vector<32x128xf32>
      %c0_69 = arith.constant 0 : index
      %c0_70 = arith.constant 0 : index
      %78 = vector.load %arg5[%c0_69, %c0_70] : memref<1x128xf32, #tpu.memory_space<vmem>>, vector<1x128xf32>
      %79 = vector.broadcast %78 : vector<1x128xf32> to vector<32x128xf32>
      %80 = arith.addf %77, %79 : vector<32x128xf32>
      %cst_71 = arith.constant 0.000000e+00 : f32
      %81 = vector.broadcast %cst_71 : f32 to vector<32x128xf32>
      %82 = arith.minimumf %80, %81 : vector<32x128xf32>
      %83 = math.exp %82 : vector<32x128xf32>
      %cst_72 = arith.constant 1.000000e+00 : f32
      %84 = vector.broadcast %cst_72 : f32 to vector<32x128xf32>
      %85 = arith.subf %83, %84 : vector<32x128xf32>
      %cst_73 = arith.constant 1.67326319 : f32
      %86 = vector.broadcast %cst_73 : f32 to vector<32x128xf32>
      %87 = arith.mulf %86, %85 : vector<32x128xf32>
      %cst_74 = arith.constant 0.000000e+00 : f32
      %88 = vector.broadcast %cst_74 : f32 to vector<32x128xf32>
      %89 = arith.cmpf ogt, %80, %88 : vector<32x128xf32>
      %90 = arith.select %89, %80, %87 : vector<32x128xi1>, vector<32x128xf32>
      %cst_75 = arith.constant 1.05070102 : f32
      %91 = vector.broadcast %cst_75 : f32 to vector<32x128xf32>
      %92 = arith.mulf %91, %90 : vector<32x128xf32>
      %c0_76 = arith.constant 0 : index
      %c0_77 = arith.constant 0 : index
      %93 = vector.load %arg7[%c0_76, %c0_77] : memref<32x128xf32, #tpu.memory_space<vmem>>, vector<32x128xf32>
      tpu.vector_store %arg7[%c0_76, %c0_77], %92 {strides = array<i32>} : memref<32x128xf32, #tpu.memory_space<vmem>>, vector<32x128xf32>,
    } else {
    }
    return
  }
  func.func @transform_0(%arg0: i32) -> (i32, i32, i32) {
    %c0_i32 = arith.constant 0 : i32
    %c0_i32_0 = arith.constant 0 : i32
    %c0_i32_1 = arith.constant 0 : i32
    %c0_i32_2 = arith.constant 0 : i32
    return %c0_i32, %c0_i32_0, %c0_i32_1 : i32, i32, i32
  }
  func.func @transform_1(%arg0: i32) -> (i32, i32, i32, i32) {
    %c0_i32 = arith.constant 0 : i32
    %c0_i32_0 = arith.constant 0 : i32
    %c0_i32_1 = arith.constant 0 : i32
    %c0_i32_2 = arith.constant 0 : i32
    return %arg0, %c0_i32, %c0_i32_0, %c0_i32_1 : i32, i32, i32, i32
  }
  func.func @transform_2(%arg0: i32) -> (i32, i32, i32) {
    %c0_i32 = arith.constant 0 : i32
    %c0_i32_0 = arith.constant 0 : i32
    %c0_i32_1 = arith.constant 0 : i32
    return %arg0, %c0_i32, %c0_i32_0 : i32, i32, i32
  }
  func.func @transform_3(%arg0: i32) -> (i32, i32) {
    %c0_i32 = arith.constant 0 : i32
    %c0_i32_0 = arith.constant 0 : i32
    %c0_i32_1 = arith.constant 0 : i32
    return %c0_i32, %c0_i32_0 : i32, i32
  }
  func.func @transform_4(%arg0: i32) -> (i32, i32) {
    %c0_i32 = arith.constant 0 : i32
    %c0_i32_0 = arith.constant 0 : i32
    %c0_i32_1 = arith.constant 0 : i32
    return %c0_i32, %c0_i32_0 : i32, i32
  }
  func.func @transform_5(%arg0: i32) -> (i32, i32) {
    %c0_i32 = arith.constant 0 : i32
    %c0_i32_0 = arith.constant 0 : i32
    %c0_i32_1 = arith.constant 0 : i32
    return %c0_i32, %c0_i32_0 : i32, i32
  }
  func.func @transform_6(%arg0: i32) -> (i32, i32) {
    %c0_i32 = arith.constant 0 : i32
    %c0_i32_0 = arith.constant 0 : i32
    %c0_i32_1 = arith.constant 0 : i32
    return %c0_i32, %c0_i32_0 : i32, i32
  }
}

</mosaic_0001>

<llo_original>
// kernel: cnn_feature_extraction_forward.7
$region0: #{cnn_feature_extraction_forward.7}
  #allocation0 [shape = 'u32[]', space=smem, size = 0x4, offset = 0x4, fixed_abs, tag = 'smem constant byte address 0x4 - core index']
  #allocation1 [shape = 'u32[144,128]{1,0:T(1,128)}', space=vmem, size = 0x12000, scoped, tag = 'internal scratch']
  #allocation2 [shape = 'f32[2,18,128]{2,1,0:T(8,128)}', space=vmem, size = 0x6000, scoped, tag = 'scratch operand']
  %s0 = inlined_call_operand.vmem [shape: f32[2,16,128], index: 0, kind: input, shape index: {}]
  %s1 = inlined_call_operand.hbm [shape: f32[1,3,128,128], index: 1, kind: input, shape index: {}]
  %s2 = inlined_call_operand.hbm [shape: f32[1,1,128], index: 2, kind: input, shape index: {}]
  %s3 = inlined_call_operand.hbm [shape: f32[1,128], index: 3, kind: input, shape index: {}]
  %s4 = inlined_call_operand.hbm [shape: f32[1,128], index: 4, kind: input, shape index: {}]
  %s5 = inlined_call_operand.vmem [shape: f32[128,128], index: 5, kind: input, shape index: {}]
  %s6 = inlined_call_operand.vmem [shape: f32[32,128], index: 6, kind: output, shape index: {}]
  %s7 = sld [smem:[#allocation0]]
  $region62: #{cnn_feature_extraction_forward.7} parent=0
    _
  %s9 = ssub.s32 1, %s7
  %s10 = scalar_select 0, %s9, %s7
  $region1: #{cnn_feature_extraction_forward.7} parent=0
    #allocation3 [shape = 'u8[196608]{0}', space=vmem, size = 0x30000, scoped, tag = 'input window, operand 1, single buffered']
    #allocation4 [shape = 's32[1]{0}', space=sflag, size = 0x4, scoped, tag = 'scoped memory for cnn_feature_extraction_forward.7']
    #allocation5 [shape = 'u8[512]{0}', space=vmem, size = 0x400, scoped, tag = 'input window, operand 2, single buffered']
    #allocation6 [shape = 's32[1]{0}', space=sflag, size = 0x4, scoped, tag = 'scoped memory for cnn_feature_extraction_forward.7']
    #allocation7 [shape = 'u8[512]{0}', space=vmem, size = 0x400, scoped, tag = 'input window, operand 3, single buffered']
    #allocation8 [shape = 'u8[512]{0}', space=vmem, size = 0x400, scoped, tag = 'input window, operand 4, single buffered']
    #allocation9 [shape = 's32[1]{0}', space=sflag, size = 0x4, scoped, tag = 'scoped memory for cnn_feature_extraction_forward.7']
    %11 = vsyncpa [#allocation4], 0
    %12 = vsyncpa [#allocation6], 0
    %13 = vsyncpa [#allocation9], 0
    // Predicated region
    $region2: #{cnn_feature_extraction_forward.7} parent=1 // pred_check
      _
    $region3: #{cnn_feature_extraction_forward.7} parent=1 // pred_check_branch
      %15 = sbr.rel (0) target = $region5
    $region4: #{cnn_feature_extraction_forward.7} parent=1 // pred_region
      _
    $region5: #{cnn_feature_extraction_forward.7} parent=1 // pred_fallthru
      _
    // Predicated region
    $region6: #{cnn_feature_extraction_forward.7} parent=1 // pred_check
      _
    $region7: #{cnn_feature_extraction_forward.7} parent=1 // pred_check_branch
      %17 = sbr.rel (0) target = $region9
    $region8: #{cnn_feature_extraction_forward.7} parent=1 // pred_region
      %s19 = ssub.s32 6144, 6144
      %20 = vsyncadd [#allocation4], %s19
      %s21 = sshll.u32 [#allocation3], 4
      %s22 = int_to_ptr.vmem [resolvable:$true] %s21
      %27 = dma.hbm_to_vmem [thread:$0]  %s1, 6144, %s22, [#allocation4], 128, 128, 8
    $region9: #{cnn_feature_extraction_forward.7} parent=1 // pred_fallthru
      _
    // Predicated region
    $region10: #{cnn_feature_extraction_forward.7} parent=1 // pred_check
      _
    $region11: #{cnn_feature_extraction_forward.7} parent=1 // pred_check_branch
      %29 = sbr.rel (0) target = $region13
    $region12: #{cnn_feature_extraction_forward.7} parent=1 // pred_region
      %s31 = ssub.s32 16, 16
      %32 = vsyncadd [#allocation6], %s31
      %s34 = sshll.u32 [#allocation5], 4
      %s35 = int_to_ptr.vmem [resolvable:$true] %s34
      %37 = dma.hbm_to_vmem [thread:$0]  %s2, 16, %s35, [#allocation6]
    $region13: #{cnn_feature_extraction_forward.7} parent=1 // pred_fallthru
      _
    // Predicated region
    $region14: #{cnn_feature_extraction_forward.7} parent=1 // pred_check
      _
    $region15: #{cnn_feature_extraction_forward.7} parent=1 // pred_check_branch
      %39 = sbr.rel (0) target = $region17
    $region16: #{cnn_feature_extraction_forward.7} parent=1 // pred_region
      %s41 = ssub.s32 16, 16
      %42 = vsyncadd [#allocation6], %s41
      %s44 = sshll.u32 [#allocation7], 4
      %s45 = int_to_ptr.vmem [resolvable:$true] %s44
      %47 = dma.hbm_to_vmem [thread:$0]  %s3, 16, %s45, [#allocation6]
    $region17: #{cnn_feature_extraction_forward.7} parent=1 // pred_fallthru
      _
    // Predicated region
    $region18: #{cnn_feature_extraction_forward.7} parent=1 // pred_check
      _
    $region19: #{cnn_feature_extraction_forward.7} parent=1 // pred_check_branch
      %49 = sbr.rel (0) target = $region21
    $region20: #{cnn_feature_extraction_forward.7} parent=1 // pred_region
      %s51 = ssub.s32 16, 16
      %52 = vsyncadd [#allocation9], %s51
      %s54 = sshll.u32 [#allocation8], 4
      %s55 = int_to_ptr.vmem [resolvable:$true] %s54
      %57 = dma.hbm_to_vmem [thread:$0]  %s4, 16, %s55, [#allocation9]
    $region21: #{cnn_feature_extraction_forward.7} parent=1 // pred_fallthru
      _
    // Predicated region
    $region22: #{cnn_feature_extraction_forward.7} parent=1 // pred_check
      _
    $region23: #{cnn_feature_extraction_forward.7} parent=1 // pred_check_branch
      %59 = sbr.rel (0) target = $region25
    $region24: #{cnn_feature_extraction_forward.7} parent=1 // pred_region
      _
    $region25: #{cnn_feature_extraction_forward.7} parent=1 // pred_fallthru
      _
    // Predicated region
    $region26: #{cnn_feature_extraction_forward.7} parent=1 // pred_check
      _
    $region27: #{cnn_feature_extraction_forward.7} parent=1 // pred_check_branch
      %61 = sbr.rel (0) target = $region29
    $region28: #{cnn_feature_extraction_forward.7} parent=1 // pred_region
      %62 = dma.done [#allocation4], 6144
    $region29: #{cnn_feature_extraction_forward.7} parent=1 // pred_fallthru
      _
    // Predicated region
    $region30: #{cnn_feature_extraction_forward.7} parent=1 // pred_check
      _
    $region31: #{cnn_feature_extraction_forward.7} parent=1 // pred_check_branch
      %64 = sbr.rel (0) target = $region33
    $region32: #{cnn_feature_extraction_forward.7} parent=1 // pred_region
      %65 = dma.done [#allocation6], 16
    $region33: #{cnn_feature_extraction_forward.7} parent=1 // pred_fallthru
      _
    // Predicated region
    $region34: #{cnn_feature_extraction_forward.7} parent=1 // pred_check
      _
    $region35: #{cnn_feature_extraction_forward.7} parent=1 // pred_check_branch
      %67 = sbr.rel (0) target = $region37
    $region36: #{cnn_feature_extraction_forward.7} parent=1 // pred_region
      %68 = dma.done [#allocation6], 16
    $region37: #{cnn_feature_extraction_forward.7} parent=1 // pred_fallthru
      _
    // Predicated region
    $region38: #{cnn_feature_extraction_forward.7} parent=1 // pred_check
      _
    $region39: #{cnn_feature_extraction_forward.7} parent=1 // pred_check_branch
      %70 = sbr.rel (0) target = $region41
    $region40: #{cnn_feature_extraction_forward.7} parent=1 // pred_region
      %71 = dma.done [#allocation9], 16
    $region41: #{cnn_feature_extraction_forward.7} parent=1 // pred_fallthru
      _
    %p72 = scmp.eq.s32.totalorder 0, 0
    // Predicated region
    $region42: #{cnn_feature_extraction_forward.7} parent=1 // pred_check
      %p73 = pneg %p72
    $region43: #{cnn_feature_extraction_forward.7} parent=1 // pred_check_branch
      %75 = sbr.rel (%p73) target = $region45
    $region44: #{cnn_feature_extraction_forward.7} parent=1 // pred_region
      %76 = vst [vmem:[#allocation2] sm:$0xff] 0.0
      %77 = vst [vmem:[#allocation2 + $0x8] sm:$0xff] 0.0
      %78 = vst [vmem:[#allocation2 + $0x10] sm:$0x3] 0.0
      %79 = vst [vmem:[#allocation2 + $0x18] sm:$0xff] 0.0
      %80 = vst [vmem:[#allocation2 + $0x20] sm:$0xff] 0.0
      %81 = vst [vmem:[#allocation2 + $0x28] sm:$0x3] 0.0
      %v82 = vld [vmem:[%s0] sm:$0xff]
      %v83 = vld [vmem:[%s0 + $0x8] sm:$0xff]
      %v84 = vld [vmem:[%s0 + $0x10] sm:$0xff]
      %v85 = vld [vmem:[%s0 + $0x18] sm:$0xff]
      %86 = vst [vmem:[#allocation2 + $0x1] sm:$0xff] %v82
      %87 = vst [vmem:[#allocation2 + $0x9] sm:$0xff] %v83
      %88 = vst [vmem:[#allocation2 + $0x19] sm:$0xff] %v84
      %89 = vst [vmem:[#allocation2 + $0x21] sm:$0xff] %v85
    $region45: #{cnn_feature_extraction_forward.7} parent=1 // pred_fallthru
      _
    %v90 = vld [vmem:[#allocation2] sm:$0xff]
    %v91 = vld [vmem:[#allocation2 + $0x8] sm:$0xff]
    %v92 = vld [vmem:[#allocation2 + $0x18] sm:$0xff]
    %v93 = vld [vmem:[#allocation2 + $0x20] sm:$0xff]
    %v94 = vld [vmem:[#allocation3] sm:$0xff]
    %v95 = vld [vmem:[#allocation3 + $0x8] sm:$0xff]
    %v96 = vld [vmem:[#allocation3 + $0x10] sm:$0xff]
    %v97 = vld [vmem:[#allocation3 + $0x18] sm:$0xff]
    %v98 = vld [vmem:[#allocation3 + $0x20] sm:$0xff]
    %v99 = vld [vmem:[#allocation3 + $0x28] sm:$0xff]
    %v100 = vld [vmem:[#allocation3 + $0x30] sm:$0xff]
    %v101 = vld [vmem:[#allocation3 + $0x38] sm:$0xff]
    %v102 = vld [vmem:[#allocation3 + $0x40] sm:$0xff]
    %v103 = vld [vmem:[#allocation3 + $0x48] sm:$0xff]
    %v104 = vld [vmem:[#allocation3 + $0x50] sm:$0xff]
    %v105 = vld [vmem:[#allocation3 + $0x58] sm:$0xff]
    %v106 = vld [vmem:[#allocation3 + $0x60] sm:$0xff]
    %v107 = vld [vmem:[#allocation3 + $0x68] sm:$0xff]
    %v108 = vld [vmem:[#allocation3 + $0x70] sm:$0xff]
    %v109 = vld [vmem:[#allocation3 + $0x78] sm:$0xff]
    %v110 = vld [vmem:[#allocation2 + $0x1] sm:$0xff]
    %v111 = vld [vmem:[#allocation2 + $0x9] sm:$0xff]
    %v112 = vld [vmem:[#allocation2 + $0x19] sm:$0xff]
    %v113 = vld [vmem:[#allocation2 + $0x21] sm:$0xff]
    %s114 = scalar_lea.vmem [#allocation3], 128
    %v115 = vld [vmem:[%s114] sm:$0xff]
    %v116 = vld [vmem:[%s114 + $0x8] sm:$0xff]
    %v117 = vld [vmem:[%s114 + $0x10] sm:$0xff]
    %v118 = vld [vmem:[%s114 + $0x18] sm:$0xff]
    %v119 = vld [vmem:[%s114 + $0x20] sm:$0xff]
    %v120 = vld [vmem:[%s114 + $0x28] sm:$0xff]
    %v121 = vld [vmem:[%s114 + $0x30] sm:$0xff]
    %v122 = vld [vmem:[%s114 + $0x38] sm:$0xff]
    %v123 = vld [vmem:[%s114 + $0x40] sm:$0xff]
    %v124 = vld [vmem:[%s114 + $0x48] sm:$0xff]
    %v125 = vld [vmem:[%s114 + $0x50] sm:$0xff]
    %v126 = vld [vmem:[%s114 + $0x58] sm:$0xff]
    %v127 = vld [vmem:[%s114 + $0x60] sm:$0xff]
    %v128 = vld [vmem:[%s114 + $0x68] sm:$0xff]
    %v129 = vld [vmem:[%s114 + $0x70] sm:$0xff]
    %v130 = vld [vmem:[%s114 + $0x78] sm:$0xff]
    %131 = vmatprep.subr.mxu0 0.0
    %132 = vmatpush1.msra.mxu0 %v115
    %133 = vmatprep.subr.mxu0 0.0
    %134 = vmatpush1.msra.mxu0 %v116
    %135 = vmatprep.subr.mxu0 0.0
    %136 = vmatpush1.msra.mxu0 %v117
    %137 = vmatprep.subr.mxu0 0.0
    %138 = vmatpush1.msra.mxu0 %v118
    %139 = vmatprep.subr.mxu0 0.0
    %140 = vmatpush1.msra.mxu0 %v119
    %141 = vmatprep.subr.mxu0 0.0
    %142 = vmatpush1.msra.mxu0 %v120
    %143 = vmatprep.subr.mxu0 0.0
    %144 = vmatpush1.msra.mxu0 %v121
    %145 = vmatprep.subr.mxu0 0.0
    %146 = vmatpush1.msra.mxu0 %v122
    %147 = vmatprep.subr.mxu0 0.0
    %148 = vmatpush1.msra.mxu0 %v123
    %149 = vmatprep.subr.mxu0 0.0
    %150 = vmatpush1.msra.mxu0 %v124
    %151 = vmatprep.subr.mxu0 0.0
    %152 = vmatpush1.msra.mxu0 %v125
    %153 = vmatprep.subr.mxu0 0.0
    %154 = vmatpush1.msra.mxu0 %v126
    %155 = vmatprep.subr.mxu0 0.0
    %156 = vmatpush1.msra.mxu0 %v127
    %157 = vmatprep.subr.mxu0 0.0
    %158 = vmatpush1.msra.mxu0 %v128
    %159 = vmatprep.subr.mxu0 0.0
    %160 = vmatpush1.msra.mxu0 %v129
    %161 = vmatprep.subr.mxu0 0.0
    %162 = vmatpush1.msra.mxu0 %v130
    %163 = vmatprep.subr.mxu0 0.0
    %164 = vmatpush1.msra.mxu0 0.0
    %165 = vmatprep.subr.mxu0 0.0
    %166 = vmatpush1.msra.mxu0 0.0
    %167 = vmatprep.subr.mxu0 0.0
    %168 = vmatpush1.msra.mxu0 0.0
    %169 = vmatprep.subr.mxu0 0.0
    %170 = vmatpush1.msra.mxu0 0.0
    %171 = vmatprep.subr.mxu0 0.0
    %172 = vmatpush1.msra.mxu0 0.0
    %173 = vmatprep.subr.mxu0 0.0
    %174 = vmatpush1.msra.mxu0 0.0
    %175 = vmatprep.subr.mxu0 0.0
    %176 = vmatpush1.msra.mxu0 0.0
    %177 = vmatprep.subr.mxu0 0.0
    %178 = vmatpush1.msra.mxu0 0.0
    %179 = vmatprep.subr.mxu0 0.0
    %180 = vmatpush1.msra.mxu0 0.0
    %181 = vmatprep.subr.mxu0 0.0
    %182 = vmatpush1.msra.mxu0 0.0
    %183 = vmatprep.subr.mxu0 0.0
    %184 = vmatpush1.msra.mxu0 0.0
    %185 = vmatprep.subr.mxu0 0.0
    %186 = vmatpush1.msra.mxu0 0.0
    %187 = vmatprep.subr.mxu0 0.0
    %188 = vmatpush1.msra.mxu0 0.0
    %189 = vmatprep.subr.mxu0 0.0
    %190 = vmatpush1.msra.mxu0 0.0
    %191 = vmatprep.subr.mxu0 0.0
    %192 = vmatpush1.msra.mxu0 0.0
    %193 = vmatprep.subr.mxu0 0.0
    %194 = vmatpush1.msra.mxu0 0.0
    %195 = vmatprep.mubr.f32.mxu0 0.0
    %196 = vmatmul.mubr.f32.gmra.mrb[0].mxu0 %v110
    %v197 = vpop.f32.mrb[0].mxu0
    %v198 = vadd.f32 0.0, %v197
    %v199 = vpop.f32.mrb[0].mxu0
    %200 = vmatprep.mubr.f32.mxu0 0.0
    %201 = vmatmul.mubr.f32.gmra.mrb[0].mxu0 %v111
    %v202 = vpop.f32.mrb[0].mxu0
    %v203 = vadd.f32 0.0, %v202
    %v204 = vpop.f32.mrb[0].mxu0
    %205 = vmatprep.mubr.f32.mxu0 0.0
    %206 = vmatmul.mubr.f32.gmra.mrb[0].mxu0 %v112
    %v207 = vpop.f32.mrb[0].mxu0
    %v208 = vadd.f32 0.0, %v207
    %v209 = vpop.f32.mrb[0].mxu0
    %210 = vmatprep.mubr.f32.mxu0 0.0
    %211 = vmatmul.mubr.f32.gmra.mrb[0].mxu0 %v113
    %v212 = vpop.f32.mrb[0].mxu0
    %v213 = vadd.f32 0.0, %v212
    %v214 = vpop.f32.mrb[0].mxu0
    %215 = vdwg.mxu0
    %216 = vmatprep.subr.mxu0 0.0
    %217 = vmatpush1.msra.mxu0 %v94
    %218 = vmatprep.subr.mxu0 0.0
    %219 = vmatpush1.msra.mxu0 %v95
    %220 = vmatprep.subr.mxu0 0.0
    %221 = vmatpush1.msra.mxu0 %v96
    %222 = vmatprep.subr.mxu0 0.0
    %223 = vmatpush1.msra.mxu0 %v97
    %224 = vmatprep.subr.mxu0 0.0
    %225 = vmatpush1.msra.mxu0 %v98
    %226 = vmatprep.subr.mxu0 0.0
    %227 = vmatpush1.msra.mxu0 %v99
    %228 = vmatprep.subr.mxu0 0.0
    %229 = vmatpush1.msra.mxu0 %v100
    %230 = vmatprep.subr.mxu0 0.0
    %231 = vmatpush1.msra.mxu0 %v101
    %232 = vmatprep.subr.mxu0 0.0
    %233 = vmatpush1.msra.mxu0 %v102
    %234 = vmatprep.subr.mxu0 0.0
    %235 = vmatpush1.msra.mxu0 %v103
    %236 = vmatprep.subr.mxu0 0.0
    %237 = vmatpush1.msra.mxu0 %v104
    %238 = vmatprep.subr.mxu0 0.0
    %239 = vmatpush1.msra.mxu0 %v105
    %240 = vmatprep.subr.mxu0 0.0
    %241 = vmatpush1.msra.mxu0 %v106
    %242 = vmatprep.subr.mxu0 0.0
    %243 = vmatpush1.msra.mxu0 %v107
    %244 = vmatprep.subr.mxu0 0.0
    %245 = vmatpush1.msra.mxu0 %v108
    %246 = vmatprep.subr.mxu0 0.0
    %247 = vmatpush1.msra.mxu0 %v109
    %248 = vmatprep.subr.mxu0 0.0
    %249 = vmatpush1.msra.mxu0 0.0
    %250 = vmatprep.subr.mxu0 0.0
    %251 = vmatpush1.msra.mxu0 0.0
    %252 = vmatprep.subr.mxu0 0.0
    %253 = vmatpush1.msra.mxu0 0.0
    %254 = vmatprep.subr.mxu0 0.0
    %255 = vmatpush1.msra.mxu0 0.0
    %256 = vmatprep.subr.mxu0 0.0
    %257 = vmatpush1.msra.mxu0 0.0
    %258 = vmatprep.subr.mxu0 0.0
    %259 = vmatpush1.msra.mxu0 0.0
    %260 = vmatprep.subr.mxu0 0.0
    %261 = vmatpush1.msra.mxu0 0.0
    %262 = vmatprep.subr.mxu0 0.0
    %263 = vmatpush1.msra.mxu0 0.0
    %264 = vmatprep.subr.mxu0 0.0
    %265 = vmatpush1.msra.mxu0 0.0
    %266 = vmatprep.subr.mxu0 0.0
    %267 = vmatpush1.msra.mxu0 0.0
    %268 = vmatprep.subr.mxu0 0.0
    %269 = vmatpush1.msra.mxu0 0.0
    %270 = vmatprep.subr.mxu0 0.0
    %271 = vmatpush1.msra.mxu0 0.0
    %272 = vmatprep.subr.mxu0 0.0
    %273 = vmatpush1.msra.mxu0 0.0
    %274 = vmatprep.subr.mxu0 0.0
    %275 = vmatpush1.msra.mxu0 0.0
    %276 = vmatprep.subr.mxu0 0.0
    %277 = vmatpush1.msra.mxu0 0.0
    %278 = vmatprep.subr.mxu0 0.0
    %279 = vmatpush1.msra.mxu0 0.0
    %280 = vmatprep.mubr.f32.mxu0 0.0
    %281 = vmatmul.mubr.f32.gmra.mrb[0].mxu0 %v90
    %v282 = vpop.f32.mrb[0].mxu0
    %v283 = vadd.f32 %v198, %v282
    %v284 = vpop.f32.mrb[0].mxu0
    %285 = vmatprep.mubr.f32.mxu0 0.0
    %286 = vmatmul.mubr.f32.gmra.mrb[0].mxu0 %v91
    %v287 = vpop.f32.mrb[0].mxu0
    %v288 = vadd.f32 %v203, %v287
    %v289 = vpop.f32.mrb[0].mxu0
    %290 = vmatprep.mubr.f32.mxu0 0.0
    %291 = vmatmul.mubr.f32.gmra.mrb[0].mxu0 %v92
    %v292 = vpop.f32.mrb[0].mxu0
    %v293 = vadd.f32 %v208, %v292
    %v294 = vpop.f32.mrb[0].mxu0
    %295 = vmatprep.mubr.f32.mxu0 0.0
    %296 = vmatmul.mubr.f32.gmra.mrb[0].mxu0 %v93
    %v297 = vpop.f32.mrb[0].mxu0
    %v298 = vadd.f32 %v213, %v297
    %v299 = vpop.f32.mrb[0].mxu0
    %300 = vdwg.mxu0
    %v301 = vld [vmem:[#allocation2 + $0x2] sm:$0xff]
    %v302 = vld [vmem:[#allocation2 + $0xa] sm:$0xff]
    %v303 = vld [vmem:[#allocation2 + $0x1a] sm:$0xff]
    %v304 = vld [vmem:[#allocation2 + $0x22] sm:$0xff]
    %s305 = scalar_lea.vmem [#allocation3], 256
    %v306 = vld [vmem:[%s305] sm:$0xff]
    %v307 = vld [vmem:[%s305 + $0x8] sm:$0xff]
    %v308 = vld [vmem:[%s305 + $0x10] sm:$0xff]
    %v309 = vld [vmem:[%s305 + $0x18] sm:$0xff]
    %v310 = vld [vmem:[%s305 + $0x20] sm:$0xff]
    %v311 = vld [vmem:[%s305 + $0x28] sm:$0xff]
    %v312 = vld [vmem:[%s305 + $0x30] sm:$0xff]
    %v313 = vld [vmem:[%s305 + $0x38] sm:$0xff]
    %v314 = vld [vmem:[%s305 + $0x40] sm:$0xff]
    %v315 = vld [vmem:[%s305 + $0x48] sm:$0xff]
    %v316 = vld [vmem:[%s305 + $0x50] sm:$0xff]
    %v317 = vld [vmem:[%s305 + $0x58] sm:$0xff]
    %v318 = vld [vmem:[%s305 + $0x60] sm:$0xff]
    %v319 = vld [vmem:[%s305 + $0x68] sm:$0xff]
    %v320 = vld [vmem:[%s305 + $0x70] sm:$0xff]
    %v321 = vld [vmem:[%s305 + $0x78] sm:$0xff]
    %322 = vmatprep.subr.mxu0 0.0
    %323 = vmatpush1.msra.mxu0 %v306
    %324 = vmatprep.subr.mxu0 0.0
    %325 = vmatpush1.msra.mxu0 %v307
    %326 = vmatprep.subr.mxu0 0.0
    %327 = vmatpush1.msra.mxu0 %v308
    %328 = vmatprep.subr.mxu0 0.0
    %329 = vmatpush1.msra.mxu0 %v309
    %330 = vmatprep.subr.mxu0 0.0
    %331 = vmatpush1.msra.mxu0 %v310
    %332 = vmatprep.subr.mxu0 0.0
    %333 = vmatpush1.msra.mxu0 %v311
    %334 = vmatprep.subr.mxu0 0.0
    %335 = vmatpush1.msra.mxu0 %v312
    %336 = vmatprep.subr.mxu0 0.0
    %337 = vmatpush1.msra.mxu0 %v313
    %338 = vmatprep.subr.mxu0 0.0
    %339 = vmatpush1.msra.mxu0 %v314
    %340 = vmatprep.subr.mxu0 0.0
    %341 = vmatpush1.msra.mxu0 %v315
    %342 = vmatprep.subr.mxu0 0.0
    %343 = vmatpush1.msra.mxu0 %v316
    %344 = vmatprep.subr.mxu0 0.0
    %345 = vmatpush1.msra.mxu0 %v317
    %346 = vmatprep.subr.mxu0 0.0
    %347 = vmatpush1.msra.mxu0 %v318
    %348 = vmatprep.subr.mxu0 0.0
    %349 = vmatpush1.msra.mxu0 %v319
    %350 = vmatprep.subr.mxu0 0.0
    %351 = vmatpush1.msra.mxu0 %v320
    %352 = vmatprep.subr.mxu0 0.0
    %353 = vmatpush1.msra.mxu0 %v321
    %354 = vmatprep.subr.mxu0 0.0
    %355 = vmatpush1.msra.mxu0 0.0
    %356 = vmatprep.subr.mxu0 0.0
    %357 = vmatpush1.msra.mxu0 0.0
    %358 = vmatprep.subr.mxu0 0.0
    %359 = vmatpush1.msra.mxu0 0.0
    %360 = vmatprep.subr.mxu0 0.0
    %361 = vmatpush1.msra.mxu0 0.0
    %362 = vmatprep.subr.mxu0 0.0
    %363 = vmatpush1.msra.mxu0 0.0
    %364 = vmatprep.subr.mxu0 0.0
    %365 = vmatpush1.msra.mxu0 0.0
    %366 = vmatprep.subr.mxu0 0.0
    %367 = vmatpush1.msra.mxu0 0.0
    %368 = vmatprep.subr.mxu0 0.0
    %369 = vmatpush1.msra.mxu0 0.0
    %370 = vmatprep.subr.mxu0 0.0
    %371 = vmatpush1.msra.mxu0 0.0
    %372 = vmatprep.subr.mxu0 0.0
    %373 = vmatpush1.msra.mxu0 0.0
    %374 = vmatprep.subr.mxu0 0.0
    %375 = vmatpush1.msra.mxu0 0.0
    %376 = vmatprep.subr.mxu0 0.0
    %377 = vmatpush1.msra.mxu0 0.0
    %378 = vmatprep.subr.mxu0 0.0
    %379 = vmatpush1.msra.mxu0 0.0
    %380 = vmatprep.subr.mxu0 0.0
    %381 = vmatpush1.msra.mxu0 0.0
    %382 = vmatprep.subr.mxu0 0.0
    %383 = vmatpush1.msra.mxu0 0.0
    %384 = vmatprep.subr.mxu0 0.0
    %385 = vmatpush1.msra.mxu0 0.0
    %386 = vmatprep.mubr.f32.mxu0 0.0
    %387 = vmatmul.mubr.f32.gmra.mrb[0].mxu0 %v301
    %v388 = vpop.f32.mrb[0].mxu0
    %v389 = vadd.f32 0.0, %v388
    %v390 = vpop.f32.mrb[0].mxu0
    %391 = vmatprep.mubr.f32.mxu0 0.0
    %392 = vmatmul.mubr.f32.gmra.mrb[0].mxu0 %v302
    %v393 = vpop.f32.mrb[0].mxu0
    %v394 = vadd.f32 0.0, %v393
    %v395 = vpop.f32.mrb[0].mxu0
    %396 = vmatprep.mubr.f32.mxu0 0.0
    %397 = vmatmul.mubr.f32.gmra.mrb[0].mxu0 %v303
    %v398 = vpop.f32.mrb[0].mxu0
    %v399 = vadd.f32 0.0, %v398
    %v400 = vpop.f32.mrb[0].mxu0
    %401 = vmatprep.mubr.f32.mxu0 0.0
    %402 = vmatmul.mubr.f32.gmra.mrb[0].mxu0 %v304
    %v403 = vpop.f32.mrb[0].mxu0
    %v404 = vadd.f32 0.0, %v403
    %v405 = vpop.f32.mrb[0].mxu0
    %406 = vdwg.mxu0
    %v407 = vadd.f32 %v283, %v389
    %v408 = vadd.f32 %v288, %v394
    %v409 = vadd.f32 %v293, %v399
    %v410 = vadd.f32 %v298, %v404
    %v411 = vld [vmem:[#allocation5] sm:$0x1]
    %v413 = vlaneseq
    %v414 = vshrl.u32 %v413, 7
    %v415 = vsub.s32 0, %v414
    %v416 = vrot.slane %v411, %v415
    %v418 = vadd.f32 %v407, %v416
    %v419 = vadd.f32 %v408, %v416
    %v420 = vadd.f32 %v409, %v416
    %v421 = vadd.f32 %v410, %v416
    %p422 = scmp.ne.s32.totalorder 0, 0
    // Predicated region
    $region46: #{cnn_feature_extraction_forward.7} parent=1 // pred_check
      %p423 = pneg %p422
    $region47: #{cnn_feature_extraction_forward.7} parent=1 // pred_check_branch
      %425 = sbr.rel (%p423) target = $region49
    $region48: #{cnn_feature_extraction_forward.7} parent=1 // pred_region
      %426 = vst [vmem:[#allocation2 + $0x1] sm:$0xff] %v418
      %427 = vst [vmem:[#allocation2 + $0x9] sm:$0xff] %v419
      %428 = vst [vmem:[#allocation2 + $0x19] sm:$0xff] %v420
      %429 = vst [vmem:[#allocation2 + $0x21] sm:$0xff] %v421
    $region49: #{cnn_feature_extraction_forward.7} parent=1 // pred_fallthru
      _
    // Predicated region
    $region50: #{cnn_feature_extraction_forward.7} parent=1 // pred_check
      %p430 = pneg %p72
    $region51: #{cnn_feature_extraction_forward.7} parent=1 // pred_check_branch
      %432 = sbr.rel (%p430) target = $region53
    $region52: #{cnn_feature_extraction_forward.7} parent=1 // pred_region
      %v433 = vadd.f32 %v418, %v419
      %v434 = vadd.f32 %v433, %v420
      %v435 = vadd.f32 %v434, %v421
      %v436 = vrot.slane %v435, 4
      %v437 = vadd.f32 %v435, %v436
      %v438 = vrot.slane %v437, 2
      %v439 = vadd.f32 %v437, %v438
      %v440 = vrot.slane %v439, 1
      %v441 = vadd.f32 %v439, %v440
      %v442 = vld [vmem:[%s5] sm:$0xff]
      %v443 = vld [vmem:[%s5 + $0x8] sm:$0xff]
      %v444 = vld [vmem:[%s5 + $0x10] sm:$0xff]
      %v445 = vld [vmem:[%s5 + $0x18] sm:$0xff]
      %v446 = vld [vmem:[%s5 + $0x20] sm:$0xff]
      %v447 = vld [vmem:[%s5 + $0x28] sm:$0xff]
      %v448 = vld [vmem:[%s5 + $0x30] sm:$0xff]
      %v449 = vld [vmem:[%s5 + $0x38] sm:$0xff]
      %v450 = vld [vmem:[%s5 + $0x40] sm:$0xff]
      %v451 = vld [vmem:[%s5 + $0x48] sm:$0xff]
      %v452 = vld [vmem:[%s5 + $0x50] sm:$0xff]
      %v453 = vld [vmem:[%s5 + $0x58] sm:$0xff]
      %v454 = vld [vmem:[%s5 + $0x60] sm:$0xff]
      %v455 = vld [vmem:[%s5 + $0x68] sm:$0xff]
      %v456 = vld [vmem:[%s5 + $0x70] sm:$0xff]
      %v457 = vld [vmem:[%s5 + $0x78] sm:$0xff]
      %458 = vmatprep.subr.mxu0 0.0
      %459 = vmatpush1.msra.mxu0 %v442
      %460 = vmatprep.subr.mxu0 0.0
      %461 = vmatpush1.msra.mxu0 %v443
      %462 = vmatprep.subr.mxu0 0.0
      %463 = vmatpush1.msra.mxu0 %v444
      %464 = vmatprep.subr.mxu0 0.0
      %465 = vmatpush1.msra.mxu0 %v445
      %466 = vmatprep.subr.mxu0 0.0
      %467 = vmatpush1.msra.mxu0 %v446
      %468 = vmatprep.subr.mxu0 0.0
      %469 = vmatpush1.msra.mxu0 %v447
      %470 = vmatprep.subr.mxu0 0.0
      %471 = vmatpush1.msra.mxu0 %v448
      %472 = vmatprep.subr.mxu0 0.0
      %473 = vmatpush1.msra.mxu0 %v449
      %474 = vmatprep.subr.mxu0 0.0
      %475 = vmatpush1.msra.mxu0 %v450
      %476 = vmatprep.subr.mxu0 0.0
      %477 = vmatpush1.msra.mxu0 %v451
      %478 = vmatprep.subr.mxu0 0.0
      %479 = vmatpush1.msra.mxu0 %v452
      %480 = vmatprep.subr.mxu0 0.0
      %481 = vmatpush1.msra.mxu0 %v453
      %482 = vmatprep.subr.mxu0 0.0
      %483 = vmatpush1.msra.mxu0 %v454
      %484 = vmatprep.subr.mxu0 0.0
      %485 = vmatpush1.msra.mxu0 %v455
      %486 = vmatprep.subr.mxu0 0.0
      %487 = vmatpush1.msra.mxu0 %v456
      %488 = vmatprep.subr.mxu0 0.0
      %489 = vmatpush1.msra.mxu0 %v457
      %490 = vmatprep.subr.mxu0 0.0
      %491 = vmatpush1.msra.mxu0 0.0
      %492 = vmatprep.subr.mxu0 0.0
      %493 = vmatpush1.msra.mxu0 0.0
      %494 = vmatprep.subr.mxu0 0.0
      %495 = vmatpush1.msra.mxu0 0.0
      %496 = vmatprep.subr.mxu0 0.0
      %497 = vmatpush1.msra.mxu0 0.0
      %498 = vmatprep.subr.mxu0 0.0
      %499 = vmatpush1.msra.mxu0 0.0
      %500 = vmatprep.subr.mxu0 0.0
      %501 = vmatpush1.msra.mxu0 0.0
      %502 = vmatprep.subr.mxu0 0.0
      %503 = vmatpush1.msra.mxu0 0.0
      %504 = vmatprep.subr.mxu0 0.0
      %505 = vmatpush1.msra.mxu0 0.0
      %506 = vmatprep.subr.mxu0 0.0
      %507 = vmatpush1.msra.mxu0 0.0
      %508 = vmatprep.subr.mxu0 0.0
      %509 = vmatpush1.msra.mxu0 0.0
      %510 = vmatprep.subr.mxu0 0.0
      %511 = vmatpush1.msra.mxu0 0.0
      %512 = vmatprep.subr.mxu0 0.0
      %513 = vmatpush1.msra.mxu0 0.0
      %514 = vmatprep.subr.mxu0 0.0
      %515 = vmatpush1.msra.mxu0 0.0
      %516 = vmatprep.subr.mxu0 0.0
      %517 = vmatpush1.msra.mxu0 0.0
      %518 = vmatprep.subr.mxu0 0.0
      %519 = vmatpush1.msra.mxu0 0.0
      %520 = vmatprep.subr.mxu0 0.0
      %521 = vmatpush1.msra.mxu0 0.0
      %522 = vmatprep.mubr.f32.mxu0 0.0
      %523 = vmatmul.mubr.f32.gmra.mrb[0].mxu0 %v441
      %v524 = vpop.f32.mrb[0].mxu0
      %v525 = vadd.f32 0.0, %v524
      %v526 = vpop.f32.mrb[0].mxu0
      %527 = vdwg.mxu0
      %v528 = vmul.f32 %v525, 0.001953125
      %v529 = vlaneseq
      %v530 = vshrl.u32 %v529, 7
      %v531 = vsub.s32 0, %v530
      %v532 = vrot.slane %v528, %v531
      %v533 = vsub.f32 %v418, %v532
      %v534 = vsub.f32 %v419, %v532
      %v535 = vsub.f32 %v420, %v532
      %v536 = vsub.f32 %v421, %v532
      %v537 = vmul.f32 %v533, %v533
      %v538 = vmul.f32 %v534, %v534
      %v539 = vmul.f32 %v535, %v535
      %v540 = vmul.f32 %v536, %v536
      %v541 = vadd.f32 %v537, %v538
      %v542 = vadd.f32 %v541, %v539
      %v543 = vadd.f32 %v542, %v540
      %v544 = vrot.slane %v543, 4
      %v545 = vadd.f32 %v543, %v544
      %v546 = vrot.slane %v545, 2
      %v547 = vadd.f32 %v545, %v546
      %v548 = vrot.slane %v547, 1
      %v549 = vadd.f32 %v547, %v548
      %550 = vmatprep.subr.mxu0 0.0
      %551 = vmatpush1.msra.mxu0 %v442
      %552 = vmatprep.subr.mxu0 0.0
      %553 = vmatpush1.msra.mxu0 %v443
      %554 = vmatprep.subr.mxu0 0.0
      %555 = vmatpush1.msra.mxu0 %v444
      %556 = vmatprep.subr.mxu0 0.0
      %557 = vmatpush1.msra.mxu0 %v445
      %558 = vmatprep.subr.mxu0 0.0
      %559 = vmatpush1.msra.mxu0 %v446
      %560 = vmatprep.subr.mxu0 0.0
      %561 = vmatpush1.msra.mxu0 %v447
      %562 = vmatprep.subr.mxu0 0.0
      %563 = vmatpush1.msra.mxu0 %v448
      %564 = vmatprep.subr.mxu0 0.0
      %565 = vmatpush1.msra.mxu0 %v449
      %566 = vmatprep.subr.mxu0 0.0
      %567 = vmatpush1.msra.mxu0 %v450
      %568 = vmatprep.subr.mxu0 0.0
      %569 = vmatpush1.msra.mxu0 %v451
      %570 = vmatprep.subr.mxu0 0.0
      %571 = vmatpush1.msra.mxu0 %v452
      %572 = vmatprep.subr.mxu0 0.0
      %573 = vmatpush1.msra.mxu0 %v453
      %574 = vmatprep.subr.mxu0 0.0
      %575 = vmatpush1.msra.mxu0 %v454
      %576 = vmatprep.subr.mxu0 0.0
      %577 = vmatpush1.msra.mxu0 %v455
      %578 = vmatprep.subr.mxu0 0.0
      %579 = vmatpush1.msra.mxu0 %v456
      %580 = vmatprep.subr.mxu0 0.0
      %581 = vmatpush1.msra.mxu0 %v457
      %582 = vmatprep.subr.mxu0 0.0
      %583 = vmatpush1.msra.mxu0 0.0
      %584 = vmatprep.subr.mxu0 0.0
      %585 = vmatpush1.msra.mxu0 0.0
      %586 = vmatprep.subr.mxu0 0.0
      %587 = vmatpush1.msra.mxu0 0.0
      %588 = vmatprep.subr.mxu0 0.0
      %589 = vmatpush1.msra.mxu0 0.0
      %590 = vmatprep.subr.mxu0 0.0
      %591 = vmatpush1.msra.mxu0 0.0
      %592 = vmatprep.subr.mxu0 0.0
      %593 = vmatpush1.msra.mxu0 0.0
      %594 = vmatprep.subr.mxu0 0.0
      %595 = vmatpush1.msra.mxu0 0.0
      %596 = vmatprep.subr.mxu0 0.0
      %597 = vmatpush1.msra.mxu0 0.0
      %598 = vmatprep.subr.mxu0 0.0
      %599 = vmatpush1.msra.mxu0 0.0
      %600 = vmatprep.subr.mxu0 0.0
      %601 = vmatpush1.msra.mxu0 0.0
      %602 = vmatprep.subr.mxu0 0.0
      %603 = vmatpush1.msra.mxu0 0.0
      %604 = vmatprep.subr.mxu0 0.0
      %605 = vmatpush1.msra.mxu0 0.0
      %606 = vmatprep.subr.mxu0 0.0
      %607 = vmatpush1.msra.mxu0 0.0
      %608 = vmatprep.subr.mxu0 0.0
      %609 = vmatpush1.msra.mxu0 0.0
      %610 = vmatprep.subr.mxu0 0.0
      %611 = vmatpush1.msra.mxu0 0.0
      %612 = vmatprep.subr.mxu0 0.0
      %613 = vmatpush1.msra.mxu0 0.0
      %614 = vmatprep.mubr.f32.mxu0 0.0
      %615 = vmatmul.mubr.f32.gmra.mrb[0].mxu0 %v549
      %v616 = vpop.f32.mrb[0].mxu0
      %v617 = vadd.f32 0.0, %v616
      %v618 = vpop.f32.mrb[0].mxu0
      %619 = vdwg.mxu0
      %v620 = vmul.f32 %v617, 0.001953125
      %v621 = vld [vmem:[#allocation7] sm:$0x1]
      %v622 = vadd.f32 %v620, 1e-05
      %v623 = vrsqrt.pop %v622
      %v624 = vmul.f32 %v621, %v623
      %v626 = vlaneseq
      %v627 = vshrl.u32 %v626, 7
      %v628 = vsub.s32 0, %v627
      %v629 = vrot.slane %v624, %v628
      %v631 = vmul.f32 %v533, %v629
      %v632 = vmul.f32 %v534, %v629
      %v633 = vmul.f32 %v535, %v629
      %v634 = vmul.f32 %v536, %v629
      %v635 = vld [vmem:[#allocation8] sm:$0x1]
      %v637 = vlaneseq
      %v638 = vshrl.u32 %v637, 7
      %v639 = vsub.s32 0, %v638
      %v640 = vrot.slane %v635, %v639
      %v642 = vadd.f32 %v631, %v640
      %v643 = vadd.f32 %v632, %v640
      %v644 = vadd.f32 %v633, %v640
      %v645 = vadd.f32 %v634, %v640
      %v646 = vmin.f32 %v642, 0.0
      %v647 = vmin.f32 %v643, 0.0
      %v648 = vmin.f32 %v644, 0.0
      %v649 = vmin.f32 %v645, 0.0
      %v650 = vmul.f32 %v646, 1.442695
      %v651 = vpow.pop %v650
      %v652 = vmul.f32 %v647, 1.442695
      %v653 = vpow.pop %v652
      %v654 = vmul.f32 %v648, 1.442695
      %v655 = vpow.pop %v654
      %v656 = vmul.f32 %v649, 1.442695
      %v657 = vpow.pop %v656
      %v658 = vsub.f32 %v651, 1.0
      %v659 = vsub.f32 %v653, 1.0
      %v660 = vsub.f32 %v655, 1.0
      %v661 = vsub.f32 %v657, 1.0
      %v662 = vmul.f32 %v658, 1.6732632
      %v663 = vmul.f32 %v659, 1.6732632
      %v664 = vmul.f32 %v660, 1.6732632
      %v665 = vmul.f32 %v661, 1.6732632
      %vm666 = vcmp.gt.f32.partialorder %v642, 0.0
      %vm667 = vcmp.gt.f32.partialorder %v643, 0.0
      %vm668 = vcmp.gt.f32.partialorder %v644, 0.0
      %vm669 = vcmp.gt.f32.partialorder %v645, 0.0
      %v670 = vsel %vm666, %v642, %v662
      %v671 = vsel %vm667, %v643, %v663
      %v672 = vsel %vm668, %v644, %v664
      %v673 = vsel %vm669, %v645, %v665
      %v674 = vmul.f32 %v670, 1.050701
      %v675 = vmul.f32 %v671, 1.050701
      %v676 = vmul.f32 %v672, 1.050701
      %v677 = vmul.f32 %v673, 1.050701
      %678 = vst [vmem:[%s6] sm:$0xff] %v674
      %679 = vst [vmem:[%s6 + $0x8] sm:$0xff] %v675
      %680 = vst [vmem:[%s6 + $0x10] sm:$0xff] %v676
      %681 = vst [vmem:[%s6 + $0x18] sm:$0xff] %v677
    $region53: #{cnn_feature_extraction_forward.7} parent=1 // pred_fallthru
      _
    // Predicated region
    $region54: #{cnn_feature_extraction_forward.7} parent=1 // pred_check
      _
    $region55: #{cnn_feature_extraction_forward.7} parent=1 // pred_check_branch
      %683 = sbr.rel (0) target = $region57
    $region56: #{cnn_feature_extraction_forward.7} parent=1 // pred_region
      _
    $region57: #{cnn_feature_extraction_forward.7} parent=1 // pred_fallthru
      _
    // Predicated region
    $region58: #{cnn_feature_extraction_forward.7} parent=1 // pred_check
      _
    $region59: #{cnn_feature_extraction_forward.7} parent=1 // pred_check_branch
      %685 = sbr.rel (0) target = $region61
    $region60: #{cnn_feature_extraction_forward.7} parent=1 // pred_region
      _
    $region61: #{cnn_feature_extraction_forward.7} parent=1 // pred_fallthru
      _
    %686 = vsyncpa [#allocation4], 1
    %687 = vsyncpa [#allocation6], 1
    %688 = vsyncpa [#allocation9], 1

// kernel: cnn_feature_extraction_forward.8
$region0: #{cnn_feature_extraction_forward.8}
  #allocation0 [shape = 'u32[]', space=smem, size = 0x4, offset = 0x4, fixed_abs, tag = 'smem constant byte address 0x4 - core index']
  #allocation1 [shape = 'u32[144,128]{1,0:T(1,128)}', space=vmem, size = 0x12000, scoped, tag = 'internal scratch']
  #allocation2 [shape = 'f32[2,20,128]{2,1,0:T(8,128)}', space=vmem, size = 0x6000, scoped, tag = 'scratch operand']
  %s0 = inlined_call_operand.vmem [shape: f32[2,16,128], index: 0, kind: input, shape index: {}]
  %s1 = inlined_call_operand.hbm [shape: f32[1,5,128,128], index: 1, kind: input, shape index: {}]
  %s2 = inlined_call_operand.hbm [shape: f32[1,1,128], index: 2, kind: input, shape index: {}]
  %s3 = inlined_call_operand.hbm [shape: f32[1,128], index: 3, kind: input, shape index: {}]
  %s4 = inlined_call_operand.hbm [shape: f32[1,128], index: 4, kind: input, shape index: {}]
  %s5 = inlined_call_operand.vmem [shape: f32[128,128], index: 5, kind: input, shape index: {}]
  %s6 = inlined_call_operand.vmem [shape: f32[32,128], index: 6, kind: output, shape index: {}]
  %s7 = sld [smem:[#allocation0]]
  $region62: #{cnn_feature_extraction_forward.8} parent=0
    _
  %s9 = ssub.s32 1, %s7
  %s10 = scalar_select 0, %s9, %s7
  $region1: #{cnn_feature_extraction_forward.8} parent=0
    #allocation3 [shape = 'u8[327680]{0}', space=vmem, size = 0x50000, scoped, tag = 'input window, operand 1, single buffered']
    #allocation4 [shape = 's32[1]{0}', space=sflag, size = 0x4, scoped, tag = 'scoped memory for cnn_feature_extraction_forward.8']
    #allocation5 [shape = 'u8[512]{0}', space=vmem, size = 0x400, scoped, tag = 'input window, operand 2, single buffered']
    #allocation6 [shape = 's32[1]{0}', space=sflag, size = 0x4, scoped, tag = 'scoped memory for cnn_feature_extraction_forward.8']
    #allocation7 [shape = 'u8[512]{0}', space=vmem, size = 0x400, scoped, tag = 'input window, operand 3, single buffered']
    #allocation8 [shape = 'u8[512]{0}', space=vmem, size = 0x400, scoped, tag = 'input window, operand 4, single buffered']
    #allocation9 [shape = 's32[1]{0}', space=sflag, size = 0x4, scoped, tag = 'scoped memory for cnn_feature_extraction_forward.8']
    %11 = vsyncpa [#allocation4], 0
    %12 = vsyncpa [#allocation6], 0
    %13 = vsyncpa [#allocation9], 0
    // Predicated region
    $region2: #{cnn_feature_extraction_forward.8} parent=1 // pred_check
      _
    $region3: #{cnn_feature_extraction_forward.8} parent=1 // pred_check_branch
      %15 = sbr.rel (0) target = $region5
    $region4: #{cnn_feature_extraction_forward.8} parent=1 // pred_region
      _
    $region5: #{cnn_feature_extraction_forward.8} parent=1 // pred_fallthru
      _
    // Predicated region
    $region6: #{cnn_feature_extraction_forward.8} parent=1 // pred_check
      _
    $region7: #{cnn_feature_extraction_forward.8} parent=1 // pred_check_branch
      %17 = sbr.rel (0) target = $region9
    $region8: #{cnn_feature_extraction_forward.8} parent=1 // pred_region
      %s19 = ssub.s32 10240, 10240
      %20 = vsyncadd [#allocation4], %s19
      %s21 = sshll.u32 [#allocation3], 4
      %s22 = int_to_ptr.vmem [resolvable:$true] %s21
      %27 = dma.hbm_to_vmem [thread:$0]  %s1, 10240, %s22, [#allocation4], 128, 128, 8
    $region9: #{cnn_feature_extraction_forward.8} parent=1 // pred_fallthru
      _
    // Predicated region
    $region10: #{cnn_feature_extraction_forward.8} parent=1 // pred_check
      _
    $region11: #{cnn_feature_extraction_forward.8} parent=1 // pred_check_branch
      %29 = sbr.rel (0) target = $region13
    $region12: #{cnn_feature_extraction_forward.8} parent=1 // pred_region
      %s31 = ssub.s32 16, 16
      %32 = vsyncadd [#allocation6], %s31
      %s34 = sshll.u32 [#allocation5], 4
      %s35 = int_to_ptr.vmem [resolvable:$true] %s34
      %37 = dma.hbm_to_vmem [thread:$0]  %s2, 16, %s35, [#allocation6]
    $region13: #{cnn_feature_extraction_forward.8} parent=1 // pred_fallthru
      _
    // Predicated region
    $region14: #{cnn_feature_extraction_forward.8} parent=1 // pred_check
      _
    $region15: #{cnn_feature_extraction_forward.8} parent=1 // pred_check_branch
      %39 = sbr.rel (0) target = $region17
    $region16: #{cnn_feature_extraction_forward.8} parent=1 // pred_region
      %s41 = ssub.s32 16, 16
      %42 = vsyncadd [#allocation6], %s41
      %s44 = sshll.u32 [#allocation7], 4
      %s45 = int_to_ptr.vmem [resolvable:$true] %s44
      %47 = dma.hbm_to_vmem [thread:$0]  %s3, 16, %s45, [#allocation6]
    $region17: #{cnn_feature_extraction_forward.8} parent=1 // pred_fallthru
      _
    // Predicated region
    $region18: #{cnn_feature_extraction_forward.8} parent=1 // pred_check
      _
    $region19: #{cnn_feature_extraction_forward.8} parent=1 // pred_check_branch
      %49 = sbr.rel (0) target = $region21
    $region20: #{cnn_feature_extraction_forward.8} parent=1 // pred_region
      %s51 = ssub.s32 16, 16
      %52 = vsyncadd [#allocation9], %s51
      %s54 = sshll.u32 [#allocation8], 4
      %s55 = int_to_ptr.vmem [resolvable:$true] %s54
      %57 = dma.hbm_to_vmem [thread:$0]  %s4, 16, %s55, [#allocation9]
    $region21: #{cnn_feature_extraction_forward.8} parent=1 // pred_fallthru
      _
    // Predicated region
    $region22: #{cnn_feature_extraction_forward.8} parent=1 // pred_check
      _
    $region23: #{cnn_feature_extraction_forward.8} parent=1 // pred_check_branch
      %59 = sbr.rel (0) target = $region25
    $region24: #{cnn_feature_extraction_forward.8} parent=1 // pred_region
      _
    $region25: #{cnn_feature_extraction_forward.8} parent=1 // pred_fallthru
      _
    // Predicated region
    $region26: #{cnn_feature_extraction_forward.8} parent=1 // pred_check
      _
    $region27: #{cnn_feature_extraction_forward.8} parent=1 // pred_check_branch
      %61 = sbr.rel (0) target = $region29
    $region28: #{cnn_feature_extraction_forward.8} parent=1 // pred_region
      %62 = dma.done [#allocation4], 10240
    $region29: #{cnn_feature_extraction_forward.8} parent=1 // pred_fallthru
      _
    // Predicated region
    $region30: #{cnn_feature_extraction_forward.8} parent=1 // pred_check
      _
    $region31: #{cnn_feature_extraction_forward.8} parent=1 // pred_check_branch
      %64 = sbr.rel (0) target = $region33
    $region32: #{cnn_feature_extraction_forward.8} parent=1 // pred_region
      %65 = dma.done [#allocation6], 16
    $region33: #{cnn_feature_extraction_forward.8} parent=1 // pred_fallthru
      _
    // Predicated region
    $region34: #{cnn_feature_extraction_forward.8} parent=1 // pred_check
      _
    $region35: #{cnn_feature_extraction_forward.8} parent=1 // pred_check_branch
      %67 = sbr.rel (0) target = $region37
    $region36: #{cnn_feature_extraction_forward.8} parent=1 // pred_region
      %68 = dma.done [#allocation6], 16
    $region37: #{cnn_feature_extraction_forward.8} parent=1 // pred_fallthru
      _
    // Predicated region
    $region38: #{cnn_feature_extraction_forward.8} parent=1 // pred_check
      _
    $region39: #{cnn_feature_extraction_forward.8} parent=1 // pred_check_branch
      %70 = sbr.rel (0) target = $region41
    $region40: #{cnn_feature_extraction_forward.8} parent=1 // pred_region
      %71 = dma.done [#allocation9], 16
    $region41: #{cnn_feature_extraction_forward.8} parent=1 // pred_fallthru
      _
    %p72 = scmp.eq.s32.totalorder 0, 0
    // Predicated region
    $region42: #{cnn_feature_extraction_forward.8} parent=1 // pred_check
      %p73 = pneg %p72
    $region43: #{cnn_feature_extraction_forward.8} parent=1 // pred_check_branch
      %75 = sbr.rel (%p73) target = $region45
    $region44: #{cnn_feature_extraction_forward.8} parent=1 // pred_region
      %76 = vst [vmem:[#allocation2] sm:$0xff] 0.0
      %77 = vst [vmem:[#allocation2 + $0x8] sm:$0xff] 0.0
      %78 = vst [vmem:[#allocation2 + $0x10] sm:$0xf] 0.0
      %79 = vst [vmem:[#allocation2 + $0x18] sm:$0xff] 0.0
      %80 = vst [vmem:[#allocation2 + $0x20] sm:$0xff] 0.0
      %81 = vst [vmem:[#allocation2 + $0x28] sm:$0xf] 0.0
      %v82 = vld [vmem:[%s0] sm:$0xff]
      %v83 = vld [vmem:[%s0 + $0x8] sm:$0xff]
      %v84 = vld [vmem:[%s0 + $0x10] sm:$0xff]
      %v85 = vld [vmem:[%s0 + $0x18] sm:$0xff]
      %86 = vst [vmem:[#allocation2 + $0x2] sm:$0xff] %v82
      %87 = vst [vmem:[#allocation2 + $0xa] sm:$0xff] %v83
      %88 = vst [vmem:[#allocation2 + $0x1a] sm:$0xff] %v84
      %89 = vst [vmem:[#allocation2 + $0x22] sm:$0xff] %v85
    $region45: #{cnn_feature_extraction_forward.8} parent=1 // pred_fallthru
      _
    %v90 = vld [vmem:[#allocation2] sm:$0xff]
    %v91 = vld [vmem:[#allocation2 + $0x8] sm:$0xff]
    %v92 = vld [vmem:[#allocation2 + $0x18] sm:$0xff]
    %v93 = vld [vmem:[#allocation2 + $0x20] sm:$0xff]
    %v94 = vld [vmem:[#allocation3] sm:$0xff]
    %v95 = vld [vmem:[#allocation3 + $0x8] sm:$0xff]
    %v96 = vld [vmem:[#allocation3 + $0x10] sm:$0xff]
    %v97 = vld [vmem:[#allocation3 + $0x18] sm:$0xff]
    %v98 = vld [vmem:[#allocation3 + $0x20] sm:$0xff]
    %v99 = vld [vmem:[#allocation3 + $0x28] sm:$0xff]
    %v100 = vld [vmem:[#allocation3 + $0x30] sm:$0xff]
    %v101 = vld [vmem:[#allocation3 + $0x38] sm:$0xff]
    %v102 = vld [vmem:[#allocation3 + $0x40] sm:$0xff]
    %v103 = vld [vmem:[#allocation3 + $0x48] sm:$0xff]
    %v104 = vld [vmem:[#allocation3 + $0x50] sm:$0xff]
    %v105 = vld [vmem:[#allocation3 + $0x58] sm:$0xff]
    %v106 = vld [vmem:[#allocation3 + $0x60] sm:$0xff]
    %v107 = vld [vmem:[#allocation3 + $0x68] sm:$0xff]
    %v108 = vld [vmem:[#allocation3 + $0x70] sm:$0xff]
    %v109 = vld [vmem:[#allocation3 + $0x78] sm:$0xff]
    %v110 = vld [vmem:[#allocation2 + $0x1] sm:$0xff]
    %v111 = vld [vmem:[#allocation2 + $0x9] sm:$0xff]
    %v112 = vld [vmem:[#allocation2 + $0x19] sm:$0xff]
    %v113 = vld [vmem:[#allocation2 + $0x21] sm:$0xff]
    %s114 = scalar_lea.vmem [#allocation3], 128
    %v115 = vld [vmem:[%s114] sm:$0xff]
    %v116 = vld [vmem:[%s114 + $0x8] sm:$0xff]
    %v117 = vld [vmem:[%s114 + $0x10] sm:$0xff]
    %v118 = vld [vmem:[%s114 + $0x18] sm:$0xff]
    %v119 = vld [vmem:[%s114 + $0x20] sm:$0xff]
    %v120 = vld [vmem:[%s114 + $0x28] sm:$0xff]
    %v121 = vld [vmem:[%s114 + $0x30] sm:$0xff]
    %v122 = vld [vmem:[%s114 + $0x38] sm:$0xff]
    %v123 = vld [vmem:[%s114 + $0x40] sm:$0xff]
    %v124 = vld [vmem:[%s114 + $0x48] sm:$0xff]
    %v125 = vld [vmem:[%s114 + $0x50] sm:$0xff]
    %v126 = vld [vmem:[%s114 + $0x58] sm:$0xff]
    %v127 = vld [vmem:[%s114 + $0x60] sm:$0xff]
    %v128 = vld [vmem:[%s114 + $0x68] sm:$0xff]
    %v129 = vld [vmem:[%s114 + $0x70] sm:$0xff]
    %v130 = vld [vmem:[%s114 + $0x78] sm:$0xff]
    %131 = vmatprep.subr.mxu0 0.0
    %132 = vmatpush1.msra.mxu0 %v115
    %133 = vmatprep.subr.mxu0 0.0
    %134 = vmatpush1.msra.mxu0 %v116
    %135 = vmatprep.subr.mxu0 0.0
    %136 = vmatpush1.msra.mxu0 %v117
    %137 = vmatprep.subr.mxu0 0.0
    %138 = vmatpush1.msra.mxu0 %v118
    %139 = vmatprep.subr.mxu0 0.0
    %140 = vmatpush1.msra.mxu0 %v119
    %141 = vmatprep.subr.mxu0 0.0
    %142 = vmatpush1.msra.mxu0 %v120
    %143 = vmatprep.subr.mxu0 0.0
    %144 = vmatpush1.msra.mxu0 %v121
    %145 = vmatprep.subr.mxu0 0.0
    %146 = vmatpush1.msra.mxu0 %v122
    %147 = vmatprep.subr.mxu0 0.0
    %148 = vmatpush1.msra.mxu0 %v123
    %149 = vmatprep.subr.mxu0 0.0
    %150 = vmatpush1.msra.mxu0 %v124
    %151 = vmatprep.subr.mxu0 0.0
    %152 = vmatpush1.msra.mxu0 %v125
    %153 = vmatprep.subr.mxu0 0.0
    %154 = vmatpush1.msra.mxu0 %v126
    %155 = vmatprep.subr.mxu0 0.0
    %156 = vmatpush1.msra.mxu0 %v127
    %157 = vmatprep.subr.mxu0 0.0
    %158 = vmatpush1.msra.mxu0 %v128
    %159 = vmatprep.subr.mxu0 0.0
    %160 = vmatpush1.msra.mxu0 %v129
    %161 = vmatprep.subr.mxu0 0.0
    %162 = vmatpush1.msra.mxu0 %v130
    %163 = vmatprep.subr.mxu0 0.0
    %164 = vmatpush1.msra.mxu0 0.0
    %165 = vmatprep.subr.mxu0 0.0
    %166 = vmatpush1.msra.mxu0 0.0
    %167 = vmatprep.subr.mxu0 0.0
    %168 = vmatpush1.msra.mxu0 0.0
    %169 = vmatprep.subr.mxu0 0.0
    %170 = vmatpush1.msra.mxu0 0.0
    %171 = vmatprep.subr.mxu0 0.0
    %172 = vmatpush1.msra.mxu0 0.0
    %173 = vmatprep.subr.mxu0 0.0
    %174 = vmatpush1.msra.mxu0 0.0
    %175 = vmatprep.subr.mxu0 0.0
    %176 = vmatpush1.msra.mxu0 0.0
    %177 = vmatprep.subr.mxu0 0.0
    %178 = vmatpush1.msra.mxu0 0.0
    %179 = vmatprep.subr.mxu0 0.0
    %180 = vmatpush1.msra.mxu0 0.0
    %181 = vmatprep.subr.mxu0 0.0
    %182 = vmatpush1.msra.mxu0 0.0
    %183 = vmatprep.subr.mxu0 0.0
    %184 = vmatpush1.msra.mxu0 0.0
    %185 = vmatprep.subr.mxu0 0.0
    %186 = vmatpush1.msra.mxu0 0.0
    %187 = vmatprep.subr.mxu0 0.0
    %188 = vmatpush1.msra.mxu0 0.0
    %189 = vmatprep.subr.mxu0 0.0
    %190 = vmatpush1.msra.mxu0 0.0
    %191 = vmatprep.subr.mxu0 0.0
    %192 = vmatpush1.msra.mxu0 0.0
    %193 = vmatprep.subr.mxu0 0.0
    %194 = vmatpush1.msra.mxu0 0.0
    %195 = vmatprep.mubr.f32.mxu0 0.0
    %196 = vmatmul.mubr.f32.gmra.mrb[0].mxu0 %v110
    %v197 = vpop.f32.mrb[0].mxu0
    %v198 = vadd.f32 0.0, %v197
    %v199 = vpop.f32.mrb[0].mxu0
    %200 = vmatprep.mubr.f32.mxu0 0.0
    %201 = vmatmul.mubr.f32.gmra.mrb[0].mxu0 %v111
    %v202 = vpop.f32.mrb[0].mxu0
    %v203 = vadd.f32 0.0, %v202
    %v204 = vpop.f32.mrb[0].mxu0
    %205 = vmatprep.mubr.f32.mxu0 0.0
    %206 = vmatmul.mubr.f32.gmra.mrb[0].mxu0 %v112
    %v207 = vpop.f32.mrb[0].mxu0
    %v208 = vadd.f32 0.0, %v207
    %v209 = vpop.f32.mrb[0].mxu0
    %210 = vmatprep.mubr.f32.mxu0 0.0
    %211 = vmatmul.mubr.f32.gmra.mrb[0].mxu0 %v113
    %v212 = vpop.f32.mrb[0].mxu0
    %v213 = vadd.f32 0.0, %v212
    %v214 = vpop.f32.mrb[0].mxu0
    %215 = vdwg.mxu0
    %216 = vmatprep.subr.mxu0 0.0
    %217 = vmatpush1.msra.mxu0 %v94
    %218 = vmatprep.subr.mxu0 0.0
    %219 = vmatpush1.msra.mxu0 %v95
    %220 = vmatprep.subr.mxu0 0.0
    %221 = vmatpush1.msra.mxu0 %v96
    %222 = vmatprep.subr.mxu0 0.0
    %223 = vmatpush1.msra.mxu0 %v97
    %224 = vmatprep.subr.mxu0 0.0
    %225 = vmatpush1.msra.mxu0 %v98
    %226 = vmatprep.subr.mxu0 0.0
    %227 = vmatpush1.msra.mxu0 %v99
    %228 = vmatprep.subr.mxu0 0.0
    %229 = vmatpush1.msra.mxu0 %v100
    %230 = vmatprep.subr.mxu0 0.0
    %231 = vmatpush1.msra.mxu0 %v101
    %232 = vmatprep.subr.mxu0 0.0
    %233 = vmatpush1.msra.mxu0 %v102
    %234 = vmatprep.subr.mxu0 0.0
    %235 = vmatpush1.msra.mxu0 %v103
    %236 = vmatprep.subr.mxu0 0.0
    %237 = vmatpush1.msra.mxu0 %v104
    %238 = vmatprep.subr.mxu0 0.0
    %239 = vmatpush1.msra.mxu0 %v105
    %240 = vmatprep.subr.mxu0 0.0
    %241 = vmatpush1.msra.mxu0 %v106
    %242 = vmatprep.subr.mxu0 0.0
    %243 = vmatpush1.msra.mxu0 %v107
    %244 = vmatprep.subr.mxu0 0.0
    %245 = vmatpush1.msra.mxu0 %v108
    %246 = vmatprep.subr.mxu0 0.0
    %247 = vmatpush1.msra.mxu0 %v109
    %248 = vmatprep.subr.mxu0 0.0
    %249 = vmatpush1.msra.mxu0 0.0
    %250 = vmatprep.subr.mxu0 0.0
    %251 = vmatpush1.msra.mxu0 0.0
    %252 = vmatprep.subr.mxu0 0.0
    %253 = vmatpush1.msra.mxu0 0.0
    %254 = vmatprep.subr.mxu0 0.0
    %255 = vmatpush1.msra.mxu0 0.0
    %256 = vmatprep.subr.mxu0 0.0
    %257 = vmatpush1.msra.mxu0 0.0
    %258 = vmatprep.subr.mxu0 0.0
    %259 = vmatpush1.msra.mxu0 0.0
    %260 = vmatprep.subr.mxu0 0.0
    %261 = vmatpush1.msra.mxu0 0.0
    %262 = vmatprep.subr.mxu0 0.0
    %263 = vmatpush1.msra.mxu0 0.0
    %264 = vmatprep.subr.mxu0 0.0
    %265 = vmatpush1.msra.mxu0 0.0
    %266 = vmatprep.subr.mxu0 0.0
    %267 = vmatpush1.msra.mxu0 0.0
    %268 = vmatprep.subr.mxu0 0.0
    %269 = vmatpush1.msra.mxu0 0.0
    %270 = vmatprep.subr.mxu0 0.0
    %271 = vmatpush1.msra.mxu0 0.0
    %272 = vmatprep.subr.mxu0 0.0
    %273 = vmatpush1.msra.mxu0 0.0
    %274 = vmatprep.subr.mxu0 0.0
    %275 = vmatpush1.msra.mxu0 0.0
    %276 = vmatprep.subr.mxu0 0.0
    %277 = vmatpush1.msra.mxu0 0.0
    %278 = vmatprep.subr.mxu0 0.0
    %279 = vmatpush1.msra.mxu0 0.0
    %280 = vmatprep.mubr.f32.mxu0 0.0
    %281 = vmatmul.mubr.f32.gmra.mrb[0].mxu0 %v90
    %v282 = vpop.f32.mrb[0].mxu0
    %v283 = vadd.f32 %v198, %v282
    %v284 = vpop.f32.mrb[0].mxu0
    %285 = vmatprep.mubr.f32.mxu0 0.0
    %286 = vmatmul.mubr.f32.gmra.mrb[0].mxu0 %v91
    %v287 = vpop.f32.mrb[0].mxu0
    %v288 = vadd.f32 %v203, %v287
    %v289 = vpop.f32.mrb[0].mxu0
    %290 = vmatprep.mubr.f32.mxu0 0.0
    %291 = vmatmul.mubr.f32.gmra.mrb[0].mxu0 %v92
    %v292 = vpop.f32.mrb[0].mxu0
    %v293 = vadd.f32 %v208, %v292
    %v294 = vpop.f32.mrb[0].mxu0
    %295 = vmatprep.mubr.f32.mxu0 0.0
    %296 = vmatmul.mubr.f32.gmra.mrb[0].mxu0 %v93
    %v297 = vpop.f32.mrb[0].mxu0
    %v298 = vadd.f32 %v213, %v297
    %v299 = vpop.f32.mrb[0].mxu0
    %300 = vdwg.mxu0
    %v301 = vld [vmem:[#allocation2 + $0x2] sm:$0xff]
    %v302 = vld [vmem:[#allocation2 + $0xa] sm:$0xff]
    %v303 = vld [vmem:[#allocation2 + $0x1a] sm:$0xff]
    %v304 = vld [vmem:[#allocation2 + $0x22] sm:$0xff]
    %s305 = scalar_lea.vmem [#allocation3], 256
    %v306 = vld [vmem:[%s305] sm:$0xff]
    %v307 = vld [vmem:[%s305 + $0x8] sm:$0xff]
    %v308 = vld [vmem:[%s305 + $0x10] sm:$0xff]
    %v309 = vld [vmem:[%s305 + $0x18] sm:$0xff]
    %v310 = vld [vmem:[%s305 + $0x20] sm:$0xff]
    %v311 = vld [vmem:[%s305 + $0x28] sm:$0xff]
    %v312 = vld [vmem:[%s305 + $0x30] sm:$0xff]
    %v313 = vld [vmem:[%s305 + $0x38] sm:$0xff]
    %v314 = vld [vmem:[%s305 + $0x40] sm:$0xff]
    %v315 = vld [vmem:[%s305 + $0x48] sm:$0xff]
    %v316 = vld [vmem:[%s305 + $0x50] sm:$0xff]
    %v317 = vld [vmem:[%s305 + $0x58] sm:$0xff]
    %v318 = vld [vmem:[%s305 + $0x60] sm:$0xff]
    %v319 = vld [vmem:[%s305 + $0x68] sm:$0xff]
    %v320 = vld [vmem:[%s305 + $0x70] sm:$0xff]
    %v321 = vld [vmem:[%s305 + $0x78] sm:$0xff]
    %322 = vmatprep.subr.mxu0 0.0
    %323 = vmatpush1.msra.mxu0 %v306
    %324 = vmatprep.subr.mxu0 0.0
    %325 = vmatpush1.msra.mxu0 %v307
    %326 = vmatprep.subr.mxu0 0.0
    %327 = vmatpush1.msra.mxu0 %v308
    %328 = vmatprep.subr.mxu0 0.0
    %329 = vmatpush1.msra.mxu0 %v309
    %330 = vmatprep.subr.mxu0 0.0
    %331 = vmatpush1.msra.mxu0 %v310
    %332 = vmatprep.subr.mxu0 0.0
    %333 = vmatpush1.msra.mxu0 %v311
    %334 = vmatprep.subr.mxu0 0.0
    %335 = vmatpush1.msra.mxu0 %v312
    %336 = vmatprep.subr.mxu0 0.0
    %337 = vmatpush1.msra.mxu0 %v313
    %338 = vmatprep.subr.mxu0 0.0
    %339 = vmatpush1.msra.mxu0 %v314
    %340 = vmatprep.subr.mxu0 0.0
    %341 = vmatpush1.msra.mxu0 %v315
    %342 = vmatprep.subr.mxu0 0.0
    %343 = vmatpush1.msra.mxu0 %v316
    %344 = vmatprep.subr.mxu0 0.0
    %345 = vmatpush1.msra.mxu0 %v317
    %346 = vmatprep.subr.mxu0 0.0
    %347 = vmatpush1.msra.mxu0 %v318
    %348 = vmatprep.subr.mxu0 0.0
    %349 = vmatpush1.msra.mxu0 %v319
    %350 = vmatprep.subr.mxu0 0.0
    %351 = vmatpush1.msra.mxu0 %v320
    %352 = vmatprep.subr.mxu0 0.0
    %353 = vmatpush1.msra.mxu0 %v321
    %354 = vmatprep.subr.mxu0 0.0
    %355 = vmatpush1.msra.mxu0 0.0
    %356 = vmatprep.subr.mxu0 0.0
    %357 = vmatpush1.msra.mxu0 0.0
    %358 = vmatprep.subr.mxu0 0.0
    %359 = vmatpush1.msra.mxu0 0.0
    %360 = vmatprep.subr.mxu0 0.0
    %361 = vmatpush1.msra.mxu0 0.0
    %362 = vmatprep.subr.mxu0 0.0
    %363 = vmatpush1.msra.mxu0 0.0
    %364 = vmatprep.subr.mxu0 0.0
    %365 = vmatpush1.msra.mxu0 0.0
    %366 = vmatprep.subr.mxu0 0.0
    %367 = vmatpush1.msra.mxu0 0.0
    %368 = vmatprep.subr.mxu0 0.0
    %369 = vmatpush1.msra.mxu0 0.0
    %370 = vmatprep.subr.mxu0 0.0
    %371 = vmatpush1.msra.mxu0 0.0
    %372 = vmatprep.subr.mxu0 0.0
    %373 = vmatpush1.msra.mxu0 0.0
    %374 = vmatprep.subr.mxu0 0.0
    %375 = vmatpush1.msra.mxu0 0.0
    %376 = vmatprep.subr.mxu0 0.0
    %377 = vmatpush1.msra.mxu0 0.0
    %378 = vmatprep.subr.mxu0 0.0
    %379 = vmatpush1.msra.mxu0 0.0
    %380 = vmatprep.subr.mxu0 0.0
    %381 = vmatpush1.msra.mxu0 0.0
    %382 = vmatprep.subr.mxu0 0.0
    %383 = vmatpush1.msra.mxu0 0.0
    %384 = vmatprep.subr.mxu0 0.0
    %385 = vmatpush1.msra.mxu0 0.0
    %386 = vmatprep.mubr.f32.mxu0 0.0
    %387 = vmatmul.mubr.f32.gmra.mrb[0].mxu0 %v301
    %v388 = vpop.f32.mrb[0].mxu0
    %v389 = vadd.f32 0.0, %v388
    %v390 = vpop.f32.mrb[0].mxu0
    %391 = vmatprep.mubr.f32.mxu0 0.0
    %392 = vmatmul.mubr.f32.gmra.mrb[0].mxu0 %v302
    %v393 = vpop.f32.mrb[0].mxu0
    %v394 = vadd.f32 0.0, %v393
    %v395 = vpop.f32.mrb[0].mxu0
    %396 = vmatprep.mubr.f32.mxu0 0.0
    %397 = vmatmul.mubr.f32.gmra.mrb[0].mxu0 %v303
    %v398 = vpop.f32.mrb[0].mxu0
    %v399 = vadd.f32 0.0, %v398
    %v400 = vpop.f32.mrb[0].mxu0
    %401 = vmatprep.mubr.f32.mxu0 0.0
    %402 = vmatmul.mubr.f32.gmra.mrb[0].mxu0 %v304
    %v403 = vpop.f32.mrb[0].mxu0
    %v404 = vadd.f32 0.0, %v403
    %v405 = vpop.f32.mrb[0].mxu0
    %406 = vdwg.mxu0
    %v407 = vadd.f32 %v283, %v389
    %v408 = vadd.f32 %v288, %v394
    %v409 = vadd.f32 %v293, %v399
    %v410 = vadd.f32 %v298, %v404
    %v411 = vld [vmem:[#allocation2 + $0x3] sm:$0xff]
    %v412 = vld [vmem:[#allocation2 + $0xb] sm:$0xff]
    %v413 = vld [vmem:[#allocation2 + $0x1b] sm:$0xff]
    %v414 = vld [vmem:[#allocation2 + $0x23] sm:$0xff]
    %s415 = scalar_lea.vmem [#allocation3], 384
    %v416 = vld [vmem:[%s415] sm:$0xff]
    %v417 = vld [vmem:[%s415 + $0x8] sm:$0xff]
    %v418 = vld [vmem:[%s415 + $0x10] sm:$0xff]
    %v419 = vld [vmem:[%s415 + $0x18] sm:$0xff]
    %v420 = vld [vmem:[%s415 + $0x20] sm:$0xff]
    %v421 = vld [vmem:[%s415 + $0x28] sm:$0xff]
    %v422 = vld [vmem:[%s415 + $0x30] sm:$0xff]
    %v423 = vld [vmem:[%s415 + $0x38] sm:$0xff]
    %v424 = vld [vmem:[%s415 + $0x40] sm:$0xff]
    %v425 = vld [vmem:[%s415 + $0x48] sm:$0xff]
    %v426 = vld [vmem:[%s415 + $0x50] sm:$0xff]
    %v427 = vld [vmem:[%s415 + $0x58] sm:$0xff]
    %v428 = vld [vmem:[%s415 + $0x60] sm:$0xff]
    %v429 = vld [vmem:[%s415 + $0x68] sm:$0xff]
    %v430 = vld [vmem:[%s415 + $0x70] sm:$0xff]
    %v431 = vld [vmem:[%s415 + $0x78] sm:$0xff]
    %432 = vmatprep.subr.mxu0 0.0
    %433 = vmatpush1.msra.mxu0 %v416
    %434 = vmatprep.subr.mxu0 0.0
    %435 = vmatpush1.msra.mxu0 %v417
    %436 = vmatprep.subr.mxu0 0.0
    %437 = vmatpush1.msra.mxu0 %v418
    %438 = vmatprep.subr.mxu0 0.0
    %439 = vmatpush1.msra.mxu0 %v419
    %440 = vmatprep.subr.mxu0 0.0
    %441 = vmatpush1.msra.mxu0 %v420
    %442 = vmatprep.subr.mxu0 0.0
    %443 = vmatpush1.msra.mxu0 %v421
    %444 = vmatprep.subr.mxu0 0.0
    %445 = vmatpush1.msra.mxu0 %v422
    %446 = vmatprep.subr.mxu0 0.0
    %447 = vmatpush1.msra.mxu0 %v423
    %448 = vmatprep.subr.mxu0 0.0
    %449 = vmatpush1.msra.mxu0 %v424
    %450 = vmatprep.subr.mxu0 0.0
    %451 = vmatpush1.msra.mxu0 %v425
    %452 = vmatprep.subr.mxu0 0.0
    %453 = vmatpush1.msra.mxu0 %v426
    %454 = vmatprep.subr.mxu0 0.0
    %455 = vmatpush1.msra.mxu0 %v427
    %456 = vmatprep.subr.mxu0 0.0
    %457 = vmatpush1.msra.mxu0 %v428
    %458 = vmatprep.subr.mxu0 0.0
    %459 = vmatpush1.msra.mxu0 %v429
    %460 = vmatprep.subr.mxu0 0.0
    %461 = vmatpush1.msra.mxu0 %v430
    %462 = vmatprep.subr.mxu0 0.0
    %463 = vmatpush1.msra.mxu0 %v431
    %464 = vmatprep.subr.mxu0 0.0
    %465 = vmatpush1.msra.mxu0 0.0
    %466 = vmatprep.subr.mxu0 0.0
    %467 = vmatpush1.msra.mxu0 0.0
    %468 = vmatprep.subr.mxu0 0.0
    %469 = vmatpush1.msra.mxu0 0.0
    %470 = vmatprep.subr.mxu0 0.0
    %471 = vmatpush1.msra.mxu0 0.0
    %472 = vmatprep.subr.mxu0 0.0
    %473 = vmatpush1.msra.mxu0 0.0
    %474 = vmatprep.subr.mxu0 0.0
    %475 = vmatpush1.msra.mxu0 0.0
    %476 = vmatprep.subr.mxu0 0.0
    %477 = vmatpush1.msra.mxu0 0.0
    %478 = vmatprep.subr.mxu0 0.0
    %479 = vmatpush1.msra.mxu0 0.0
    %480 = vmatprep.subr.mxu0 0.0
    %481 = vmatpush1.msra.mxu0 0.0
    %482 = vmatprep.subr.mxu0 0.0
    %483 = vmatpush1.msra.mxu0 0.0
    %484 = vmatprep.subr.mxu0 0.0
    %485 = vmatpush1.msra.mxu0 0.0
    %486 = vmatprep.subr.mxu0 0.0
    %487 = vmatpush1.msra.mxu0 0.0
    %488 = vmatprep.subr.mxu0 0.0
    %489 = vmatpush1.msra.mxu0 0.0
    %490 = vmatprep.subr.mxu0 0.0
    %491 = vmatpush1.msra.mxu0 0.0
    %492 = vmatprep.subr.mxu0 0.0
    %493 = vmatpush1.msra.mxu0 0.0
    %494 = vmatprep.subr.mxu0 0.0
    %495 = vmatpush1.msra.mxu0 0.0
    %496 = vmatprep.mubr.f32.mxu0 0.0
    %497 = vmatmul.mubr.f32.gmra.mrb[0].mxu0 %v411
    %v498 = vpop.f32.mrb[0].mxu0
    %v499 = vadd.f32 0.0, %v498
    %v500 = vpop.f32.mrb[0].mxu0
    %501 = vmatprep.mubr.f32.mxu0 0.0
    %502 = vmatmul.mubr.f32.gmra.mrb[0].mxu0 %v412
    %v503 = vpop.f32.mrb[0].mxu0
    %v504 = vadd.f32 0.0, %v503
    %v505 = vpop.f32.mrb[0].mxu0
    %506 = vmatprep.mubr.f32.mxu0 0.0
    %507 = vmatmul.mubr.f32.gmra.mrb[0].mxu0 %v413
    %v508 = vpop.f32.mrb[0].mxu0
    %v509 = vadd.f32 0.0, %v508
    %v510 = vpop.f32.mrb[0].mxu0
    %511 = vmatprep.mubr.f32.mxu0 0.0
    %512 = vmatmul.mubr.f32.gmra.mrb[0].mxu0 %v414
    %v513 = vpop.f32.mrb[0].mxu0
    %v514 = vadd.f32 0.0, %v513
    %v515 = vpop.f32.mrb[0].mxu0
    %516 = vdwg.mxu0
    %v517 = vadd.f32 %v407, %v499
    %v518 = vadd.f32 %v408, %v504
    %v519 = vadd.f32 %v409, %v509
    %v520 = vadd.f32 %v410, %v514
    %v521 = vld [vmem:[#allocation2 + $0x4] sm:$0xff]
    %v522 = vld [vmem:[#allocation2 + $0xc] sm:$0xff]
    %v523 = vld [vmem:[#allocation2 + $0x1c] sm:$0xff]
    %v524 = vld [vmem:[#allocation2 + $0x24] sm:$0xff]
    %s525 = scalar_lea.vmem [#allocation3], 512
    %v526 = vld [vmem:[%s525] sm:$0xff]
    %v527 = vld [vmem:[%s525 + $0x8] sm:$0xff]
    %v528 = vld [vmem:[%s525 + $0x10] sm:$0xff]
    %v529 = vld [vmem:[%s525 + $0x18] sm:$0xff]
    %v530 = vld [vmem:[%s525 + $0x20] sm:$0xff]
    %v531 = vld [vmem:[%s525 + $0x28] sm:$0xff]
    %v532 = vld [vmem:[%s525 + $0x30] sm:$0xff]
    %v533 = vld [vmem:[%s525 + $0x38] sm:$0xff]
    %v534 = vld [vmem:[%s525 + $0x40] sm:$0xff]
    %v535 = vld [vmem:[%s525 + $0x48] sm:$0xff]
    %v536 = vld [vmem:[%s525 + $0x50] sm:$0xff]
    %v537 = vld [vmem:[%s525 + $0x58] sm:$0xff]
    %v538 = vld [vmem:[%s525 + $0x60] sm:$0xff]
    %v539 = vld [vmem:[%s525 + $0x68] sm:$0xff]
    %v540 = vld [vmem:[%s525 + $0x70] sm:$0xff]
    %v541 = vld [vmem:[%s525 + $0x78] sm:$0xff]
    %542 = vmatprep.subr.mxu0 0.0
    %543 = vmatpush1.msra.mxu0 %v526
    %544 = vmatprep.subr.mxu0 0.0
    %545 = vmatpush1.msra.mxu0 %v527
    %546 = vmatprep.subr.mxu0 0.0
    %547 = vmatpush1.msra.mxu0 %v528
    %548 = vmatprep.subr.mxu0 0.0
    %549 = vmatpush1.msra.mxu0 %v529
    %550 = vmatprep.subr.mxu0 0.0
    %551 = vmatpush1.msra.mxu0 %v530
    %552 = vmatprep.subr.mxu0 0.0
    %553 = vmatpush1.msra.mxu0 %v531
    %554 = vmatprep.subr.mxu0 0.0
    %555 = vmatpush1.msra.mxu0 %v532
    %556 = vmatprep.subr.mxu0 0.0
    %557 = vmatpush1.msra.mxu0 %v533
    %558 = vmatprep.subr.mxu0 0.0
    %559 = vmatpush1.msra.mxu0 %v534
    %560 = vmatprep.subr.mxu0 0.0
    %561 = vmatpush1.msra.mxu0 %v535
    %562 = vmatprep.subr.mxu0 0.0
    %563 = vmatpush1.msra.mxu0 %v536
    %564 = vmatprep.subr.mxu0 0.0
    %565 = vmatpush1.msra.mxu0 %v537
    %566 = vmatprep.subr.mxu0 0.0
    %567 = vmatpush1.msra.mxu0 %v538
    %568 = vmatprep.subr.mxu0 0.0
    %569 = vmatpush1.msra.mxu0 %v539
    %570 = vmatprep.subr.mxu0 0.0
    %571 = vmatpush1.msra.mxu0 %v540
    %572 = vmatprep.subr.mxu0 0.0
    %573 = vmatpush1.msra.mxu0 %v541
    %574 = vmatprep.subr.mxu0 0.0
    %575 = vmatpush1.msra.mxu0 0.0
    %576 = vmatprep.subr.mxu0 0.0
    %577 = vmatpush1.msra.mxu0 0.0
    %578 = vmatprep.subr.mxu0 0.0
    %579 = vmatpush1.msra.mxu0 0.0
    %580 = vmatprep.subr.mxu0 0.0
    %581 = vmatpush1.msra.mxu0 0.0
    %582 = vmatprep.subr.mxu0 0.0
    %583 = vmatpush1.msra.mxu0 0.0
    %584 = vmatprep.subr.mxu0 0.0
    %585 = vmatpush1.msra.mxu0 0.0
    %586 = vmatprep.subr.mxu0 0.0
    %587 = vmatpush1.msra.mxu0 0.0
    %588 = vmatprep.subr.mxu0 0.0
    %589 = vmatpush1.msra.mxu0 0.0
    %590 = vmatprep.subr.mxu0 0.0
    %591 = vmatpush1.msra.mxu0 0.0
    %592 = vmatprep.subr.mxu0 0.0
    %593 = vmatpush1.msra.mxu0 0.0
    %594 = vmatprep.subr.mxu0 0.0
    %595 = vmatpush1.msra.mxu0 0.0
    %596 = vmatprep.subr.mxu0 0.0
    %597 = vmatpush1.msra.mxu0 0.0
    %598 = vmatprep.subr.mxu0 0.0
    %599 = vmatpush1.msra.mxu0 0.0
    %600 = vmatprep.subr.mxu0 0.0
    %601 = vmatpush1.msra.mxu0 0.0
    %602 = vmatprep.subr.mxu0 0.0
    %603 = vmatpush1.msra.mxu0 0.0
    %604 = vmatprep.subr.mxu0 0.0
    %605 = vmatpush1.msra.mxu0 0.0
    %606 = vmatprep.mubr.f32.mxu0 0.0
    %607 = vmatmul.mubr.f32.gmra.mrb[0].mxu0 %v521
    %v608 = vpop.f32.mrb[0].mxu0
    %v609 = vadd.f32 0.0, %v608
    %v610 = vpop.f32.mrb[0].mxu0
    %611 = vmatprep.mubr.f32.mxu0 0.0
    %612 = vmatmul.mubr.f32.gmra.mrb[0].mxu0 %v522
    %v613 = vpop.f32.mrb[0].mxu0
    %v614 = vadd.f32 0.0, %v613
    %v615 = vpop.f32.mrb[0].mxu0
    %616 = vmatprep.mubr.f32.mxu0 0.0
    %617 = vmatmul.mubr.f32.gmra.mrb[0].mxu0 %v523
    %v618 = vpop.f32.mrb[0].mxu0
    %v619 = vadd.f32 0.0, %v618
    %v620 = vpop.f32.mrb[0].mxu0
    %621 = vmatprep.mubr.f32.mxu0 0.0
    %622 = vmatmul.mubr.f32.gmra.mrb[0].mxu0 %v524
    %v623 = vpop.f32.mrb[0].mxu0
    %v624 = vadd.f32 0.0, %v623
    %v625 = vpop.f32.mrb[0].mxu0
    %626 = vdwg.mxu0
    %v627 = vadd.f32 %v517, %v609
    %v628 = vadd.f32 %v518, %v614
    %v629 = vadd.f32 %v519, %v619
    %v630 = vadd.f32 %v520, %v624
    %v631 = vld [vmem:[#allocation5] sm:$0x1]
    %v633 = vlaneseq
    %v634 = vshrl.u32 %v633, 7
    %v635 = vsub.s32 0, %v634
    %v636 = vrot.slane %v631, %v635
    %v638 = vadd.f32 %v627, %v636
    %v639 = vadd.f32 %v628, %v636
    %v640 = vadd.f32 %v629, %v636
    %v641 = vadd.f32 %v630, %v636
    %p642 = scmp.ne.s32.totalorder 0, 0
    // Predicated region
    $region46: #{cnn_feature_extraction_forward.8} parent=1 // pred_check
      %p643 = pneg %p642
    $region47: #{cnn_feature_extraction_forward.8} parent=1 // pred_check_branch
      %645 = sbr.rel (%p643) target = $region49
    $region48: #{cnn_feature_extraction_forward.8} parent=1 // pred_region
      %646 = vst [vmem:[#allocation2 + $0x2] sm:$0xff] %v638
      %647 = vst [vmem:[#allocation2 + $0xa] sm:$0xff] %v639
      %648 = vst [vmem:[#allocation2 + $0x1a] sm:$0xff] %v640
      %649 = vst [vmem:[#allocation2 + $0x22] sm:$0xff] %v641
    $region49: #{cnn_feature_extraction_forward.8} parent=1 // pred_fallthru
      _
    // Predicated region
    $region50: #{cnn_feature_extraction_forward.8} parent=1 // pred_check
      %p650 = pneg %p72
    $region51: #{cnn_feature_extraction_forward.8} parent=1 // pred_check_branch
      %652 = sbr.rel (%p650) target = $region53
    $region52: #{cnn_feature_extraction_forward.8} parent=1 // pred_region
      %v653 = vadd.f32 %v638, %v639
      %v654 = vadd.f32 %v653, %v640
      %v655 = vadd.f32 %v654, %v641
      %v656 = vrot.slane %v655, 4
      %v657 = vadd.f32 %v655, %v656
      %v658 = vrot.slane %v657, 2
      %v659 = vadd.f32 %v657, %v658
      %v660 = vrot.slane %v659, 1
      %v661 = vadd.f32 %v659, %v660
      %v662 = vld [vmem:[%s5] sm:$0xff]
      %v663 = vld [vmem:[%s5 + $0x8] sm:$0xff]
      %v664 = vld [vmem:[%s5 + $0x10] sm:$0xff]
      %v665 = vld [vmem:[%s5 + $0x18] sm:$0xff]
      %v666 = vld [vmem:[%s5 + $0x20] sm:$0xff]
      %v667 = vld [vmem:[%s5 + $0x28] sm:$0xff]
      %v668 = vld [vmem:[%s5 + $0x30] sm:$0xff]
      %v669 = vld [vmem:[%s5 + $0x38] sm:$0xff]
      %v670 = vld [vmem:[%s5 + $0x40] sm:$0xff]
      %v671 = vld [vmem:[%s5 + $0x48] sm:$0xff]
      %v672 = vld [vmem:[%s5 + $0x50] sm:$0xff]
      %v673 = vld [vmem:[%s5 + $0x58] sm:$0xff]
      %v674 = vld [vmem:[%s5 + $0x60] sm:$0xff]
      %v675 = vld [vmem:[%s5 + $0x68] sm:$0xff]
      %v676 = vld [vmem:[%s5 + $0x70] sm:$0xff]
      %v677 = vld [vmem:[%s5 + $0x78] sm:$0xff]
      %678 = vmatprep.subr.mxu0 0.0
      %679 = vmatpush1.msra.mxu0 %v662
      %680 = vmatprep.subr.mxu0 0.0
      %681 = vmatpush1.msra.mxu0 %v663
      %682 = vmatprep.subr.mxu0 0.0
      %683 = vmatpush1.msra.mxu0 %v664
      %684 = vmatprep.subr.mxu0 0.0
      %685 = vmatpush1.msra.mxu0 %v665
      %686 = vmatprep.subr.mxu0 0.0
      %687 = vmatpush1.msra.mxu0 %v666
      %688 = vmatprep.subr.mxu0 0.0
      %689 = vmatpush1.msra.mxu0 %v667
      %690 = vmatprep.subr.mxu0 0.0
      %691 = vmatpush1.msra.mxu0 %v668
      %692 = vmatprep.subr.mxu0 0.0
      %693 = vmatpush1.msra.mxu0 %v669
      %694 = vmatprep.subr.mxu0 0.0
      %695 = vmatpush1.msra.mxu0 %v670
      %696 = vmatprep.subr.mxu0 0.0
      %697 = vmatpush1.msra.mxu0 %v671
      %698 = vmatprep.subr.mxu0 0.0
      %699 = vmatpush1.msra.mxu0 %v672
      %700 = vmatprep.subr.mxu0 0.0
      %701 = vmatpush1.msra.mxu0 %v673
      %702 = vmatprep.subr.mxu0 0.0
      %703 = vmatpush1.msra.mxu0 %v674
      %704 = vmatprep.subr.mxu0 0.0
      %705 = vmatpush1.msra.mxu0 %v675
      %706 = vmatprep.subr.mxu0 0.0
      %707 = vmatpush1.msra.mxu0 %v676
      %708 = vmatprep.subr.mxu0 0.0
      %709 = vmatpush1.msra.mxu0 %v677
      %710 = vmatprep.subr.mxu0 0.0
      %711 = vmatpush1.msra.mxu0 0.0
      %712 = vmatprep.subr.mxu0 0.0
      %713 = vmatpush1.msra.mxu0 0.0
      %714 = vmatprep.subr.mxu0 0.0
      %715 = vmatpush1.msra.mxu0 0.0
      %716 = vmatprep.subr.mxu0 0.0
      %717 = vmatpush1.msra.mxu0 0.0
      %718 = vmatprep.subr.mxu0 0.0
      %719 = vmatpush1.msra.mxu0 0.0
      %720 = vmatprep.subr.mxu0 0.0
      %721 = vmatpush1.msra.mxu0 0.0
      %722 = vmatprep.subr.mxu0 0.0
      %723 = vmatpush1.msra.mxu0 0.0
      %724 = vmatprep.subr.mxu0 0.0
      %725 = vmatpush1.msra.mxu0 0.0
      %726 = vmatprep.subr.mxu0 0.0
      %727 = vmatpush1.msra.mxu0 0.0
      %728 = vmatprep.subr.mxu0 0.0
      %729 = vmatpush1.msra.mxu0 0.0
      %730 = vmatprep.subr.mxu0 0.0
      %731 = vmatpush1.msra.mxu0 0.0
      %732 = vmatprep.subr.mxu0 0.0
      %733 = vmatpush1.msra.mxu0 0.0
      %734 = vmatprep.subr.mxu0 0.0
      %735 = vmatpush1.msra.mxu0 0.0
      %736 = vmatprep.subr.mxu0 0.0
      %737 = vmatpush1.msra.mxu0 0.0
      %738 = vmatprep.subr.mxu0 0.0
      %739 = vmatpush1.msra.mxu0 0.0
      %740 = vmatprep.subr.mxu0 0.0
      %741 = vmatpush1.msra.mxu0 0.0
      %742 = vmatprep.mubr.f32.mxu0 0.0
      %743 = vmatmul.mubr.f32.gmra.mrb[0].mxu0 %v661
      %v744 = vpop.f32.mrb[0].mxu0
      %v745 = vadd.f32 0.0, %v744
      %v746 = vpop.f32.mrb[0].mxu0
      %747 = vdwg.mxu0
      %v748 = vmul.f32 %v745, 0.001953125
      %v749 = vlaneseq
      %v750 = vshrl.u32 %v749, 7
      %v751 = vsub.s32 0, %v750
      %v752 = vrot.slane %v748, %v751
      %v753 = vsub.f32 %v638, %v752
      %v754 = vsub.f32 %v639, %v752
      %v755 = vsub.f32 %v640, %v752
      %v756 = vsub.f32 %v641, %v752
      %v757 = vmul.f32 %v753, %v753
      %v758 = vmul.f32 %v754, %v754
      %v759 = vmul.f32 %v755, %v755
      %v760 = vmul.f32 %v756, %v756
      %v761 = vadd.f32 %v757, %v758
      %v762 = vadd.f32 %v761, %v759
      %v763 = vadd.f32 %v762, %v760
      %v764 = vrot.slane %v763, 4
      %v765 = vadd.f32 %v763, %v764
      %v766 = vrot.slane %v765, 2
      %v767 = vadd.f32 %v765, %v766
      %v768 = vrot.slane %v767, 1
      %v769 = vadd.f32 %v767, %v768
      %770 = vmatprep.subr.mxu0 0.0
      %771 = vmatpush1.msra.mxu0 %v662
      %772 = vmatprep.subr.mxu0 0.0
      %773 = vmatpush1.msra.mxu0 %v663
      %774 = vmatprep.subr.mxu0 0.0
      %775 = vmatpush1.msra.mxu0 %v664
      %776 = vmatprep.subr.mxu0 0.0
      %777 = vmatpush1.msra.mxu0 %v665
      %778 = vmatprep.subr.mxu0 0.0
      %779 = vmatpush1.msra.mxu0 %v666
      %780 = vmatprep.subr.mxu0 0.0
      %781 = vmatpush1.msra.mxu0 %v667
      %782 = vmatprep.subr.mxu0 0.0
      %783 = vmatpush1.msra.mxu0 %v668
      %784 = vmatprep.subr.mxu0 0.0
      %785 = vmatpush1.msra.mxu0 %v669
      %786 = vmatprep.subr.mxu0 0.0
      %787 = vmatpush1.msra.mxu0 %v670
      %788 = vmatprep.subr.mxu0 0.0
      %789 = vmatpush1.msra.mxu0 %v671
      %790 = vmatprep.subr.mxu0 0.0
      %791 = vmatpush1.msra.mxu0 %v672
      %792 = vmatprep.subr.mxu0 0.0
      %793 = vmatpush1.msra.mxu0 %v673
      %794 = vmatprep.subr.mxu0 0.0
      %795 = vmatpush1.msra.mxu0 %v674
      %796 = vmatprep.subr.mxu0 0.0
      %797 = vmatpush1.msra.mxu0 %v675
      %798 = vmatprep.subr.mxu0 0.0
      %799 = vmatpush1.msra.mxu0 %v676
      %800 = vmatprep.subr.mxu0 0.0
      %801 = vmatpush1.msra.mxu0 %v677
      %802 = vmatprep.subr.mxu0 0.0
      %803 = vmatpush1.msra.mxu0 0.0
      %804 = vmatprep.subr.mxu0 0.0
      %805 = vmatpush1.msra.mxu0 0.0
      %806 = vmatprep.subr.mxu0 0.0
      %807 = vmatpush1.msra.mxu0 0.0
      %808 = vmatprep.subr.mxu0 0.0
      %809 = vmatpush1.msra.mxu0 0.0
      %810 = vmatprep.subr.mxu0 0.0
      %811 = vmatpush1.msra.mxu0 0.0
      %812 = vmatprep.subr.mxu0 0.0
      %813 = vmatpush1.msra.mxu0 0.0
      %814 = vmatprep.subr.mxu0 0.0
      %815 = vmatpush1.msra.mxu0 0.0
      %816 = vmatprep.subr.mxu0 0.0
      %817 = vmatpush1.msra.mxu0 0.0
      %818 = vmatprep.subr.mxu0 0.0
      %819 = vmatpush1.msra.mxu0 0.0
      %820 = vmatprep.subr.mxu0 0.0
      %821 = vmatpush1.msra.mxu0 0.0
      %822 = vmatprep.subr.mxu0 0.0
      %823 = vmatpush1.msra.mxu0 0.0
      %824 = vmatprep.subr.mxu0 0.0
      %825 = vmatpush1.msra.mxu0 0.0
      %826 = vmatprep.subr.mxu0 0.0
      %827 = vmatpush1.msra.mxu0 0.0
      %828 = vmatprep.subr.mxu0 0.0
      %829 = vmatpush1.msra.mxu0 0.0
      %830 = vmatprep.subr.mxu0 0.0
      %831 = vmatpush1.msra.mxu0 0.0
      %832 = vmatprep.subr.mxu0 0.0
      %833 = vmatpush1.msra.mxu0 0.0
      %834 = vmatprep.mubr.f32.mxu0 0.0
      %835 = vmatmul.mubr.f32.gmra.mrb[0].mxu0 %v769
      %v836 = vpop.f32.mrb[0].mxu0
      %v837 = vadd.f32 0.0, %v836
      %v838 = vpop.f32.mrb[0].mxu0
      %839 = vdwg.mxu0
      %v840 = vmul.f32 %v837, 0.001953125
      %v841 = vld [vmem:[#allocation7] sm:$0x1]
      %v842 = vadd.f32 %v840, 1e-05
      %v843 = vrsqrt.pop %v842
      %v844 = vmul.f32 %v841, %v843
      %v846 = vlaneseq
      %v847 = vshrl.u32 %v846, 7
      %v848 = vsub.s32 0, %v847
      %v849 = vrot.slane %v844, %v848
      %v851 = vmul.f32 %v753, %v849
      %v852 = vmul.f32 %v754, %v849
      %v853 = vmul.f32 %v755, %v849
      %v854 = vmul.f32 %v756, %v849
      %v855 = vld [vmem:[#allocation8] sm:$0x1]
      %v857 = vlaneseq
      %v858 = vshrl.u32 %v857, 7
      %v859 = vsub.s32 0, %v858
      %v860 = vrot.slane %v855, %v859
      %v862 = vadd.f32 %v851, %v860
      %v863 = vadd.f32 %v852, %v860
      %v864 = vadd.f32 %v853, %v860
      %v865 = vadd.f32 %v854, %v860
      %v866 = vmin.f32 %v862, 0.0
      %v867 = vmin.f32 %v863, 0.0
      %v868 = vmin.f32 %v864, 0.0
      %v869 = vmin.f32 %v865, 0.0
      %v870 = vmul.f32 %v866, 1.442695
      %v871 = vpow.pop %v870
      %v872 = vmul.f32 %v867, 1.442695
      %v873 = vpow.pop %v872
      %v874 = vmul.f32 %v868, 1.442695
      %v875 = vpow.pop %v874
      %v876 = vmul.f32 %v869, 1.442695
      %v877 = vpow.pop %v876
      %v878 = vsub.f32 %v871, 1.0
      %v879 = vsub.f32 %v873, 1.0
      %v880 = vsub.f32 %v875, 1.0
      %v881 = vsub.f32 %v877, 1.0
      %v882 = vmul.f32 %v878, 1.6732632
      %v883 = vmul.f32 %v879, 1.6732632
      %v884 = vmul.f32 %v880, 1.6732632
      %v885 = vmul.f32 %v881, 1.6732632
      %vm886 = vcmp.gt.f32.partialorder %v862, 0.0
      %vm887 = vcmp.gt.f32.partialorder %v863, 0.0
      %vm888 = vcmp.gt.f32.partialorder %v864, 0.0
      %vm889 = vcmp.gt.f32.partialorder %v865, 0.0
      %v890 = vsel %vm886, %v862, %v882
      %v891 = vsel %vm887, %v863, %v883
      %v892 = vsel %vm888, %v864, %v884
      %v893 = vsel %vm889, %v865, %v885
      %v894 = vmul.f32 %v890, 1.050701
      %v895 = vmul.f32 %v891, 1.050701
      %v896 = vmul.f32 %v892, 1.050701
      %v897 = vmul.f32 %v893, 1.050701
      %898 = vst [vmem:[%s6] sm:$0xff] %v894
      %899 = vst [vmem:[%s6 + $0x8] sm:$0xff] %v895
      %900 = vst [vmem:[%s6 + $0x10] sm:$0xff] %v896
      %901 = vst [vmem:[%s6 + $0x18] sm:$0xff] %v897
    $region53: #{cnn_feature_extraction_forward.8} parent=1 // pred_fallthru
      _
    // Predicated region
    $region54: #{cnn_feature_extraction_forward.8} parent=1 // pred_check
      _
    $region55: #{cnn_feature_extraction_forward.8} parent=1 // pred_check_branch
      %903 = sbr.rel (0) target = $region57
    $region56: #{cnn_feature_extraction_forward.8} parent=1 // pred_region
      _
    $region57: #{cnn_feature_extraction_forward.8} parent=1 // pred_fallthru
      _
    // Predicated region
    $region58: #{cnn_feature_extraction_forward.8} parent=1 // pred_check
      _
    $region59: #{cnn_feature_extraction_forward.8} parent=1 // pred_check_branch
      %905 = sbr.rel (0) target = $region61
    $region60: #{cnn_feature_extraction_forward.8} parent=1 // pred_region
      _
    $region61: #{cnn_feature_extraction_forward.8} parent=1 // pred_fallthru
      _
    %906 = vsyncpa [#allocation4], 1
    %907 = vsyncpa [#allocation6], 1
    %908 = vsyncpa [#allocation9], 1

// kernel: cnn_feature_extraction_forward.9
$region0: #{cnn_feature_extraction_forward.9}
  #allocation0 [shape = 'u32[]', space=smem, size = 0x4, offset = 0x4, fixed_abs, tag = 'smem constant byte address 0x4 - core index']
  #allocation1 [shape = 'u32[144,128]{1,0:T(1,128)}', space=vmem, size = 0x12000, scoped, tag = 'internal scratch']
  #allocation2 [shape = 'f32[2,22,128]{2,1,0:T(8,128)}', space=vmem, size = 0x6000, scoped, tag = 'scratch operand']
  %s0 = inlined_call_operand.vmem [shape: f32[2,16,128], index: 0, kind: input, shape index: {}]
  %s1 = inlined_call_operand.hbm [shape: f32[1,7,128,128], index: 1, kind: input, shape index: {}]
  %s2 = inlined_call_operand.hbm [shape: f32[1,1,128], index: 2, kind: input, shape index: {}]
  %s3 = inlined_call_operand.hbm [shape: f32[1,128], index: 3, kind: input, shape index: {}]
  %s4 = inlined_call_operand.hbm [shape: f32[1,128], index: 4, kind: input, shape index: {}]
  %s5 = inlined_call_operand.vmem [shape: f32[128,128], index: 5, kind: input, shape index: {}]
  %s6 = inlined_call_operand.vmem [shape: f32[32,128], index: 6, kind: output, shape index: {}]
  %s7 = sld [smem:[#allocation0]]
  $region62: #{cnn_feature_extraction_forward.9} parent=0
    _
  %s9 = ssub.s32 1, %s7
  %s10 = scalar_select 0, %s9, %s7
  $region1: #{cnn_feature_extraction_forward.9} parent=0
    #allocation3 [shape = 'u8[458752]{0}', space=vmem, size = 0x70000, scoped, tag = 'input window, operand 1, single buffered']
    #allocation4 [shape = 's32[1]{0}', space=sflag, size = 0x4, scoped, tag = 'scoped memory for cnn_feature_extraction_forward.9']
    #allocation5 [shape = 'u8[512]{0}', space=vmem, size = 0x400, scoped, tag = 'input window, operand 2, single buffered']
    #allocation6 [shape = 's32[1]{0}', space=sflag, size = 0x4, scoped, tag = 'scoped memory for cnn_feature_extraction_forward.9']
    #allocation7 [shape = 'u8[512]{0}', space=vmem, size = 0x400, scoped, tag = 'input window, operand 3, single buffered']
    #allocation8 [shape = 'u8[512]{0}', space=vmem, size = 0x400, scoped, tag = 'input window, operand 4, single buffered']
    #allocation9 [shape = 's32[1]{0}', space=sflag, size = 0x4, scoped, tag = 'scoped memory for cnn_feature_extraction_forward.9']
    %11 = vsyncpa [#allocation4], 0
    %12 = vsyncpa [#allocation6], 0
    %13 = vsyncpa [#allocation9], 0
    // Predicated region
    $region2: #{cnn_feature_extraction_forward.9} parent=1 // pred_check
      _
    $region3: #{cnn_feature_extraction_forward.9} parent=1 // pred_check_branch
      %15 = sbr.rel (0) target = $region5
    $region4: #{cnn_feature_extraction_forward.9} parent=1 // pred_region
      _
    $region5: #{cnn_feature_extraction_forward.9} parent=1 // pred_fallthru
      _
    // Predicated region
    $region6: #{cnn_feature_extraction_forward.9} parent=1 // pred_check
      _
    $region7: #{cnn_feature_extraction_forward.9} parent=1 // pred_check_branch
      %17 = sbr.rel (0) target = $region9
    $region8: #{cnn_feature_extraction_forward.9} parent=1 // pred_region
      %s19 = ssub.s32 14336, 14336
      %20 = vsyncadd [#allocation4], %s19
      %s21 = sshll.u32 [#allocation3], 4
      %s22 = int_to_ptr.vmem [resolvable:$true] %s21
      %27 = dma.hbm_to_vmem [thread:$0]  %s1, 14336, %s22, [#allocation4], 128, 128, 8
    $region9: #{cnn_feature_extraction_forward.9} parent=1 // pred_fallthru
      _
    // Predicated region
    $region10: #{cnn_feature_extraction_forward.9} parent=1 // pred_check
      _
    $region11: #{cnn_feature_extraction_forward.9} parent=1 // pred_check_branch
      %29 = sbr.rel (0) target = $region13
    $region12: #{cnn_feature_extraction_forward.9} parent=1 // pred_region
      %s31 = ssub.s32 16, 16
      %32 = vsyncadd [#allocation6], %s31
      %s34 = sshll.u32 [#allocation5], 4
      %s35 = int_to_ptr.vmem [resolvable:$true] %s34
      %37 = dma.hbm_to_vmem [thread:$0]  %s2, 16, %s35, [#allocation6]
    $region13: #{cnn_feature_extraction_forward.9} parent=1 // pred_fallthru
      _
    // Predicated region
    $region14: #{cnn_feature_extraction_forward.9} parent=1 // pred_check
      _
    $region15: #{cnn_feature_extraction_forward.9} parent=1 // pred_check_branch
      %39 = sbr.rel (0) target = $region17
    $region16: #{cnn_feature_extraction_forward.9} parent=1 // pred_region
      %s41 = ssub.s32 16, 16
      %42 = vsyncadd [#allocation6], %s41
      %s44 = sshll.u32 [#allocation7], 4
      %s45 = int_to_ptr.vmem [resolvable:$true] %s44
      %47 = dma.hbm_to_vmem [thread:$0]  %s3, 16, %s45, [#allocation6]
    $region17: #{cnn_feature_extraction_forward.9} parent=1 // pred_fallthru
      _
    // Predicated region
    $region18: #{cnn_feature_extraction_forward.9} parent=1 // pred_check
      _
    $region19: #{cnn_feature_extraction_forward.9} parent=1 // pred_check_branch
      %49 = sbr.rel (0) target = $region21
    $region20: #{cnn_feature_extraction_forward.9} parent=1 // pred_region
      %s51 = ssub.s32 16, 16
      %52 = vsyncadd [#allocation9], %s51
      %s54 = sshll.u32 [#allocation8], 4
      %s55 = int_to_ptr.vmem [resolvable:$true] %s54
      %57 = dma.hbm_to_vmem [thread:$0]  %s4, 16, %s55, [#allocation9]
    $region21: #{cnn_feature_extraction_forward.9} parent=1 // pred_fallthru
      _
    // Predicated region
    $region22: #{cnn_feature_extraction_forward.9} parent=1 // pred_check
      _
    $region23: #{cnn_feature_extraction_forward.9} parent=1 // pred_check_branch
      %59 = sbr.rel (0) target = $region25
    $region24: #{cnn_feature_extraction_forward.9} parent=1 // pred_region
      _
    $region25: #{cnn_feature_extraction_forward.9} parent=1 // pred_fallthru
      _
    // Predicated region
    $region26: #{cnn_feature_extraction_forward.9} parent=1 // pred_check
      _
    $region27: #{cnn_feature_extraction_forward.9} parent=1 // pred_check_branch
      %61 = sbr.rel (0) target = $region29
    $region28: #{cnn_feature_extraction_forward.9} parent=1 // pred_region
      %62 = dma.done [#allocation4], 14336
    $region29: #{cnn_feature_extraction_forward.9} parent=1 // pred_fallthru
      _
    // Predicated region
    $region30: #{cnn_feature_extraction_forward.9} parent=1 // pred_check
      _
    $region31: #{cnn_feature_extraction_forward.9} parent=1 // pred_check_branch
      %64 = sbr.rel (0) target = $region33
    $region32: #{cnn_feature_extraction_forward.9} parent=1 // pred_region
      %65 = dma.done [#allocation6], 16
    $region33: #{cnn_feature_extraction_forward.9} parent=1 // pred_fallthru
      _
    // Predicated region
    $region34: #{cnn_feature_extraction_forward.9} parent=1 // pred_check
      _
    $region35: #{cnn_feature_extraction_forward.9} parent=1 // pred_check_branch
      %67 = sbr.rel (0) target = $region37
    $region36: #{cnn_feature_extraction_forward.9} parent=1 // pred_region
      %68 = dma.done [#allocation6], 16
    $region37: #{cnn_feature_extraction_forward.9} parent=1 // pred_fallthru
      _
    // Predicated region
    $region38: #{cnn_feature_extraction_forward.9} parent=1 // pred_check
      _
    $region39: #{cnn_feature_extraction_forward.9} parent=1 // pred_check_branch
      %70 = sbr.rel (0) target = $region41
    $region40: #{cnn_feature_extraction_forward.9} parent=1 // pred_region
      %71 = dma.done [#allocation9], 16
    $region41: #{cnn_feature_extraction_forward.9} parent=1 // pred_fallthru
      _
    %p72 = scmp.eq.s32.totalorder 0, 0
    // Predicated region
    $region42: #{cnn_feature_extraction_forward.9} parent=1 // pred_check
      %p73 = pneg %p72
    $region43: #{cnn_feature_extraction_forward.9} parent=1 // pred_check_branch
      %75 = sbr.rel (%p73) target = $region45
    $region44: #{cnn_feature_extraction_forward.9} parent=1 // pred_region
      %76 = vst [vmem:[#allocation2] sm:$0xff] 0.0
      %77 = vst [vmem:[#allocation2 + $0x8] sm:$0xff] 0.0
      %78 = vst [vmem:[#allocation2 + $0x10] sm:$0x3f] 0.0
      %79 = vst [vmem:[#allocation2 + $0x18] sm:$0xff] 0.0
      %80 = vst [vmem:[#allocation2 + $0x20] sm:$0xff] 0.0
      %81 = vst [vmem:[#allocation2 + $0x28] sm:$0x3f] 0.0
      %v82 = vld [vmem:[%s0] sm:$0xff]
      %v83 = vld [vmem:[%s0 + $0x8] sm:$0xff]
      %v84 = vld [vmem:[%s0 + $0x10] sm:$0xff]
      %v85 = vld [vmem:[%s0 + $0x18] sm:$0xff]
      %86 = vst [vmem:[#allocation2 + $0x3] sm:$0xff] %v82
      %87 = vst [vmem:[#allocation2 + $0xb] sm:$0xff] %v83
      %88 = vst [vmem:[#allocation2 + $0x1b] sm:$0xff] %v84
      %89 = vst [vmem:[#allocation2 + $0x23] sm:$0xff] %v85
    $region45: #{cnn_feature_extraction_forward.9} parent=1 // pred_fallthru
      _
    %v90 = vld [vmem:[#allocation2] sm:$0xff]
    %v91 = vld [vmem:[#allocation2 + $0x8] sm:$0xff]
    %v92 = vld [vmem:[#allocation2 + $0x18] sm:$0xff]
    %v93 = vld [vmem:[#allocation2 + $0x20] sm:$0xff]
    %v94 = vld [vmem:[#allocation3] sm:$0xff]
    %v95 = vld [vmem:[#allocation3 + $0x8] sm:$0xff]
    %v96 = vld [vmem:[#allocation3 + $0x10] sm:$0xff]
    %v97 = vld [vmem:[#allocation3 + $0x18] sm:$0xff]
    %v98 = vld [vmem:[#allocation3 + $0x20] sm:$0xff]
    %v99 = vld [vmem:[#allocation3 + $0x28] sm:$0xff]
    %v100 = vld [vmem:[#allocation3 + $0x30] sm:$0xff]
    %v101 = vld [vmem:[#allocation3 + $0x38] sm:$0xff]
    %v102 = vld [vmem:[#allocation3 + $0x40] sm:$0xff]
    %v103 = vld [vmem:[#allocation3 + $0x48] sm:$0xff]
    %v104 = vld [vmem:[#allocation3 + $0x50] sm:$0xff]
    %v105 = vld [vmem:[#allocation3 + $0x58] sm:$0xff]
    %v106 = vld [vmem:[#allocation3 + $0x60] sm:$0xff]
    %v107 = vld [vmem:[#allocation3 + $0x68] sm:$0xff]
    %v108 = vld [vmem:[#allocation3 + $0x70] sm:$0xff]
    %v109 = vld [vmem:[#allocation3 + $0x78] sm:$0xff]
    %v110 = vld [vmem:[#allocation2 + $0x1] sm:$0xff]
    %v111 = vld [vmem:[#allocation2 + $0x9] sm:$0xff]
    %v112 = vld [vmem:[#allocation2 + $0x19] sm:$0xff]
    %v113 = vld [vmem:[#allocation2 + $0x21] sm:$0xff]
    %s114 = scalar_lea.vmem [#allocation3], 128
    %v115 = vld [vmem:[%s114] sm:$0xff]
    %v116 = vld [vmem:[%s114 + $0x8] sm:$0xff]
    %v117 = vld [vmem:[%s114 + $0x10] sm:$0xff]
    %v118 = vld [vmem:[%s114 + $0x18] sm:$0xff]
    %v119 = vld [vmem:[%s114 + $0x20] sm:$0xff]
    %v120 = vld [vmem:[%s114 + $0x28] sm:$0xff]
    %v121 = vld [vmem:[%s114 + $0x30] sm:$0xff]
    %v122 = vld [vmem:[%s114 + $0x38] sm:$0xff]
    %v123 = vld [vmem:[%s114 + $0x40] sm:$0xff]
    %v124 = vld [vmem:[%s114 + $0x48] sm:$0xff]
    %v125 = vld [vmem:[%s114 + $0x50] sm:$0xff]
    %v126 = vld [vmem:[%s114 + $0x58] sm:$0xff]
    %v127 = vld [vmem:[%s114 + $0x60] sm:$0xff]
    %v128 = vld [vmem:[%s114 + $0x68] sm:$0xff]
    %v129 = vld [vmem:[%s114 + $0x70] sm:$0xff]
    %v130 = vld [vmem:[%s114 + $0x78] sm:$0xff]
    %131 = vmatprep.subr.mxu0 0.0
    %132 = vmatpush1.msra.mxu0 %v115
    %133 = vmatprep.subr.mxu0 0.0
    %134 = vmatpush1.msra.mxu0 %v116
    %135 = vmatprep.subr.mxu0 0.0
    %136 = vmatpush1.msra.mxu0 %v117
    %137 = vmatprep.subr.mxu0 0.0
    %138 = vmatpush1.msra.mxu0 %v118
    %139 = vmatprep.subr.mxu0 0.0
    %140 = vmatpush1.msra.mxu0 %v119
    %141 = vmatprep.subr.mxu0 0.0
    %142 = vmatpush1.msra.mxu0 %v120
    %143 = vmatprep.subr.mxu0 0.0
    %144 = vmatpush1.msra.mxu0 %v121
    %145 = vmatprep.subr.mxu0 0.0
    %146 = vmatpush1.msra.mxu0 %v122
    %147 = vmatprep.subr.mxu0 0.0
    %148 = vmatpush1.msra.mxu0 %v123
    %149 = vmatprep.subr.mxu0 0.0
    %150 = vmatpush1.msra.mxu0 %v124
    %151 = vmatprep.subr.mxu0 0.0
    %152 = vmatpush1.msra.mxu0 %v125
    %153 = vmatprep.subr.mxu0 0.0
    %154 = vmatpush1.msra.mxu0 %v126
    %155 = vmatprep.subr.mxu0 0.0
    %156 = vmatpush1.msra.mxu0 %v127
    %157 = vmatprep.subr.mxu0 0.0
    %158 = vmatpush1.msra.mxu0 %v128
    %159 = vmatprep.subr.mxu0 0.0
    %160 = vmatpush1.msra.mxu0 %v129
    %161 = vmatprep.subr.mxu0 0.0
    %162 = vmatpush1.msra.mxu0 %v130
    %163 = vmatprep.subr.mxu0 0.0
    %164 = vmatpush1.msra.mxu0 0.0
    %165 = vmatprep.subr.mxu0 0.0
    %166 = vmatpush1.msra.mxu0 0.0
    %167 = vmatprep.subr.mxu0 0.0
    %168 = vmatpush1.msra.mxu0 0.0
    %169 = vmatprep.subr.mxu0 0.0
    %170 = vmatpush1.msra.mxu0 0.0
    %171 = vmatprep.subr.mxu0 0.0
    %172 = vmatpush1.msra.mxu0 0.0
    %173 = vmatprep.subr.mxu0 0.0
    %174 = vmatpush1.msra.mxu0 0.0
    %175 = vmatprep.subr.mxu0 0.0
    %176 = vmatpush1.msra.mxu0 0.0
    %177 = vmatprep.subr.mxu0 0.0
    %178 = vmatpush1.msra.mxu0 0.0
    %179 = vmatprep.subr.mxu0 0.0
    %180 = vmatpush1.msra.mxu0 0.0
    %181 = vmatprep.subr.mxu0 0.0
    %182 = vmatpush1.msra.mxu0 0.0
    %183 = vmatprep.subr.mxu0 0.0
    %184 = vmatpush1.msra.mxu0 0.0
    %185 = vmatprep.subr.mxu0 0.0
    %186 = vmatpush1.msra.mxu0 0.0
    %187 = vmatprep.subr.mxu0 0.0
    %188 = vmatpush1.msra.mxu0 0.0
    %189 = vmatprep.subr.mxu0 0.0
    %190 = vmatpush1.msra.mxu0 0.0
    %191 = vmatprep.subr.mxu0 0.0
    %192 = vmatpush1.msra.mxu0 0.0
    %193 = vmatprep.subr.mxu0 0.0
    %194 = vmatpush1.msra.mxu0 0.0
    %195 = vmatprep.mubr.f32.mxu0 0.0
    %196 = vmatmul.mubr.f32.gmra.mrb[0].mxu0 %v110
    %v197 = vpop.f32.mrb[0].mxu0
    %v198 = vadd.f32 0.0, %v197
    %v199 = vpop.f32.mrb[0].mxu0
    %200 = vmatprep.mubr.f32.mxu0 0.0
    %201 = vmatmul.mubr.f32.gmra.mrb[0].mxu0 %v111
    %v202 = vpop.f32.mrb[0].mxu0
    %v203 = vadd.f32 0.0, %v202
    %v204 = vpop.f32.mrb[0].mxu0
    %205 = vmatprep.mubr.f32.mxu0 0.0
    %206 = vmatmul.mubr.f32.gmra.mrb[0].mxu0 %v112
    %v207 = vpop.f32.mrb[0].mxu0
    %v208 = vadd.f32 0.0, %v207
    %v209 = vpop.f32.mrb[0].mxu0
    %210 = vmatprep.mubr.f32.mxu0 0.0
    %211 = vmatmul.mubr.f32.gmra.mrb[0].mxu0 %v113
    %v212 = vpop.f32.mrb[0].mxu0
    %v213 = vadd.f32 0.0, %v212
    %v214 = vpop.f32.mrb[0].mxu0
    %215 = vdwg.mxu0
    %216 = vmatprep.subr.mxu0 0.0
    %217 = vmatpush1.msra.mxu0 %v94
    %218 = vmatprep.subr.mxu0 0.0
    %219 = vmatpush1.msra.mxu0 %v95
    %220 = vmatprep.subr.mxu0 0.0
    %221 = vmatpush1.msra.mxu0 %v96
    %222 = vmatprep.subr.mxu0 0.0
    %223 = vmatpush1.msra.mxu0 %v97
    %224 = vmatprep.subr.mxu0 0.0
    %225 = vmatpush1.msra.mxu0 %v98
    %226 = vmatprep.subr.mxu0 0.0
    %227 = vmatpush1.msra.mxu0 %v99
    %228 = vmatprep.subr.mxu0 0.0
    %229 = vmatpush1.msra.mxu0 %v100
    %230 = vmatprep.subr.mxu0 0.0
    %231 = vmatpush1.msra.mxu0 %v101
    %232 = vmatprep.subr.mxu0 0.0
    %233 = vmatpush1.msra.mxu0 %v102
    %234 = vmatprep.subr.mxu0 0.0
    %235 = vmatpush1.msra.mxu0 %v103
    %236 = vmatprep.subr.mxu0 0.0
    %237 = vmatpush1.msra.mxu0 %v104
    %238 = vmatprep.subr.mxu0 0.0
    %239 = vmatpush1.msra.mxu0 %v105
    %240 = vmatprep.subr.mxu0 0.0
    %241 = vmatpush1.msra.mxu0 %v106
    %242 = vmatprep.subr.mxu0 0.0
    %243 = vmatpush1.msra.mxu0 %v107
    %244 = vmatprep.subr.mxu0 0.0
    %245 = vmatpush1.msra.mxu0 %v108
    %246 = vmatprep.subr.mxu0 0.0
    %247 = vmatpush1.msra.mxu0 %v109
    %248 = vmatprep.subr.mxu0 0.0
    %249 = vmatpush1.msra.mxu0 0.0
    %250 = vmatprep.subr.mxu0 0.0
    %251 = vmatpush1.msra.mxu0 0.0
    %252 = vmatprep.subr.mxu0 0.0
    %253 = vmatpush1.msra.mxu0 0.0
    %254 = vmatprep.subr.mxu0 0.0
    %255 = vmatpush1.msra.mxu0 0.0
    %256 = vmatprep.subr.mxu0 0.0
    %257 = vmatpush1.msra.mxu0 0.0
    %258 = vmatprep.subr.mxu0 0.0
    %259 = vmatpush1.msra.mxu0 0.0
    %260 = vmatprep.subr.mxu0 0.0
    %261 = vmatpush1.msra.mxu0 0.0
    %262 = vmatprep.subr.mxu0 0.0
    %263 = vmatpush1.msra.mxu0 0.0
    %264 = vmatprep.subr.mxu0 0.0
    %265 = vmatpush1.msra.mxu0 0.0
    %266 = vmatprep.subr.mxu0 0.0
    %267 = vmatpush1.msra.mxu0 0.0
    %268 = vmatprep.subr.mxu0 0.0
    %269 = vmatpush1.msra.mxu0 0.0
    %270 = vmatprep.subr.mxu0 0.0
    %271 = vmatpush1.msra.mxu0 0.0
    %272 = vmatprep.subr.mxu0 0.0
    %273 = vmatpush1.msra.mxu0 0.0
    %274 = vmatprep.subr.mxu0 0.0
    %275 = vmatpush1.msra.mxu0 0.0
    %276 = vmatprep.subr.mxu0 0.0
    %277 = vmatpush1.msra.mxu0 0.0
    %278 = vmatprep.subr.mxu0 0.0
    %279 = vmatpush1.msra.mxu0 0.0
    %280 = vmatprep.mubr.f32.mxu0 0.0
    %281 = vmatmul.mubr.f32.gmra.mrb[0].mxu0 %v90
    %v282 = vpop.f32.mrb[0].mxu0
    %v283 = vadd.f32 %v198, %v282
    %v284 = vpop.f32.mrb[0].mxu0
    %285 = vmatprep.mubr.f32.mxu0 0.0
    %286 = vmatmul.mubr.f32.gmra.mrb[0].mxu0 %v91
    %v287 = vpop.f32.mrb[0].mxu0
    %v288 = vadd.f32 %v203, %v287
    %v289 = vpop.f32.mrb[0].mxu0
    %290 = vmatprep.mubr.f32.mxu0 0.0
    %291 = vmatmul.mubr.f32.gmra.mrb[0].mxu0 %v92
    %v292 = vpop.f32.mrb[0].mxu0
    %v293 = vadd.f32 %v208, %v292
    %v294 = vpop.f32.mrb[0].mxu0
    %295 = vmatprep.mubr.f32.mxu0 0.0
    %296 = vmatmul.mubr.f32.gmra.mrb[0].mxu0 %v93
    %v297 = vpop.f32.mrb[0].mxu0
    %v298 = vadd.f32 %v213, %v297
    %v299 = vpop.f32.mrb[0].mxu0
    %300 = vdwg.mxu0
    %v301 = vld [vmem:[#allocation2 + $0x2] sm:$0xff]
    %v302 = vld [vmem:[#allocation2 + $0xa] sm:$0xff]
    %v303 = vld [vmem:[#allocation2 + $0x1a] sm:$0xff]
    %v304 = vld [vmem:[#allocation2 + $0x22] sm:$0xff]
    %s305 = scalar_lea.vmem [#allocation3], 256
    %v306 = vld [vmem:[%s305] sm:$0xff]
    %v307 = vld [vmem:[%s305 + $0x8] sm:$0xff]
    %v308 = vld [vmem:[%s305 + $0x10] sm:$0xff]
    %v309 = vld [vmem:[%s305 + $0x18] sm:$0xff]
    %v310 = vld [vmem:[%s305 + $0x20] sm:$0xff]
    %v311 = vld [vmem:[%s305 + $0x28] sm:$0xff]
    %v312 = vld [vmem:[%s305 + $0x30] sm:$0xff]
    %v313 = vld [vmem:[%s305 + $0x38] sm:$0xff]
    %v314 = vld [vmem:[%s305 + $0x40] sm:$0xff]
    %v315 = vld [vmem:[%s305 + $0x48] sm:$0xff]
    %v316 = vld [vmem:[%s305 + $0x50] sm:$0xff]
    %v317 = vld [vmem:[%s305 + $0x58] sm:$0xff]
    %v318 = vld [vmem:[%s305 + $0x60] sm:$0xff]
    %v319 = vld [vmem:[%s305 + $0x68] sm:$0xff]
    %v320 = vld [vmem:[%s305 + $0x70] sm:$0xff]
    %v321 = vld [vmem:[%s305 + $0x78] sm:$0xff]
    %322 = vmatprep.subr.mxu0 0.0
    %323 = vmatpush1.msra.mxu0 %v306
    %324 = vmatprep.subr.mxu0 0.0
    %325 = vmatpush1.msra.mxu0 %v307
    %326 = vmatprep.subr.mxu0 0.0
    %327 = vmatpush1.msra.mxu0 %v308
    %328 = vmatprep.subr.mxu0 0.0
    %329 = vmatpush1.msra.mxu0 %v309
    %330 = vmatprep.subr.mxu0 0.0
    %331 = vmatpush1.msra.mxu0 %v310
    %332 = vmatprep.subr.mxu0 0.0
    %333 = vmatpush1.msra.mxu0 %v311
    %334 = vmatprep.subr.mxu0 0.0
    %335 = vmatpush1.msra.mxu0 %v312
    %336 = vmatprep.subr.mxu0 0.0
    %337 = vmatpush1.msra.mxu0 %v313
    %338 = vmatprep.subr.mxu0 0.0
    %339 = vmatpush1.msra.mxu0 %v314
    %340 = vmatprep.subr.mxu0 0.0
    %341 = vmatpush1.msra.mxu0 %v315
    %342 = vmatprep.subr.mxu0 0.0
    %343 = vmatpush1.msra.mxu0 %v316
    %344 = vmatprep.subr.mxu0 0.0
    %345 = vmatpush1.msra.mxu0 %v317
    %346 = vmatprep.subr.mxu0 0.0
    %347 = vmatpush1.msra.mxu0 %v318
    %348 = vmatprep.subr.mxu0 0.0
    %349 = vmatpush1.msra.mxu0 %v319
    %350 = vmatprep.subr.mxu0 0.0
    %351 = vmatpush1.msra.mxu0 %v320
    %352 = vmatprep.subr.mxu0 0.0
    %353 = vmatpush1.msra.mxu0 %v321
    %354 = vmatprep.subr.mxu0 0.0
    %355 = vmatpush1.msra.mxu0 0.0
    %356 = vmatprep.subr.mxu0 0.0
    %357 = vmatpush1.msra.mxu0 0.0
    %358 = vmatprep.subr.mxu0 0.0
    %359 = vmatpush1.msra.mxu0 0.0
    %360 = vmatprep.subr.mxu0 0.0
    %361 = vmatpush1.msra.mxu0 0.0
    %362 = vmatprep.subr.mxu0 0.0
    %363 = vmatpush1.msra.mxu0 0.0
    %364 = vmatprep.subr.mxu0 0.0
    %365 = vmatpush1.msra.mxu0 0.0
    %366 = vmatprep.subr.mxu0 0.0
    %367 = vmatpush1.msra.mxu0 0.0
    %368 = vmatprep.subr.mxu0 0.0
    %369 = vmatpush1.msra.mxu0 0.0
    %370 = vmatprep.subr.mxu0 0.0
    %371 = vmatpush1.msra.mxu0 0.0
    %372 = vmatprep.subr.mxu0 0.0
    %373 = vmatpush1.msra.mxu0 0.0
    %374 = vmatprep.subr.mxu0 0.0
    %375 = vmatpush1.msra.mxu0 0.0
    %376 = vmatprep.subr.mxu0 0.0
    %377 = vmatpush1.msra.mxu0 0.0
    %378 = vmatprep.subr.mxu0 0.0
    %379 = vmatpush1.msra.mxu0 0.0
    %380 = vmatprep.subr.mxu0 0.0
    %381 = vmatpush1.msra.mxu0 0.0
    %382 = vmatprep.subr.mxu0 0.0
    %383 = vmatpush1.msra.mxu0 0.0
    %384 = vmatprep.subr.mxu0 0.0
    %385 = vmatpush1.msra.mxu0 0.0
    %386 = vmatprep.mubr.f32.mxu0 0.0
    %387 = vmatmul.mubr.f32.gmra.mrb[0].mxu0 %v301
    %v388 = vpop.f32.mrb[0].mxu0
    %v389 = vadd.f32 0.0, %v388
    %v390 = vpop.f32.mrb[0].mxu0
    %391 = vmatprep.mubr.f32.mxu0 0.0
    %392 = vmatmul.mubr.f32.gmra.mrb[0].mxu0 %v302
    %v393 = vpop.f32.mrb[0].mxu0
    %v394 = vadd.f32 0.0, %v393
    %v395 = vpop.f32.mrb[0].mxu0
    %396 = vmatprep.mubr.f32.mxu0 0.0
    %397 = vmatmul.mubr.f32.gmra.mrb[0].mxu0 %v303
    %v398 = vpop.f32.mrb[0].mxu0
    %v399 = vadd.f32 0.0, %v398
    %v400 = vpop.f32.mrb[0].mxu0
    %401 = vmatprep.mubr.f32.mxu0 0.0
    %402 = vmatmul.mubr.f32.gmra.mrb[0].mxu0 %v304
    %v403 = vpop.f32.mrb[0].mxu0
    %v404 = vadd.f32 0.0, %v403
    %v405 = vpop.f32.mrb[0].mxu0
    %406 = vdwg.mxu0
    %v407 = vadd.f32 %v283, %v389
    %v408 = vadd.f32 %v288, %v394
    %v409 = vadd.f32 %v293, %v399
    %v410 = vadd.f32 %v298, %v404
    %v411 = vld [vmem:[#allocation2 + $0x3] sm:$0xff]
    %v412 = vld [vmem:[#allocation2 + $0xb] sm:$0xff]
    %v413 = vld [vmem:[#allocation2 + $0x1b] sm:$0xff]
    %v414 = vld [vmem:[#allocation2 + $0x23] sm:$0xff]
    %s415 = scalar_lea.vmem [#allocation3], 384
    %v416 = vld [vmem:[%s415] sm:$0xff]
    %v417 = vld [vmem:[%s415 + $0x8] sm:$0xff]
    %v418 = vld [vmem:[%s415 + $0x10] sm:$0xff]
    %v419 = vld [vmem:[%s415 + $0x18] sm:$0xff]
    %v420 = vld [vmem:[%s415 + $0x20] sm:$0xff]
    %v421 = vld [vmem:[%s415 + $0x28] sm:$0xff]
    %v422 = vld [vmem:[%s415 + $0x30] sm:$0xff]
    %v423 = vld [vmem:[%s415 + $0x38] sm:$0xff]
    %v424 = vld [vmem:[%s415 + $0x40] sm:$0xff]
    %v425 = vld [vmem:[%s415 + $0x48] sm:$0xff]
    %v426 = vld [vmem:[%s415 + $0x50] sm:$0xff]
    %v427 = vld [vmem:[%s415 + $0x58] sm:$0xff]
    %v428 = vld [vmem:[%s415 + $0x60] sm:$0xff]
    %v429 = vld [vmem:[%s415 + $0x68] sm:$0xff]
    %v430 = vld [vmem:[%s415 + $0x70] sm:$0xff]
    %v431 = vld [vmem:[%s415 + $0x78] sm:$0xff]
    %432 = vmatprep.subr.mxu0 0.0
    %433 = vmatpush1.msra.mxu0 %v416
    %434 = vmatprep.subr.mxu0 0.0
    %435 = vmatpush1.msra.mxu0 %v417
    %436 = vmatprep.subr.mxu0 0.0
    %437 = vmatpush1.msra.mxu0 %v418
    %438 = vmatprep.subr.mxu0 0.0
    %439 = vmatpush1.msra.mxu0 %v419
    %440 = vmatprep.subr.mxu0 0.0
    %441 = vmatpush1.msra.mxu0 %v420
    %442 = vmatprep.subr.mxu0 0.0
    %443 = vmatpush1.msra.mxu0 %v421
    %444 = vmatprep.subr.mxu0 0.0
    %445 = vmatpush1.msra.mxu0 %v422
    %446 = vmatprep.subr.mxu0 0.0
    %447 = vmatpush1.msra.mxu0 %v423
    %448 = vmatprep.subr.mxu0 0.0
    %449 = vmatpush1.msra.mxu0 %v424
    %450 = vmatprep.subr.mxu0 0.0
    %451 = vmatpush1.msra.mxu0 %v425
    %452 = vmatprep.subr.mxu0 0.0
    %453 = vmatpush1.msra.mxu0 %v426
    %454 = vmatprep.subr.mxu0 0.0
    %455 = vmatpush1.msra.mxu0 %v427
    %456 = vmatprep.subr.mxu0 0.0
    %457 = vmatpush1.msra.mxu0 %v428
    %458 = vmatprep.subr.mxu0 0.0
    %459 = vmatpush1.msra.mxu0 %v429
    %460 = vmatprep.subr.mxu0 0.0
    %461 = vmatpush1.msra.mxu0 %v430
    %462 = vmatprep.subr.mxu0 0.0
    %463 = vmatpush1.msra.mxu0 %v431
    %464 = vmatprep.subr.mxu0 0.0
    %465 = vmatpush1.msra.mxu0 0.0
    %466 = vmatprep.subr.mxu0 0.0
    %467 = vmatpush1.msra.mxu0 0.0
    %468 = vmatprep.subr.mxu0 0.0
    %469 = vmatpush1.msra.mxu0 0.0
    %470 = vmatprep.subr.mxu0 0.0
    %471 = vmatpush1.msra.mxu0 0.0
    %472 = vmatprep.subr.mxu0 0.0
    %473 = vmatpush1.msra.mxu0 0.0
    %474 = vmatprep.subr.mxu0 0.0
    %475 = vmatpush1.msra.mxu0 0.0
    %476 = vmatprep.subr.mxu0 0.0
    %477 = vmatpush1.msra.mxu0 0.0
    %478 = vmatprep.subr.mxu0 0.0
    %479 = vmatpush1.msra.mxu0 0.0
    %480 = vmatprep.subr.mxu0 0.0
    %481 = vmatpush1.msra.mxu0 0.0
    %482 = vmatprep.subr.mxu0 0.0
    %483 = vmatpush1.msra.mxu0 0.0
    %484 = vmatprep.subr.mxu0 0.0
    %485 = vmatpush1.msra.mxu0 0.0
    %486 = vmatprep.subr.mxu0 0.0
    %487 = vmatpush1.msra.mxu0 0.0
    %488 = vmatprep.subr.mxu0 0.0
    %489 = vmatpush1.msra.mxu0 0.0
    %490 = vmatprep.subr.mxu0 0.0
    %491 = vmatpush1.msra.mxu0 0.0
    %492 = vmatprep.subr.mxu0 0.0
    %493 = vmatpush1.msra.mxu0 0.0
    %494 = vmatprep.subr.mxu0 0.0
    %495 = vmatpush1.msra.mxu0 0.0
    %496 = vmatprep.mubr.f32.mxu0 0.0
    %497 = vmatmul.mubr.f32.gmra.mrb[0].mxu0 %v411
    %v498 = vpop.f32.mrb[0].mxu0
    %v499 = vadd.f32 0.0, %v498
    %v500 = vpop.f32.mrb[0].mxu0
    %501 = vmatprep.mubr.f32.mxu0 0.0
    %502 = vmatmul.mubr.f32.gmra.mrb[0].mxu0 %v412
    %v503 = vpop.f32.mrb[0].mxu0
    %v504 = vadd.f32 0.0, %v503
    %v505 = vpop.f32.mrb[0].mxu0
    %506 = vmatprep.mubr.f32.mxu0 0.0
    %507 = vmatmul.mubr.f32.gmra.mrb[0].mxu0 %v413
    %v508 = vpop.f32.mrb[0].mxu0
    %v509 = vadd.f32 0.0, %v508
    %v510 = vpop.f32.mrb[0].mxu0
    %511 = vmatprep.mubr.f32.mxu0 0.0
    %512 = vmatmul.mubr.f32.gmra.mrb[0].mxu0 %v414
    %v513 = vpop.f32.mrb[0].mxu0
    %v514 = vadd.f32 0.0, %v513
    %v515 = vpop.f32.mrb[0].mxu0
    %516 = vdwg.mxu0
    %v517 = vadd.f32 %v407, %v499
    %v518 = vadd.f32 %v408, %v504
    %v519 = vadd.f32 %v409, %v509
    %v520 = vadd.f32 %v410, %v514
    %v521 = vld [vmem:[#allocation2 + $0x4] sm:$0xff]
    %v522 = vld [vmem:[#allocation2 + $0xc] sm:$0xff]
    %v523 = vld [vmem:[#allocation2 + $0x1c] sm:$0xff]
    %v524 = vld [vmem:[#allocation2 + $0x24] sm:$0xff]
    %s525 = scalar_lea.vmem [#allocation3], 512
    %v526 = vld [vmem:[%s525] sm:$0xff]
    %v527 = vld [vmem:[%s525 + $0x8] sm:$0xff]
    %v528 = vld [vmem:[%s525 + $0x10] sm:$0xff]
    %v529 = vld [vmem:[%s525 + $0x18] sm:$0xff]
    %v530 = vld [vmem:[%s525 + $0x20] sm:$0xff]
    %v531 = vld [vmem:[%s525 + $0x28] sm:$0xff]
    %v532 = vld [vmem:[%s525 + $0x30] sm:$0xff]
    %v533 = vld [vmem:[%s525 + $0x38] sm:$0xff]
    %v534 = vld [vmem:[%s525 + $0x40] sm:$0xff]
    %v535 = vld [vmem:[%s525 + $0x48] sm:$0xff]
    %v536 = vld [vmem:[%s525 + $0x50] sm:$0xff]
    %v537 = vld [vmem:[%s525 + $0x58] sm:$0xff]
    %v538 = vld [vmem:[%s525 + $0x60] sm:$0xff]
    %v539 = vld [vmem:[%s525 + $0x68] sm:$0xff]
    %v540 = vld [vmem:[%s525 + $0x70] sm:$0xff]
    %v541 = vld [vmem:[%s525 + $0x78] sm:$0xff]
    %542 = vmatprep.subr.mxu0 0.0
    %543 = vmatpush1.msra.mxu0 %v526
    %544 = vmatprep.subr.mxu0 0.0
    %545 = vmatpush1.msra.mxu0 %v527
    %546 = vmatprep.subr.mxu0 0.0
    %547 = vmatpush1.msra.mxu0 %v528
    %548 = vmatprep.subr.mxu0 0.0
    %549 = vmatpush1.msra.mxu0 %v529
    %550 = vmatprep.subr.mxu0 0.0
    %551 = vmatpush1.msra.mxu0 %v530
    %552 = vmatprep.subr.mxu0 0.0
    %553 = vmatpush1.msra.mxu0 %v531
    %554 = vmatprep.subr.mxu0 0.0
    %555 = vmatpush1.msra.mxu0 %v532
    %556 = vmatprep.subr.mxu0 0.0
    %557 = vmatpush1.msra.mxu0 %v533
    %558 = vmatprep.subr.mxu0 0.0
    %559 = vmatpush1.msra.mxu0 %v534
    %560 = vmatprep.subr.mxu0 0.0
    %561 = vmatpush1.msra.mxu0 %v535
    %562 = vmatprep.subr.mxu0 0.0
    %563 = vmatpush1.msra.mxu0 %v536
    %564 = vmatprep.subr.mxu0 0.0
    %565 = vmatpush1.msra.mxu0 %v537
    %566 = vmatprep.subr.mxu0 0.0
    %567 = vmatpush1.msra.mxu0 %v538
    %568 = vmatprep.subr.mxu0 0.0
    %569 = vmatpush1.msra.mxu0 %v539
    %570 = vmatprep.subr.mxu0 0.0
    %571 = vmatpush1.msra.mxu0 %v540
    %572 = vmatprep.subr.mxu0 0.0
    %573 = vmatpush1.msra.mxu0 %v541
    %574 = vmatprep.subr.mxu0 0.0
    %575 = vmatpush1.msra.mxu0 0.0
    %576 = vmatprep.subr.mxu0 0.0
    %577 = vmatpush1.msra.mxu0 0.0
    %578 = vmatprep.subr.mxu0 0.0
    %579 = vmatpush1.msra.mxu0 0.0
    %580 = vmatprep.subr.mxu0 0.0
    %581 = vmatpush1.msra.mxu0 0.0
    %582 = vmatprep.subr.mxu0 0.0
    %583 = vmatpush1.msra.mxu0 0.0
    %584 = vmatprep.subr.mxu0 0.0
    %585 = vmatpush1.msra.mxu0 0.0
    %586 = vmatprep.subr.mxu0 0.0
    %587 = vmatpush1.msra.mxu0 0.0
    %588 = vmatprep.subr.mxu0 0.0
    %589 = vmatpush1.msra.mxu0 0.0
    %590 = vmatprep.subr.mxu0 0.0
    %591 = vmatpush1.msra.mxu0 0.0
    %592 = vmatprep.subr.mxu0 0.0
    %593 = vmatpush1.msra.mxu0 0.0
    %594 = vmatprep.subr.mxu0 0.0
    %595 = vmatpush1.msra.mxu0 0.0
    %596 = vmatprep.subr.mxu0 0.0
    %597 = vmatpush1.msra.mxu0 0.0
    %598 = vmatprep.subr.mxu0 0.0
    %599 = vmatpush1.msra.mxu0 0.0
    %600 = vmatprep.subr.mxu0 0.0
    %601 = vmatpush1.msra.mxu0 0.0
    %602 = vmatprep.subr.mxu0 0.0
    %603 = vmatpush1.msra.mxu0 0.0
    %604 = vmatprep.subr.mxu0 0.0
    %605 = vmatpush1.msra.mxu0 0.0
    %606 = vmatprep.mubr.f32.mxu0 0.0
    %607 = vmatmul.mubr.f32.gmra.mrb[0].mxu0 %v521
    %v608 = vpop.f32.mrb[0].mxu0
    %v609 = vadd.f32 0.0, %v608
    %v610 = vpop.f32.mrb[0].mxu0
    %611 = vmatprep.mubr.f32.mxu0 0.0
    %612 = vmatmul.mubr.f32.gmra.mrb[0].mxu0 %v522
    %v613 = vpop.f32.mrb[0].mxu0
    %v614 = vadd.f32 0.0, %v613
    %v615 = vpop.f32.mrb[0].mxu0
    %616 = vmatprep.mubr.f32.mxu0 0.0
    %617 = vmatmul.mubr.f32.gmra.mrb[0].mxu0 %v523
    %v618 = vpop.f32.mrb[0].mxu0
    %v619 = vadd.f32 0.0, %v618
    %v620 = vpop.f32.mrb[0].mxu0
    %621 = vmatprep.mubr.f32.mxu0 0.0
    %622 = vmatmul.mubr.f32.gmra.mrb[0].mxu0 %v524
    %v623 = vpop.f32.mrb[0].mxu0
    %v624 = vadd.f32 0.0, %v623
    %v625 = vpop.f32.mrb[0].mxu0
    %626 = vdwg.mxu0
    %v627 = vadd.f32 %v517, %v609
    %v628 = vadd.f32 %v518, %v614
    %v629 = vadd.f32 %v519, %v619
    %v630 = vadd.f32 %v520, %v624
    %v631 = vld [vmem:[#allocation2 + $0x5] sm:$0xff]
    %v632 = vld [vmem:[#allocation2 + $0xd] sm:$0xff]
    %v633 = vld [vmem:[#allocation2 + $0x1d] sm:$0xff]
    %v634 = vld [vmem:[#allocation2 + $0x25] sm:$0xff]
    %s635 = scalar_lea.vmem [#allocation3], 640
    %v636 = vld [vmem:[%s635] sm:$0xff]
    %v637 = vld [vmem:[%s635 + $0x8] sm:$0xff]
    %v638 = vld [vmem:[%s635 + $0x10] sm:$0xff]
    %v639 = vld [vmem:[%s635 + $0x18] sm:$0xff]
    %v640 = vld [vmem:[%s635 + $0x20] sm:$0xff]
    %v641 = vld [vmem:[%s635 + $0x28] sm:$0xff]
    %v642 = vld [vmem:[%s635 + $0x30] sm:$0xff]
    %v643 = vld [vmem:[%s635 + $0x38] sm:$0xff]
    %v644 = vld [vmem:[%s635 + $0x40] sm:$0xff]
    %v645 = vld [vmem:[%s635 + $0x48] sm:$0xff]
    %v646 = vld [vmem:[%s635 + $0x50] sm:$0xff]
    %v647 = vld [vmem:[%s635 + $0x58] sm:$0xff]
    %v648 = vld [vmem:[%s635 + $0x60] sm:$0xff]
    %v649 = vld [vmem:[%s635 + $0x68] sm:$0xff]
    %v650 = vld [vmem:[%s635 + $0x70] sm:$0xff]
    %v651 = vld [vmem:[%s635 + $0x78] sm:$0xff]
    %652 = vmatprep.subr.mxu0 0.0
    %653 = vmatpush1.msra.mxu0 %v636
    %654 = vmatprep.subr.mxu0 0.0
    %655 = vmatpush1.msra.mxu0 %v637
    %656 = vmatprep.subr.mxu0 0.0
    %657 = vmatpush1.msra.mxu0 %v638
    %658 = vmatprep.subr.mxu0 0.0
    %659 = vmatpush1.msra.mxu0 %v639
    %660 = vmatprep.subr.mxu0 0.0
    %661 = vmatpush1.msra.mxu0 %v640
    %662 = vmatprep.subr.mxu0 0.0
    %663 = vmatpush1.msra.mxu0 %v641
    %664 = vmatprep.subr.mxu0 0.0
    %665 = vmatpush1.msra.mxu0 %v642
    %666 = vmatprep.subr.mxu0 0.0
    %667 = vmatpush1.msra.mxu0 %v643
    %668 = vmatprep.subr.mxu0 0.0
    %669 = vmatpush1.msra.mxu0 %v644
    %670 = vmatprep.subr.mxu0 0.0
    %671 = vmatpush1.msra.mxu0 %v645
    %672 = vmatprep.subr.mxu0 0.0
    %673 = vmatpush1.msra.mxu0 %v646
    %674 = vmatprep.subr.mxu0 0.0
    %675 = vmatpush1.msra.mxu0 %v647
    %676 = vmatprep.subr.mxu0 0.0
    %677 = vmatpush1.msra.mxu0 %v648
    %678 = vmatprep.subr.mxu0 0.0
    %679 = vmatpush1.msra.mxu0 %v649
    %680 = vmatprep.subr.mxu0 0.0
    %681 = vmatpush1.msra.mxu0 %v650
    %682 = vmatprep.subr.mxu0 0.0
    %683 = vmatpush1.msra.mxu0 %v651
    %684 = vmatprep.subr.mxu0 0.0
    %685 = vmatpush1.msra.mxu0 0.0
    %686 = vmatprep.subr.mxu0 0.0
    %687 = vmatpush1.msra.mxu0 0.0
    %688 = vmatprep.subr.mxu0 0.0
    %689 = vmatpush1.msra.mxu0 0.0
    %690 = vmatprep.subr.mxu0 0.0
    %691 = vmatpush1.msra.mxu0 0.0
    %692 = vmatprep.subr.mxu0 0.0
    %693 = vmatpush1.msra.mxu0 0.0
    %694 = vmatprep.subr.mxu0 0.0
    %695 = vmatpush1.msra.mxu0 0.0
    %696 = vmatprep.subr.mxu0 0.0
    %697 = vmatpush1.msra.mxu0 0.0
    %698 = vmatprep.subr.mxu0 0.0
    %699 = vmatpush1.msra.mxu0 0.0
    %700 = vmatprep.subr.mxu0 0.0
    %701 = vmatpush1.msra.mxu0 0.0
    %702 = vmatprep.subr.mxu0 0.0
    %703 = vmatpush1.msra.mxu0 0.0
    %704 = vmatprep.subr.mxu0 0.0
    %705 = vmatpush1.msra.mxu0 0.0
    %706 = vmatprep.subr.mxu0 0.0
    %707 = vmatpush1.msra.mxu0 0.0
    %708 = vmatprep.subr.mxu0 0.0
    %709 = vmatpush1.msra.mxu0 0.0
    %710 = vmatprep.subr.mxu0 0.0
    %711 = vmatpush1.msra.mxu0 0.0
    %712 = vmatprep.subr.mxu0 0.0
    %713 = vmatpush1.msra.mxu0 0.0
    %714 = vmatprep.subr.mxu0 0.0
    %715 = vmatpush1.msra.mxu0 0.0
    %716 = vmatprep.mubr.f32.mxu0 0.0
    %717 = vmatmul.mubr.f32.gmra.mrb[0].mxu0 %v631
    %v718 = vpop.f32.mrb[0].mxu0
    %v719 = vadd.f32 0.0, %v718
    %v720 = vpop.f32.mrb[0].mxu0
    %721 = vmatprep.mubr.f32.mxu0 0.0
    %722 = vmatmul.mubr.f32.gmra.mrb[0].mxu0 %v632
    %v723 = vpop.f32.mrb[0].mxu0
    %v724 = vadd.f32 0.0, %v723
    %v725 = vpop.f32.mrb[0].mxu0
    %726 = vmatprep.mubr.f32.mxu0 0.0
    %727 = vmatmul.mubr.f32.gmra.mrb[0].mxu0 %v633
    %v728 = vpop.f32.mrb[0].mxu0
    %v729 = vadd.f32 0.0, %v728
    %v730 = vpop.f32.mrb[0].mxu0
    %731 = vmatprep.mubr.f32.mxu0 0.0
    %732 = vmatmul.mubr.f32.gmra.mrb[0].mxu0 %v634
    %v733 = vpop.f32.mrb[0].mxu0
    %v734 = vadd.f32 0.0, %v733
    %v735 = vpop.f32.mrb[0].mxu0
    %736 = vdwg.mxu0
    %v737 = vadd.f32 %v627, %v719
    %v738 = vadd.f32 %v628, %v724
    %v739 = vadd.f32 %v629, %v729
    %v740 = vadd.f32 %v630, %v734
    %v741 = vld [vmem:[#allocation2 + $0x6] sm:$0xff]
    %v742 = vld [vmem:[#allocation2 + $0xe] sm:$0xff]
    %v743 = vld [vmem:[#allocation2 + $0x1e] sm:$0xff]
    %v744 = vld [vmem:[#allocation2 + $0x26] sm:$0xff]
    %s745 = scalar_lea.vmem [#allocation3], 768
    %v746 = vld [vmem:[%s745] sm:$0xff]
    %v747 = vld [vmem:[%s745 + $0x8] sm:$0xff]
    %v748 = vld [vmem:[%s745 + $0x10] sm:$0xff]
    %v749 = vld [vmem:[%s745 + $0x18] sm:$0xff]
    %v750 = vld [vmem:[%s745 + $0x20] sm:$0xff]
    %v751 = vld [vmem:[%s745 + $0x28] sm:$0xff]
    %v752 = vld [vmem:[%s745 + $0x30] sm:$0xff]
    %v753 = vld [vmem:[%s745 + $0x38] sm:$0xff]
    %v754 = vld [vmem:[%s745 + $0x40] sm:$0xff]
    %v755 = vld [vmem:[%s745 + $0x48] sm:$0xff]
    %v756 = vld [vmem:[%s745 + $0x50] sm:$0xff]
    %v757 = vld [vmem:[%s745 + $0x58] sm:$0xff]
    %v758 = vld [vmem:[%s745 + $0x60] sm:$0xff]
    %v759 = vld [vmem:[%s745 + $0x68] sm:$0xff]
    %v760 = vld [vmem:[%s745 + $0x70] sm:$0xff]
    %v761 = vld [vmem:[%s745 + $0x78] sm:$0xff]
    %762 = vmatprep.subr.mxu0 0.0
    %763 = vmatpush1.msra.mxu0 %v746
    %764 = vmatprep.subr.mxu0 0.0
    %765 = vmatpush1.msra.mxu0 %v747
    %766 = vmatprep.subr.mxu0 0.0
    %767 = vmatpush1.msra.mxu0 %v748
    %768 = vmatprep.subr.mxu0 0.0
    %769 = vmatpush1.msra.mxu0 %v749
    %770 = vmatprep.subr.mxu0 0.0
    %771 = vmatpush1.msra.mxu0 %v750
    %772 = vmatprep.subr.mxu0 0.0
    %773 = vmatpush1.msra.mxu0 %v751
    %774 = vmatprep.subr.mxu0 0.0
    %775 = vmatpush1.msra.mxu0 %v752
    %776 = vmatprep.subr.mxu0 0.0
    %777 = vmatpush1.msra.mxu0 %v753
    %778 = vmatprep.subr.mxu0 0.0
    %779 = vmatpush1.msra.mxu0 %v754
    %780 = vmatprep.subr.mxu0 0.0
    %781 = vmatpush1.msra.mxu0 %v755
    %782 = vmatprep.subr.mxu0 0.0
    %783 = vmatpush1.msra.mxu0 %v756
    %784 = vmatprep.subr.mxu0 0.0
    %785 = vmatpush1.msra.mxu0 %v757
    %786 = vmatprep.subr.mxu0 0.0
    %787 = vmatpush1.msra.mxu0 %v758
    %788 = vmatprep.subr.mxu0 0.0
    %789 = vmatpush1.msra.mxu0 %v759
    %790 = vmatprep.subr.mxu0 0.0
    %791 = vmatpush1.msra.mxu0 %v760
    %792 = vmatprep.subr.mxu0 0.0
    %793 = vmatpush1.msra.mxu0 %v761
    %794 = vmatprep.subr.mxu0 0.0
    %795 = vmatpush1.msra.mxu0 0.0
    %796 = vmatprep.subr.mxu0 0.0
    %797 = vmatpush1.msra.mxu0 0.0
    %798 = vmatprep.subr.mxu0 0.0
    %799 = vmatpush1.msra.mxu0 0.0
    %800 = vmatprep.subr.mxu0 0.0
    %801 = vmatpush1.msra.mxu0 0.0
    %802 = vmatprep.subr.mxu0 0.0
    %803 = vmatpush1.msra.mxu0 0.0
    %804 = vmatprep.subr.mxu0 0.0
    %805 = vmatpush1.msra.mxu0 0.0
    %806 = vmatprep.subr.mxu0 0.0
    %807 = vmatpush1.msra.mxu0 0.0
    %808 = vmatprep.subr.mxu0 0.0
    %809 = vmatpush1.msra.mxu0 0.0
    %810 = vmatprep.subr.mxu0 0.0
    %811 = vmatpush1.msra.mxu0 0.0
    %812 = vmatprep.subr.mxu0 0.0
    %813 = vmatpush1.msra.mxu0 0.0
    %814 = vmatprep.subr.mxu0 0.0
    %815 = vmatpush1.msra.mxu0 0.0
    %816 = vmatprep.subr.mxu0 0.0
    %817 = vmatpush1.msra.mxu0 0.0
    %818 = vmatprep.subr.mxu0 0.0
    %819 = vmatpush1.msra.mxu0 0.0
    %820 = vmatprep.subr.mxu0 0.0
    %821 = vmatpush1.msra.mxu0 0.0
    %822 = vmatprep.subr.mxu0 0.0
    %823 = vmatpush1.msra.mxu0 0.0
    %824 = vmatprep.subr.mxu0 0.0
    %825 = vmatpush1.msra.mxu0 0.0
    %826 = vmatprep.mubr.f32.mxu0 0.0
    %827 = vmatmul.mubr.f32.gmra.mrb[0].mxu0 %v741
    %v828 = vpop.f32.mrb[0].mxu0
    %v829 = vadd.f32 0.0, %v828
    %v830 = vpop.f32.mrb[0].mxu0
    %831 = vmatprep.mubr.f32.mxu0 0.0
    %832 = vmatmul.mubr.f32.gmra.mrb[0].mxu0 %v742
    %v833 = vpop.f32.mrb[0].mxu0
    %v834 = vadd.f32 0.0, %v833
    %v835 = vpop.f32.mrb[0].mxu0
    %836 = vmatprep.mubr.f32.mxu0 0.0
    %837 = vmatmul.mubr.f32.gmra.mrb[0].mxu0 %v743
    %v838 = vpop.f32.mrb[0].mxu0
    %v839 = vadd.f32 0.0, %v838
    %v840 = vpop.f32.mrb[0].mxu0
    %841 = vmatprep.mubr.f32.mxu0 0.0
    %842 = vmatmul.mubr.f32.gmra.mrb[0].mxu0 %v744
    %v843 = vpop.f32.mrb[0].mxu0
    %v844 = vadd.f32 0.0, %v843
    %v845 = vpop.f32.mrb[0].mxu0
    %846 = vdwg.mxu0
    %v847 = vadd.f32 %v737, %v829
    %v848 = vadd.f32 %v738, %v834
    %v849 = vadd.f32 %v739, %v839
    %v850 = vadd.f32 %v740, %v844
    %v851 = vld [vmem:[#allocation5] sm:$0x1]
    %v853 = vlaneseq
    %v854 = vshrl.u32 %v853, 7
    %v855 = vsub.s32 0, %v854
    %v856 = vrot.slane %v851, %v855
    %v858 = vadd.f32 %v847, %v856
    %v859 = vadd.f32 %v848, %v856
    %v860 = vadd.f32 %v849, %v856
    %v861 = vadd.f32 %v850, %v856
    %p862 = scmp.ne.s32.totalorder 0, 0
    // Predicated region
    $region46: #{cnn_feature_extraction_forward.9} parent=1 // pred_check
      %p863 = pneg %p862
    $region47: #{cnn_feature_extraction_forward.9} parent=1 // pred_check_branch
      %865 = sbr.rel (%p863) target = $region49
    $region48: #{cnn_feature_extraction_forward.9} parent=1 // pred_region
      %866 = vst [vmem:[#allocation2 + $0x3] sm:$0xff] %v858
      %867 = vst [vmem:[#allocation2 + $0xb] sm:$0xff] %v859
      %868 = vst [vmem:[#allocation2 + $0x1b] sm:$0xff] %v860
      %869 = vst [vmem:[#allocation2 + $0x23] sm:$0xff] %v861
    $region49: #{cnn_feature_extraction_forward.9} parent=1 // pred_fallthru
      _
    // Predicated region
    $region50: #{cnn_feature_extraction_forward.9} parent=1 // pred_check
      %p870 = pneg %p72
    $region51: #{cnn_feature_extraction_forward.9} parent=1 // pred_check_branch
      %872 = sbr.rel (%p870) target = $region53
    $region52: #{cnn_feature_extraction_forward.9} parent=1 // pred_region
      %v873 = vadd.f32 %v858, %v859
      %v874 = vadd.f32 %v873, %v860
      %v875 = vadd.f32 %v874, %v861
      %v876 = vrot.slane %v875, 4
      %v877 = vadd.f32 %v875, %v876
      %v878 = vrot.slane %v877, 2
      %v879 = vadd.f32 %v877, %v878
      %v880 = vrot.slane %v879, 1
      %v881 = vadd.f32 %v879, %v880
      %v882 = vld [vmem:[%s5] sm:$0xff]
      %v883 = vld [vmem:[%s5 + $0x8] sm:$0xff]
      %v884 = vld [vmem:[%s5 + $0x10] sm:$0xff]
      %v885 = vld [vmem:[%s5 + $0x18] sm:$0xff]
      %v886 = vld [vmem:[%s5 + $0x20] sm:$0xff]
      %v887 = vld [vmem:[%s5 + $0x28] sm:$0xff]
      %v888 = vld [vmem:[%s5 + $0x30] sm:$0xff]
      %v889 = vld [vmem:[%s5 + $0x38] sm:$0xff]
      %v890 = vld [vmem:[%s5 + $0x40] sm:$0xff]
      %v891 = vld [vmem:[%s5 + $0x48] sm:$0xff]
      %v892 = vld [vmem:[%s5 + $0x50] sm:$0xff]
      %v893 = vld [vmem:[%s5 + $0x58] sm:$0xff]
      %v894 = vld [vmem:[%s5 + $0x60] sm:$0xff]
      %v895 = vld [vmem:[%s5 + $0x68] sm:$0xff]
      %v896 = vld [vmem:[%s5 + $0x70] sm:$0xff]
      %v897 = vld [vmem:[%s5 + $0x78] sm:$0xff]
      %898 = vmatprep.subr.mxu0 0.0
      %899 = vmatpush1.msra.mxu0 %v882
      %900 = vmatprep.subr.mxu0 0.0
      %901 = vmatpush1.msra.mxu0 %v883
      %902 = vmatprep.subr.mxu0 0.0
      %903 = vmatpush1.msra.mxu0 %v884
      %904 = vmatprep.subr.mxu0 0.0
      %905 = vmatpush1.msra.mxu0 %v885
      %906 = vmatprep.subr.mxu0 0.0
      %907 = vmatpush1.msra.mxu0 %v886
      %908 = vmatprep.subr.mxu0 0.0
      %909 = vmatpush1.msra.mxu0 %v887
      %910 = vmatprep.subr.mxu0 0.0
      %911 = vmatpush1.msra.mxu0 %v888
      %912 = vmatprep.subr.mxu0 0.0
      %913 = vmatpush1.msra.mxu0 %v889
      %914 = vmatprep.subr.mxu0 0.0
      %915 = vmatpush1.msra.mxu0 %v890
      %916 = vmatprep.subr.mxu0 0.0
      %917 = vmatpush1.msra.mxu0 %v891
      %918 = vmatprep.subr.mxu0 0.0
      %919 = vmatpush1.msra.mxu0 %v892
      %920 = vmatprep.subr.mxu0 0.0
      %921 = vmatpush1.msra.mxu0 %v893
      %922 = vmatprep.subr.mxu0 0.0
      %923 = vmatpush1.msra.mxu0 %v894
      %924 = vmatprep.subr.mxu0 0.0
      %925 = vmatpush1.msra.mxu0 %v895
      %926 = vmatprep.subr.mxu0 0.0
      %927 = vmatpush1.msra.mxu0 %v896
      %928 = vmatprep.subr.mxu0 0.0
      %929 = vmatpush1.msra.mxu0 %v897
      %930 = vmatprep.subr.mxu0 0.0
      %931 = vmatpush1.msra.mxu0 0.0
      %932 = vmatprep.subr.mxu0 0.0
      %933 = vmatpush1.msra.mxu0 0.0
      %934 = vmatprep.subr.mxu0 0.0
      %935 = vmatpush1.msra.mxu0 0.0
      %936 = vmatprep.subr.mxu0 0.0
      %937 = vmatpush1.msra.mxu0 0.0
      %938 = vmatprep.subr.mxu0 0.0
      %939 = vmatpush1.msra.mxu0 0.0
      %940 = vmatprep.subr.mxu0 0.0
      %941 = vmatpush1.msra.mxu0 0.0
      %942 = vmatprep.subr.mxu0 0.0
      %943 = vmatpush1.msra.mxu0 0.0
      %944 = vmatprep.subr.mxu0 0.0
      %945 = vmatpush1.msra.mxu0 0.0
      %946 = vmatprep.subr.mxu0 0.0
      %947 = vmatpush1.msra.mxu0 0.0
      %948 = vmatprep.subr.mxu0 0.0
      %949 = vmatpush1.msra.mxu0 0.0
      %950 = vmatprep.subr.mxu0 0.0
      %951 = vmatpush1.msra.mxu0 0.0
      %952 = vmatprep.subr.mxu0 0.0
      %953 = vmatpush1.msra.mxu0 0.0
      %954 = vmatprep.subr.mxu0 0.0
      %955 = vmatpush1.msra.mxu0 0.0
      %956 = vmatprep.subr.mxu0 0.0
      %957 = vmatpush1.msra.mxu0 0.0
      %958 = vmatprep.subr.mxu0 0.0
      %959 = vmatpush1.msra.mxu0 0.0
      %960 = vmatprep.subr.mxu0 0.0
      %961 = vmatpush1.msra.mxu0 0.0
      %962 = vmatprep.mubr.f32.mxu0 0.0
      %963 = vmatmul.mubr.f32.gmra.mrb[0].mxu0 %v881
      %v964 = vpop.f32.mrb[0].mxu0
      %v965 = vadd.f32 0.0, %v964
      %v966 = vpop.f32.mrb[0].mxu0
      %967 = vdwg.mxu0
      %v968 = vmul.f32 %v965, 0.001953125
      %v969 = vlaneseq
      %v970 = vshrl.u32 %v969, 7
      %v971 = vsub.s32 0, %v970
      %v972 = vrot.slane %v968, %v971
      %v973 = vsub.f32 %v858, %v972
      %v974 = vsub.f32 %v859, %v972
      %v975 = vsub.f32 %v860, %v972
      %v976 = vsub.f32 %v861, %v972
      %v977 = vmul.f32 %v973, %v973
      %v978 = vmul.f32 %v974, %v974
      %v979 = vmul.f32 %v975, %v975
      %v980 = vmul.f32 %v976, %v976
      %v981 = vadd.f32 %v977, %v978
      %v982 = vadd.f32 %v981, %v979
      %v983 = vadd.f32 %v982, %v980
      %v984 = vrot.slane %v983, 4
      %v985 = vadd.f32 %v983, %v984
      %v986 = vrot.slane %v985, 2
      %v987 = vadd.f32 %v985, %v986
      %v988 = vrot.slane %v987, 1
      %v989 = vadd.f32 %v987, %v988
      %990 = vmatprep.subr.mxu0 0.0
      %991 = vmatpush1.msra.mxu0 %v882
      %992 = vmatprep.subr.mxu0 0.0
      %993 = vmatpush1.msra.mxu0 %v883
      %994 = vmatprep.subr.mxu0 0.0
      %995 = vmatpush1.msra.mxu0 %v884
      %996 = vmatprep.subr.mxu0 0.0
      %997 = vmatpush1.msra.mxu0 %v885
      %998 = vmatprep.subr.mxu0 0.0
      %999 = vmatpush1.msra.mxu0 %v886
      %1000 = vmatprep.subr.mxu0 0.0
      %1001 = vmatpush1.msra.mxu0 %v887
      %1002 = vmatprep.subr.mxu0 0.0
      %1003 = vmatpush1.msra.mxu0 %v888
      %1004 = vmatprep.subr.mxu0 0.0
      %1005 = vmatpush1.msra.mxu0 %v889
      %1006 = vmatprep.subr.mxu0 0.0
      %1007 = vmatpush1.msra.mxu0 %v890
      %1008 = vmatprep.subr.mxu0 0.0
      %1009 = vmatpush1.msra.mxu0 %v891
      %1010 = vmatprep.subr.mxu0 0.0
      %1011 = vmatpush1.msra.mxu0 %v892
      %1012 = vmatprep.subr.mxu0 0.0
      %1013 = vmatpush1.msra.mxu0 %v893
      %1014 = vmatprep.subr.mxu0 0.0
      %1015 = vmatpush1.msra.mxu0 %v894
      %1016 = vmatprep.subr.mxu0 0.0
      %1017 = vmatpush1.msra.mxu0 %v895
      %1018 = vmatprep.subr.mxu0 0.0
      %1019 = vmatpush1.msra.mxu0 %v896
      %1020 = vmatprep.subr.mxu0 0.0
      %1021 = vmatpush1.msra.mxu0 %v897
      %1022 = vmatprep.subr.mxu0 0.0
      %1023 = vmatpush1.msra.mxu0 0.0
      %1024 = vmatprep.subr.mxu0 0.0
      %1025 = vmatpush1.msra.mxu0 0.0
      %1026 = vmatprep.subr.mxu0 0.0
      %1027 = vmatpush1.msra.mxu0 0.0
      %1028 = vmatprep.subr.mxu0 0.0
      %1029 = vmatpush1.msra.mxu0 0.0
      %1030 = vmatprep.subr.mxu0 0.0
      %1031 = vmatpush1.msra.mxu0 0.0
      %1032 = vmatprep.subr.mxu0 0.0
      %1033 = vmatpush1.msra.mxu0 0.0
      %1034 = vmatprep.subr.mxu0 0.0
      %1035 = vmatpush1.msra.mxu0 0.0
      %1036 = vmatprep.subr.mxu0 0.0
      %1037 = vmatpush1.msra.mxu0 0.0
      %1038 = vmatprep.subr.mxu0 0.0
      %1039 = vmatpush1.msra.mxu0 0.0
      %1040 = vmatprep.subr.mxu0 0.0
      %1041 = vmatpush1.msra.mxu0 0.0
      %1042 = vmatprep.subr.mxu0 0.0
      %1043 = vmatpush1.msra.mxu0 0.0
      %1044 = vmatprep.subr.mxu0 0.0
      %1045 = vmatpush1.msra.mxu0 0.0
      %1046 = vmatprep.subr.mxu0 0.0
      %1047 = vmatpush1.msra.mxu0 0.0
      %1048 = vmatprep.subr.mxu0 0.0
      %1049 = vmatpush1.msra.mxu0 0.0
      %1050 = vmatprep.subr.mxu0 0.0
      %1051 = vmatpush1.msra.mxu0 0.0
      %1052 = vmatprep.subr.mxu0 0.0
      %1053 = vmatpush1.msra.mxu0 0.0
      %1054 = vmatprep.mubr.f32.mxu0 0.0
      %1055 = vmatmul.mubr.f32.gmra.mrb[0].mxu0 %v989
      %v1056 = vpop.f32.mrb[0].mxu0
      %v1057 = vadd.f32 0.0, %v1056
      %v1058 = vpop.f32.mrb[0].mxu0
      %1059 = vdwg.mxu0
      %v1060 = vmul.f32 %v1057, 0.001953125
      %v1061 = vld [vmem:[#allocation7] sm:$0x1]
      %v1062 = vadd.f32 %v1060, 1e-05
      %v1063 = vrsqrt.pop %v1062
      %v1064 = vmul.f32 %v1061, %v1063
      %v1066 = vlaneseq
      %v1067 = vshrl.u32 %v1066, 7
      %v1068 = vsub.s32 0, %v1067
      %v1069 = vrot.slane %v1064, %v1068
      %v1071 = vmul.f32 %v973, %v1069
      %v1072 = vmul.f32 %v974, %v1069
      %v1073 = vmul.f32 %v975, %v1069
      %v1074 = vmul.f32 %v976, %v1069
      %v1075 = vld [vmem:[#allocation8] sm:$0x1]
      %v1077 = vlaneseq
      %v1078 = vshrl.u32 %v1077, 7
      %v1079 = vsub.s32 0, %v1078
      %v1080 = vrot.slane %v1075, %v1079
      %v1082 = vadd.f32 %v1071, %v1080
      %v1083 = vadd.f32 %v1072, %v1080
      %v1084 = vadd.f32 %v1073, %v1080
      %v1085 = vadd.f32 %v1074, %v1080
      %v1086 = vmin.f32 %v1082, 0.0
      %v1087 = vmin.f32 %v1083, 0.0
      %v1088 = vmin.f32 %v1084, 0.0
      %v1089 = vmin.f32 %v1085, 0.0
      %v1090 = vmul.f32 %v1086, 1.442695
      %v1091 = vpow.pop %v1090
      %v1092 = vmul.f32 %v1087, 1.442695
      %v1093 = vpow.pop %v1092
      %v1094 = vmul.f32 %v1088, 1.442695
      %v1095 = vpow.pop %v1094
      %v1096 = vmul.f32 %v1089, 1.442695
      %v1097 = vpow.pop %v1096
      %v1098 = vsub.f32 %v1091, 1.0
      %v1099 = vsub.f32 %v1093, 1.0
      %v1100 = vsub.f32 %v1095, 1.0
      %v1101 = vsub.f32 %v1097, 1.0
      %v1102 = vmul.f32 %v1098, 1.6732632
      %v1103 = vmul.f32 %v1099, 1.6732632
      %v1104 = vmul.f32 %v1100, 1.6732632
      %v1105 = vmul.f32 %v1101, 1.6732632
      %vm1106 = vcmp.gt.f32.partialorder %v1082, 0.0
      %vm1107 = vcmp.gt.f32.partialorder %v1083, 0.0
      %vm1108 = vcmp.gt.f32.partialorder %v1084, 0.0
      %vm1109 = vcmp.gt.f32.partialorder %v1085, 0.0
      %v1110 = vsel %vm1106, %v1082, %v1102
      %v1111 = vsel %vm1107, %v1083, %v1103
      %v1112 = vsel %vm1108, %v1084, %v1104
      %v1113 = vsel %vm1109, %v1085, %v1105
      %v1114 = vmul.f32 %v1110, 1.050701
      %v1115 = vmul.f32 %v1111, 1.050701
      %v1116 = vmul.f32 %v1112, 1.050701
      %v1117 = vmul.f32 %v1113, 1.050701
      %1118 = vst [vmem:[%s6] sm:$0xff] %v1114
      %1119 = vst [vmem:[%s6 + $0x8] sm:$0xff] %v1115
      %1120 = vst [vmem:[%s6 + $0x10] sm:$0xff] %v1116
      %1121 = vst [vmem:[%s6 + $0x18] sm:$0xff] %v1117
    $region53: #{cnn_feature_extraction_forward.9} parent=1 // pred_fallthru
      _
    // Predicated region
    $region54: #{cnn_feature_extraction_forward.9} parent=1 // pred_check
      _
    $region55: #{cnn_feature_extraction_forward.9} parent=1 // pred_check_branch
      %1123 = sbr.rel (0) target = $region57
    $region56: #{cnn_feature_extraction_forward.9} parent=1 // pred_region
      _
    $region57: #{cnn_feature_extraction_forward.9} parent=1 // pred_fallthru
      _
    // Predicated region
    $region58: #{cnn_feature_extraction_forward.9} parent=1 // pred_check
      _
    $region59: #{cnn_feature_extraction_forward.9} parent=1 // pred_check_branch
      %1125 = sbr.rel (0) target = $region61
    $region60: #{cnn_feature_extraction_forward.9} parent=1 // pred_region
      _
    $region61: #{cnn_feature_extraction_forward.9} parent=1 // pred_fallthru
      _
    %1126 = vsyncpa [#allocation4], 1
    %1127 = vsyncpa [#allocation6], 1
    %1128 = vsyncpa [#allocation9], 1

// kernel: cnn_feature_extraction_forward.10
$region0: #{cnn_feature_extraction_forward.10}
  #allocation0 [shape = 'u32[]', space=smem, size = 0x4, offset = 0x4, fixed_abs, tag = 'smem constant byte address 0x4 - core index']
  #allocation1 [shape = 'u32[144,128]{1,0:T(1,128)}', space=vmem, size = 0x12000, scoped, tag = 'internal scratch']
  #allocation2 [shape = 'f32[2,20,128]{2,1,0:T(8,128)}', space=vmem, size = 0x6000, scoped, tag = 'scratch operand']
  %s0 = inlined_call_operand.vmem [shape: f32[2,16,128], index: 0, kind: input, shape index: {}]
  %s1 = inlined_call_operand.hbm [shape: f32[3,5,128,128], index: 1, kind: input, shape index: {}]
  %s2 = inlined_call_operand.hbm [shape: f32[3,1,128], index: 2, kind: input, shape index: {}]
  %s3 = inlined_call_operand.hbm [shape: f32[1,128], index: 3, kind: input, shape index: {}]
  %s4 = inlined_call_operand.hbm [shape: f32[1,128], index: 4, kind: input, shape index: {}]
  %s5 = inlined_call_operand.vmem [shape: f32[128,128], index: 5, kind: input, shape index: {}]
  %s6 = inlined_call_operand.vmem [shape: f32[32,128], index: 6, kind: output, shape index: {}]
  %s7 = sld [smem:[#allocation0]]
  $region85: #{cnn_feature_extraction_forward.10} parent=0
    _
  %s9 = ssub.s32 1, %s7
  %s10 = scalar_select 0, %s9, %s7
  $region1: #{cnn_feature_extraction_forward.10} parent=0
    #allocation3 [shape = 'u8[655360]{0}', space=vmem, size = 0xa0000, scoped, tag = 'input window, operand 1']
    #allocation4 [shape = 's32[2]{0}', space=sflag, size = 0x8, scoped, tag = 'scoped memory for cnn_feature_extraction_forward.10']
    #allocation5 [shape = 'u8[1024]{0}', space=vmem, size = 0x400, scoped, tag = 'input window, operand 2']
    #allocation6 [shape = 's32[2]{0}', space=sflag, size = 0x8, scoped, tag = 'scoped memory for cnn_feature_extraction_forward.10']
    #allocation7 [shape = 'u8[512]{0}', space=vmem, size = 0x400, scoped, tag = 'input window, operand 3, single buffered']
    #allocation8 [shape = 'u8[512]{0}', space=vmem, size = 0x400, scoped, tag = 'input window, operand 4, single buffered']
    #allocation9 [shape = 's32[1]{0}', space=sflag, size = 0x4, scoped, tag = 'scoped memory for cnn_feature_extraction_forward.10']
    %11 = vsyncpa [#allocation4], 0
    %s12 = scalar_lea.sflag [#allocation4], 1
    %13 = vsyncpa %s12, 0
    %14 = vsyncpa [#allocation6], 0
    %s15 = scalar_lea.sflag [#allocation6], 1
    %16 = vsyncpa %s15, 0
    %17 = vsyncpa [#allocation9], 0
    loop: start=0, step=1, limit=5
    $region2: #{cnn_feature_extraction_forward.10} parent=1 // loop_pre_header
      _
    $region3: #{cnn_feature_extraction_forward.10} parent=1 // loop_header
      %s19 = sphi 0, %s23
      %p20 = scmp.ge.s32.totalorder %s19, 5
      %s27 = sphi 0, %s27
      %s29 = sphi 0, %s27
      %s30 = sphi 0, %s29
      %s44 = sphi 0, %s30
      %s50 = sphi 0, %s52
      %s53 = sphi 0, %s50
      %s54 = sphi 0, %s53
      %s70 = sphi 0, %s54
      %s76 = sphi 0, %s78
      %s79 = sphi 0, %s76
      %s80 = sphi 0, %s79
      %s96 = sphi 0, %s80
      %s100 = sphi 0, %s100
      %s102 = sphi 0, %s100
      %s103 = sphi 0, %s102
      %s117 = sphi 0, %s103
      %s121 = sphi 0, %s121
      %s123 = sphi 0, %s121
      %s124 = sphi 0, %s123
      %s138 = sphi 0, %s124
      %s142 = sphi 0, %s142
      %s144 = sphi 0, %s142
      %s145 = sphi 0, %s144
      %s159 = sphi 0, %s145
      %s163 = sphi 0, %s163
      %s165 = sphi 0, %s163
      %s166 = sphi 0, %s165
      %s180 = sphi 0, %s166
    $region4: #{cnn_feature_extraction_forward.10} parent=1 // loop_header_branch
      %22 = sbr.rel (%p20) target = $region8
    $region5: #{cnn_feature_extraction_forward.10} parent=1 // loop_body
      %s24 = ssub.s32 %s19, 1
      %s25 = ssub.s32 %s19, 2
      %s26 = sadd.s32 %s19, 1
      %s28 = sadd.s32 %s27, 1
      %p31 = scmp.eq.s32.totalorder %s19, 2
      %p32 = scmp.ne.s32.totalorder %s27, %s29
      %p33 = scmp.eq.s32.totalorder %s19, 0
      %p34 = por %p32, %p33
      %p35 = scmp.ne.s32.totalorder %s27, %s29
      %p36 = scmp.eq.s32.totalorder %s24, 2
      %p37 = por %p35, %p36
      %p38 = scmp.ne.s32.totalorder %s29, %s30
      %p39 = scmp.eq.s32.totalorder %s24, 0
      %p40 = por %p38, %p39
      %p41 = scmp.ne.s32.totalorder %s29, %s30
      %p42 = scmp.eq.s32.totalorder %s25, 2
      %p43 = por %p41, %p42
      %p45 = scmp.ne.s32.totalorder %s30, %s44
      %p46 = scmp.eq.s32.totalorder %s25, 0
      %p47 = por %p45, %p46
      %s48 = ssub.s32 %s19, %s26
      %p49 = scmp.eq.s32.totalorder %s48, 0
      %s51 = sadd.s32 %s50, 1
      %s52 = scalar_select %p49, %s50, %s51
      %p55 = pneg %p49
      %p56 = scmp.eq.s32.totalorder %s19, 2
      %p57 = por %p55, %p56
      %p58 = scmp.ne.s32.totalorder %s50, %s53
      %p59 = scmp.eq.s32.totalorder %s19, 0
      %p60 = por %p58, %p59
      %p61 = scmp.ne.s32.totalorder %s50, %s53
      %p62 = scmp.eq.s32.totalorder %s24, 2
      %p63 = por %p61, %p62
      %p64 = scmp.ne.s32.totalorder %s53, %s54
      %p65 = scmp.eq.s32.totalorder %s24, 0
      %p66 = por %p64, %p65
      %p67 = scmp.ne.s32.totalorder %s53, %s54
      %p68 = scmp.eq.s32.totalorder %s25, 2
      %p69 = por %p67, %p68
      %p71 = scmp.ne.s32.totalorder %s54, %s70
      %p72 = scmp.eq.s32.totalorder %s25, 0
      %p73 = por %p71, %p72
      %s74 = ssub.s32 %s19, %s26
      %p75 = scmp.eq.s32.totalorder %s74, 0
      %s77 = sadd.s32 %s76, 1
      %s78 = scalar_select %p75, %s76, %s77
      %p81 = pneg %p75
      %p82 = scmp.eq.s32.totalorder %s19, 2
      %p83 = por %p81, %p82
      %p84 = scmp.ne.s32.totalorder %s76, %s79
      %p85 = scmp.eq.s32.totalorder %s19, 0
      %p86 = por %p84, %p85
      %p87 = scmp.ne.s32.totalorder %s76, %s79
      %p88 = scmp.eq.s32.totalorder %s24, 2
      %p89 = por %p87, %p88
      %p90 = scmp.ne.s32.totalorder %s79, %s80
      %p91 = scmp.eq.s32.totalorder %s24, 0
      %p92 = por %p90, %p91
      %p93 = scmp.ne.s32.totalorder %s79, %s80
      %p94 = scmp.eq.s32.totalorder %s25, 2
      %p95 = por %p93, %p94
      %p97 = scmp.ne.s32.totalorder %s80, %s96
      %p98 = scmp.eq.s32.totalorder %s25, 0
      %p99 = por %p97, %p98
      %s101 = sadd.s32 %s100, 1
      %p104 = scmp.eq.s32.totalorder %s19, 2
      %p105 = scmp.ne.s32.totalorder %s100, %s102
      %p106 = scmp.eq.s32.totalorder %s19, 0
      %p107 = por %p105, %p106
      %p108 = scmp.ne.s32.totalorder %s100, %s102
      %p109 = scmp.eq.s32.totalorder %s24, 2
      %p110 = por %p108, %p109
      %p111 = scmp.ne.s32.totalorder %s102, %s103
      %p112 = scmp.eq.s32.totalorder %s24, 0
      %p113 = por %p111, %p112
      %p114 = scmp.ne.s32.totalorder %s102, %s103
      %p115 = scmp.eq.s32.totalorder %s25, 2
      %p116 = por %p114, %p115
      %p118 = scmp.ne.s32.totalorder %s103, %s117
      %p119 = scmp.eq.s32.totalorder %s25, 0
      %p120 = por %p118, %p119
      %s122 = sadd.s32 %s121, 1
      %p125 = scmp.eq.s32.totalorder %s19, 2
      %p126 = scmp.ne.s32.totalorder %s121, %s123
      %p127 = scmp.eq.s32.totalorder %s19, 0
      %p128 = por %p126, %p127
      %p129 = scmp.ne.s32.totalorder %s121, %s123
      %p130 = scmp.eq.s32.totalorder %s24, 2
      %p131 = por %p129, %p130
      %p132 = scmp.ne.s32.totalorder %s123, %s124
      %p133 = scmp.eq.s32.totalorder %s24, 0
      %p134 = por %p132, %p133
      %p135 = scmp.ne.s32.totalorder %s123, %s124
      %p136 = scmp.eq.s32.totalorder %s25, 2
      %p137 = por %p135, %p136
      %p139 = scmp.ne.s32.totalorder %s124, %s138
      %p140 = scmp.eq.s32.totalorder %s25, 0
      %p141 = por %p139, %p140
      %s143 = sadd.s32 %s142, 1
      %p146 = scmp.eq.s32.totalorder %s19, 2
      %p147 = scmp.ne.s32.totalorder %s142, %s144
      %p148 = scmp.eq.s32.totalorder %s19, 0
      %p149 = por %p147, %p148
      %p150 = scmp.ne.s32.totalorder %s142, %s144
      %p151 = scmp.eq.s32.totalorder %s24, 2
      %p152 = por %p150, %p151
      %p153 = scmp.ne.s32.totalorder %s144, %s145
      %p154 = scmp.eq.s32.totalorder %s24, 0
      %p155 = por %p153, %p154
      %p156 = scmp.ne.s32.totalorder %s144, %s145
      %p157 = scmp.eq.s32.totalorder %s25, 2
      %p158 = por %p156, %p157
      %p160 = scmp.ne.s32.totalorder %s145, %s159
      %p161 = scmp.eq.s32.totalorder %s25, 0
      %p162 = por %p160, %p161
      %s164 = sadd.s32 %s163, 1
      %p167 = scmp.eq.s32.totalorder %s19, 2
      %p168 = scmp.ne.s32.totalorder %s163, %s165
      %p169 = scmp.eq.s32.totalorder %s19, 0
      %p170 = por %p168, %p169
      %p171 = scmp.ne.s32.totalorder %s163, %s165
      %p172 = scmp.eq.s32.totalorder %s24, 2
      %p173 = por %p171, %p172
      %p174 = scmp.ne.s32.totalorder %s165, %s166
      %p175 = scmp.eq.s32.totalorder %s24, 0
      %p176 = por %p174, %p175
      %p177 = scmp.ne.s32.totalorder %s165, %s166
      %p178 = scmp.eq.s32.totalorder %s25, 2
      %p179 = por %p177, %p178
      %p181 = scmp.ne.s32.totalorder %s166, %s180
      %p182 = scmp.eq.s32.totalorder %s25, 0
      %p183 = por %p181, %p182
      %p184 = scmp.le.s32.totalorder 1, %s19
      %p185 = scmp.lt.s32.totalorder %s19, 4
      %p186 = pnand %p184, %p185
      %p187 = pneg %p186
      // Predicated region
      $region9: #{cnn_feature_extraction_forward.10} parent=5 // pred_check
        _
      $region10: #{cnn_feature_extraction_forward.10} parent=5 // pred_check_branch
        %189 = sbr.rel (%p186) target = $region12
      $region11: #{cnn_feature_extraction_forward.10} parent=5 // pred_region
        %s190 = ssub.s32 %s19, 1
        // Predicated region
        $region13: #{cnn_feature_extraction_forward.10} parent=11 // pred_check
          %p191 = pneg %p40
        $region14: #{cnn_feature_extraction_forward.10} parent=11 // pred_check_branch
          %193 = sbr.rel (%p191) target = $region16
        $region15: #{cnn_feature_extraction_forward.10} parent=11 // pred_region
          _
        $region16: #{cnn_feature_extraction_forward.10} parent=11 // pred_fallthru
          _
        // Predicated region
        $region17: #{cnn_feature_extraction_forward.10} parent=11 // pred_check
          %p194 = pneg %p113
        $region18: #{cnn_feature_extraction_forward.10} parent=11 // pred_check_branch
          %196 = sbr.rel (%p194) target = $region20
        $region19: #{cnn_feature_extraction_forward.10} parent=11 // pred_region
          %s198 = ssub.s32 16, 16
          %199 = vsyncadd [#allocation6], %s198
          %s201 = sshll.u32 [#allocation7], 4
          %s202 = int_to_ptr.vmem [resolvable:$true] %s201
          %204 = dma.hbm_to_vmem [thread:$0]  %s3, 16, %s202, [#allocation6]
        $region20: #{cnn_feature_extraction_forward.10} parent=11 // pred_fallthru
          _
        // Predicated region
        $region21: #{cnn_feature_extraction_forward.10} parent=11 // pred_check
          %p205 = pneg %p134
        $region22: #{cnn_feature_extraction_forward.10} parent=11 // pred_check_branch
          %207 = sbr.rel (%p205) target = $region24
        $region23: #{cnn_feature_extraction_forward.10} parent=11 // pred_region
          %s209 = ssub.s32 16, 16
          %210 = vsyncadd [#allocation9], %s209
          %s212 = sshll.u32 [#allocation8], 4
          %s213 = int_to_ptr.vmem [resolvable:$true] %s212
          %215 = dma.hbm_to_vmem [thread:$0]  %s4, 16, %s213, [#allocation9]
        $region24: #{cnn_feature_extraction_forward.10} parent=11 // pred_fallthru
          _
        // Predicated region
        $region25: #{cnn_feature_extraction_forward.10} parent=11 // pred_check
          %p216 = pneg %p155
        $region26: #{cnn_feature_extraction_forward.10} parent=11 // pred_check_branch
          %218 = sbr.rel (%p216) target = $region28
        $region27: #{cnn_feature_extraction_forward.10} parent=11 // pred_region
          _
        $region28: #{cnn_feature_extraction_forward.10} parent=11 // pred_fallthru
          _
      $region12: #{cnn_feature_extraction_forward.10} parent=5 // pred_fallthru
        _
      %p219 = scmp.lt.s32.totalorder %s19, 3
      // Predicated region
      $region29: #{cnn_feature_extraction_forward.10} parent=5 // pred_check
        %p220 = pneg %p219
      $region30: #{cnn_feature_extraction_forward.10} parent=5 // pred_check_branch
        %222 = sbr.rel (%p220) target = $region32
      $region31: #{cnn_feature_extraction_forward.10} parent=5 // pred_region
        // Predicated region
        $region33: #{cnn_feature_extraction_forward.10} parent=31 // pred_check
          %p223 = pneg %p60
        $region34: #{cnn_feature_extraction_forward.10} parent=31 // pred_check_branch
          %225 = sbr.rel (%p223) target = $region36
        $region35: #{cnn_feature_extraction_forward.10} parent=31 // pred_region
          %s226 = sand.u32 %s50, 1
          %s227 = scalar_lea.sflag [#allocation4], %s226
          %s228 = sand.u32 %s50, 1
          %s229 = smul.addr %s228, 640
          %s230 = scalar_lea.vmem [#allocation3], %s229
          %s232 = ssub.s32 10240, 10240
          %233 = vsyncadd %s227, %s232
          %s234 = smul.addr %s19, 80
          %s235 = smul.addr %s234, 128
          %s236 = scalar_lea.hbm %s1, %s235
          %s237 = sshll.u32 %s230, 4
          %s238 = int_to_ptr.vmem [resolvable:$true] %s237
          %243 = dma.hbm_to_vmem [thread:$0]  %s236, 10240, %s238, %s227, 128, 128, 8
        $region36: #{cnn_feature_extraction_forward.10} parent=31 // pred_fallthru
          _
        // Predicated region
        $region37: #{cnn_feature_extraction_forward.10} parent=31 // pred_check
          %p244 = pneg %p86
        $region38: #{cnn_feature_extraction_forward.10} parent=31 // pred_check_branch
          %246 = sbr.rel (%p244) target = $region40
        $region39: #{cnn_feature_extraction_forward.10} parent=31 // pred_region
          %s247 = sand.u32 %s19, 1
          %s248 = scalar_lea.sflag [#allocation6], %s247
          %s249 = sand.u32 %s76, 1
          %s250 = scalar_lea.vmem [#allocation5], %s249
          %s252 = ssub.s32 16, 16
          %253 = vsyncadd %s248, %s252
          %s254 = smul.addr %s19, 16
          %s255 = scalar_lea.hbm %s2, %s254
          %s257 = sshll.u32 %s250, 4
          %s258 = int_to_ptr.vmem [resolvable:$true] %s257
          %260 = dma.hbm_to_vmem [thread:$0]  %s255, 16, %s258, %s248
        $region40: #{cnn_feature_extraction_forward.10} parent=31 // pred_fallthru
          _
      $region32: #{cnn_feature_extraction_forward.10} parent=5 // pred_fallthru
        _
      %p261 = scmp.le.s32.totalorder 1, %s19
      %p262 = scmp.lt.s32.totalorder %s19, 4
      %p263 = pnand %p261, %p262
      %p264 = pneg %p263
      // Predicated region
      $region41: #{cnn_feature_extraction_forward.10} parent=5 // pred_check
        _
      $region42: #{cnn_feature_extraction_forward.10} parent=5 // pred_check_branch
        %266 = sbr.rel (%p263) target = $region44
      $region43: #{cnn_feature_extraction_forward.10} parent=5 // pred_region
        %s267 = ssub.s32 %s19, 1
        %s268 = sand.u32 %s53, 1
        %s269 = scalar_lea.sflag [#allocation4], %s268
        %s270 = sand.u32 %s53, 1
        %s271 = smul.addr %s270, 640
        %s272 = scalar_lea.vmem [#allocation3], %s271
        // Predicated region
        $region45: #{cnn_feature_extraction_forward.10} parent=43 // pred_check
          %p273 = pneg %p66
        $region46: #{cnn_feature_extraction_forward.10} parent=43 // pred_check_branch
          %275 = sbr.rel (%p273) target = $region48
        $region47: #{cnn_feature_extraction_forward.10} parent=43 // pred_region
          %276 = dma.done %s269, 10240
        $region48: #{cnn_feature_extraction_forward.10} parent=43 // pred_fallthru
          _
        %s277 = sand.u32 %s24, 1
        %s278 = scalar_lea.sflag [#allocation6], %s277
        %s279 = sand.u32 %s79, 1
        %s280 = scalar_lea.vmem [#allocation5], %s279
        // Predicated region
        $region49: #{cnn_feature_extraction_forward.10} parent=43 // pred_check
          %p281 = pneg %p92
        $region50: #{cnn_feature_extraction_forward.10} parent=43 // pred_check_branch
          %283 = sbr.rel (%p281) target = $region52
        $region51: #{cnn_feature_extraction_forward.10} parent=43 // pred_region
          %284 = dma.done %s278, 16
        $region52: #{cnn_feature_extraction_forward.10} parent=43 // pred_fallthru
          _
        // Predicated region
        $region53: #{cnn_feature_extraction_forward.10} parent=43 // pred_check
          %p285 = pneg %p113
        $region54: #{cnn_feature_extraction_forward.10} parent=43 // pred_check_branch
          %287 = sbr.rel (%p285) target = $region56
        $region55: #{cnn_feature_extraction_forward.10} parent=43 // pred_region
          %288 = dma.done [#allocation6], 16
        $region56: #{cnn_feature_extraction_forward.10} parent=43 // pred_fallthru
          _
        // Predicated region
        $region57: #{cnn_feature_extraction_forward.10} parent=43 // pred_check
          %p289 = pneg %p134
        $region58: #{cnn_feature_extraction_forward.10} parent=43 // pred_check_branch
          %291 = sbr.rel (%p289) target = $region60
        $region59: #{cnn_feature_extraction_forward.10} parent=43 // pred_region
          %292 = dma.done [#allocation9], 16
        $region60: #{cnn_feature_extraction_forward.10} parent=43 // pred_fallthru
          _
        %p293 = pneg %p40
        %p294 = pneg %p37
        %s295 = sand.u32 %s53, 1
        %s296 = scalar_lea.sflag [#allocation4], %s295
        %s297 = sand.u32 %s53, 1
        %s298 = smul.addr %s297, 640
        %s299 = scalar_lea.vmem [#allocation3], %s298
        %p300 = pneg %p66
        %p301 = pneg %p63
        %s302 = sand.u32 %s24, 1
        %s303 = scalar_lea.sflag [#allocation6], %s302
        %s304 = sand.u32 %s79, 1
        %s305 = scalar_lea.vmem [#allocation5], %s304
        %p306 = pneg %p92
        %p307 = pneg %p89
        %p308 = pneg %p113
        %p309 = pneg %p110
        %p310 = pneg %p134
        %p311 = pneg %p131
        %p312 = pneg %p155
        %p313 = pneg %p152
        %p314 = pneg %p176
        %p315 = pneg %p173
        %p316 = scmp.eq.s32.totalorder %s24, 0
        // Predicated region
        $region61: #{cnn_feature_extraction_forward.10} parent=43 // pred_check
          %p317 = pneg %p316
        $region62: #{cnn_feature_extraction_forward.10} parent=43 // pred_check_branch
          %319 = sbr.rel (%p317) target = $region64
        $region63: #{cnn_feature_extraction_forward.10} parent=43 // pred_region
          %320 = vst [vmem:[#allocation2] sm:$0xff] 0.0
          %321 = vst [vmem:[#allocation2 + $0x8] sm:$0xff] 0.0
          %322 = vst [vmem:[#allocation2 + $0x10] sm:$0xf] 0.0
          %323 = vst [vmem:[#allocation2 + $0x18] sm:$0xff] 0.0
          %324 = vst [vmem:[#allocation2 + $0x20] sm:$0xff] 0.0
          %325 = vst [vmem:[#allocation2 + $0x28] sm:$0xf] 0.0
          %v326 = vld [vmem:[%s0] sm:$0xff]
          %v327 = vld [vmem:[%s0 + $0x8] sm:$0xff]
          %v328 = vld [vmem:[%s0 + $0x10] sm:$0xff]
          %v329 = vld [vmem:[%s0 + $0x18] sm:$0xff]
          %330 = vst [vmem:[#allocation2 + $0x2] sm:$0xff] %v326
          %331 = vst [vmem:[#allocation2 + $0xa] sm:$0xff] %v327
          %332 = vst [vmem:[#allocation2 + $0x1a] sm:$0xff] %v328
          %333 = vst [vmem:[#allocation2 + $0x22] sm:$0xff] %v329
        $region64: #{cnn_feature_extraction_forward.10} parent=43 // pred_fallthru
          _
        %v334 = vld [vmem:[#allocation2] sm:$0xff]
        %v335 = vld [vmem:[#allocation2 + $0x8] sm:$0xff]
        %v336 = vld [vmem:[#allocation2 + $0x18] sm:$0xff]
        %v337 = vld [vmem:[#allocation2 + $0x20] sm:$0xff]
        %v338 = vld [vmem:[%s272] sm:$0xff]
        %v339 = vld [vmem:[%s272 + $0x8] sm:$0xff]
        %v340 = vld [vmem:[%s272 + $0x10] sm:$0xff]
        %v341 = vld [vmem:[%s272 + $0x18] sm:$0xff]
        %v342 = vld [vmem:[%s272 + $0x20] sm:$0xff]
        %v343 = vld [vmem:[%s272 + $0x28] sm:$0xff]
        %v344 = vld [vmem:[%s272 + $0x30] sm:$0xff]
        %v345 = vld [vmem:[%s272 + $0x38] sm:$0xff]
        %v346 = vld [vmem:[%s272 + $0x40] sm:$0xff]
        %v347 = vld [vmem:[%s272 + $0x48] sm:$0xff]
        %v348 = vld [vmem:[%s272 + $0x50] sm:$0xff]
        %v349 = vld [vmem:[%s272 + $0x58] sm:$0xff]
        %v350 = vld [vmem:[%s272 + $0x60] sm:$0xff]
        %v351 = vld [vmem:[%s272 + $0x68] sm:$0xff]
        %v352 = vld [vmem:[%s272 + $0x70] sm:$0xff]
        %v353 = vld [vmem:[%s272 + $0x78] sm:$0xff]
        %v354 = vld [vmem:[#allocation2 + $0x1] sm:$0xff]
        %v355 = vld [vmem:[#allocation2 + $0x9] sm:$0xff]
        %v356 = vld [vmem:[#allocation2 + $0x19] sm:$0xff]
        %v357 = vld [vmem:[#allocation2 + $0x21] sm:$0xff]
        %s358 = scalar_lea.vmem %s272, 128 [#allocation3]
        %v359 = vld [vmem:[%s358] sm:$0xff]
        %v360 = vld [vmem:[%s358 + $0x8] sm:$0xff]
        %v361 = vld [vmem:[%s358 + $0x10] sm:$0xff]
        %v362 = vld [vmem:[%s358 + $0x18] sm:$0xff]
        %v363 = vld [vmem:[%s358 + $0x20] sm:$0xff]
        %v364 = vld [vmem:[%s358 + $0x28] sm:$0xff]
        %v365 = vld [vmem:[%s358 + $0x30] sm:$0xff]
        %v366 = vld [vmem:[%s358 + $0x38] sm:$0xff]
        %v367 = vld [vmem:[%s358 + $0x40] sm:$0xff]
        %v368 = vld [vmem:[%s358 + $0x48] sm:$0xff]
        %v369 = vld [vmem:[%s358 + $0x50] sm:$0xff]
        %v370 = vld [vmem:[%s358 + $0x58] sm:$0xff]
        %v371 = vld [vmem:[%s358 + $0x60] sm:$0xff]
        %v372 = vld [vmem:[%s358 + $0x68] sm:$0xff]
        %v373 = vld [vmem:[%s358 + $0x70] sm:$0xff]
        %v374 = vld [vmem:[%s358 + $0x78] sm:$0xff]
        %375 = vmatprep.subr.mxu0 0.0
        %376 = vmatpush1.msra.mxu0 %v359
        %377 = vmatprep.subr.mxu0 0.0
        %378 = vmatpush1.msra.mxu0 %v360
        %379 = vmatprep.subr.mxu0 0.0
        %380 = vmatpush1.msra.mxu0 %v361
        %381 = vmatprep.subr.mxu0 0.0
        %382 = vmatpush1.msra.mxu0 %v362
        %383 = vmatprep.subr.mxu0 0.0
        %384 = vmatpush1.msra.mxu0 %v363
        %385 = vmatprep.subr.mxu0 0.0
        %386 = vmatpush1.msra.mxu0 %v364
        %387 = vmatprep.subr.mxu0 0.0
        %388 = vmatpush1.msra.mxu0 %v365
        %389 = vmatprep.subr.mxu0 0.0
        %390 = vmatpush1.msra.mxu0 %v366
        %391 = vmatprep.subr.mxu0 0.0
        %392 = vmatpush1.msra.mxu0 %v367
        %393 = vmatprep.subr.mxu0 0.0
        %394 = vmatpush1.msra.mxu0 %v368
        %395 = vmatprep.subr.mxu0 0.0
        %396 = vmatpush1.msra.mxu0 %v369
        %397 = vmatprep.subr.mxu0 0.0
        %398 = vmatpush1.msra.mxu0 %v370
        %399 = vmatprep.subr.mxu0 0.0
        %400 = vmatpush1.msra.mxu0 %v371
        %401 = vmatprep.subr.mxu0 0.0
        %402 = vmatpush1.msra.mxu0 %v372
        %403 = vmatprep.subr.mxu0 0.0
        %404 = vmatpush1.msra.mxu0 %v373
        %405 = vmatprep.subr.mxu0 0.0
        %406 = vmatpush1.msra.mxu0 %v374
        %407 = vmatprep.subr.mxu0 0.0
        %408 = vmatpush1.msra.mxu0 0.0
        %409 = vmatprep.subr.mxu0 0.0
        %410 = vmatpush1.msra.mxu0 0.0
        %411 = vmatprep.subr.mxu0 0.0
        %412 = vmatpush1.msra.mxu0 0.0
        %413 = vmatprep.subr.mxu0 0.0
        %414 = vmatpush1.msra.mxu0 0.0
        %415 = vmatprep.subr.mxu0 0.0
        %416 = vmatpush1.msra.mxu0 0.0
        %417 = vmatprep.subr.mxu0 0.0
        %418 = vmatpush1.msra.mxu0 0.0
        %419 = vmatprep.subr.mxu0 0.0
        %420 = vmatpush1.msra.mxu0 0.0
        %421 = vmatprep.subr.mxu0 0.0
        %422 = vmatpush1.msra.mxu0 0.0
        %423 = vmatprep.subr.mxu0 0.0
        %424 = vmatpush1.msra.mxu0 0.0
        %425 = vmatprep.subr.mxu0 0.0
        %426 = vmatpush1.msra.mxu0 0.0
        %427 = vmatprep.subr.mxu0 0.0
        %428 = vmatpush1.msra.mxu0 0.0
        %429 = vmatprep.subr.mxu0 0.0
        %430 = vmatpush1.msra.mxu0 0.0
        %431 = vmatprep.subr.mxu0 0.0
        %432 = vmatpush1.msra.mxu0 0.0
        %433 = vmatprep.subr.mxu0 0.0
        %434 = vmatpush1.msra.mxu0 0.0
        %435 = vmatprep.subr.mxu0 0.0
        %436 = vmatpush1.msra.mxu0 0.0
        %437 = vmatprep.subr.mxu0 0.0
        %438 = vmatpush1.msra.mxu0 0.0
        %439 = vmatprep.mubr.f32.mxu0 0.0
        %440 = vmatmul.mubr.f32.gmra.mrb[0].mxu0 %v354
        %v441 = vpop.f32.mrb[0].mxu0
        %v442 = vadd.f32 0.0, %v441
        %v443 = vpop.f32.mrb[0].mxu0
        %444 = vmatprep.mubr.f32.mxu0 0.0
        %445 = vmatmul.mubr.f32.gmra.mrb[0].mxu0 %v355
        %v446 = vpop.f32.mrb[0].mxu0
        %v447 = vadd.f32 0.0, %v446
        %v448 = vpop.f32.mrb[0].mxu0
        %449 = vmatprep.mubr.f32.mxu0 0.0
        %450 = vmatmul.mubr.f32.gmra.mrb[0].mxu0 %v356
        %v451 = vpop.f32.mrb[0].mxu0
        %v452 = vadd.f32 0.0, %v451
        %v453 = vpop.f32.mrb[0].mxu0
        %454 = vmatprep.mubr.f32.mxu0 0.0
        %455 = vmatmul.mubr.f32.gmra.mrb[0].mxu0 %v357
        %v456 = vpop.f32.mrb[0].mxu0
        %v457 = vadd.f32 0.0, %v456
        %v458 = vpop.f32.mrb[0].mxu0
        %459 = vdwg.mxu0
        %460 = vmatprep.subr.mxu0 0.0
        %461 = vmatpush1.msra.mxu0 %v338
        %462 = vmatprep.subr.mxu0 0.0
        %463 = vmatpush1.msra.mxu0 %v339
        %464 = vmatprep.subr.mxu0 0.0
        %465 = vmatpush1.msra.mxu0 %v340
        %466 = vmatprep.subr.mxu0 0.0
        %467 = vmatpush1.msra.mxu0 %v341
        %468 = vmatprep.subr.mxu0 0.0
        %469 = vmatpush1.msra.mxu0 %v342
        %470 = vmatprep.subr.mxu0 0.0
        %471 = vmatpush1.msra.mxu0 %v343
        %472 = vmatprep.subr.mxu0 0.0
        %473 = vmatpush1.msra.mxu0 %v344
        %474 = vmatprep.subr.mxu0 0.0
        %475 = vmatpush1.msra.mxu0 %v345
        %476 = vmatprep.subr.mxu0 0.0
        %477 = vmatpush1.msra.mxu0 %v346
        %478 = vmatprep.subr.mxu0 0.0
        %479 = vmatpush1.msra.mxu0 %v347
        %480 = vmatprep.subr.mxu0 0.0
        %481 = vmatpush1.msra.mxu0 %v348
        %482 = vmatprep.subr.mxu0 0.0
        %483 = vmatpush1.msra.mxu0 %v349
        %484 = vmatprep.subr.mxu0 0.0
        %485 = vmatpush1.msra.mxu0 %v350
        %486 = vmatprep.subr.mxu0 0.0
        %487 = vmatpush1.msra.mxu0 %v351
        %488 = vmatprep.subr.mxu0 0.0
        %489 = vmatpush1.msra.mxu0 %v352
        %490 = vmatprep.subr.mxu0 0.0
        %491 = vmatpush1.msra.mxu0 %v353
        %492 = vmatprep.subr.mxu0 0.0
        %493 = vmatpush1.msra.mxu0 0.0
        %494 = vmatprep.subr.mxu0 0.0
        %495 = vmatpush1.msra.mxu0 0.0
        %496 = vmatprep.subr.mxu0 0.0
        %497 = vmatpush1.msra.mxu0 0.0
        %498 = vmatprep.subr.mxu0 0.0
        %499 = vmatpush1.msra.mxu0 0.0
        %500 = vmatprep.subr.mxu0 0.0
        %501 = vmatpush1.msra.mxu0 0.0
        %502 = vmatprep.subr.mxu0 0.0
        %503 = vmatpush1.msra.mxu0 0.0
        %504 = vmatprep.subr.mxu0 0.0
        %505 = vmatpush1.msra.mxu0 0.0
        %506 = vmatprep.subr.mxu0 0.0
        %507 = vmatpush1.msra.mxu0 0.0
        %508 = vmatprep.subr.mxu0 0.0
        %509 = vmatpush1.msra.mxu0 0.0
        %510 = vmatprep.subr.mxu0 0.0
        %511 = vmatpush1.msra.mxu0 0.0
        %512 = vmatprep.subr.mxu0 0.0
        %513 = vmatpush1.msra.mxu0 0.0
        %514 = vmatprep.subr.mxu0 0.0
        %515 = vmatpush1.msra.mxu0 0.0
        %516 = vmatprep.subr.mxu0 0.0
        %517 = vmatpush1.msra.mxu0 0.0
        %518 = vmatprep.subr.mxu0 0.0
        %519 = vmatpush1.msra.mxu0 0.0
        %520 = vmatprep.subr.mxu0 0.0
        %521 = vmatpush1.msra.mxu0 0.0
        %522 = vmatprep.subr.mxu0 0.0
        %523 = vmatpush1.msra.mxu0 0.0
        %524 = vmatprep.mubr.f32.mxu0 0.0
        %525 = vmatmul.mubr.f32.gmra.mrb[0].mxu0 %v334
        %v526 = vpop.f32.mrb[0].mxu0
        %v527 = vadd.f32 %v442, %v526
        %v528 = vpop.f32.mrb[0].mxu0
        %529 = vmatprep.mubr.f32.mxu0 0.0
        %530 = vmatmul.mubr.f32.gmra.mrb[0].mxu0 %v335
        %v531 = vpop.f32.mrb[0].mxu0
        %v532 = vadd.f32 %v447, %v531
        %v533 = vpop.f32.mrb[0].mxu0
        %534 = vmatprep.mubr.f32.mxu0 0.0
        %535 = vmatmul.mubr.f32.gmra.mrb[0].mxu0 %v336
        %v536 = vpop.f32.mrb[0].mxu0
        %v537 = vadd.f32 %v452, %v536
        %v538 = vpop.f32.mrb[0].mxu0
        %539 = vmatprep.mubr.f32.mxu0 0.0
        %540 = vmatmul.mubr.f32.gmra.mrb[0].mxu0 %v337
        %v541 = vpop.f32.mrb[0].mxu0
        %v542 = vadd.f32 %v457, %v541
        %v543 = vpop.f32.mrb[0].mxu0
        %544 = vdwg.mxu0
        %v545 = vld [vmem:[#allocation2 + $0x2] sm:$0xff]
        %v546 = vld [vmem:[#allocation2 + $0xa] sm:$0xff]
        %v547 = vld [vmem:[#allocation2 + $0x1a] sm:$0xff]
        %v548 = vld [vmem:[#allocation2 + $0x22] sm:$0xff]
        %s549 = scalar_lea.vmem %s272, 256 [#allocation3]
        %v550 = vld [vmem:[%s549] sm:$0xff]
        %v551 = vld [vmem:[%s549 + $0x8] sm:$0xff]
        %v552 = vld [vmem:[%s549 + $0x10] sm:$0xff]
        %v553 = vld [vmem:[%s549 + $0x18] sm:$0xff]
        %v554 = vld [vmem:[%s549 + $0x20] sm:$0xff]
        %v555 = vld [vmem:[%s549 + $0x28] sm:$0xff]
        %v556 = vld [vmem:[%s549 + $0x30] sm:$0xff]
        %v557 = vld [vmem:[%s549 + $0x38] sm:$0xff]
        %v558 = vld [vmem:[%s549 + $0x40] sm:$0xff]
        %v559 = vld [vmem:[%s549 + $0x48] sm:$0xff]
        %v560 = vld [vmem:[%s549 + $0x50] sm:$0xff]
        %v561 = vld [vmem:[%s549 + $0x58] sm:$0xff]
        %v562 = vld [vmem:[%s549 + $0x60] sm:$0xff]
        %v563 = vld [vmem:[%s549 + $0x68] sm:$0xff]
        %v564 = vld [vmem:[%s549 + $0x70] sm:$0xff]
        %v565 = vld [vmem:[%s549 + $0x78] sm:$0xff]
        %566 = vmatprep.subr.mxu0 0.0
        %567 = vmatpush1.msra.mxu0 %v550
        %568 = vmatprep.subr.mxu0 0.0
        %569 = vmatpush1.msra.mxu0 %v551
        %570 = vmatprep.subr.mxu0 0.0
        %571 = vmatpush1.msra.mxu0 %v552
        %572 = vmatprep.subr.mxu0 0.0
        %573 = vmatpush1.msra.mxu0 %v553
        %574 = vmatprep.subr.mxu0 0.0
        %575 = vmatpush1.msra.mxu0 %v554
        %576 = vmatprep.subr.mxu0 0.0
        %577 = vmatpush1.msra.mxu0 %v555
        %578 = vmatprep.subr.mxu0 0.0
        %579 = vmatpush1.msra.mxu0 %v556
        %580 = vmatprep.subr.mxu0 0.0
        %581 = vmatpush1.msra.mxu0 %v557
        %582 = vmatprep.subr.mxu0 0.0
        %583 = vmatpush1.msra.mxu0 %v558
        %584 = vmatprep.subr.mxu0 0.0
        %585 = vmatpush1.msra.mxu0 %v559
        %586 = vmatprep.subr.mxu0 0.0
        %587 = vmatpush1.msra.mxu0 %v560
        %588 = vmatprep.subr.mxu0 0.0
        %589 = vmatpush1.msra.mxu0 %v561
        %590 = vmatprep.subr.mxu0 0.0
        %591 = vmatpush1.msra.mxu0 %v562
        %592 = vmatprep.subr.mxu0 0.0
        %593 = vmatpush1.msra.mxu0 %v563
        %594 = vmatprep.subr.mxu0 0.0
        %595 = vmatpush1.msra.mxu0 %v564
        %596 = vmatprep.subr.mxu0 0.0
        %597 = vmatpush1.msra.mxu0 %v565
        %598 = vmatprep.subr.mxu0 0.0
        %599 = vmatpush1.msra.mxu0 0.0
        %600 = vmatprep.subr.mxu0 0.0
        %601 = vmatpush1.msra.mxu0 0.0
        %602 = vmatprep.subr.mxu0 0.0
        %603 = vmatpush1.msra.mxu0 0.0
        %604 = vmatprep.subr.mxu0 0.0
        %605 = vmatpush1.msra.mxu0 0.0
        %606 = vmatprep.subr.mxu0 0.0
        %607 = vmatpush1.msra.mxu0 0.0
        %608 = vmatprep.subr.mxu0 0.0
        %609 = vmatpush1.msra.mxu0 0.0
        %610 = vmatprep.subr.mxu0 0.0
        %611 = vmatpush1.msra.mxu0 0.0
        %612 = vmatprep.subr.mxu0 0.0
        %613 = vmatpush1.msra.mxu0 0.0
        %614 = vmatprep.subr.mxu0 0.0
        %615 = vmatpush1.msra.mxu0 0.0
        %616 = vmatprep.subr.mxu0 0.0
        %617 = vmatpush1.msra.mxu0 0.0
        %618 = vmatprep.subr.mxu0 0.0
        %619 = vmatpush1.msra.mxu0 0.0
        %620 = vmatprep.subr.mxu0 0.0
        %621 = vmatpush1.msra.mxu0 0.0
        %622 = vmatprep.subr.mxu0 0.0
        %623 = vmatpush1.msra.mxu0 0.0
        %624 = vmatprep.subr.mxu0 0.0
        %625 = vmatpush1.msra.mxu0 0.0
        %626 = vmatprep.subr.mxu0 0.0
        %627 = vmatpush1.msra.mxu0 0.0
        %628 = vmatprep.subr.mxu0 0.0
        %629 = vmatpush1.msra.mxu0 0.0
        %630 = vmatprep.mubr.f32.mxu0 0.0
        %631 = vmatmul.mubr.f32.gmra.mrb[0].mxu0 %v545
        %v632 = vpop.f32.mrb[0].mxu0
        %v633 = vadd.f32 0.0, %v632
        %v634 = vpop.f32.mrb[0].mxu0
        %635 = vmatprep.mubr.f32.mxu0 0.0
        %636 = vmatmul.mubr.f32.gmra.mrb[0].mxu0 %v546
        %v637 = vpop.f32.mrb[0].mxu0
        %v638 = vadd.f32 0.0, %v637
        %v639 = vpop.f32.mrb[0].mxu0
        %640 = vmatprep.mubr.f32.mxu0 0.0
        %641 = vmatmul.mubr.f32.gmra.mrb[0].mxu0 %v547
        %v642 = vpop.f32.mrb[0].mxu0
        %v643 = vadd.f32 0.0, %v642
        %v644 = vpop.f32.mrb[0].mxu0
        %645 = vmatprep.mubr.f32.mxu0 0.0
        %646 = vmatmul.mubr.f32.gmra.mrb[0].mxu0 %v548
        %v647 = vpop.f32.mrb[0].mxu0
        %v648 = vadd.f32 0.0, %v647
        %v649 = vpop.f32.mrb[0].mxu0
        %650 = vdwg.mxu0
        %v651 = vadd.f32 %v527, %v633
        %v652 = vadd.f32 %v532, %v638
        %v653 = vadd.f32 %v537, %v643
        %v654 = vadd.f32 %v542, %v648
        %v655 = vld [vmem:[#allocation2 + $0x3] sm:$0xff]
        %v656 = vld [vmem:[#allocation2 + $0xb] sm:$0xff]
        %v657 = vld [vmem:[#allocation2 + $0x1b] sm:$0xff]
        %v658 = vld [vmem:[#allocation2 + $0x23] sm:$0xff]
        %s659 = scalar_lea.vmem %s272, 384 [#allocation3]
        %v660 = vld [vmem:[%s659] sm:$0xff]
        %v661 = vld [vmem:[%s659 + $0x8] sm:$0xff]
        %v662 = vld [vmem:[%s659 + $0x10] sm:$0xff]
        %v663 = vld [vmem:[%s659 + $0x18] sm:$0xff]
        %v664 = vld [vmem:[%s659 + $0x20] sm:$0xff]
        %v665 = vld [vmem:[%s659 + $0x28] sm:$0xff]
        %v666 = vld [vmem:[%s659 + $0x30] sm:$0xff]
        %v667 = vld [vmem:[%s659 + $0x38] sm:$0xff]
        %v668 = vld [vmem:[%s659 + $0x40] sm:$0xff]
        %v669 = vld [vmem:[%s659 + $0x48] sm:$0xff]
        %v670 = vld [vmem:[%s659 + $0x50] sm:$0xff]
        %v671 = vld [vmem:[%s659 + $0x58] sm:$0xff]
        %v672 = vld [vmem:[%s659 + $0x60] sm:$0xff]
        %v673 = vld [vmem:[%s659 + $0x68] sm:$0xff]
        %v674 = vld [vmem:[%s659 + $0x70] sm:$0xff]
        %v675 = vld [vmem:[%s659 + $0x78] sm:$0xff]
        %676 = vmatprep.subr.mxu0 0.0
        %677 = vmatpush1.msra.mxu0 %v660
        %678 = vmatprep.subr.mxu0 0.0
        %679 = vmatpush1.msra.mxu0 %v661
        %680 = vmatprep.subr.mxu0 0.0
        %681 = vmatpush1.msra.mxu0 %v662
        %682 = vmatprep.subr.mxu0 0.0
        %683 = vmatpush1.msra.mxu0 %v663
        %684 = vmatprep.subr.mxu0 0.0
        %685 = vmatpush1.msra.mxu0 %v664
        %686 = vmatprep.subr.mxu0 0.0
        %687 = vmatpush1.msra.mxu0 %v665
        %688 = vmatprep.subr.mxu0 0.0
        %689 = vmatpush1.msra.mxu0 %v666
        %690 = vmatprep.subr.mxu0 0.0
        %691 = vmatpush1.msra.mxu0 %v667
        %692 = vmatprep.subr.mxu0 0.0
        %693 = vmatpush1.msra.mxu0 %v668
        %694 = vmatprep.subr.mxu0 0.0
        %695 = vmatpush1.msra.mxu0 %v669
        %696 = vmatprep.subr.mxu0 0.0
        %697 = vmatpush1.msra.mxu0 %v670
        %698 = vmatprep.subr.mxu0 0.0
        %699 = vmatpush1.msra.mxu0 %v671
        %700 = vmatprep.subr.mxu0 0.0
        %701 = vmatpush1.msra.mxu0 %v672
        %702 = vmatprep.subr.mxu0 0.0
        %703 = vmatpush1.msra.mxu0 %v673
        %704 = vmatprep.subr.mxu0 0.0
        %705 = vmatpush1.msra.mxu0 %v674
        %706 = vmatprep.subr.mxu0 0.0
        %707 = vmatpush1.msra.mxu0 %v675
        %708 = vmatprep.subr.mxu0 0.0
        %709 = vmatpush1.msra.mxu0 0.0
        %710 = vmatprep.subr.mxu0 0.0
        %711 = vmatpush1.msra.mxu0 0.0
        %712 = vmatprep.subr.mxu0 0.0
        %713 = vmatpush1.msra.mxu0 0.0
        %714 = vmatprep.subr.mxu0 0.0
        %715 = vmatpush1.msra.mxu0 0.0
        %716 = vmatprep.subr.mxu0 0.0
        %717 = vmatpush1.msra.mxu0 0.0
        %718 = vmatprep.subr.mxu0 0.0
        %719 = vmatpush1.msra.mxu0 0.0
        %720 = vmatprep.subr.mxu0 0.0
        %721 = vmatpush1.msra.mxu0 0.0
        %722 = vmatprep.subr.mxu0 0.0
        %723 = vmatpush1.msra.mxu0 0.0
        %724 = vmatprep.subr.mxu0 0.0
        %725 = vmatpush1.msra.mxu0 0.0
        %726 = vmatprep.subr.mxu0 0.0
        %727 = vmatpush1.msra.mxu0 0.0
        %728 = vmatprep.subr.mxu0 0.0
        %729 = vmatpush1.msra.mxu0 0.0
        %730 = vmatprep.subr.mxu0 0.0
        %731 = vmatpush1.msra.mxu0 0.0
        %732 = vmatprep.subr.mxu0 0.0
        %733 = vmatpush1.msra.mxu0 0.0
        %734 = vmatprep.subr.mxu0 0.0
        %735 = vmatpush1.msra.mxu0 0.0
        %736 = vmatprep.subr.mxu0 0.0
        %737 = vmatpush1.msra.mxu0 0.0
        %738 = vmatprep.subr.mxu0 0.0
        %739 = vmatpush1.msra.mxu0 0.0
        %740 = vmatprep.mubr.f32.mxu0 0.0
        %741 = vmatmul.mubr.f32.gmra.mrb[0].mxu0 %v655
        %v742 = vpop.f32.mrb[0].mxu0
        %v743 = vadd.f32 0.0, %v742
        %v744 = vpop.f32.mrb[0].mxu0
        %745 = vmatprep.mubr.f32.mxu0 0.0
        %746 = vmatmul.mubr.f32.gmra.mrb[0].mxu0 %v656
        %v747 = vpop.f32.mrb[0].mxu0
        %v748 = vadd.f32 0.0, %v747
        %v749 = vpop.f32.mrb[0].mxu0
        %750 = vmatprep.mubr.f32.mxu0 0.0
        %751 = vmatmul.mubr.f32.gmra.mrb[0].mxu0 %v657
        %v752 = vpop.f32.mrb[0].mxu0
        %v753 = vadd.f32 0.0, %v752
        %v754 = vpop.f32.mrb[0].mxu0
        %755 = vmatprep.mubr.f32.mxu0 0.0
        %756 = vmatmul.mubr.f32.gmra.mrb[0].mxu0 %v658
        %v757 = vpop.f32.mrb[0].mxu0
        %v758 = vadd.f32 0.0, %v757
        %v759 = vpop.f32.mrb[0].mxu0
        %760 = vdwg.mxu0
        %v761 = vadd.f32 %v651, %v743
        %v762 = vadd.f32 %v652, %v748
        %v763 = vadd.f32 %v653, %v753
        %v764 = vadd.f32 %v654, %v758
        %v765 = vld [vmem:[#allocation2 + $0x4] sm:$0xff]
        %v766 = vld [vmem:[#allocation2 + $0xc] sm:$0xff]
        %v767 = vld [vmem:[#allocation2 + $0x1c] sm:$0xff]
        %v768 = vld [vmem:[#allocation2 + $0x24] sm:$0xff]
        %s769 = scalar_lea.vmem %s272, 512 [#allocation3]
        %v770 = vld [vmem:[%s769] sm:$0xff]
        %v771 = vld [vmem:[%s769 + $0x8] sm:$0xff]
        %v772 = vld [vmem:[%s769 + $0x10] sm:$0xff]
        %v773 = vld [vmem:[%s769 + $0x18] sm:$0xff]
        %v774 = vld [vmem:[%s769 + $0x20] sm:$0xff]
        %v775 = vld [vmem:[%s769 + $0x28] sm:$0xff]
        %v776 = vld [vmem:[%s769 + $0x30] sm:$0xff]
        %v777 = vld [vmem:[%s769 + $0x38] sm:$0xff]
        %v778 = vld [vmem:[%s769 + $0x40] sm:$0xff]
        %v779 = vld [vmem:[%s769 + $0x48] sm:$0xff]
        %v780 = vld [vmem:[%s769 + $0x50] sm:$0xff]
        %v781 = vld [vmem:[%s769 + $0x58] sm:$0xff]
        %v782 = vld [vmem:[%s769 + $0x60] sm:$0xff]
        %v783 = vld [vmem:[%s769 + $0x68] sm:$0xff]
        %v784 = vld [vmem:[%s769 + $0x70] sm:$0xff]
        %v785 = vld [vmem:[%s769 + $0x78] sm:$0xff]
        %786 = vmatprep.subr.mxu0 0.0
        %787 = vmatpush1.msra.mxu0 %v770
        %788 = vmatprep.subr.mxu0 0.0
        %789 = vmatpush1.msra.mxu0 %v771
        %790 = vmatprep.subr.mxu0 0.0
        %791 = vmatpush1.msra.mxu0 %v772
        %792 = vmatprep.subr.mxu0 0.0
        %793 = vmatpush1.msra.mxu0 %v773
        %794 = vmatprep.subr.mxu0 0.0
        %795 = vmatpush1.msra.mxu0 %v774
        %796 = vmatprep.subr.mxu0 0.0
        %797 = vmatpush1.msra.mxu0 %v775
        %798 = vmatprep.subr.mxu0 0.0
        %799 = vmatpush1.msra.mxu0 %v776
        %800 = vmatprep.subr.mxu0 0.0
        %801 = vmatpush1.msra.mxu0 %v777
        %802 = vmatprep.subr.mxu0 0.0
        %803 = vmatpush1.msra.mxu0 %v778
        %804 = vmatprep.subr.mxu0 0.0
        %805 = vmatpush1.msra.mxu0 %v779
        %806 = vmatprep.subr.mxu0 0.0
        %807 = vmatpush1.msra.mxu0 %v780
        %808 = vmatprep.subr.mxu0 0.0
        %809 = vmatpush1.msra.mxu0 %v781
        %810 = vmatprep.subr.mxu0 0.0
        %811 = vmatpush1.msra.mxu0 %v782
        %812 = vmatprep.subr.mxu0 0.0
        %813 = vmatpush1.msra.mxu0 %v783
        %814 = vmatprep.subr.mxu0 0.0
        %815 = vmatpush1.msra.mxu0 %v784
        %816 = vmatprep.subr.mxu0 0.0
        %817 = vmatpush1.msra.mxu0 %v785
        %818 = vmatprep.subr.mxu0 0.0
        %819 = vmatpush1.msra.mxu0 0.0
        %820 = vmatprep.subr.mxu0 0.0
        %821 = vmatpush1.msra.mxu0 0.0
        %822 = vmatprep.subr.mxu0 0.0
        %823 = vmatpush1.msra.mxu0 0.0
        %824 = vmatprep.subr.mxu0 0.0
        %825 = vmatpush1.msra.mxu0 0.0
        %826 = vmatprep.subr.mxu0 0.0
        %827 = vmatpush1.msra.mxu0 0.0
        %828 = vmatprep.subr.mxu0 0.0
        %829 = vmatpush1.msra.mxu0 0.0
        %830 = vmatprep.subr.mxu0 0.0
        %831 = vmatpush1.msra.mxu0 0.0
        %832 = vmatprep.subr.mxu0 0.0
        %833 = vmatpush1.msra.mxu0 0.0
        %834 = vmatprep.subr.mxu0 0.0
        %835 = vmatpush1.msra.mxu0 0.0
        %836 = vmatprep.subr.mxu0 0.0
        %837 = vmatpush1.msra.mxu0 0.0
        %838 = vmatprep.subr.mxu0 0.0
        %839 = vmatpush1.msra.mxu0 0.0
        %840 = vmatprep.subr.mxu0 0.0
        %841 = vmatpush1.msra.mxu0 0.0
        %842 = vmatprep.subr.mxu0 0.0
        %843 = vmatpush1.msra.mxu0 0.0
        %844 = vmatprep.subr.mxu0 0.0
        %845 = vmatpush1.msra.mxu0 0.0
        %846 = vmatprep.subr.mxu0 0.0
        %847 = vmatpush1.msra.mxu0 0.0
        %848 = vmatprep.subr.mxu0 0.0
        %849 = vmatpush1.msra.mxu0 0.0
        %850 = vmatprep.mubr.f32.mxu0 0.0
        %851 = vmatmul.mubr.f32.gmra.mrb[0].mxu0 %v765
        %v852 = vpop.f32.mrb[0].mxu0
        %v853 = vadd.f32 0.0, %v852
        %v854 = vpop.f32.mrb[0].mxu0
        %855 = vmatprep.mubr.f32.mxu0 0.0
        %856 = vmatmul.mubr.f32.gmra.mrb[0].mxu0 %v766
        %v857 = vpop.f32.mrb[0].mxu0
        %v858 = vadd.f32 0.0, %v857
        %v859 = vpop.f32.mrb[0].mxu0
        %860 = vmatprep.mubr.f32.mxu0 0.0
        %861 = vmatmul.mubr.f32.gmra.mrb[0].mxu0 %v767
        %v862 = vpop.f32.mrb[0].mxu0
        %v863 = vadd.f32 0.0, %v862
        %v864 = vpop.f32.mrb[0].mxu0
        %865 = vmatprep.mubr.f32.mxu0 0.0
        %866 = vmatmul.mubr.f32.gmra.mrb[0].mxu0 %v768
        %v867 = vpop.f32.mrb[0].mxu0
        %v868 = vadd.f32 0.0, %v867
        %v869 = vpop.f32.mrb[0].mxu0
        %870 = vdwg.mxu0
        %v871 = vadd.f32 %v761, %v853
        %v872 = vadd.f32 %v762, %v858
        %v873 = vadd.f32 %v763, %v863
        %v874 = vadd.f32 %v764, %v868
        %v875 = vld [vmem:[%s280] sm:$0x1]
        %v877 = vlaneseq
        %v878 = vshrl.u32 %v877, 7
        %v879 = vsub.s32 0, %v878
        %v880 = vrot.slane %v875, %v879
        %v882 = vadd.f32 %v871, %v880
        %v883 = vadd.f32 %v872, %v880
        %v884 = vadd.f32 %v873, %v880
        %v885 = vadd.f32 %v874, %v880
        %p886 = scmp.ne.s32.totalorder %s24, 2
        // Predicated region
        $region65: #{cnn_feature_extraction_forward.10} parent=43 // pred_check
          %p887 = pneg %p886
        $region66: #{cnn_feature_extraction_forward.10} parent=43 // pred_check_branch
          %889 = sbr.rel (%p887) target = $region68
        $region67: #{cnn_feature_extraction_forward.10} parent=43 // pred_region
          %890 = vst [vmem:[#allocation2 + $0x2] sm:$0xff] %v882
          %891 = vst [vmem:[#allocation2 + $0xa] sm:$0xff] %v883
          %892 = vst [vmem:[#allocation2 + $0x1a] sm:$0xff] %v884
          %893 = vst [vmem:[#allocation2 + $0x22] sm:$0xff] %v885
        $region68: #{cnn_feature_extraction_forward.10} parent=43 // pred_fallthru
          _
        %p894 = scmp.eq.s32.totalorder %s24, 2
        // Predicated region
        $region69: #{cnn_feature_extraction_forward.10} parent=43 // pred_check
          %p895 = pneg %p894
        $region70: #{cnn_feature_extraction_forward.10} parent=43 // pred_check_branch
          %897 = sbr.rel (%p895) target = $region72
        $region71: #{cnn_feature_extraction_forward.10} parent=43 // pred_region
          %v898 = vadd.f32 %v882, %v883
          %v899 = vadd.f32 %v898, %v884
          %v900 = vadd.f32 %v899, %v885
          %v901 = vrot.slane %v900, 4
          %v902 = vadd.f32 %v900, %v901
          %v903 = vrot.slane %v902, 2
          %v904 = vadd.f32 %v902, %v903
          %v905 = vrot.slane %v904, 1
          %v906 = vadd.f32 %v904, %v905
          %v907 = vld [vmem:[%s5] sm:$0xff]
          %v908 = vld [vmem:[%s5 + $0x8] sm:$0xff]
          %v909 = vld [vmem:[%s5 + $0x10] sm:$0xff]
          %v910 = vld [vmem:[%s5 + $0x18] sm:$0xff]
          %v911 = vld [vmem:[%s5 + $0x20] sm:$0xff]
          %v912 = vld [vmem:[%s5 + $0x28] sm:$0xff]
          %v913 = vld [vmem:[%s5 + $0x30] sm:$0xff]
          %v914 = vld [vmem:[%s5 + $0x38] sm:$0xff]
          %v915 = vld [vmem:[%s5 + $0x40] sm:$0xff]
          %v916 = vld [vmem:[%s5 + $0x48] sm:$0xff]
          %v917 = vld [vmem:[%s5 + $0x50] sm:$0xff]
          %v918 = vld [vmem:[%s5 + $0x58] sm:$0xff]
          %v919 = vld [vmem:[%s5 + $0x60] sm:$0xff]
          %v920 = vld [vmem:[%s5 + $0x68] sm:$0xff]
          %v921 = vld [vmem:[%s5 + $0x70] sm:$0xff]
          %v922 = vld [vmem:[%s5 + $0x78] sm:$0xff]
          %923 = vmatprep.subr.mxu0 0.0
          %924 = vmatpush1.msra.mxu0 %v907
          %925 = vmatprep.subr.mxu0 0.0
          %926 = vmatpush1.msra.mxu0 %v908
          %927 = vmatprep.subr.mxu0 0.0
          %928 = vmatpush1.msra.mxu0 %v909
          %929 = vmatprep.subr.mxu0 0.0
          %930 = vmatpush1.msra.mxu0 %v910
          %931 = vmatprep.subr.mxu0 0.0
          %932 = vmatpush1.msra.mxu0 %v911
          %933 = vmatprep.subr.mxu0 0.0
          %934 = vmatpush1.msra.mxu0 %v912
          %935 = vmatprep.subr.mxu0 0.0
          %936 = vmatpush1.msra.mxu0 %v913
          %937 = vmatprep.subr.mxu0 0.0
          %938 = vmatpush1.msra.mxu0 %v914
          %939 = vmatprep.subr.mxu0 0.0
          %940 = vmatpush1.msra.mxu0 %v915
          %941 = vmatprep.subr.mxu0 0.0
          %942 = vmatpush1.msra.mxu0 %v916
          %943 = vmatprep.subr.mxu0 0.0
          %944 = vmatpush1.msra.mxu0 %v917
          %945 = vmatprep.subr.mxu0 0.0
          %946 = vmatpush1.msra.mxu0 %v918
          %947 = vmatprep.subr.mxu0 0.0
          %948 = vmatpush1.msra.mxu0 %v919
          %949 = vmatprep.subr.mxu0 0.0
          %950 = vmatpush1.msra.mxu0 %v920
          %951 = vmatprep.subr.mxu0 0.0
          %952 = vmatpush1.msra.mxu0 %v921
          %953 = vmatprep.subr.mxu0 0.0
          %954 = vmatpush1.msra.mxu0 %v922
          %955 = vmatprep.subr.mxu0 0.0
          %956 = vmatpush1.msra.mxu0 0.0
          %957 = vmatprep.subr.mxu0 0.0
          %958 = vmatpush1.msra.mxu0 0.0
          %959 = vmatprep.subr.mxu0 0.0
          %960 = vmatpush1.msra.mxu0 0.0
          %961 = vmatprep.subr.mxu0 0.0
          %962 = vmatpush1.msra.mxu0 0.0
          %963 = vmatprep.subr.mxu0 0.0
          %964 = vmatpush1.msra.mxu0 0.0
          %965 = vmatprep.subr.mxu0 0.0
          %966 = vmatpush1.msra.mxu0 0.0
          %967 = vmatprep.subr.mxu0 0.0
          %968 = vmatpush1.msra.mxu0 0.0
          %969 = vmatprep.subr.mxu0 0.0
          %970 = vmatpush1.msra.mxu0 0.0
          %971 = vmatprep.subr.mxu0 0.0
          %972 = vmatpush1.msra.mxu0 0.0
          %973 = vmatprep.subr.mxu0 0.0
          %974 = vmatpush1.msra.mxu0 0.0
          %975 = vmatprep.subr.mxu0 0.0
          %976 = vmatpush1.msra.mxu0 0.0
          %977 = vmatprep.subr.mxu0 0.0
          %978 = vmatpush1.msra.mxu0 0.0
          %979 = vmatprep.subr.mxu0 0.0
          %980 = vmatpush1.msra.mxu0 0.0
          %981 = vmatprep.subr.mxu0 0.0
          %982 = vmatpush1.msra.mxu0 0.0
          %983 = vmatprep.subr.mxu0 0.0
          %984 = vmatpush1.msra.mxu0 0.0
          %985 = vmatprep.subr.mxu0 0.0
          %986 = vmatpush1.msra.mxu0 0.0
          %987 = vmatprep.mubr.f32.mxu0 0.0
          %988 = vmatmul.mubr.f32.gmra.mrb[0].mxu0 %v906
          %v989 = vpop.f32.mrb[0].mxu0
          %v990 = vadd.f32 0.0, %v989
          %v991 = vpop.f32.mrb[0].mxu0
          %992 = vdwg.mxu0
          %v993 = vmul.f32 %v990, 0.001953125
          %v994 = vlaneseq
          %v995 = vshrl.u32 %v994, 7
          %v996 = vsub.s32 0, %v995
          %v997 = vrot.slane %v993, %v996
          %v998 = vsub.f32 %v882, %v997
          %v999 = vsub.f32 %v883, %v997
          %v1000 = vsub.f32 %v884, %v997
          %v1001 = vsub.f32 %v885, %v997
          %v1002 = vmul.f32 %v998, %v998
          %v1003 = vmul.f32 %v999, %v999
          %v1004 = vmul.f32 %v1000, %v1000
          %v1005 = vmul.f32 %v1001, %v1001
          %v1006 = vadd.f32 %v1002, %v1003
          %v1007 = vadd.f32 %v1006, %v1004
          %v1008 = vadd.f32 %v1007, %v1005
          %v1009 = vrot.slane %v1008, 4
          %v1010 = vadd.f32 %v1008, %v1009
          %v1011 = vrot.slane %v1010, 2
          %v1012 = vadd.f32 %v1010, %v1011
          %v1013 = vrot.slane %v1012, 1
          %v1014 = vadd.f32 %v1012, %v1013
          %1015 = vmatprep.subr.mxu0 0.0
          %1016 = vmatpush1.msra.mxu0 %v907
          %1017 = vmatprep.subr.mxu0 0.0
          %1018 = vmatpush1.msra.mxu0 %v908
          %1019 = vmatprep.subr.mxu0 0.0
          %1020 = vmatpush1.msra.mxu0 %v909
          %1021 = vmatprep.subr.mxu0 0.0
          %1022 = vmatpush1.msra.mxu0 %v910
          %1023 = vmatprep.subr.mxu0 0.0
          %1024 = vmatpush1.msra.mxu0 %v911
          %1025 = vmatprep.subr.mxu0 0.0
          %1026 = vmatpush1.msra.mxu0 %v912
          %1027 = vmatprep.subr.mxu0 0.0
          %1028 = vmatpush1.msra.mxu0 %v913
          %1029 = vmatprep.subr.mxu0 0.0
          %1030 = vmatpush1.msra.mxu0 %v914
          %1031 = vmatprep.subr.mxu0 0.0
          %1032 = vmatpush1.msra.mxu0 %v915
          %1033 = vmatprep.subr.mxu0 0.0
          %1034 = vmatpush1.msra.mxu0 %v916
          %1035 = vmatprep.subr.mxu0 0.0
          %1036 = vmatpush1.msra.mxu0 %v917
          %1037 = vmatprep.subr.mxu0 0.0
          %1038 = vmatpush1.msra.mxu0 %v918
          %1039 = vmatprep.subr.mxu0 0.0
          %1040 = vmatpush1.msra.mxu0 %v919
          %1041 = vmatprep.subr.mxu0 0.0
          %1042 = vmatpush1.msra.mxu0 %v920
          %1043 = vmatprep.subr.mxu0 0.0
          %1044 = vmatpush1.msra.mxu0 %v921
          %1045 = vmatprep.subr.mxu0 0.0
          %1046 = vmatpush1.msra.mxu0 %v922
          %1047 = vmatprep.subr.mxu0 0.0
          %1048 = vmatpush1.msra.mxu0 0.0
          %1049 = vmatprep.subr.mxu0 0.0
          %1050 = vmatpush1.msra.mxu0 0.0
          %1051 = vmatprep.subr.mxu0 0.0
          %1052 = vmatpush1.msra.mxu0 0.0
          %1053 = vmatprep.subr.mxu0 0.0
          %1054 = vmatpush1.msra.mxu0 0.0
          %1055 = vmatprep.subr.mxu0 0.0
          %1056 = vmatpush1.msra.mxu0 0.0
          %1057 = vmatprep.subr.mxu0 0.0
          %1058 = vmatpush1.msra.mxu0 0.0
          %1059 = vmatprep.subr.mxu0 0.0
          %1060 = vmatpush1.msra.mxu0 0.0
          %1061 = vmatprep.subr.mxu0 0.0
          %1062 = vmatpush1.msra.mxu0 0.0
          %1063 = vmatprep.subr.mxu0 0.0
          %1064 = vmatpush1.msra.mxu0 0.0
          %1065 = vmatprep.subr.mxu0 0.0
          %1066 = vmatpush1.msra.mxu0 0.0
          %1067 = vmatprep.subr.mxu0 0.0
          %1068 = vmatpush1.msra.mxu0 0.0
          %1069 = vmatprep.subr.mxu0 0.0
          %1070 = vmatpush1.msra.mxu0 0.0
          %1071 = vmatprep.subr.mxu0 0.0
          %1072 = vmatpush1.msra.mxu0 0.0
          %1073 = vmatprep.subr.mxu0 0.0
          %1074 = vmatpush1.msra.mxu0 0.0
          %1075 = vmatprep.subr.mxu0 0.0
          %1076 = vmatpush1.msra.mxu0 0.0
          %1077 = vmatprep.subr.mxu0 0.0
          %1078 = vmatpush1.msra.mxu0 0.0
          %1079 = vmatprep.mubr.f32.mxu0 0.0
          %1080 = vmatmul.mubr.f32.gmra.mrb[0].mxu0 %v1014
          %v1081 = vpop.f32.mrb[0].mxu0
          %v1082 = vadd.f32 0.0, %v1081
          %v1083 = vpop.f32.mrb[0].mxu0
          %1084 = vdwg.mxu0
          %v1085 = vmul.f32 %v1082, 0.001953125
          %v1086 = vld [vmem:[#allocation7] sm:$0x1]
          %v1087 = vadd.f32 %v1085, 1e-05
          %v1088 = vrsqrt.pop %v1087
          %v1089 = vmul.f32 %v1086, %v1088
          %v1091 = vlaneseq
          %v1092 = vshrl.u32 %v1091, 7
          %v1093 = vsub.s32 0, %v1092
          %v1094 = vrot.slane %v1089, %v1093
          %v1096 = vmul.f32 %v998, %v1094
          %v1097 = vmul.f32 %v999, %v1094
          %v1098 = vmul.f32 %v1000, %v1094
          %v1099 = vmul.f32 %v1001, %v1094
          %v1100 = vld [vmem:[#allocation8] sm:$0x1]
          %v1102 = vlaneseq
          %v1103 = vshrl.u32 %v1102, 7
          %v1104 = vsub.s32 0, %v1103
          %v1105 = vrot.slane %v1100, %v1104
          %v1107 = vadd.f32 %v1096, %v1105
          %v1108 = vadd.f32 %v1097, %v1105
          %v1109 = vadd.f32 %v1098, %v1105
          %v1110 = vadd.f32 %v1099, %v1105
          %v1111 = vmin.f32 %v1107, 0.0
          %v1112 = vmin.f32 %v1108, 0.0
          %v1113 = vmin.f32 %v1109, 0.0
          %v1114 = vmin.f32 %v1110, 0.0
          %v1115 = vmul.f32 %v1111, 1.442695
          %v1116 = vpow.pop %v1115
          %v1117 = vmul.f32 %v1112, 1.442695
          %v1118 = vpow.pop %v1117
          %v1119 = vmul.f32 %v1113, 1.442695
          %v1120 = vpow.pop %v1119
          %v1121 = vmul.f32 %v1114, 1.442695
          %v1122 = vpow.pop %v1121
          %v1123 = vsub.f32 %v1116, 1.0
          %v1124 = vsub.f32 %v1118, 1.0
          %v1125 = vsub.f32 %v1120, 1.0
          %v1126 = vsub.f32 %v1122, 1.0
          %v1127 = vmul.f32 %v1123, 1.6732632
          %v1128 = vmul.f32 %v1124, 1.6732632
          %v1129 = vmul.f32 %v1125, 1.6732632
          %v1130 = vmul.f32 %v1126, 1.6732632
          %vm1131 = vcmp.gt.f32.partialorder %v1107, 0.0
          %vm1132 = vcmp.gt.f32.partialorder %v1108, 0.0
          %vm1133 = vcmp.gt.f32.partialorder %v1109, 0.0
          %vm1134 = vcmp.gt.f32.partialorder %v1110, 0.0
          %v1135 = vsel %vm1131, %v1107, %v1127
          %v1136 = vsel %vm1132, %v1108, %v1128
          %v1137 = vsel %vm1133, %v1109, %v1129
          %v1138 = vsel %vm1134, %v1110, %v1130
          %v1139 = vmul.f32 %v1135, 1.050701
          %v1140 = vmul.f32 %v1136, 1.050701
          %v1141 = vmul.f32 %v1137, 1.050701
          %v1142 = vmul.f32 %v1138, 1.050701
          %1143 = vst [vmem:[%s6] sm:$0xff] %v1139
          %1144 = vst [vmem:[%s6 + $0x8] sm:$0xff] %v1140
          %1145 = vst [vmem:[%s6 + $0x10] sm:$0xff] %v1141
          %1146 = vst [vmem:[%s6 + $0x18] sm:$0xff] %v1142
        $region72: #{cnn_feature_extraction_forward.10} parent=43 // pred_fallthru
          _
        // Predicated region
        $region73: #{cnn_feature_extraction_forward.10} parent=43 // pred_check
          %p1147 = pneg %p173
        $region74: #{cnn_feature_extraction_forward.10} parent=43 // pred_check_branch
          %1149 = sbr.rel (%p1147) target = $region76
        $region75: #{cnn_feature_extraction_forward.10} parent=43 // pred_region
          _
        $region76: #{cnn_feature_extraction_forward.10} parent=43 // pred_fallthru
          _
        // Predicated region
        $region77: #{cnn_feature_extraction_forward.10} parent=43 // pred_check
          %p1150 = pneg %p173
        $region78: #{cnn_feature_extraction_forward.10} parent=43 // pred_check_branch
          %1152 = sbr.rel (%p1150) target = $region80
        $region79: #{cnn_feature_extraction_forward.10} parent=43 // pred_region
          _
        $region80: #{cnn_feature_extraction_forward.10} parent=43 // pred_fallthru
          _
      $region44: #{cnn_feature_extraction_forward.10} parent=5 // pred_fallthru
        _
      %p1153 = scmp.le.s32.totalorder 2, %s19
      // Predicated region
      $region81: #{cnn_feature_extraction_forward.10} parent=5 // pred_check
        %p1154 = pneg %p1153
      $region82: #{cnn_feature_extraction_forward.10} parent=5 // pred_check_branch
        %1156 = sbr.rel (%p1154) target = $region84
      $region83: #{cnn_feature_extraction_forward.10} parent=5 // pred_region
        %s1157 = ssub.s32 %s19, 2
      $region84: #{cnn_feature_extraction_forward.10} parent=5 // pred_fallthru
        _
    $region6: #{cnn_feature_extraction_forward.10} parent=1 // loop_footer
      %s23 = sadd.s32 1, %s19
    $region7: #{cnn_feature_extraction_forward.10} parent=1 // loop_footer_branch
      %18 = sbr.rel target = $region3
    $region8: #{cnn_feature_extraction_forward.10} parent=1 // loop_exit
      _
    %1158 = vsyncpa [#allocation4], 1
    %s1159 = scalar_lea.sflag [#allocation4], 1
    %1160 = vsyncpa %s1159, 1
    %1161 = vsyncpa [#allocation6], 1
    %s1162 = scalar_lea.sflag [#allocation6], 1
    %1163 = vsyncpa %s1162, 1
    %1164 = vsyncpa [#allocation9], 1

// kernel: cnn_feature_extraction_forward.11
$region0: #{cnn_feature_extraction_forward.11}
  #allocation0 [shape = 'u32[]', space=smem, size = 0x4, offset = 0x4, fixed_abs, tag = 'smem constant byte address 0x4 - core index']
  #allocation1 [shape = 'u32[144,128]{1,0:T(1,128)}', space=vmem, size = 0x12000, scoped, tag = 'internal scratch']
  #allocation2 [shape = 'f32[2,20,128]{2,1,0:T(8,128)}', space=vmem, size = 0x6000, scoped, tag = 'scratch operand']
  %s0 = inlined_call_operand.vmem [shape: f32[2,16,128], index: 0, kind: input, shape index: {}]
  %s1 = inlined_call_operand.vmem [shape: f32[7,5,128,128], index: 1, kind: input, shape index: {}]
  %s2 = inlined_call_operand.vmem [shape: f32[7,1,128], index: 2, kind: input, shape index: {}]
  %s3 = inlined_call_operand.vmem [shape: f32[1,128], index: 3, kind: input, shape index: {}]
  %s4 = inlined_call_operand.vmem [shape: f32[1,128], index: 4, kind: input, shape index: {}]
  %s5 = inlined_call_operand.vmem [shape: f32[128,128], index: 5, kind: input, shape index: {}]
  %s6 = inlined_call_operand.vmem [shape: f32[32,128], index: 6, kind: output, shape index: {}]
  %s7 = sld [smem:[#allocation0]]
  $region69: #{cnn_feature_extraction_forward.11} parent=0
    _
  %s9 = ssub.s32 1, %s7
  %s10 = scalar_select 0, %s9, %s7
  loop: start=0, step=1, limit=9
  $region2: #{cnn_feature_extraction_forward.11} parent=0 // loop_pre_header
    _
  $region3: #{cnn_feature_extraction_forward.11} parent=0 // loop_header
    %s12 = sphi 0, %s16
    %p13 = scmp.ge.s32.totalorder %s12, 9
    %s20 = sphi 0, %s20
    %s22 = sphi 0, %s20
    %s23 = sphi 0, %s22
    %s37 = sphi 0, %s23
    %s43 = sphi 0, %s45
    %s46 = sphi 0, %s43
    %s47 = sphi 0, %s46
    %s63 = sphi 0, %s47
    %s69 = sphi 0, %s71
    %s72 = sphi 0, %s69
    %s73 = sphi 0, %s72
    %s89 = sphi 0, %s73
    %s93 = sphi 0, %s93
    %s95 = sphi 0, %s93
    %s96 = sphi 0, %s95
    %s110 = sphi 0, %s96
    %s114 = sphi 0, %s114
    %s116 = sphi 0, %s114
    %s117 = sphi 0, %s116
    %s131 = sphi 0, %s117
    %s135 = sphi 0, %s135
    %s137 = sphi 0, %s135
    %s138 = sphi 0, %s137
    %s152 = sphi 0, %s138
    %s156 = sphi 0, %s156
    %s158 = sphi 0, %s156
    %s159 = sphi 0, %s158
    %s173 = sphi 0, %s159
  $region4: #{cnn_feature_extraction_forward.11} parent=0 // loop_header_branch
    %15 = sbr.rel (%p13) target = $region8
  $region5: #{cnn_feature_extraction_forward.11} parent=0 // loop_body
    %s17 = ssub.s32 %s12, 1
    %s18 = ssub.s32 %s12, 2
    %s19 = sadd.s32 %s12, 1
    %s21 = sadd.s32 %s20, 1
    %p24 = scmp.eq.s32.totalorder %s12, 6
    %p25 = scmp.ne.s32.totalorder %s20, %s22
    %p26 = scmp.eq.s32.totalorder %s12, 0
    %p27 = por %p25, %p26
    %p28 = scmp.ne.s32.totalorder %s20, %s22
    %p29 = scmp.eq.s32.totalorder %s17, 6
    %p30 = por %p28, %p29
    %p31 = scmp.ne.s32.totalorder %s22, %s23
    %p32 = scmp.eq.s32.totalorder %s17, 0
    %p33 = por %p31, %p32
    %p34 = scmp.ne.s32.totalorder %s22, %s23
    %p35 = scmp.eq.s32.totalorder %s18, 6
    %p36 = por %p34, %p35
    %p38 = scmp.ne.s32.totalorder %s23, %s37
    %p39 = scmp.eq.s32.totalorder %s18, 0
    %p40 = por %p38, %p39
    %s41 = ssub.s32 %s12, %s19
    %p42 = scmp.eq.s32.totalorder %s41, 0
    %s44 = sadd.s32 %s43, 1
    %s45 = scalar_select %p42, %s43, %s44
    %p48 = pneg %p42
    %p49 = scmp.eq.s32.totalorder %s12, 6
    %p50 = por %p48, %p49
    %p51 = scmp.ne.s32.totalorder %s43, %s46
    %p52 = scmp.eq.s32.totalorder %s12, 0
    %p53 = por %p51, %p52
    %p54 = scmp.ne.s32.totalorder %s43, %s46
    %p55 = scmp.eq.s32.totalorder %s17, 6
    %p56 = por %p54, %p55
    %p57 = scmp.ne.s32.totalorder %s46, %s47
    %p58 = scmp.eq.s32.totalorder %s17, 0
    %p59 = por %p57, %p58
    %p60 = scmp.ne.s32.totalorder %s46, %s47
    %p61 = scmp.eq.s32.totalorder %s18, 6
    %p62 = por %p60, %p61
    %p64 = scmp.ne.s32.totalorder %s47, %s63
    %p65 = scmp.eq.s32.totalorder %s18, 0
    %p66 = por %p64, %p65
    %s67 = ssub.s32 %s12, %s19
    %p68 = scmp.eq.s32.totalorder %s67, 0
    %s70 = sadd.s32 %s69, 1
    %s71 = scalar_select %p68, %s69, %s70
    %p74 = pneg %p68
    %p75 = scmp.eq.s32.totalorder %s12, 6
    %p76 = por %p74, %p75
    %p77 = scmp.ne.s32.totalorder %s69, %s72
    %p78 = scmp.eq.s32.totalorder %s12, 0
    %p79 = por %p77, %p78
    %p80 = scmp.ne.s32.totalorder %s69, %s72
    %p81 = scmp.eq.s32.totalorder %s17, 6
    %p82 = por %p80, %p81
    %p83 = scmp.ne.s32.totalorder %s72, %s73
    %p84 = scmp.eq.s32.totalorder %s17, 0
    %p85 = por %p83, %p84
    %p86 = scmp.ne.s32.totalorder %s72, %s73
    %p87 = scmp.eq.s32.totalorder %s18, 6
    %p88 = por %p86, %p87
    %p90 = scmp.ne.s32.totalorder %s73, %s89
    %p91 = scmp.eq.s32.totalorder %s18, 0
    %p92 = por %p90, %p91
    %s94 = sadd.s32 %s93, 1
    %p97 = scmp.eq.s32.totalorder %s12, 6
    %p98 = scmp.ne.s32.totalorder %s93, %s95
    %p99 = scmp.eq.s32.totalorder %s12, 0
    %p100 = por %p98, %p99
    %p101 = scmp.ne.s32.totalorder %s93, %s95
    %p102 = scmp.eq.s32.totalorder %s17, 6
    %p103 = por %p101, %p102
    %p104 = scmp.ne.s32.totalorder %s95, %s96
    %p105 = scmp.eq.s32.totalorder %s17, 0
    %p106 = por %p104, %p105
    %p107 = scmp.ne.s32.totalorder %s95, %s96
    %p108 = scmp.eq.s32.totalorder %s18, 6
    %p109 = por %p107, %p108
    %p111 = scmp.ne.s32.totalorder %s96, %s110
    %p112 = scmp.eq.s32.totalorder %s18, 0
    %p113 = por %p111, %p112
    %s115 = sadd.s32 %s114, 1
    %p118 = scmp.eq.s32.totalorder %s12, 6
    %p119 = scmp.ne.s32.totalorder %s114, %s116
    %p120 = scmp.eq.s32.totalorder %s12, 0
    %p121 = por %p119, %p120
    %p122 = scmp.ne.s32.totalorder %s114, %s116
    %p123 = scmp.eq.s32.totalorder %s17, 6
    %p124 = por %p122, %p123
    %p125 = scmp.ne.s32.totalorder %s116, %s117
    %p126 = scmp.eq.s32.totalorder %s17, 0
    %p127 = por %p125, %p126
    %p128 = scmp.ne.s32.totalorder %s116, %s117
    %p129 = scmp.eq.s32.totalorder %s18, 6
    %p130 = por %p128, %p129
    %p132 = scmp.ne.s32.totalorder %s117, %s131
    %p133 = scmp.eq.s32.totalorder %s18, 0
    %p134 = por %p132, %p133
    %s136 = sadd.s32 %s135, 1
    %p139 = scmp.eq.s32.totalorder %s12, 6
    %p140 = scmp.ne.s32.totalorder %s135, %s137
    %p141 = scmp.eq.s32.totalorder %s12, 0
    %p142 = por %p140, %p141
    %p143 = scmp.ne.s32.totalorder %s135, %s137
    %p144 = scmp.eq.s32.totalorder %s17, 6
    %p145 = por %p143, %p144
    %p146 = scmp.ne.s32.totalorder %s137, %s138
    %p147 = scmp.eq.s32.totalorder %s17, 0
    %p148 = por %p146, %p147
    %p149 = scmp.ne.s32.totalorder %s137, %s138
    %p150 = scmp.eq.s32.totalorder %s18, 6
    %p151 = por %p149, %p150
    %p153 = scmp.ne.s32.totalorder %s138, %s152
    %p154 = scmp.eq.s32.totalorder %s18, 0
    %p155 = por %p153, %p154
    %s157 = sadd.s32 %s156, 1
    %p160 = scmp.eq.s32.totalorder %s12, 6
    %p161 = scmp.ne.s32.totalorder %s156, %s158
    %p162 = scmp.eq.s32.totalorder %s12, 0
    %p163 = por %p161, %p162
    %p164 = scmp.ne.s32.totalorder %s156, %s158
    %p165 = scmp.eq.s32.totalorder %s17, 6
    %p166 = por %p164, %p165
    %p167 = scmp.ne.s32.totalorder %s158, %s159
    %p168 = scmp.eq.s32.totalorder %s17, 0
    %p169 = por %p167, %p168
    %p170 = scmp.ne.s32.totalorder %s158, %s159
    %p171 = scmp.eq.s32.totalorder %s18, 6
    %p172 = por %p170, %p171
    %p174 = scmp.ne.s32.totalorder %s159, %s173
    %p175 = scmp.eq.s32.totalorder %s18, 0
    %p176 = por %p174, %p175
    %p177 = scmp.le.s32.totalorder 1, %s12
    %p178 = scmp.lt.s32.totalorder %s12, 8
    %p179 = pnand %p177, %p178
    %p180 = pneg %p179
    // Predicated region
    $region9: #{cnn_feature_extraction_forward.11} parent=5 // pred_check
      _
    $region10: #{cnn_feature_extraction_forward.11} parent=5 // pred_check_branch
      %182 = sbr.rel (%p179) target = $region12
    $region11: #{cnn_feature_extraction_forward.11} parent=5 // pred_region
      %s183 = ssub.s32 %s12, 1
      // Predicated region
      $region13: #{cnn_feature_extraction_forward.11} parent=11 // pred_check
        %p184 = pneg %p33
      $region14: #{cnn_feature_extraction_forward.11} parent=11 // pred_check_branch
        %186 = sbr.rel (%p184) target = $region16
      $region15: #{cnn_feature_extraction_forward.11} parent=11 // pred_region
        _
      $region16: #{cnn_feature_extraction_forward.11} parent=11 // pred_fallthru
        _
      // Predicated region
      $region17: #{cnn_feature_extraction_forward.11} parent=11 // pred_check
        %p187 = pneg %p106
      $region18: #{cnn_feature_extraction_forward.11} parent=11 // pred_check_branch
        %189 = sbr.rel (%p187) target = $region20
      $region19: #{cnn_feature_extraction_forward.11} parent=11 // pred_region
        _
      $region20: #{cnn_feature_extraction_forward.11} parent=11 // pred_fallthru
        _
      // Predicated region
      $region21: #{cnn_feature_extraction_forward.11} parent=11 // pred_check
        %p190 = pneg %p127
      $region22: #{cnn_feature_extraction_forward.11} parent=11 // pred_check_branch
        %192 = sbr.rel (%p190) target = $region24
      $region23: #{cnn_feature_extraction_forward.11} parent=11 // pred_region
        _
      $region24: #{cnn_feature_extraction_forward.11} parent=11 // pred_fallthru
        _
      // Predicated region
      $region25: #{cnn_feature_extraction_forward.11} parent=11 // pred_check
        %p193 = pneg %p148
      $region26: #{cnn_feature_extraction_forward.11} parent=11 // pred_check_branch
        %195 = sbr.rel (%p193) target = $region28
      $region27: #{cnn_feature_extraction_forward.11} parent=11 // pred_region
        _
      $region28: #{cnn_feature_extraction_forward.11} parent=11 // pred_fallthru
        _
    $region12: #{cnn_feature_extraction_forward.11} parent=5 // pred_fallthru
      _
    %p196 = scmp.lt.s32.totalorder %s12, 7
    // Predicated region
    $region29: #{cnn_feature_extraction_forward.11} parent=5 // pred_check
      %p197 = pneg %p196
    $region30: #{cnn_feature_extraction_forward.11} parent=5 // pred_check_branch
      %199 = sbr.rel (%p197) target = $region32
    $region31: #{cnn_feature_extraction_forward.11} parent=5 // pred_region
      // Predicated region
      $region33: #{cnn_feature_extraction_forward.11} parent=31 // pred_check
        %p200 = pneg %p53
      $region34: #{cnn_feature_extraction_forward.11} parent=31 // pred_check_branch
        %202 = sbr.rel (%p200) target = $region36
      $region35: #{cnn_feature_extraction_forward.11} parent=31 // pred_region
        %p203 = scmp.lt.s32.totalorder %s12, 6
        %s204 = scalar_select %p203, %s12, 6
        %s205 = smul.addr %s204, 80
        %s206 = smul.addr %s205, 8
        %s207 = scalar_lea.vmem %s1, %s206
      $region36: #{cnn_feature_extraction_forward.11} parent=31 // pred_fallthru
        _
      // Predicated region
      $region37: #{cnn_feature_extraction_forward.11} parent=31 // pred_check
        %p208 = pneg %p79
      $region38: #{cnn_feature_extraction_forward.11} parent=31 // pred_check_branch
        %210 = sbr.rel (%p208) target = $region40
      $region39: #{cnn_feature_extraction_forward.11} parent=31 // pred_region
        %p211 = scmp.lt.s32.totalorder %s12, 6
        %s212 = scalar_select %p211, %s12, 6
        %s213 = scalar_lea.vmem %s2, %s212
      $region40: #{cnn_feature_extraction_forward.11} parent=31 // pred_fallthru
        _
    $region32: #{cnn_feature_extraction_forward.11} parent=5 // pred_fallthru
      _
    %p214 = scmp.le.s32.totalorder 1, %s12
    %p215 = scmp.lt.s32.totalorder %s12, 8
    %p216 = pnand %p214, %p215
    %p217 = pneg %p216
    // Predicated region
    $region41: #{cnn_feature_extraction_forward.11} parent=5 // pred_check
      _
    $region42: #{cnn_feature_extraction_forward.11} parent=5 // pred_check_branch
      %219 = sbr.rel (%p216) target = $region44
    $region43: #{cnn_feature_extraction_forward.11} parent=5 // pred_region
      %s220 = ssub.s32 %s12, 1
      %p221 = pneg %p33
      %p222 = pneg %p30
      %p223 = scmp.lt.s32.totalorder %s17, 6
      %s224 = scalar_select %p223, %s17, 6
      %s225 = smul.addr %s224, 80
      %s226 = smul.addr %s225, 8
      %s227 = scalar_lea.vmem %s1, %s226
      %p228 = pneg %p59
      %p229 = pneg %p56
      %p230 = scmp.lt.s32.totalorder %s17, 6
      %s231 = scalar_select %p230, %s17, 6
      %s232 = scalar_lea.vmem %s2, %s231
      %p233 = pneg %p85
      %p234 = pneg %p82
      %p235 = pneg %p106
      %p236 = pneg %p103
      %p237 = pneg %p127
      %p238 = pneg %p124
      %p239 = pneg %p148
      %p240 = pneg %p145
      %p241 = pneg %p169
      %p242 = pneg %p166
      %p243 = scmp.lt.s32.totalorder %s17, 6
      %s244 = scalar_select %p243, %s17, 6
      %s245 = smul.addr %s244, 80
      %s246 = smul.addr %s245, 8
      %s247 = scalar_lea.vmem %s1, %s246
      %p248 = scmp.lt.s32.totalorder %s17, 6
      %s249 = scalar_select %p248, %s17, 6
      %s250 = scalar_lea.vmem %s2, %s249
      %p251 = scmp.eq.s32.totalorder %s17, 0
      // Predicated region
      $region45: #{cnn_feature_extraction_forward.11} parent=43 // pred_check
        %p252 = pneg %p251
      $region46: #{cnn_feature_extraction_forward.11} parent=43 // pred_check_branch
        %254 = sbr.rel (%p252) target = $region48
      $region47: #{cnn_feature_extraction_forward.11} parent=43 // pred_region
        %255 = vst [vmem:[#allocation2] sm:$0xff] 0.0
        %256 = vst [vmem:[#allocation2 + $0x8] sm:$0xff] 0.0
        %257 = vst [vmem:[#allocation2 + $0x10] sm:$0xf] 0.0
        %258 = vst [vmem:[#allocation2 + $0x18] sm:$0xff] 0.0
        %259 = vst [vmem:[#allocation2 + $0x20] sm:$0xff] 0.0
        %260 = vst [vmem:[#allocation2 + $0x28] sm:$0xf] 0.0
        %v261 = vld [vmem:[%s0] sm:$0xff]
        %v262 = vld [vmem:[%s0 + $0x8] sm:$0xff]
        %v263 = vld [vmem:[%s0 + $0x10] sm:$0xff]
        %v264 = vld [vmem:[%s0 + $0x18] sm:$0xff]
        %265 = vst [vmem:[#allocation2 + $0x2] sm:$0xff] %v261
        %266 = vst [vmem:[#allocation2 + $0xa] sm:$0xff] %v262
        %267 = vst [vmem:[#allocation2 + $0x1a] sm:$0xff] %v263
        %268 = vst [vmem:[#allocation2 + $0x22] sm:$0xff] %v264
      $region48: #{cnn_feature_extraction_forward.11} parent=43 // pred_fallthru
        _
      %v269 = vld [vmem:[#allocation2] sm:$0xff]
      %v270 = vld [vmem:[#allocation2 + $0x8] sm:$0xff]
      %v271 = vld [vmem:[#allocation2 + $0x18] sm:$0xff]
      %v272 = vld [vmem:[#allocation2 + $0x20] sm:$0xff]
      %v273 = vld [vmem:[%s247] sm:$0xff]
      %v274 = vld [vmem:[%s247 + $0x8] sm:$0xff]
      %v275 = vld [vmem:[%s247 + $0x10] sm:$0xff]
      %v276 = vld [vmem:[%s247 + $0x18] sm:$0xff]
      %v277 = vld [vmem:[%s247 + $0x20] sm:$0xff]
      %v278 = vld [vmem:[%s247 + $0x28] sm:$0xff]
      %v279 = vld [vmem:[%s247 + $0x30] sm:$0xff]
      %v280 = vld [vmem:[%s247 + $0x38] sm:$0xff]
      %v281 = vld [vmem:[%s247 + $0x40] sm:$0xff]
      %v282 = vld [vmem:[%s247 + $0x48] sm:$0xff]
      %v283 = vld [vmem:[%s247 + $0x50] sm:$0xff]
      %v284 = vld [vmem:[%s247 + $0x58] sm:$0xff]
      %v285 = vld [vmem:[%s247 + $0x60] sm:$0xff]
      %v286 = vld [vmem:[%s247 + $0x68] sm:$0xff]
      %v287 = vld [vmem:[%s247 + $0x70] sm:$0xff]
      %v288 = vld [vmem:[%s247 + $0x78] sm:$0xff]
      %v289 = vld [vmem:[#allocation2 + $0x1] sm:$0xff]
      %v290 = vld [vmem:[#allocation2 + $0x9] sm:$0xff]
      %v291 = vld [vmem:[#allocation2 + $0x19] sm:$0xff]
      %v292 = vld [vmem:[#allocation2 + $0x21] sm:$0xff]
      %s293 = scalar_lea.vmem %s247, 128
      %v294 = vld [vmem:[%s293] sm:$0xff]
      %v295 = vld [vmem:[%s293 + $0x8] sm:$0xff]
      %v296 = vld [vmem:[%s293 + $0x10] sm:$0xff]
      %v297 = vld [vmem:[%s293 + $0x18] sm:$0xff]
      %v298 = vld [vmem:[%s293 + $0x20] sm:$0xff]
      %v299 = vld [vmem:[%s293 + $0x28] sm:$0xff]
      %v300 = vld [vmem:[%s293 + $0x30] sm:$0xff]
      %v301 = vld [vmem:[%s293 + $0x38] sm:$0xff]
      %v302 = vld [vmem:[%s293 + $0x40] sm:$0xff]
      %v303 = vld [vmem:[%s293 + $0x48] sm:$0xff]
      %v304 = vld [vmem:[%s293 + $0x50] sm:$0xff]
      %v305 = vld [vmem:[%s293 + $0x58] sm:$0xff]
      %v306 = vld [vmem:[%s293 + $0x60] sm:$0xff]
      %v307 = vld [vmem:[%s293 + $0x68] sm:$0xff]
      %v308 = vld [vmem:[%s293 + $0x70] sm:$0xff]
      %v309 = vld [vmem:[%s293 + $0x78] sm:$0xff]
      %310 = vmatprep.subr.mxu0 0.0
      %311 = vmatpush1.msra.mxu0 %v294
      %312 = vmatprep.subr.mxu0 0.0
      %313 = vmatpush1.msra.mxu0 %v295
      %314 = vmatprep.subr.mxu0 0.0
      %315 = vmatpush1.msra.mxu0 %v296
      %316 = vmatprep.subr.mxu0 0.0
      %317 = vmatpush1.msra.mxu0 %v297
      %318 = vmatprep.subr.mxu0 0.0
      %319 = vmatpush1.msra.mxu0 %v298
      %320 = vmatprep.subr.mxu0 0.0
      %321 = vmatpush1.msra.mxu0 %v299
      %322 = vmatprep.subr.mxu0 0.0
      %323 = vmatpush1.msra.mxu0 %v300
      %324 = vmatprep.subr.mxu0 0.0
      %325 = vmatpush1.msra.mxu0 %v301
      %326 = vmatprep.subr.mxu0 0.0
      %327 = vmatpush1.msra.mxu0 %v302
      %328 = vmatprep.subr.mxu0 0.0
      %329 = vmatpush1.msra.mxu0 %v303
      %330 = vmatprep.subr.mxu0 0.0
      %331 = vmatpush1.msra.mxu0 %v304
      %332 = vmatprep.subr.mxu0 0.0
      %333 = vmatpush1.msra.mxu0 %v305
      %334 = vmatprep.subr.mxu0 0.0
      %335 = vmatpush1.msra.mxu0 %v306
      %336 = vmatprep.subr.mxu0 0.0
      %337 = vmatpush1.msra.mxu0 %v307
      %338 = vmatprep.subr.mxu0 0.0
      %339 = vmatpush1.msra.mxu0 %v308
      %340 = vmatprep.subr.mxu0 0.0
      %341 = vmatpush1.msra.mxu0 %v309
      %342 = vmatprep.subr.mxu0 0.0
      %343 = vmatpush1.msra.mxu0 0.0
      %344 = vmatprep.subr.mxu0 0.0
      %345 = vmatpush1.msra.mxu0 0.0
      %346 = vmatprep.subr.mxu0 0.0
      %347 = vmatpush1.msra.mxu0 0.0
      %348 = vmatprep.subr.mxu0 0.0
      %349 = vmatpush1.msra.mxu0 0.0
      %350 = vmatprep.subr.mxu0 0.0
      %351 = vmatpush1.msra.mxu0 0.0
      %352 = vmatprep.subr.mxu0 0.0
      %353 = vmatpush1.msra.mxu0 0.0
      %354 = vmatprep.subr.mxu0 0.0
      %355 = vmatpush1.msra.mxu0 0.0
      %356 = vmatprep.subr.mxu0 0.0
      %357 = vmatpush1.msra.mxu0 0.0
      %358 = vmatprep.subr.mxu0 0.0
      %359 = vmatpush1.msra.mxu0 0.0
      %360 = vmatprep.subr.mxu0 0.0
      %361 = vmatpush1.msra.mxu0 0.0
      %362 = vmatprep.subr.mxu0 0.0
      %363 = vmatpush1.msra.mxu0 0.0
      %364 = vmatprep.subr.mxu0 0.0
      %365 = vmatpush1.msra.mxu0 0.0
      %366 = vmatprep.subr.mxu0 0.0
      %367 = vmatpush1.msra.mxu0 0.0
      %368 = vmatprep.subr.mxu0 0.0
      %369 = vmatpush1.msra.mxu0 0.0
      %370 = vmatprep.subr.mxu0 0.0
      %371 = vmatpush1.msra.mxu0 0.0
      %372 = vmatprep.subr.mxu0 0.0
      %373 = vmatpush1.msra.mxu0 0.0
      %374 = vmatprep.mubr.f32.mxu0 0.0
      %375 = vmatmul.mubr.f32.gmra.mrb[0].mxu0 %v289
      %v376 = vpop.f32.mrb[0].mxu0
      %v377 = vadd.f32 0.0, %v376
      %v378 = vpop.f32.mrb[0].mxu0
      %379 = vmatprep.mubr.f32.mxu0 0.0
      %380 = vmatmul.mubr.f32.gmra.mrb[0].mxu0 %v290
      %v381 = vpop.f32.mrb[0].mxu0
      %v382 = vadd.f32 0.0, %v381
      %v383 = vpop.f32.mrb[0].mxu0
      %384 = vmatprep.mubr.f32.mxu0 0.0
      %385 = vmatmul.mubr.f32.gmra.mrb[0].mxu0 %v291
      %v386 = vpop.f32.mrb[0].mxu0
      %v387 = vadd.f32 0.0, %v386
      %v388 = vpop.f32.mrb[0].mxu0
      %389 = vmatprep.mubr.f32.mxu0 0.0
      %390 = vmatmul.mubr.f32.gmra.mrb[0].mxu0 %v292
      %v391 = vpop.f32.mrb[0].mxu0
      %v392 = vadd.f32 0.0, %v391
      %v393 = vpop.f32.mrb[0].mxu0
      %394 = vdwg.mxu0
      %395 = vmatprep.subr.mxu0 0.0
      %396 = vmatpush1.msra.mxu0 %v273
      %397 = vmatprep.subr.mxu0 0.0
      %398 = vmatpush1.msra.mxu0 %v274
      %399 = vmatprep.subr.mxu0 0.0
      %400 = vmatpush1.msra.mxu0 %v275
      %401 = vmatprep.subr.mxu0 0.0
      %402 = vmatpush1.msra.mxu0 %v276
      %403 = vmatprep.subr.mxu0 0.0
      %404 = vmatpush1.msra.mxu0 %v277
      %405 = vmatprep.subr.mxu0 0.0
      %406 = vmatpush1.msra.mxu0 %v278
      %407 = vmatprep.subr.mxu0 0.0
      %408 = vmatpush1.msra.mxu0 %v279
      %409 = vmatprep.subr.mxu0 0.0
      %410 = vmatpush1.msra.mxu0 %v280
      %411 = vmatprep.subr.mxu0 0.0
      %412 = vmatpush1.msra.mxu0 %v281
      %413 = vmatprep.subr.mxu0 0.0
      %414 = vmatpush1.msra.mxu0 %v282
      %415 = vmatprep.subr.mxu0 0.0
      %416 = vmatpush1.msra.mxu0 %v283
      %417 = vmatprep.subr.mxu0 0.0
      %418 = vmatpush1.msra.mxu0 %v284
      %419 = vmatprep.subr.mxu0 0.0
      %420 = vmatpush1.msra.mxu0 %v285
      %421 = vmatprep.subr.mxu0 0.0
      %422 = vmatpush1.msra.mxu0 %v286
      %423 = vmatprep.subr.mxu0 0.0
      %424 = vmatpush1.msra.mxu0 %v287
      %425 = vmatprep.subr.mxu0 0.0
      %426 = vmatpush1.msra.mxu0 %v288
      %427 = vmatprep.subr.mxu0 0.0
      %428 = vmatpush1.msra.mxu0 0.0
      %429 = vmatprep.subr.mxu0 0.0
      %430 = vmatpush1.msra.mxu0 0.0
      %431 = vmatprep.subr.mxu0 0.0
      %432 = vmatpush1.msra.mxu0 0.0
      %433 = vmatprep.subr.mxu0 0.0
      %434 = vmatpush1.msra.mxu0 0.0
      %435 = vmatprep.subr.mxu0 0.0
      %436 = vmatpush1.msra.mxu0 0.0
      %437 = vmatprep.subr.mxu0 0.0
      %438 = vmatpush1.msra.mxu0 0.0
      %439 = vmatprep.subr.mxu0 0.0
      %440 = vmatpush1.msra.mxu0 0.0
      %441 = vmatprep.subr.mxu0 0.0
      %442 = vmatpush1.msra.mxu0 0.0
      %443 = vmatprep.subr.mxu0 0.0
      %444 = vmatpush1.msra.mxu0 0.0
      %445 = vmatprep.subr.mxu0 0.0
      %446 = vmatpush1.msra.mxu0 0.0
      %447 = vmatprep.subr.mxu0 0.0
      %448 = vmatpush1.msra.mxu0 0.0
      %449 = vmatprep.subr.mxu0 0.0
      %450 = vmatpush1.msra.mxu0 0.0
      %451 = vmatprep.subr.mxu0 0.0
      %452 = vmatpush1.msra.mxu0 0.0
      %453 = vmatprep.subr.mxu0 0.0
      %454 = vmatpush1.msra.mxu0 0.0
      %455 = vmatprep.subr.mxu0 0.0
      %456 = vmatpush1.msra.mxu0 0.0
      %457 = vmatprep.subr.mxu0 0.0
      %458 = vmatpush1.msra.mxu0 0.0
      %459 = vmatprep.mubr.f32.mxu0 0.0
      %460 = vmatmul.mubr.f32.gmra.mrb[0].mxu0 %v269
      %v461 = vpop.f32.mrb[0].mxu0
      %v462 = vadd.f32 %v377, %v461
      %v463 = vpop.f32.mrb[0].mxu0
      %464 = vmatprep.mubr.f32.mxu0 0.0
      %465 = vmatmul.mubr.f32.gmra.mrb[0].mxu0 %v270
      %v466 = vpop.f32.mrb[0].mxu0
      %v467 = vadd.f32 %v382, %v466
      %v468 = vpop.f32.mrb[0].mxu0
      %469 = vmatprep.mubr.f32.mxu0 0.0
      %470 = vmatmul.mubr.f32.gmra.mrb[0].mxu0 %v271
      %v471 = vpop.f32.mrb[0].mxu0
      %v472 = vadd.f32 %v387, %v471
      %v473 = vpop.f32.mrb[0].mxu0
      %474 = vmatprep.mubr.f32.mxu0 0.0
      %475 = vmatmul.mubr.f32.gmra.mrb[0].mxu0 %v272
      %v476 = vpop.f32.mrb[0].mxu0
      %v477 = vadd.f32 %v392, %v476
      %v478 = vpop.f32.mrb[0].mxu0
      %479 = vdwg.mxu0
      %v480 = vld [vmem:[#allocation2 + $0x2] sm:$0xff]
      %v481 = vld [vmem:[#allocation2 + $0xa] sm:$0xff]
      %v482 = vld [vmem:[#allocation2 + $0x1a] sm:$0xff]
      %v483 = vld [vmem:[#allocation2 + $0x22] sm:$0xff]
      %s484 = scalar_lea.vmem %s247, 256
      %v485 = vld [vmem:[%s484] sm:$0xff]
      %v486 = vld [vmem:[%s484 + $0x8] sm:$0xff]
      %v487 = vld [vmem:[%s484 + $0x10] sm:$0xff]
      %v488 = vld [vmem:[%s484 + $0x18] sm:$0xff]
      %v489 = vld [vmem:[%s484 + $0x20] sm:$0xff]
      %v490 = vld [vmem:[%s484 + $0x28] sm:$0xff]
      %v491 = vld [vmem:[%s484 + $0x30] sm:$0xff]
      %v492 = vld [vmem:[%s484 + $0x38] sm:$0xff]
      %v493 = vld [vmem:[%s484 + $0x40] sm:$0xff]
      %v494 = vld [vmem:[%s484 + $0x48] sm:$0xff]
      %v495 = vld [vmem:[%s484 + $0x50] sm:$0xff]
      %v496 = vld [vmem:[%s484 + $0x58] sm:$0xff]
      %v497 = vld [vmem:[%s484 + $0x60] sm:$0xff]
      %v498 = vld [vmem:[%s484 + $0x68] sm:$0xff]
      %v499 = vld [vmem:[%s484 + $0x70] sm:$0xff]
      %v500 = vld [vmem:[%s484 + $0x78] sm:$0xff]
      %501 = vmatprep.subr.mxu0 0.0
      %502 = vmatpush1.msra.mxu0 %v485
      %503 = vmatprep.subr.mxu0 0.0
      %504 = vmatpush1.msra.mxu0 %v486
      %505 = vmatprep.subr.mxu0 0.0
      %506 = vmatpush1.msra.mxu0 %v487
      %507 = vmatprep.subr.mxu0 0.0
      %508 = vmatpush1.msra.mxu0 %v488
      %509 = vmatprep.subr.mxu0 0.0
      %510 = vmatpush1.msra.mxu0 %v489
      %511 = vmatprep.subr.mxu0 0.0
      %512 = vmatpush1.msra.mxu0 %v490
      %513 = vmatprep.subr.mxu0 0.0
      %514 = vmatpush1.msra.mxu0 %v491
      %515 = vmatprep.subr.mxu0 0.0
      %516 = vmatpush1.msra.mxu0 %v492
      %517 = vmatprep.subr.mxu0 0.0
      %518 = vmatpush1.msra.mxu0 %v493
      %519 = vmatprep.subr.mxu0 0.0
      %520 = vmatpush1.msra.mxu0 %v494
      %521 = vmatprep.subr.mxu0 0.0
      %522 = vmatpush1.msra.mxu0 %v495
      %523 = vmatprep.subr.mxu0 0.0
      %524 = vmatpush1.msra.mxu0 %v496
      %525 = vmatprep.subr.mxu0 0.0
      %526 = vmatpush1.msra.mxu0 %v497
      %527 = vmatprep.subr.mxu0 0.0
      %528 = vmatpush1.msra.mxu0 %v498
      %529 = vmatprep.subr.mxu0 0.0
      %530 = vmatpush1.msra.mxu0 %v499
      %531 = vmatprep.subr.mxu0 0.0
      %532 = vmatpush1.msra.mxu0 %v500
      %533 = vmatprep.subr.mxu0 0.0
      %534 = vmatpush1.msra.mxu0 0.0
      %535 = vmatprep.subr.mxu0 0.0
      %536 = vmatpush1.msra.mxu0 0.0
      %537 = vmatprep.subr.mxu0 0.0
      %538 = vmatpush1.msra.mxu0 0.0
      %539 = vmatprep.subr.mxu0 0.0
      %540 = vmatpush1.msra.mxu0 0.0
      %541 = vmatprep.subr.mxu0 0.0
      %542 = vmatpush1.msra.mxu0 0.0
      %543 = vmatprep.subr.mxu0 0.0
      %544 = vmatpush1.msra.mxu0 0.0
      %545 = vmatprep.subr.mxu0 0.0
      %546 = vmatpush1.msra.mxu0 0.0
      %547 = vmatprep.subr.mxu0 0.0
      %548 = vmatpush1.msra.mxu0 0.0
      %549 = vmatprep.subr.mxu0 0.0
      %550 = vmatpush1.msra.mxu0 0.0
      %551 = vmatprep.subr.mxu0 0.0
      %552 = vmatpush1.msra.mxu0 0.0
      %553 = vmatprep.subr.mxu0 0.0
      %554 = vmatpush1.msra.mxu0 0.0
      %555 = vmatprep.subr.mxu0 0.0
      %556 = vmatpush1.msra.mxu0 0.0
      %557 = vmatprep.subr.mxu0 0.0
      %558 = vmatpush1.msra.mxu0 0.0
      %559 = vmatprep.subr.mxu0 0.0
      %560 = vmatpush1.msra.mxu0 0.0
      %561 = vmatprep.subr.mxu0 0.0
      %562 = vmatpush1.msra.mxu0 0.0
      %563 = vmatprep.subr.mxu0 0.0
      %564 = vmatpush1.msra.mxu0 0.0
      %565 = vmatprep.mubr.f32.mxu0 0.0
      %566 = vmatmul.mubr.f32.gmra.mrb[0].mxu0 %v480
      %v567 = vpop.f32.mrb[0].mxu0
      %v568 = vadd.f32 0.0, %v567
      %v569 = vpop.f32.mrb[0].mxu0
      %570 = vmatprep.mubr.f32.mxu0 0.0
      %571 = vmatmul.mubr.f32.gmra.mrb[0].mxu0 %v481
      %v572 = vpop.f32.mrb[0].mxu0
      %v573 = vadd.f32 0.0, %v572
      %v574 = vpop.f32.mrb[0].mxu0
      %575 = vmatprep.mubr.f32.mxu0 0.0
      %576 = vmatmul.mubr.f32.gmra.mrb[0].mxu0 %v482
      %v577 = vpop.f32.mrb[0].mxu0
      %v578 = vadd.f32 0.0, %v577
      %v579 = vpop.f32.mrb[0].mxu0
      %580 = vmatprep.mubr.f32.mxu0 0.0
      %581 = vmatmul.mubr.f32.gmra.mrb[0].mxu0 %v483
      %v582 = vpop.f32.mrb[0].mxu0
      %v583 = vadd.f32 0.0, %v582
      %v584 = vpop.f32.mrb[0].mxu0
      %585 = vdwg.mxu0
      %v586 = vadd.f32 %v462, %v568
      %v587 = vadd.f32 %v467, %v573
      %v588 = vadd.f32 %v472, %v578
      %v589 = vadd.f32 %v477, %v583
      %v590 = vld [vmem:[#allocation2 + $0x3] sm:$0xff]
      %v591 = vld [vmem:[#allocation2 + $0xb] sm:$0xff]
      %v592 = vld [vmem:[#allocation2 + $0x1b] sm:$0xff]
      %v593 = vld [vmem:[#allocation2 + $0x23] sm:$0xff]
      %s594 = scalar_lea.vmem %s247, 384
      %v595 = vld [vmem:[%s594] sm:$0xff]
      %v596 = vld [vmem:[%s594 + $0x8] sm:$0xff]
      %v597 = vld [vmem:[%s594 + $0x10] sm:$0xff]
      %v598 = vld [vmem:[%s594 + $0x18] sm:$0xff]
      %v599 = vld [vmem:[%s594 + $0x20] sm:$0xff]
      %v600 = vld [vmem:[%s594 + $0x28] sm:$0xff]
      %v601 = vld [vmem:[%s594 + $0x30] sm:$0xff]
      %v602 = vld [vmem:[%s594 + $0x38] sm:$0xff]
      %v603 = vld [vmem:[%s594 + $0x40] sm:$0xff]
      %v604 = vld [vmem:[%s594 + $0x48] sm:$0xff]
      %v605 = vld [vmem:[%s594 + $0x50] sm:$0xff]
      %v606 = vld [vmem:[%s594 + $0x58] sm:$0xff]
      %v607 = vld [vmem:[%s594 + $0x60] sm:$0xff]
      %v608 = vld [vmem:[%s594 + $0x68] sm:$0xff]
      %v609 = vld [vmem:[%s594 + $0x70] sm:$0xff]
      %v610 = vld [vmem:[%s594 + $0x78] sm:$0xff]
      %611 = vmatprep.subr.mxu0 0.0
      %612 = vmatpush1.msra.mxu0 %v595
      %613 = vmatprep.subr.mxu0 0.0
      %614 = vmatpush1.msra.mxu0 %v596
      %615 = vmatprep.subr.mxu0 0.0
      %616 = vmatpush1.msra.mxu0 %v597
      %617 = vmatprep.subr.mxu0 0.0
      %618 = vmatpush1.msra.mxu0 %v598
      %619 = vmatprep.subr.mxu0 0.0
      %620 = vmatpush1.msra.mxu0 %v599
      %621 = vmatprep.subr.mxu0 0.0
      %622 = vmatpush1.msra.mxu0 %v600
      %623 = vmatprep.subr.mxu0 0.0
      %624 = vmatpush1.msra.mxu0 %v601
      %625 = vmatprep.subr.mxu0 0.0
      %626 = vmatpush1.msra.mxu0 %v602
      %627 = vmatprep.subr.mxu0 0.0
      %628 = vmatpush1.msra.mxu0 %v603
      %629 = vmatprep.subr.mxu0 0.0
      %630 = vmatpush1.msra.mxu0 %v604
      %631 = vmatprep.subr.mxu0 0.0
      %632 = vmatpush1.msra.mxu0 %v605
      %633 = vmatprep.subr.mxu0 0.0
      %634 = vmatpush1.msra.mxu0 %v606
      %635 = vmatprep.subr.mxu0 0.0
      %636 = vmatpush1.msra.mxu0 %v607
      %637 = vmatprep.subr.mxu0 0.0
      %638 = vmatpush1.msra.mxu0 %v608
      %639 = vmatprep.subr.mxu0 0.0
      %640 = vmatpush1.msra.mxu0 %v609
      %641 = vmatprep.subr.mxu0 0.0
      %642 = vmatpush1.msra.mxu0 %v610
      %643 = vmatprep.subr.mxu0 0.0
      %644 = vmatpush1.msra.mxu0 0.0
      %645 = vmatprep.subr.mxu0 0.0
      %646 = vmatpush1.msra.mxu0 0.0
      %647 = vmatprep.subr.mxu0 0.0
      %648 = vmatpush1.msra.mxu0 0.0
      %649 = vmatprep.subr.mxu0 0.0
      %650 = vmatpush1.msra.mxu0 0.0
      %651 = vmatprep.subr.mxu0 0.0
      %652 = vmatpush1.msra.mxu0 0.0
      %653 = vmatprep.subr.mxu0 0.0
      %654 = vmatpush1.msra.mxu0 0.0
      %655 = vmatprep.subr.mxu0 0.0
      %656 = vmatpush1.msra.mxu0 0.0
      %657 = vmatprep.subr.mxu0 0.0
      %658 = vmatpush1.msra.mxu0 0.0
      %659 = vmatprep.subr.mxu0 0.0
      %660 = vmatpush1.msra.mxu0 0.0
      %661 = vmatprep.subr.mxu0 0.0
      %662 = vmatpush1.msra.mxu0 0.0
      %663 = vmatprep.subr.mxu0 0.0
      %664 = vmatpush1.msra.mxu0 0.0
      %665 = vmatprep.subr.mxu0 0.0
      %666 = vmatpush1.msra.mxu0 0.0
      %667 = vmatprep.subr.mxu0 0.0
      %668 = vmatpush1.msra.mxu0 0.0
      %669 = vmatprep.subr.mxu0 0.0
      %670 = vmatpush1.msra.mxu0 0.0
      %671 = vmatprep.subr.mxu0 0.0
      %672 = vmatpush1.msra.mxu0 0.0
      %673 = vmatprep.subr.mxu0 0.0
      %674 = vmatpush1.msra.mxu0 0.0
      %675 = vmatprep.mubr.f32.mxu0 0.0
      %676 = vmatmul.mubr.f32.gmra.mrb[0].mxu0 %v590
      %v677 = vpop.f32.mrb[0].mxu0
      %v678 = vadd.f32 0.0, %v677
      %v679 = vpop.f32.mrb[0].mxu0
      %680 = vmatprep.mubr.f32.mxu0 0.0
      %681 = vmatmul.mubr.f32.gmra.mrb[0].mxu0 %v591
      %v682 = vpop.f32.mrb[0].mxu0
      %v683 = vadd.f32 0.0, %v682
      %v684 = vpop.f32.mrb[0].mxu0
      %685 = vmatprep.mubr.f32.mxu0 0.0
      %686 = vmatmul.mubr.f32.gmra.mrb[0].mxu0 %v592
      %v687 = vpop.f32.mrb[0].mxu0
      %v688 = vadd.f32 0.0, %v687
      %v689 = vpop.f32.mrb[0].mxu0
      %690 = vmatprep.mubr.f32.mxu0 0.0
      %691 = vmatmul.mubr.f32.gmra.mrb[0].mxu0 %v593
      %v692 = vpop.f32.mrb[0].mxu0
      %v693 = vadd.f32 0.0, %v692
      %v694 = vpop.f32.mrb[0].mxu0
      %695 = vdwg.mxu0
      %v696 = vadd.f32 %v586, %v678
      %v697 = vadd.f32 %v587, %v683
      %v698 = vadd.f32 %v588, %v688
      %v699 = vadd.f32 %v589, %v693
      %v700 = vld [vmem:[#allocation2 + $0x4] sm:$0xff]
      %v701 = vld [vmem:[#allocation2 + $0xc] sm:$0xff]
      %v702 = vld [vmem:[#allocation2 + $0x1c] sm:$0xff]
      %v703 = vld [vmem:[#allocation2 + $0x24] sm:$0xff]
      %s704 = scalar_lea.vmem %s247, 512
      %v705 = vld [vmem:[%s704] sm:$0xff]
      %v706 = vld [vmem:[%s704 + $0x8] sm:$0xff]
      %v707 = vld [vmem:[%s704 + $0x10] sm:$0xff]
      %v708 = vld [vmem:[%s704 + $0x18] sm:$0xff]
      %v709 = vld [vmem:[%s704 + $0x20] sm:$0xff]
      %v710 = vld [vmem:[%s704 + $0x28] sm:$0xff]
      %v711 = vld [vmem:[%s704 + $0x30] sm:$0xff]
      %v712 = vld [vmem:[%s704 + $0x38] sm:$0xff]
      %v713 = vld [vmem:[%s704 + $0x40] sm:$0xff]
      %v714 = vld [vmem:[%s704 + $0x48] sm:$0xff]
      %v715 = vld [vmem:[%s704 + $0x50] sm:$0xff]
      %v716 = vld [vmem:[%s704 + $0x58] sm:$0xff]
      %v717 = vld [vmem:[%s704 + $0x60] sm:$0xff]
      %v718 = vld [vmem:[%s704 + $0x68] sm:$0xff]
      %v719 = vld [vmem:[%s704 + $0x70] sm:$0xff]
      %v720 = vld [vmem:[%s704 + $0x78] sm:$0xff]
      %721 = vmatprep.subr.mxu0 0.0
      %722 = vmatpush1.msra.mxu0 %v705
      %723 = vmatprep.subr.mxu0 0.0
      %724 = vmatpush1.msra.mxu0 %v706
      %725 = vmatprep.subr.mxu0 0.0
      %726 = vmatpush1.msra.mxu0 %v707
      %727 = vmatprep.subr.mxu0 0.0
      %728 = vmatpush1.msra.mxu0 %v708
      %729 = vmatprep.subr.mxu0 0.0
      %730 = vmatpush1.msra.mxu0 %v709
      %731 = vmatprep.subr.mxu0 0.0
      %732 = vmatpush1.msra.mxu0 %v710
      %733 = vmatprep.subr.mxu0 0.0
      %734 = vmatpush1.msra.mxu0 %v711
      %735 = vmatprep.subr.mxu0 0.0
      %736 = vmatpush1.msra.mxu0 %v712
      %737 = vmatprep.subr.mxu0 0.0
      %738 = vmatpush1.msra.mxu0 %v713
      %739 = vmatprep.subr.mxu0 0.0
      %740 = vmatpush1.msra.mxu0 %v714
      %741 = vmatprep.subr.mxu0 0.0
      %742 = vmatpush1.msra.mxu0 %v715
      %743 = vmatprep.subr.mxu0 0.0
      %744 = vmatpush1.msra.mxu0 %v716
      %745 = vmatprep.subr.mxu0 0.0
      %746 = vmatpush1.msra.mxu0 %v717
      %747 = vmatprep.subr.mxu0 0.0
      %748 = vmatpush1.msra.mxu0 %v718
      %749 = vmatprep.subr.mxu0 0.0
      %750 = vmatpush1.msra.mxu0 %v719
      %751 = vmatprep.subr.mxu0 0.0
      %752 = vmatpush1.msra.mxu0 %v720
      %753 = vmatprep.subr.mxu0 0.0
      %754 = vmatpush1.msra.mxu0 0.0
      %755 = vmatprep.subr.mxu0 0.0
      %756 = vmatpush1.msra.mxu0 0.0
      %757 = vmatprep.subr.mxu0 0.0
      %758 = vmatpush1.msra.mxu0 0.0
      %759 = vmatprep.subr.mxu0 0.0
      %760 = vmatpush1.msra.mxu0 0.0
      %761 = vmatprep.subr.mxu0 0.0
      %762 = vmatpush1.msra.mxu0 0.0
      %763 = vmatprep.subr.mxu0 0.0
      %764 = vmatpush1.msra.mxu0 0.0
      %765 = vmatprep.subr.mxu0 0.0
      %766 = vmatpush1.msra.mxu0 0.0
      %767 = vmatprep.subr.mxu0 0.0
      %768 = vmatpush1.msra.mxu0 0.0
      %769 = vmatprep.subr.mxu0 0.0
      %770 = vmatpush1.msra.mxu0 0.0
      %771 = vmatprep.subr.mxu0 0.0
      %772 = vmatpush1.msra.mxu0 0.0
      %773 = vmatprep.subr.mxu0 0.0
      %774 = vmatpush1.msra.mxu0 0.0
      %775 = vmatprep.subr.mxu0 0.0
      %776 = vmatpush1.msra.mxu0 0.0
      %777 = vmatprep.subr.mxu0 0.0
      %778 = vmatpush1.msra.mxu0 0.0
      %779 = vmatprep.subr.mxu0 0.0
      %780 = vmatpush1.msra.mxu0 0.0
      %781 = vmatprep.subr.mxu0 0.0
      %782 = vmatpush1.msra.mxu0 0.0
      %783 = vmatprep.subr.mxu0 0.0
      %784 = vmatpush1.msra.mxu0 0.0
      %785 = vmatprep.mubr.f32.mxu0 0.0
      %786 = vmatmul.mubr.f32.gmra.mrb[0].mxu0 %v700
      %v787 = vpop.f32.mrb[0].mxu0
      %v788 = vadd.f32 0.0, %v787
      %v789 = vpop.f32.mrb[0].mxu0
      %790 = vmatprep.mubr.f32.mxu0 0.0
      %791 = vmatmul.mubr.f32.gmra.mrb[0].mxu0 %v701
      %v792 = vpop.f32.mrb[0].mxu0
      %v793 = vadd.f32 0.0, %v792
      %v794 = vpop.f32.mrb[0].mxu0
      %795 = vmatprep.mubr.f32.mxu0 0.0
      %796 = vmatmul.mubr.f32.gmra.mrb[0].mxu0 %v702
      %v797 = vpop.f32.mrb[0].mxu0
      %v798 = vadd.f32 0.0, %v797
      %v799 = vpop.f32.mrb[0].mxu0
      %800 = vmatprep.mubr.f32.mxu0 0.0
      %801 = vmatmul.mubr.f32.gmra.mrb[0].mxu0 %v703
      %v802 = vpop.f32.mrb[0].mxu0
      %v803 = vadd.f32 0.0, %v802
      %v804 = vpop.f32.mrb[0].mxu0
      %805 = vdwg.mxu0
      %v806 = vadd.f32 %v696, %v788
      %v807 = vadd.f32 %v697, %v793
      %v808 = vadd.f32 %v698, %v798
      %v809 = vadd.f32 %v699, %v803
      %v810 = vld [vmem:[%s250] sm:$0x1]
      %v812 = vlaneseq
      %v813 = vshrl.u32 %v812, 7
      %v814 = vsub.s32 0, %v813
      %v815 = vrot.slane %v810, %v814
      %v817 = vadd.f32 %v806, %v815
      %v818 = vadd.f32 %v807, %v815
      %v819 = vadd.f32 %v808, %v815
      %v820 = vadd.f32 %v809, %v815
      %p821 = scmp.ne.s32.totalorder %s17, 6
      // Predicated region
      $region49: #{cnn_feature_extraction_forward.11} parent=43 // pred_check
        %p822 = pneg %p821
      $region50: #{cnn_feature_extraction_forward.11} parent=43 // pred_check_branch
        %824 = sbr.rel (%p822) target = $region52
      $region51: #{cnn_feature_extraction_forward.11} parent=43 // pred_region
        %825 = vst [vmem:[#allocation2 + $0x2] sm:$0xff] %v817
        %826 = vst [vmem:[#allocation2 + $0xa] sm:$0xff] %v818
        %827 = vst [vmem:[#allocation2 + $0x1a] sm:$0xff] %v819
        %828 = vst [vmem:[#allocation2 + $0x22] sm:$0xff] %v820
      $region52: #{cnn_feature_extraction_forward.11} parent=43 // pred_fallthru
        _
      %p829 = scmp.eq.s32.totalorder %s17, 6
      // Predicated region
      $region53: #{cnn_feature_extraction_forward.11} parent=43 // pred_check
        %p830 = pneg %p829
      $region54: #{cnn_feature_extraction_forward.11} parent=43 // pred_check_branch
        %832 = sbr.rel (%p830) target = $region56
      $region55: #{cnn_feature_extraction_forward.11} parent=43 // pred_region
        %v833 = vadd.f32 %v817, %v818
        %v834 = vadd.f32 %v833, %v819
        %v835 = vadd.f32 %v834, %v820
        %v836 = vrot.slane %v835, 4
        %v837 = vadd.f32 %v835, %v836
        %v838 = vrot.slane %v837, 2
        %v839 = vadd.f32 %v837, %v838
        %v840 = vrot.slane %v839, 1
        %v841 = vadd.f32 %v839, %v840
        %v842 = vld [vmem:[%s5] sm:$0xff]
        %v843 = vld [vmem:[%s5 + $0x8] sm:$0xff]
        %v844 = vld [vmem:[%s5 + $0x10] sm:$0xff]
        %v845 = vld [vmem:[%s5 + $0x18] sm:$0xff]
        %v846 = vld [vmem:[%s5 + $0x20] sm:$0xff]
        %v847 = vld [vmem:[%s5 + $0x28] sm:$0xff]
        %v848 = vld [vmem:[%s5 + $0x30] sm:$0xff]
        %v849 = vld [vmem:[%s5 + $0x38] sm:$0xff]
        %v850 = vld [vmem:[%s5 + $0x40] sm:$0xff]
        %v851 = vld [vmem:[%s5 + $0x48] sm:$0xff]
        %v852 = vld [vmem:[%s5 + $0x50] sm:$0xff]
        %v853 = vld [vmem:[%s5 + $0x58] sm:$0xff]
        %v854 = vld [vmem:[%s5 + $0x60] sm:$0xff]
        %v855 = vld [vmem:[%s5 + $0x68] sm:$0xff]
        %v856 = vld [vmem:[%s5 + $0x70] sm:$0xff]
        %v857 = vld [vmem:[%s5 + $0x78] sm:$0xff]
        %858 = vmatprep.subr.mxu0 0.0
        %859 = vmatpush1.msra.mxu0 %v842
        %860 = vmatprep.subr.mxu0 0.0
        %861 = vmatpush1.msra.mxu0 %v843
        %862 = vmatprep.subr.mxu0 0.0
        %863 = vmatpush1.msra.mxu0 %v844
        %864 = vmatprep.subr.mxu0 0.0
        %865 = vmatpush1.msra.mxu0 %v845
        %866 = vmatprep.subr.mxu0 0.0
        %867 = vmatpush1.msra.mxu0 %v846
        %868 = vmatprep.subr.mxu0 0.0
        %869 = vmatpush1.msra.mxu0 %v847
        %870 = vmatprep.subr.mxu0 0.0
        %871 = vmatpush1.msra.mxu0 %v848
        %872 = vmatprep.subr.mxu0 0.0
        %873 = vmatpush1.msra.mxu0 %v849
        %874 = vmatprep.subr.mxu0 0.0
        %875 = vmatpush1.msra.mxu0 %v850
        %876 = vmatprep.subr.mxu0 0.0
        %877 = vmatpush1.msra.mxu0 %v851
        %878 = vmatprep.subr.mxu0 0.0
        %879 = vmatpush1.msra.mxu0 %v852
        %880 = vmatprep.subr.mxu0 0.0
        %881 = vmatpush1.msra.mxu0 %v853
        %882 = vmatprep.subr.mxu0 0.0
        %883 = vmatpush1.msra.mxu0 %v854
        %884 = vmatprep.subr.mxu0 0.0
        %885 = vmatpush1.msra.mxu0 %v855
        %886 = vmatprep.subr.mxu0 0.0
        %887 = vmatpush1.msra.mxu0 %v856
        %888 = vmatprep.subr.mxu0 0.0
        %889 = vmatpush1.msra.mxu0 %v857
        %890 = vmatprep.subr.mxu0 0.0
        %891 = vmatpush1.msra.mxu0 0.0
        %892 = vmatprep.subr.mxu0 0.0
        %893 = vmatpush1.msra.mxu0 0.0
        %894 = vmatprep.subr.mxu0 0.0
        %895 = vmatpush1.msra.mxu0 0.0
        %896 = vmatprep.subr.mxu0 0.0
        %897 = vmatpush1.msra.mxu0 0.0
        %898 = vmatprep.subr.mxu0 0.0
        %899 = vmatpush1.msra.mxu0 0.0
        %900 = vmatprep.subr.mxu0 0.0
        %901 = vmatpush1.msra.mxu0 0.0
        %902 = vmatprep.subr.mxu0 0.0
        %903 = vmatpush1.msra.mxu0 0.0
        %904 = vmatprep.subr.mxu0 0.0
        %905 = vmatpush1.msra.mxu0 0.0
        %906 = vmatprep.subr.mxu0 0.0
        %907 = vmatpush1.msra.mxu0 0.0
        %908 = vmatprep.subr.mxu0 0.0
        %909 = vmatpush1.msra.mxu0 0.0
        %910 = vmatprep.subr.mxu0 0.0
        %911 = vmatpush1.msra.mxu0 0.0
        %912 = vmatprep.subr.mxu0 0.0
        %913 = vmatpush1.msra.mxu0 0.0
        %914 = vmatprep.subr.mxu0 0.0
        %915 = vmatpush1.msra.mxu0 0.0
        %916 = vmatprep.subr.mxu0 0.0
        %917 = vmatpush1.msra.mxu0 0.0
        %918 = vmatprep.subr.mxu0 0.0
        %919 = vmatpush1.msra.mxu0 0.0
        %920 = vmatprep.subr.mxu0 0.0
        %921 = vmatpush1.msra.mxu0 0.0
        %922 = vmatprep.mubr.f32.mxu0 0.0
        %923 = vmatmul.mubr.f32.gmra.mrb[0].mxu0 %v841
        %v924 = vpop.f32.mrb[0].mxu0
        %v925 = vadd.f32 0.0, %v924
        %v926 = vpop.f32.mrb[0].mxu0
        %927 = vdwg.mxu0
        %v928 = vmul.f32 %v925, 0.001953125
        %v929 = vlaneseq
        %v930 = vshrl.u32 %v929, 7
        %v931 = vsub.s32 0, %v930
        %v932 = vrot.slane %v928, %v931
        %v933 = vsub.f32 %v817, %v932
        %v934 = vsub.f32 %v818, %v932
        %v935 = vsub.f32 %v819, %v932
        %v936 = vsub.f32 %v820, %v932
        %v937 = vmul.f32 %v933, %v933
        %v938 = vmul.f32 %v934, %v934
        %v939 = vmul.f32 %v935, %v935
        %v940 = vmul.f32 %v936, %v936
        %v941 = vadd.f32 %v937, %v938
        %v942 = vadd.f32 %v941, %v939
        %v943 = vadd.f32 %v942, %v940
        %v944 = vrot.slane %v943, 4
        %v945 = vadd.f32 %v943, %v944
        %v946 = vrot.slane %v945, 2
        %v947 = vadd.f32 %v945, %v946
        %v948 = vrot.slane %v947, 1
        %v949 = vadd.f32 %v947, %v948
        %950 = vmatprep.subr.mxu0 0.0
        %951 = vmatpush1.msra.mxu0 %v842
        %952 = vmatprep.subr.mxu0 0.0
        %953 = vmatpush1.msra.mxu0 %v843
        %954 = vmatprep.subr.mxu0 0.0
        %955 = vmatpush1.msra.mxu0 %v844
        %956 = vmatprep.subr.mxu0 0.0
        %957 = vmatpush1.msra.mxu0 %v845
        %958 = vmatprep.subr.mxu0 0.0
        %959 = vmatpush1.msra.mxu0 %v846
        %960 = vmatprep.subr.mxu0 0.0
        %961 = vmatpush1.msra.mxu0 %v847
        %962 = vmatprep.subr.mxu0 0.0
        %963 = vmatpush1.msra.mxu0 %v848
        %964 = vmatprep.subr.mxu0 0.0
        %965 = vmatpush1.msra.mxu0 %v849
        %966 = vmatprep.subr.mxu0 0.0
        %967 = vmatpush1.msra.mxu0 %v850
        %968 = vmatprep.subr.mxu0 0.0
        %969 = vmatpush1.msra.mxu0 %v851
        %970 = vmatprep.subr.mxu0 0.0
        %971 = vmatpush1.msra.mxu0 %v852
        %972 = vmatprep.subr.mxu0 0.0
        %973 = vmatpush1.msra.mxu0 %v853
        %974 = vmatprep.subr.mxu0 0.0
        %975 = vmatpush1.msra.mxu0 %v854
        %976 = vmatprep.subr.mxu0 0.0
        %977 = vmatpush1.msra.mxu0 %v855
        %978 = vmatprep.subr.mxu0 0.0
        %979 = vmatpush1.msra.mxu0 %v856
        %980 = vmatprep.subr.mxu0 0.0
        %981 = vmatpush1.msra.mxu0 %v857
        %982 = vmatprep.subr.mxu0 0.0
        %983 = vmatpush1.msra.mxu0 0.0
        %984 = vmatprep.subr.mxu0 0.0
        %985 = vmatpush1.msra.mxu0 0.0
        %986 = vmatprep.subr.mxu0 0.0
        %987 = vmatpush1.msra.mxu0 0.0
        %988 = vmatprep.subr.mxu0 0.0
        %989 = vmatpush1.msra.mxu0 0.0
        %990 = vmatprep.subr.mxu0 0.0
        %991 = vmatpush1.msra.mxu0 0.0
        %992 = vmatprep.subr.mxu0 0.0
        %993 = vmatpush1.msra.mxu0 0.0
        %994 = vmatprep.subr.mxu0 0.0
        %995 = vmatpush1.msra.mxu0 0.0
        %996 = vmatprep.subr.mxu0 0.0
        %997 = vmatpush1.msra.mxu0 0.0
        %998 = vmatprep.subr.mxu0 0.0
        %999 = vmatpush1.msra.mxu0 0.0
        %1000 = vmatprep.subr.mxu0 0.0
        %1001 = vmatpush1.msra.mxu0 0.0
        %1002 = vmatprep.subr.mxu0 0.0
        %1003 = vmatpush1.msra.mxu0 0.0
        %1004 = vmatprep.subr.mxu0 0.0
        %1005 = vmatpush1.msra.mxu0 0.0
        %1006 = vmatprep.subr.mxu0 0.0
        %1007 = vmatpush1.msra.mxu0 0.0
        %1008 = vmatprep.subr.mxu0 0.0
        %1009 = vmatpush1.msra.mxu0 0.0
        %1010 = vmatprep.subr.mxu0 0.0
        %1011 = vmatpush1.msra.mxu0 0.0
        %1012 = vmatprep.subr.mxu0 0.0
        %1013 = vmatpush1.msra.mxu0 0.0
        %1014 = vmatprep.mubr.f32.mxu0 0.0
        %1015 = vmatmul.mubr.f32.gmra.mrb[0].mxu0 %v949
        %v1016 = vpop.f32.mrb[0].mxu0
        %v1017 = vadd.f32 0.0, %v1016
        %v1018 = vpop.f32.mrb[0].mxu0
        %1019 = vdwg.mxu0
        %v1020 = vmul.f32 %v1017, 0.001953125
        %v1021 = vld [vmem:[%s3] sm:$0x1]
        %v1022 = vadd.f32 %v1020, 1e-05
        %v1023 = vrsqrt.pop %v1022
        %v1024 = vmul.f32 %v1021, %v1023
        %v1026 = vlaneseq
        %v1027 = vshrl.u32 %v1026, 7
        %v1028 = vsub.s32 0, %v1027
        %v1029 = vrot.slane %v1024, %v1028
        %v1031 = vmul.f32 %v933, %v1029
        %v1032 = vmul.f32 %v934, %v1029
        %v1033 = vmul.f32 %v935, %v1029
        %v1034 = vmul.f32 %v936, %v1029
        %v1035 = vld [vmem:[%s4] sm:$0x1]
        %v1037 = vlaneseq
        %v1038 = vshrl.u32 %v1037, 7
        %v1039 = vsub.s32 0, %v1038
        %v1040 = vrot.slane %v1035, %v1039
        %v1042 = vadd.f32 %v1031, %v1040
        %v1043 = vadd.f32 %v1032, %v1040
        %v1044 = vadd.f32 %v1033, %v1040
        %v1045 = vadd.f32 %v1034, %v1040
        %v1046 = vmin.f32 %v1042, 0.0
        %v1047 = vmin.f32 %v1043, 0.0
        %v1048 = vmin.f32 %v1044, 0.0
        %v1049 = vmin.f32 %v1045, 0.0
        %v1050 = vmul.f32 %v1046, 1.442695
        %v1051 = vpow.pop %v1050
        %v1052 = vmul.f32 %v1047, 1.442695
        %v1053 = vpow.pop %v1052
        %v1054 = vmul.f32 %v1048, 1.442695
        %v1055 = vpow.pop %v1054
        %v1056 = vmul.f32 %v1049, 1.442695
        %v1057 = vpow.pop %v1056
        %v1058 = vsub.f32 %v1051, 1.0
        %v1059 = vsub.f32 %v1053, 1.0
        %v1060 = vsub.f32 %v1055, 1.0
        %v1061 = vsub.f32 %v1057, 1.0
        %v1062 = vmul.f32 %v1058, 1.6732632
        %v1063 = vmul.f32 %v1059, 1.6732632
        %v1064 = vmul.f32 %v1060, 1.6732632
        %v1065 = vmul.f32 %v1061, 1.6732632
        %vm1066 = vcmp.gt.f32.partialorder %v1042, 0.0
        %vm1067 = vcmp.gt.f32.partialorder %v1043, 0.0
        %vm1068 = vcmp.gt.f32.partialorder %v1044, 0.0
        %vm1069 = vcmp.gt.f32.partialorder %v1045, 0.0
        %v1070 = vsel %vm1066, %v1042, %v1062
        %v1071 = vsel %vm1067, %v1043, %v1063
        %v1072 = vsel %vm1068, %v1044, %v1064
        %v1073 = vsel %vm1069, %v1045, %v1065
        %v1074 = vmul.f32 %v1070, 1.050701
        %v1075 = vmul.f32 %v1071, 1.050701
        %v1076 = vmul.f32 %v1072, 1.050701
        %v1077 = vmul.f32 %v1073, 1.050701
        %1078 = vst [vmem:[%s6] sm:$0xff] %v1074
        %1079 = vst [vmem:[%s6 + $0x8] sm:$0xff] %v1075
        %1080 = vst [vmem:[%s6 + $0x10] sm:$0xff] %v1076
        %1081 = vst [vmem:[%s6 + $0x18] sm:$0xff] %v1077
      $region56: #{cnn_feature_extraction_forward.11} parent=43 // pred_fallthru
        _
      // Predicated region
      $region57: #{cnn_feature_extraction_forward.11} parent=43 // pred_check
        %p1082 = pneg %p166
      $region58: #{cnn_feature_extraction_forward.11} parent=43 // pred_check_branch
        %1084 = sbr.rel (%p1082) target = $region60
      $region59: #{cnn_feature_extraction_forward.11} parent=43 // pred_region
        _
      $region60: #{cnn_feature_extraction_forward.11} parent=43 // pred_fallthru
        _
      // Predicated region
      $region61: #{cnn_feature_extraction_forward.11} parent=43 // pred_check
        %p1085 = pneg %p166
      $region62: #{cnn_feature_extraction_forward.11} parent=43 // pred_check_branch
        %1087 = sbr.rel (%p1085) target = $region64
      $region63: #{cnn_feature_extraction_forward.11} parent=43 // pred_region
        _
      $region64: #{cnn_feature_extraction_forward.11} parent=43 // pred_fallthru
        _
    $region44: #{cnn_feature_extraction_forward.11} parent=5 // pred_fallthru
      _
    %p1088 = scmp.le.s32.totalorder 2, %s12
    // Predicated region
    $region65: #{cnn_feature_extraction_forward.11} parent=5 // pred_check
      %p1089 = pneg %p1088
    $region66: #{cnn_feature_extraction_forward.11} parent=5 // pred_check_branch
      %1091 = sbr.rel (%p1089) target = $region68
    $region67: #{cnn_feature_extraction_forward.11} parent=5 // pred_region
      %s1092 = ssub.s32 %s12, 2
    $region68: #{cnn_feature_extraction_forward.11} parent=5 // pred_fallthru
      _
  $region6: #{cnn_feature_extraction_forward.11} parent=0 // loop_footer
    %s16 = sadd.s32 1, %s12
  $region7: #{cnn_feature_extraction_forward.11} parent=0 // loop_footer_branch
    %11 = sbr.rel target = $region3
  $region8: #{cnn_feature_extraction_forward.11} parent=0 // loop_exit
    _

// kernel: cnn_feature_extraction_forward.12
$region0: #{cnn_feature_extraction_forward.12}
  #allocation0 [shape = 'u32[]', space=smem, size = 0x4, offset = 0x4, fixed_abs, tag = 'smem constant byte address 0x4 - core index']
  #allocation1 [shape = 'u32[144,128]{1,0:T(1,128)}', space=vmem, size = 0x12000, scoped, tag = 'internal scratch']
  #allocation2 [shape = 'f32[2,20,128]{2,1,0:T(8,128)}', space=vmem, size = 0x6000, scoped, tag = 'scratch operand']
  %s0 = inlined_call_operand.vmem [shape: f32[2,16,128], index: 0, kind: input, shape index: {}]
  %s1 = inlined_call_operand.hbm [shape: f32[15,5,128,128], index: 1, kind: input, shape index: {}]
  %s2 = inlined_call_operand.vmem [shape: f32[15,1,128], index: 2, kind: input, shape index: {}]
  %s3 = inlined_call_operand.vmem [shape: f32[1,128], index: 3, kind: input, shape index: {}]
  %s4 = inlined_call_operand.vmem [shape: f32[1,128], index: 4, kind: input, shape index: {}]
  %s5 = inlined_call_operand.vmem [shape: f32[128,128], index: 5, kind: input, shape index: {}]
  %s6 = inlined_call_operand.vmem [shape: f32[32,128], index: 6, kind: output, shape index: {}]
  %s7 = sld [smem:[#allocation0]]
  $region73: #{cnn_feature_extraction_forward.12} parent=0
    _
  %s9 = ssub.s32 1, %s7
  %s10 = scalar_select 0, %s9, %s7
  $region1: #{cnn_feature_extraction_forward.12} parent=0
    #allocation3 [shape = 'u8[655360]{0}', space=vmem, size = 0xa0000, scoped, tag = 'input window, operand 1']
    #allocation4 [shape = 's32[2]{0}', space=sflag, size = 0x8, scoped, tag = 'scoped memory for cnn_feature_extraction_forward.12']
    %11 = vsyncpa [#allocation4], 0
    %s12 = scalar_lea.sflag [#allocation4], 1
    %13 = vsyncpa %s12, 0
    loop: start=0, step=1, limit=17
    $region2: #{cnn_feature_extraction_forward.12} parent=1 // loop_pre_header
      _
    $region3: #{cnn_feature_extraction_forward.12} parent=1 // loop_header
      %s15 = sphi 0, %s19
      %p16 = scmp.ge.s32.totalorder %s15, 17
      %s23 = sphi 0, %s23
      %s25 = sphi 0, %s23
      %s26 = sphi 0, %s25
      %s40 = sphi 0, %s26
      %s46 = sphi 0, %s48
      %s49 = sphi 0, %s46
      %s50 = sphi 0, %s49
      %s66 = sphi 0, %s50
      %s72 = sphi 0, %s74
      %s75 = sphi 0, %s72
      %s76 = sphi 0, %s75
      %s92 = sphi 0, %s76
      %s96 = sphi 0, %s96
      %s98 = sphi 0, %s96
      %s99 = sphi 0, %s98
      %s113 = sphi 0, %s99
      %s117 = sphi 0, %s117
      %s119 = sphi 0, %s117
      %s120 = sphi 0, %s119
      %s134 = sphi 0, %s120
      %s138 = sphi 0, %s138
      %s140 = sphi 0, %s138
      %s141 = sphi 0, %s140
      %s155 = sphi 0, %s141
      %s159 = sphi 0, %s159
      %s161 = sphi 0, %s159
      %s162 = sphi 0, %s161
      %s176 = sphi 0, %s162
    $region4: #{cnn_feature_extraction_forward.12} parent=1 // loop_header_branch
      %18 = sbr.rel (%p16) target = $region8
    $region5: #{cnn_feature_extraction_forward.12} parent=1 // loop_body
      %s20 = ssub.s32 %s15, 1
      %s21 = ssub.s32 %s15, 2
      %s22 = sadd.s32 %s15, 1
      %s24 = sadd.s32 %s23, 1
      %p27 = scmp.eq.s32.totalorder %s15, 14
      %p28 = scmp.ne.s32.totalorder %s23, %s25
      %p29 = scmp.eq.s32.totalorder %s15, 0
      %p30 = por %p28, %p29
      %p31 = scmp.ne.s32.totalorder %s23, %s25
      %p32 = scmp.eq.s32.totalorder %s20, 14
      %p33 = por %p31, %p32
      %p34 = scmp.ne.s32.totalorder %s25, %s26
      %p35 = scmp.eq.s32.totalorder %s20, 0
      %p36 = por %p34, %p35
      %p37 = scmp.ne.s32.totalorder %s25, %s26
      %p38 = scmp.eq.s32.totalorder %s21, 14
      %p39 = por %p37, %p38
      %p41 = scmp.ne.s32.totalorder %s26, %s40
      %p42 = scmp.eq.s32.totalorder %s21, 0
      %p43 = por %p41, %p42
      %s44 = ssub.s32 %s15, %s22
      %p45 = scmp.eq.s32.totalorder %s44, 0
      %s47 = sadd.s32 %s46, 1
      %s48 = scalar_select %p45, %s46, %s47
      %p51 = pneg %p45
      %p52 = scmp.eq.s32.totalorder %s15, 14
      %p53 = por %p51, %p52
      %p54 = scmp.ne.s32.totalorder %s46, %s49
      %p55 = scmp.eq.s32.totalorder %s15, 0
      %p56 = por %p54, %p55
      %p57 = scmp.ne.s32.totalorder %s46, %s49
      %p58 = scmp.eq.s32.totalorder %s20, 14
      %p59 = por %p57, %p58
      %p60 = scmp.ne.s32.totalorder %s49, %s50
      %p61 = scmp.eq.s32.totalorder %s20, 0
      %p62 = por %p60, %p61
      %p63 = scmp.ne.s32.totalorder %s49, %s50
      %p64 = scmp.eq.s32.totalorder %s21, 14
      %p65 = por %p63, %p64
      %p67 = scmp.ne.s32.totalorder %s50, %s66
      %p68 = scmp.eq.s32.totalorder %s21, 0
      %p69 = por %p67, %p68
      %s70 = ssub.s32 %s15, %s22
      %p71 = scmp.eq.s32.totalorder %s70, 0
      %s73 = sadd.s32 %s72, 1
      %s74 = scalar_select %p71, %s72, %s73
      %p77 = pneg %p71
      %p78 = scmp.eq.s32.totalorder %s15, 14
      %p79 = por %p77, %p78
      %p80 = scmp.ne.s32.totalorder %s72, %s75
      %p81 = scmp.eq.s32.totalorder %s15, 0
      %p82 = por %p80, %p81
      %p83 = scmp.ne.s32.totalorder %s72, %s75
      %p84 = scmp.eq.s32.totalorder %s20, 14
      %p85 = por %p83, %p84
      %p86 = scmp.ne.s32.totalorder %s75, %s76
      %p87 = scmp.eq.s32.totalorder %s20, 0
      %p88 = por %p86, %p87
      %p89 = scmp.ne.s32.totalorder %s75, %s76
      %p90 = scmp.eq.s32.totalorder %s21, 14
      %p91 = por %p89, %p90
      %p93 = scmp.ne.s32.totalorder %s76, %s92
      %p94 = scmp.eq.s32.totalorder %s21, 0
      %p95 = por %p93, %p94
      %s97 = sadd.s32 %s96, 1
      %p100 = scmp.eq.s32.totalorder %s15, 14
      %p101 = scmp.ne.s32.totalorder %s96, %s98
      %p102 = scmp.eq.s32.totalorder %s15, 0
      %p103 = por %p101, %p102
      %p104 = scmp.ne.s32.totalorder %s96, %s98
      %p105 = scmp.eq.s32.totalorder %s20, 14
      %p106 = por %p104, %p105
      %p107 = scmp.ne.s32.totalorder %s98, %s99
      %p108 = scmp.eq.s32.totalorder %s20, 0
      %p109 = por %p107, %p108
      %p110 = scmp.ne.s32.totalorder %s98, %s99
      %p111 = scmp.eq.s32.totalorder %s21, 14
      %p112 = por %p110, %p111
      %p114 = scmp.ne.s32.totalorder %s99, %s113
      %p115 = scmp.eq.s32.totalorder %s21, 0
      %p116 = por %p114, %p115
      %s118 = sadd.s32 %s117, 1
      %p121 = scmp.eq.s32.totalorder %s15, 14
      %p122 = scmp.ne.s32.totalorder %s117, %s119
      %p123 = scmp.eq.s32.totalorder %s15, 0
      %p124 = por %p122, %p123
      %p125 = scmp.ne.s32.totalorder %s117, %s119
      %p126 = scmp.eq.s32.totalorder %s20, 14
      %p127 = por %p125, %p126
      %p128 = scmp.ne.s32.totalorder %s119, %s120
      %p129 = scmp.eq.s32.totalorder %s20, 0
      %p130 = por %p128, %p129
      %p131 = scmp.ne.s32.totalorder %s119, %s120
      %p132 = scmp.eq.s32.totalorder %s21, 14
      %p133 = por %p131, %p132
      %p135 = scmp.ne.s32.totalorder %s120, %s134
      %p136 = scmp.eq.s32.totalorder %s21, 0
      %p137 = por %p135, %p136
      %s139 = sadd.s32 %s138, 1
      %p142 = scmp.eq.s32.totalorder %s15, 14
      %p143 = scmp.ne.s32.totalorder %s138, %s140
      %p144 = scmp.eq.s32.totalorder %s15, 0
      %p145 = por %p143, %p144
      %p146 = scmp.ne.s32.totalorder %s138, %s140
      %p147 = scmp.eq.s32.totalorder %s20, 14
      %p148 = por %p146, %p147
      %p149 = scmp.ne.s32.totalorder %s140, %s141
      %p150 = scmp.eq.s32.totalorder %s20, 0
      %p151 = por %p149, %p150
      %p152 = scmp.ne.s32.totalorder %s140, %s141
      %p153 = scmp.eq.s32.totalorder %s21, 14
      %p154 = por %p152, %p153
      %p156 = scmp.ne.s32.totalorder %s141, %s155
      %p157 = scmp.eq.s32.totalorder %s21, 0
      %p158 = por %p156, %p157
      %s160 = sadd.s32 %s159, 1
      %p163 = scmp.eq.s32.totalorder %s15, 14
      %p164 = scmp.ne.s32.totalorder %s159, %s161
      %p165 = scmp.eq.s32.totalorder %s15, 0
      %p166 = por %p164, %p165
      %p167 = scmp.ne.s32.totalorder %s159, %s161
      %p168 = scmp.eq.s32.totalorder %s20, 14
      %p169 = por %p167, %p168
      %p170 = scmp.ne.s32.totalorder %s161, %s162
      %p171 = scmp.eq.s32.totalorder %s20, 0
      %p172 = por %p170, %p171
      %p173 = scmp.ne.s32.totalorder %s161, %s162
      %p174 = scmp.eq.s32.totalorder %s21, 14
      %p175 = por %p173, %p174
      %p177 = scmp.ne.s32.totalorder %s162, %s176
      %p178 = scmp.eq.s32.totalorder %s21, 0
      %p179 = por %p177, %p178
      %p180 = scmp.le.s32.totalorder 1, %s15
      %p181 = scmp.lt.s32.totalorder %s15, 16
      %p182 = pnand %p180, %p181
      %p183 = pneg %p182
      // Predicated region
      $region9: #{cnn_feature_extraction_forward.12} parent=5 // pred_check
        _
      $region10: #{cnn_feature_extraction_forward.12} parent=5 // pred_check_branch
        %185 = sbr.rel (%p182) target = $region12
      $region11: #{cnn_feature_extraction_forward.12} parent=5 // pred_region
        %s186 = ssub.s32 %s15, 1
        // Predicated region
        $region13: #{cnn_feature_extraction_forward.12} parent=11 // pred_check
          %p187 = pneg %p36
        $region14: #{cnn_feature_extraction_forward.12} parent=11 // pred_check_branch
          %189 = sbr.rel (%p187) target = $region16
        $region15: #{cnn_feature_extraction_forward.12} parent=11 // pred_region
          _
        $region16: #{cnn_feature_extraction_forward.12} parent=11 // pred_fallthru
          _
        // Predicated region
        $region17: #{cnn_feature_extraction_forward.12} parent=11 // pred_check
          %p190 = pneg %p109
        $region18: #{cnn_feature_extraction_forward.12} parent=11 // pred_check_branch
          %192 = sbr.rel (%p190) target = $region20
        $region19: #{cnn_feature_extraction_forward.12} parent=11 // pred_region
          _
        $region20: #{cnn_feature_extraction_forward.12} parent=11 // pred_fallthru
          _
        // Predicated region
        $region21: #{cnn_feature_extraction_forward.12} parent=11 // pred_check
          %p193 = pneg %p130
        $region22: #{cnn_feature_extraction_forward.12} parent=11 // pred_check_branch
          %195 = sbr.rel (%p193) target = $region24
        $region23: #{cnn_feature_extraction_forward.12} parent=11 // pred_region
          _
        $region24: #{cnn_feature_extraction_forward.12} parent=11 // pred_fallthru
          _
        // Predicated region
        $region25: #{cnn_feature_extraction_forward.12} parent=11 // pred_check
          %p196 = pneg %p151
        $region26: #{cnn_feature_extraction_forward.12} parent=11 // pred_check_branch
          %198 = sbr.rel (%p196) target = $region28
        $region27: #{cnn_feature_extraction_forward.12} parent=11 // pred_region
          _
        $region28: #{cnn_feature_extraction_forward.12} parent=11 // pred_fallthru
          _
      $region12: #{cnn_feature_extraction_forward.12} parent=5 // pred_fallthru
        _
      %p199 = scmp.lt.s32.totalorder %s15, 15
      // Predicated region
      $region29: #{cnn_feature_extraction_forward.12} parent=5 // pred_check
        %p200 = pneg %p199
      $region30: #{cnn_feature_extraction_forward.12} parent=5 // pred_check_branch
        %202 = sbr.rel (%p200) target = $region32
      $region31: #{cnn_feature_extraction_forward.12} parent=5 // pred_region
        // Predicated region
        $region33: #{cnn_feature_extraction_forward.12} parent=31 // pred_check
          %p203 = pneg %p56
        $region34: #{cnn_feature_extraction_forward.12} parent=31 // pred_check_branch
          %205 = sbr.rel (%p203) target = $region36
        $region35: #{cnn_feature_extraction_forward.12} parent=31 // pred_region
          %s206 = sand.u32 %s46, 1
          %s207 = scalar_lea.sflag [#allocation4], %s206
          %s208 = sand.u32 %s46, 1
          %s209 = smul.addr %s208, 640
          %s210 = scalar_lea.vmem [#allocation3], %s209
          %s212 = ssub.s32 10240, 10240
          %213 = vsyncadd %s207, %s212
          %s214 = smul.addr %s15, 80
          %s215 = smul.addr %s214, 128
          %s216 = scalar_lea.hbm %s1, %s215
          %s217 = sshll.u32 %s210, 4
          %s218 = int_to_ptr.vmem [resolvable:$true] %s217
          %223 = dma.hbm_to_vmem [thread:$0]  %s216, 10240, %s218, %s207, 128, 128, 8
        $region36: #{cnn_feature_extraction_forward.12} parent=31 // pred_fallthru
          _
        // Predicated region
        $region37: #{cnn_feature_extraction_forward.12} parent=31 // pred_check
          %p224 = pneg %p82
        $region38: #{cnn_feature_extraction_forward.12} parent=31 // pred_check_branch
          %226 = sbr.rel (%p224) target = $region40
        $region39: #{cnn_feature_extraction_forward.12} parent=31 // pred_region
          %p227 = scmp.lt.s32.totalorder %s15, 14
          %s228 = scalar_select %p227, %s15, 14
          %s229 = scalar_lea.vmem %s2, %s228
        $region40: #{cnn_feature_extraction_forward.12} parent=31 // pred_fallthru
          _
      $region32: #{cnn_feature_extraction_forward.12} parent=5 // pred_fallthru
        _
      %p230 = scmp.le.s32.totalorder 1, %s15
      %p231 = scmp.lt.s32.totalorder %s15, 16
      %p232 = pnand %p230, %p231
      %p233 = pneg %p232
      // Predicated region
      $region41: #{cnn_feature_extraction_forward.12} parent=5 // pred_check
        _
      $region42: #{cnn_feature_extraction_forward.12} parent=5 // pred_check_branch
        %235 = sbr.rel (%p232) target = $region44
      $region43: #{cnn_feature_extraction_forward.12} parent=5 // pred_region
        %s236 = ssub.s32 %s15, 1
        %s237 = sand.u32 %s49, 1
        %s238 = scalar_lea.sflag [#allocation4], %s237
        %s239 = sand.u32 %s49, 1
        %s240 = smul.addr %s239, 640
        %s241 = scalar_lea.vmem [#allocation3], %s240
        // Predicated region
        $region45: #{cnn_feature_extraction_forward.12} parent=43 // pred_check
          %p242 = pneg %p62
        $region46: #{cnn_feature_extraction_forward.12} parent=43 // pred_check_branch
          %244 = sbr.rel (%p242) target = $region48
        $region47: #{cnn_feature_extraction_forward.12} parent=43 // pred_region
          %245 = dma.done %s238, 10240
        $region48: #{cnn_feature_extraction_forward.12} parent=43 // pred_fallthru
          _
        %p246 = pneg %p36
        %p247 = pneg %p33
        %s248 = sand.u32 %s49, 1
        %s249 = scalar_lea.sflag [#allocation4], %s248
        %s250 = sand.u32 %s49, 1
        %s251 = smul.addr %s250, 640
        %s252 = scalar_lea.vmem [#allocation3], %s251
        %p253 = pneg %p62
        %p254 = pneg %p59
        %p255 = scmp.lt.s32.totalorder %s20, 14
        %s256 = scalar_select %p255, %s20, 14
        %s257 = scalar_lea.vmem %s2, %s256
        %p258 = pneg %p88
        %p259 = pneg %p85
        %p260 = pneg %p109
        %p261 = pneg %p106
        %p262 = pneg %p130
        %p263 = pneg %p127
        %p264 = pneg %p151
        %p265 = pneg %p148
        %p266 = pneg %p172
        %p267 = pneg %p169
        %p268 = scmp.lt.s32.totalorder %s20, 14
        %s269 = scalar_select %p268, %s20, 14
        %s270 = scalar_lea.vmem %s2, %s269
        %p271 = scmp.eq.s32.totalorder %s20, 0
        // Predicated region
        $region49: #{cnn_feature_extraction_forward.12} parent=43 // pred_check
          %p272 = pneg %p271
        $region50: #{cnn_feature_extraction_forward.12} parent=43 // pred_check_branch
          %274 = sbr.rel (%p272) target = $region52
        $region51: #{cnn_feature_extraction_forward.12} parent=43 // pred_region
          %275 = vst [vmem:[#allocation2] sm:$0xff] 0.0
          %276 = vst [vmem:[#allocation2 + $0x8] sm:$0xff] 0.0
          %277 = vst [vmem:[#allocation2 + $0x10] sm:$0xf] 0.0
          %278 = vst [vmem:[#allocation2 + $0x18] sm:$0xff] 0.0
          %279 = vst [vmem:[#allocation2 + $0x20] sm:$0xff] 0.0
          %280 = vst [vmem:[#allocation2 + $0x28] sm:$0xf] 0.0
          %v281 = vld [vmem:[%s0] sm:$0xff]
          %v282 = vld [vmem:[%s0 + $0x8] sm:$0xff]
          %v283 = vld [vmem:[%s0 + $0x10] sm:$0xff]
          %v284 = vld [vmem:[%s0 + $0x18] sm:$0xff]
          %285 = vst [vmem:[#allocation2 + $0x2] sm:$0xff] %v281
          %286 = vst [vmem:[#allocation2 + $0xa] sm:$0xff] %v282
          %287 = vst [vmem:[#allocation2 + $0x1a] sm:$0xff] %v283
          %288 = vst [vmem:[#allocation2 + $0x22] sm:$0xff] %v284
        $region52: #{cnn_feature_extraction_forward.12} parent=43 // pred_fallthru
          _
        %v289 = vld [vmem:[#allocation2] sm:$0xff]
        %v290 = vld [vmem:[#allocation2 + $0x8] sm:$0xff]
        %v291 = vld [vmem:[#allocation2 + $0x18] sm:$0xff]
        %v292 = vld [vmem:[#allocation2 + $0x20] sm:$0xff]
        %v293 = vld [vmem:[%s241] sm:$0xff]
        %v294 = vld [vmem:[%s241 + $0x8] sm:$0xff]
        %v295 = vld [vmem:[%s241 + $0x10] sm:$0xff]
        %v296 = vld [vmem:[%s241 + $0x18] sm:$0xff]
        %v297 = vld [vmem:[%s241 + $0x20] sm:$0xff]
        %v298 = vld [vmem:[%s241 + $0x28] sm:$0xff]
        %v299 = vld [vmem:[%s241 + $0x30] sm:$0xff]
        %v300 = vld [vmem:[%s241 + $0x38] sm:$0xff]
        %v301 = vld [vmem:[%s241 + $0x40] sm:$0xff]
        %v302 = vld [vmem:[%s241 + $0x48] sm:$0xff]
        %v303 = vld [vmem:[%s241 + $0x50] sm:$0xff]
        %v304 = vld [vmem:[%s241 + $0x58] sm:$0xff]
        %v305 = vld [vmem:[%s241 + $0x60] sm:$0xff]
        %v306 = vld [vmem:[%s241 + $0x68] sm:$0xff]
        %v307 = vld [vmem:[%s241 + $0x70] sm:$0xff]
        %v308 = vld [vmem:[%s241 + $0x78] sm:$0xff]
        %v309 = vld [vmem:[#allocation2 + $0x1] sm:$0xff]
        %v310 = vld [vmem:[#allocation2 + $0x9] sm:$0xff]
        %v311 = vld [vmem:[#allocation2 + $0x19] sm:$0xff]
        %v312 = vld [vmem:[#allocation2 + $0x21] sm:$0xff]
        %s313 = scalar_lea.vmem %s241, 128 [#allocation3]
        %v314 = vld [vmem:[%s313] sm:$0xff]
        %v315 = vld [vmem:[%s313 + $0x8] sm:$0xff]
        %v316 = vld [vmem:[%s313 + $0x10] sm:$0xff]
        %v317 = vld [vmem:[%s313 + $0x18] sm:$0xff]
        %v318 = vld [vmem:[%s313 + $0x20] sm:$0xff]
        %v319 = vld [vmem:[%s313 + $0x28] sm:$0xff]
        %v320 = vld [vmem:[%s313 + $0x30] sm:$0xff]
        %v321 = vld [vmem:[%s313 + $0x38] sm:$0xff]
        %v322 = vld [vmem:[%s313 + $0x40] sm:$0xff]
        %v323 = vld [vmem:[%s313 + $0x48] sm:$0xff]
        %v324 = vld [vmem:[%s313 + $0x50] sm:$0xff]
        %v325 = vld [vmem:[%s313 + $0x58] sm:$0xff]
        %v326 = vld [vmem:[%s313 + $0x60] sm:$0xff]
        %v327 = vld [vmem:[%s313 + $0x68] sm:$0xff]
        %v328 = vld [vmem:[%s313 + $0x70] sm:$0xff]
        %v329 = vld [vmem:[%s313 + $0x78] sm:$0xff]
        %330 = vmatprep.subr.mxu0 0.0
        %331 = vmatpush1.msra.mxu0 %v314
        %332 = vmatprep.subr.mxu0 0.0
        %333 = vmatpush1.msra.mxu0 %v315
        %334 = vmatprep.subr.mxu0 0.0
        %335 = vmatpush1.msra.mxu0 %v316
        %336 = vmatprep.subr.mxu0 0.0
        %337 = vmatpush1.msra.mxu0 %v317
        %338 = vmatprep.subr.mxu0 0.0
        %339 = vmatpush1.msra.mxu0 %v318
        %340 = vmatprep.subr.mxu0 0.0
        %341 = vmatpush1.msra.mxu0 %v319
        %342 = vmatprep.subr.mxu0 0.0
        %343 = vmatpush1.msra.mxu0 %v320
        %344 = vmatprep.subr.mxu0 0.0
        %345 = vmatpush1.msra.mxu0 %v321
        %346 = vmatprep.subr.mxu0 0.0
        %347 = vmatpush1.msra.mxu0 %v322
        %348 = vmatprep.subr.mxu0 0.0
        %349 = vmatpush1.msra.mxu0 %v323
        %350 = vmatprep.subr.mxu0 0.0
        %351 = vmatpush1.msra.mxu0 %v324
        %352 = vmatprep.subr.mxu0 0.0
        %353 = vmatpush1.msra.mxu0 %v325
        %354 = vmatprep.subr.mxu0 0.0
        %355 = vmatpush1.msra.mxu0 %v326
        %356 = vmatprep.subr.mxu0 0.0
        %357 = vmatpush1.msra.mxu0 %v327
        %358 = vmatprep.subr.mxu0 0.0
        %359 = vmatpush1.msra.mxu0 %v328
        %360 = vmatprep.subr.mxu0 0.0
        %361 = vmatpush1.msra.mxu0 %v329
        %362 = vmatprep.subr.mxu0 0.0
        %363 = vmatpush1.msra.mxu0 0.0
        %364 = vmatprep.subr.mxu0 0.0
        %365 = vmatpush1.msra.mxu0 0.0
        %366 = vmatprep.subr.mxu0 0.0
        %367 = vmatpush1.msra.mxu0 0.0
        %368 = vmatprep.subr.mxu0 0.0
        %369 = vmatpush1.msra.mxu0 0.0
        %370 = vmatprep.subr.mxu0 0.0
        %371 = vmatpush1.msra.mxu0 0.0
        %372 = vmatprep.subr.mxu0 0.0
        %373 = vmatpush1.msra.mxu0 0.0
        %374 = vmatprep.subr.mxu0 0.0
        %375 = vmatpush1.msra.mxu0 0.0
        %376 = vmatprep.subr.mxu0 0.0
        %377 = vmatpush1.msra.mxu0 0.0
        %378 = vmatprep.subr.mxu0 0.0
        %379 = vmatpush1.msra.mxu0 0.0
        %380 = vmatprep.subr.mxu0 0.0
        %381 = vmatpush1.msra.mxu0 0.0
        %382 = vmatprep.subr.mxu0 0.0
        %383 = vmatpush1.msra.mxu0 0.0
        %384 = vmatprep.subr.mxu0 0.0
        %385 = vmatpush1.msra.mxu0 0.0
        %386 = vmatprep.subr.mxu0 0.0
        %387 = vmatpush1.msra.mxu0 0.0
        %388 = vmatprep.subr.mxu0 0.0
        %389 = vmatpush1.msra.mxu0 0.0
        %390 = vmatprep.subr.mxu0 0.0
        %391 = vmatpush1.msra.mxu0 0.0
        %392 = vmatprep.subr.mxu0 0.0
        %393 = vmatpush1.msra.mxu0 0.0
        %394 = vmatprep.mubr.f32.mxu0 0.0
        %395 = vmatmul.mubr.f32.gmra.mrb[0].mxu0 %v309
        %v396 = vpop.f32.mrb[0].mxu0
        %v397 = vadd.f32 0.0, %v396
        %v398 = vpop.f32.mrb[0].mxu0
        %399 = vmatprep.mubr.f32.mxu0 0.0
        %400 = vmatmul.mubr.f32.gmra.mrb[0].mxu0 %v310
        %v401 = vpop.f32.mrb[0].mxu0
        %v402 = vadd.f32 0.0, %v401
        %v403 = vpop.f32.mrb[0].mxu0
        %404 = vmatprep.mubr.f32.mxu0 0.0
        %405 = vmatmul.mubr.f32.gmra.mrb[0].mxu0 %v311
        %v406 = vpop.f32.mrb[0].mxu0
        %v407 = vadd.f32 0.0, %v406
        %v408 = vpop.f32.mrb[0].mxu0
        %409 = vmatprep.mubr.f32.mxu0 0.0
        %410 = vmatmul.mubr.f32.gmra.mrb[0].mxu0 %v312
        %v411 = vpop.f32.mrb[0].mxu0
        %v412 = vadd.f32 0.0, %v411
        %v413 = vpop.f32.mrb[0].mxu0
        %414 = vdwg.mxu0
        %415 = vmatprep.subr.mxu0 0.0
        %416 = vmatpush1.msra.mxu0 %v293
        %417 = vmatprep.subr.mxu0 0.0
        %418 = vmatpush1.msra.mxu0 %v294
        %419 = vmatprep.subr.mxu0 0.0
        %420 = vmatpush1.msra.mxu0 %v295
        %421 = vmatprep.subr.mxu0 0.0
        %422 = vmatpush1.msra.mxu0 %v296
        %423 = vmatprep.subr.mxu0 0.0
        %424 = vmatpush1.msra.mxu0 %v297
        %425 = vmatprep.subr.mxu0 0.0
        %426 = vmatpush1.msra.mxu0 %v298
        %427 = vmatprep.subr.mxu0 0.0
        %428 = vmatpush1.msra.mxu0 %v299
        %429 = vmatprep.subr.mxu0 0.0
        %430 = vmatpush1.msra.mxu0 %v300
        %431 = vmatprep.subr.mxu0 0.0
        %432 = vmatpush1.msra.mxu0 %v301
        %433 = vmatprep.subr.mxu0 0.0
        %434 = vmatpush1.msra.mxu0 %v302
        %435 = vmatprep.subr.mxu0 0.0
        %436 = vmatpush1.msra.mxu0 %v303
        %437 = vmatprep.subr.mxu0 0.0
        %438 = vmatpush1.msra.mxu0 %v304
        %439 = vmatprep.subr.mxu0 0.0
        %440 = vmatpush1.msra.mxu0 %v305
        %441 = vmatprep.subr.mxu0 0.0
        %442 = vmatpush1.msra.mxu0 %v306
        %443 = vmatprep.subr.mxu0 0.0
        %444 = vmatpush1.msra.mxu0 %v307
        %445 = vmatprep.subr.mxu0 0.0
        %446 = vmatpush1.msra.mxu0 %v308
        %447 = vmatprep.subr.mxu0 0.0
        %448 = vmatpush1.msra.mxu0 0.0
        %449 = vmatprep.subr.mxu0 0.0
        %450 = vmatpush1.msra.mxu0 0.0
        %451 = vmatprep.subr.mxu0 0.0
        %452 = vmatpush1.msra.mxu0 0.0
        %453 = vmatprep.subr.mxu0 0.0
        %454 = vmatpush1.msra.mxu0 0.0
        %455 = vmatprep.subr.mxu0 0.0
        %456 = vmatpush1.msra.mxu0 0.0
        %457 = vmatprep.subr.mxu0 0.0
        %458 = vmatpush1.msra.mxu0 0.0
        %459 = vmatprep.subr.mxu0 0.0
        %460 = vmatpush1.msra.mxu0 0.0
        %461 = vmatprep.subr.mxu0 0.0
        %462 = vmatpush1.msra.mxu0 0.0
        %463 = vmatprep.subr.mxu0 0.0
        %464 = vmatpush1.msra.mxu0 0.0
        %465 = vmatprep.subr.mxu0 0.0
        %466 = vmatpush1.msra.mxu0 0.0
        %467 = vmatprep.subr.mxu0 0.0
        %468 = vmatpush1.msra.mxu0 0.0
        %469 = vmatprep.subr.mxu0 0.0
        %470 = vmatpush1.msra.mxu0 0.0
        %471 = vmatprep.subr.mxu0 0.0
        %472 = vmatpush1.msra.mxu0 0.0
        %473 = vmatprep.subr.mxu0 0.0
        %474 = vmatpush1.msra.mxu0 0.0
        %475 = vmatprep.subr.mxu0 0.0
        %476 = vmatpush1.msra.mxu0 0.0
        %477 = vmatprep.subr.mxu0 0.0
        %478 = vmatpush1.msra.mxu0 0.0
        %479 = vmatprep.mubr.f32.mxu0 0.0
        %480 = vmatmul.mubr.f32.gmra.mrb[0].mxu0 %v289
        %v481 = vpop.f32.mrb[0].mxu0
        %v482 = vadd.f32 %v397, %v481
        %v483 = vpop.f32.mrb[0].mxu0
        %484 = vmatprep.mubr.f32.mxu0 0.0
        %485 = vmatmul.mubr.f32.gmra.mrb[0].mxu0 %v290
        %v486 = vpop.f32.mrb[0].mxu0
        %v487 = vadd.f32 %v402, %v486
        %v488 = vpop.f32.mrb[0].mxu0
        %489 = vmatprep.mubr.f32.mxu0 0.0
        %490 = vmatmul.mubr.f32.gmra.mrb[0].mxu0 %v291
        %v491 = vpop.f32.mrb[0].mxu0
        %v492 = vadd.f32 %v407, %v491
        %v493 = vpop.f32.mrb[0].mxu0
        %494 = vmatprep.mubr.f32.mxu0 0.0
        %495 = vmatmul.mubr.f32.gmra.mrb[0].mxu0 %v292
        %v496 = vpop.f32.mrb[0].mxu0
        %v497 = vadd.f32 %v412, %v496
        %v498 = vpop.f32.mrb[0].mxu0
        %499 = vdwg.mxu0
        %v500 = vld [vmem:[#allocation2 + $0x2] sm:$0xff]
        %v501 = vld [vmem:[#allocation2 + $0xa] sm:$0xff]
        %v502 = vld [vmem:[#allocation2 + $0x1a] sm:$0xff]
        %v503 = vld [vmem:[#allocation2 + $0x22] sm:$0xff]
        %s504 = scalar_lea.vmem %s241, 256 [#allocation3]
        %v505 = vld [vmem:[%s504] sm:$0xff]
        %v506 = vld [vmem:[%s504 + $0x8] sm:$0xff]
        %v507 = vld [vmem:[%s504 + $0x10] sm:$0xff]
        %v508 = vld [vmem:[%s504 + $0x18] sm:$0xff]
        %v509 = vld [vmem:[%s504 + $0x20] sm:$0xff]
        %v510 = vld [vmem:[%s504 + $0x28] sm:$0xff]
        %v511 = vld [vmem:[%s504 + $0x30] sm:$0xff]
        %v512 = vld [vmem:[%s504 + $0x38] sm:$0xff]
        %v513 = vld [vmem:[%s504 + $0x40] sm:$0xff]
        %v514 = vld [vmem:[%s504 + $0x48] sm:$0xff]
        %v515 = vld [vmem:[%s504 + $0x50] sm:$0xff]
        %v516 = vld [vmem:[%s504 + $0x58] sm:$0xff]
        %v517 = vld [vmem:[%s504 + $0x60] sm:$0xff]
        %v518 = vld [vmem:[%s504 + $0x68] sm:$0xff]
        %v519 = vld [vmem:[%s504 + $0x70] sm:$0xff]
        %v520 = vld [vmem:[%s504 + $0x78] sm:$0xff]
        %521 = vmatprep.subr.mxu0 0.0
        %522 = vmatpush1.msra.mxu0 %v505
        %523 = vmatprep.subr.mxu0 0.0
        %524 = vmatpush1.msra.mxu0 %v506
        %525 = vmatprep.subr.mxu0 0.0
        %526 = vmatpush1.msra.mxu0 %v507
        %527 = vmatprep.subr.mxu0 0.0
        %528 = vmatpush1.msra.mxu0 %v508
        %529 = vmatprep.subr.mxu0 0.0
        %530 = vmatpush1.msra.mxu0 %v509
        %531 = vmatprep.subr.mxu0 0.0
        %532 = vmatpush1.msra.mxu0 %v510
        %533 = vmatprep.subr.mxu0 0.0
        %534 = vmatpush1.msra.mxu0 %v511
        %535 = vmatprep.subr.mxu0 0.0
        %536 = vmatpush1.msra.mxu0 %v512
        %537 = vmatprep.subr.mxu0 0.0
        %538 = vmatpush1.msra.mxu0 %v513
        %539 = vmatprep.subr.mxu0 0.0
        %540 = vmatpush1.msra.mxu0 %v514
        %541 = vmatprep.subr.mxu0 0.0
        %542 = vmatpush1.msra.mxu0 %v515
        %543 = vmatprep.subr.mxu0 0.0
        %544 = vmatpush1.msra.mxu0 %v516
        %545 = vmatprep.subr.mxu0 0.0
        %546 = vmatpush1.msra.mxu0 %v517
        %547 = vmatprep.subr.mxu0 0.0
        %548 = vmatpush1.msra.mxu0 %v518
        %549 = vmatprep.subr.mxu0 0.0
        %550 = vmatpush1.msra.mxu0 %v519
        %551 = vmatprep.subr.mxu0 0.0
        %552 = vmatpush1.msra.mxu0 %v520
        %553 = vmatprep.subr.mxu0 0.0
        %554 = vmatpush1.msra.mxu0 0.0
        %555 = vmatprep.subr.mxu0 0.0
        %556 = vmatpush1.msra.mxu0 0.0
        %557 = vmatprep.subr.mxu0 0.0
        %558 = vmatpush1.msra.mxu0 0.0
        %559 = vmatprep.subr.mxu0 0.0
        %560 = vmatpush1.msra.mxu0 0.0
        %561 = vmatprep.subr.mxu0 0.0
        %562 = vmatpush1.msra.mxu0 0.0
        %563 = vmatprep.subr.mxu0 0.0
        %564 = vmatpush1.msra.mxu0 0.0
        %565 = vmatprep.subr.mxu0 0.0
        %566 = vmatpush1.msra.mxu0 0.0
        %567 = vmatprep.subr.mxu0 0.0
        %568 = vmatpush1.msra.mxu0 0.0
        %569 = vmatprep.subr.mxu0 0.0
        %570 = vmatpush1.msra.mxu0 0.0
        %571 = vmatprep.subr.mxu0 0.0
        %572 = vmatpush1.msra.mxu0 0.0
        %573 = vmatprep.subr.mxu0 0.0
        %574 = vmatpush1.msra.mxu0 0.0
        %575 = vmatprep.subr.mxu0 0.0
        %576 = vmatpush1.msra.mxu0 0.0
        %577 = vmatprep.subr.mxu0 0.0
        %578 = vmatpush1.msra.mxu0 0.0
        %579 = vmatprep.subr.mxu0 0.0
        %580 = vmatpush1.msra.mxu0 0.0
        %581 = vmatprep.subr.mxu0 0.0
        %582 = vmatpush1.msra.mxu0 0.0
        %583 = vmatprep.subr.mxu0 0.0
        %584 = vmatpush1.msra.mxu0 0.0
        %585 = vmatprep.mubr.f32.mxu0 0.0
        %586 = vmatmul.mubr.f32.gmra.mrb[0].mxu0 %v500
        %v587 = vpop.f32.mrb[0].mxu0
        %v588 = vadd.f32 0.0, %v587
        %v589 = vpop.f32.mrb[0].mxu0
        %590 = vmatprep.mubr.f32.mxu0 0.0
        %591 = vmatmul.mubr.f32.gmra.mrb[0].mxu0 %v501
        %v592 = vpop.f32.mrb[0].mxu0
        %v593 = vadd.f32 0.0, %v592
        %v594 = vpop.f32.mrb[0].mxu0
        %595 = vmatprep.mubr.f32.mxu0 0.0
        %596 = vmatmul.mubr.f32.gmra.mrb[0].mxu0 %v502
        %v597 = vpop.f32.mrb[0].mxu0
        %v598 = vadd.f32 0.0, %v597
        %v599 = vpop.f32.mrb[0].mxu0
        %600 = vmatprep.mubr.f32.mxu0 0.0
        %601 = vmatmul.mubr.f32.gmra.mrb[0].mxu0 %v503
        %v602 = vpop.f32.mrb[0].mxu0
        %v603 = vadd.f32 0.0, %v602
        %v604 = vpop.f32.mrb[0].mxu0
        %605 = vdwg.mxu0
        %v606 = vadd.f32 %v482, %v588
        %v607 = vadd.f32 %v487, %v593
        %v608 = vadd.f32 %v492, %v598
        %v609 = vadd.f32 %v497, %v603
        %v610 = vld [vmem:[#allocation2 + $0x3] sm:$0xff]
        %v611 = vld [vmem:[#allocation2 + $0xb] sm:$0xff]
        %v612 = vld [vmem:[#allocation2 + $0x1b] sm:$0xff]
        %v613 = vld [vmem:[#allocation2 + $0x23] sm:$0xff]
        %s614 = scalar_lea.vmem %s241, 384 [#allocation3]
        %v615 = vld [vmem:[%s614] sm:$0xff]
        %v616 = vld [vmem:[%s614 + $0x8] sm:$0xff]
        %v617 = vld [vmem:[%s614 + $0x10] sm:$0xff]
        %v618 = vld [vmem:[%s614 + $0x18] sm:$0xff]
        %v619 = vld [vmem:[%s614 + $0x20] sm:$0xff]
        %v620 = vld [vmem:[%s614 + $0x28] sm:$0xff]
        %v621 = vld [vmem:[%s614 + $0x30] sm:$0xff]
        %v622 = vld [vmem:[%s614 + $0x38] sm:$0xff]
        %v623 = vld [vmem:[%s614 + $0x40] sm:$0xff]
        %v624 = vld [vmem:[%s614 + $0x48] sm:$0xff]
        %v625 = vld [vmem:[%s614 + $0x50] sm:$0xff]
        %v626 = vld [vmem:[%s614 + $0x58] sm:$0xff]
        %v627 = vld [vmem:[%s614 + $0x60] sm:$0xff]
        %v628 = vld [vmem:[%s614 + $0x68] sm:$0xff]
        %v629 = vld [vmem:[%s614 + $0x70] sm:$0xff]
        %v630 = vld [vmem:[%s614 + $0x78] sm:$0xff]
        %631 = vmatprep.subr.mxu0 0.0
        %632 = vmatpush1.msra.mxu0 %v615
        %633 = vmatprep.subr.mxu0 0.0
        %634 = vmatpush1.msra.mxu0 %v616
        %635 = vmatprep.subr.mxu0 0.0
        %636 = vmatpush1.msra.mxu0 %v617
        %637 = vmatprep.subr.mxu0 0.0
        %638 = vmatpush1.msra.mxu0 %v618
        %639 = vmatprep.subr.mxu0 0.0
        %640 = vmatpush1.msra.mxu0 %v619
        %641 = vmatprep.subr.mxu0 0.0
        %642 = vmatpush1.msra.mxu0 %v620
        %643 = vmatprep.subr.mxu0 0.0
        %644 = vmatpush1.msra.mxu0 %v621
        %645 = vmatprep.subr.mxu0 0.0
        %646 = vmatpush1.msra.mxu0 %v622
        %647 = vmatprep.subr.mxu0 0.0
        %648 = vmatpush1.msra.mxu0 %v623
        %649 = vmatprep.subr.mxu0 0.0
        %650 = vmatpush1.msra.mxu0 %v624
        %651 = vmatprep.subr.mxu0 0.0
        %652 = vmatpush1.msra.mxu0 %v625
        %653 = vmatprep.subr.mxu0 0.0
        %654 = vmatpush1.msra.mxu0 %v626
        %655 = vmatprep.subr.mxu0 0.0
        %656 = vmatpush1.msra.mxu0 %v627
        %657 = vmatprep.subr.mxu0 0.0
        %658 = vmatpush1.msra.mxu0 %v628
        %659 = vmatprep.subr.mxu0 0.0
        %660 = vmatpush1.msra.mxu0 %v629
        %661 = vmatprep.subr.mxu0 0.0
        %662 = vmatpush1.msra.mxu0 %v630
        %663 = vmatprep.subr.mxu0 0.0
        %664 = vmatpush1.msra.mxu0 0.0
        %665 = vmatprep.subr.mxu0 0.0
        %666 = vmatpush1.msra.mxu0 0.0
        %667 = vmatprep.subr.mxu0 0.0
        %668 = vmatpush1.msra.mxu0 0.0
        %669 = vmatprep.subr.mxu0 0.0
        %670 = vmatpush1.msra.mxu0 0.0
        %671 = vmatprep.subr.mxu0 0.0
        %672 = vmatpush1.msra.mxu0 0.0
        %673 = vmatprep.subr.mxu0 0.0
        %674 = vmatpush1.msra.mxu0 0.0
        %675 = vmatprep.subr.mxu0 0.0
        %676 = vmatpush1.msra.mxu0 0.0
        %677 = vmatprep.subr.mxu0 0.0
        %678 = vmatpush1.msra.mxu0 0.0
        %679 = vmatprep.subr.mxu0 0.0
        %680 = vmatpush1.msra.mxu0 0.0
        %681 = vmatprep.subr.mxu0 0.0
        %682 = vmatpush1.msra.mxu0 0.0
        %683 = vmatprep.subr.mxu0 0.0
        %684 = vmatpush1.msra.mxu0 0.0
        %685 = vmatprep.subr.mxu0 0.0
        %686 = vmatpush1.msra.mxu0 0.0
        %687 = vmatprep.subr.mxu0 0.0
        %688 = vmatpush1.msra.mxu0 0.0
        %689 = vmatprep.subr.mxu0 0.0
        %690 = vmatpush1.msra.mxu0 0.0
        %691 = vmatprep.subr.mxu0 0.0
        %692 = vmatpush1.msra.mxu0 0.0
        %693 = vmatprep.subr.mxu0 0.0
        %694 = vmatpush1.msra.mxu0 0.0
        %695 = vmatprep.mubr.f32.mxu0 0.0
        %696 = vmatmul.mubr.f32.gmra.mrb[0].mxu0 %v610
        %v697 = vpop.f32.mrb[0].mxu0
        %v698 = vadd.f32 0.0, %v697
        %v699 = vpop.f32.mrb[0].mxu0
        %700 = vmatprep.mubr.f32.mxu0 0.0
        %701 = vmatmul.mubr.f32.gmra.mrb[0].mxu0 %v611
        %v702 = vpop.f32.mrb[0].mxu0
        %v703 = vadd.f32 0.0, %v702
        %v704 = vpop.f32.mrb[0].mxu0
        %705 = vmatprep.mubr.f32.mxu0 0.0
        %706 = vmatmul.mubr.f32.gmra.mrb[0].mxu0 %v612
        %v707 = vpop.f32.mrb[0].mxu0
        %v708 = vadd.f32 0.0, %v707
        %v709 = vpop.f32.mrb[0].mxu0
        %710 = vmatprep.mubr.f32.mxu0 0.0
        %711 = vmatmul.mubr.f32.gmra.mrb[0].mxu0 %v613
        %v712 = vpop.f32.mrb[0].mxu0
        %v713 = vadd.f32 0.0, %v712
        %v714 = vpop.f32.mrb[0].mxu0
        %715 = vdwg.mxu0
        %v716 = vadd.f32 %v606, %v698
        %v717 = vadd.f32 %v607, %v703
        %v718 = vadd.f32 %v608, %v708
        %v719 = vadd.f32 %v609, %v713
        %v720 = vld [vmem:[#allocation2 + $0x4] sm:$0xff]
        %v721 = vld [vmem:[#allocation2 + $0xc] sm:$0xff]
        %v722 = vld [vmem:[#allocation2 + $0x1c] sm:$0xff]
        %v723 = vld [vmem:[#allocation2 + $0x24] sm:$0xff]
        %s724 = scalar_lea.vmem %s241, 512 [#allocation3]
        %v725 = vld [vmem:[%s724] sm:$0xff]
        %v726 = vld [vmem:[%s724 + $0x8] sm:$0xff]
        %v727 = vld [vmem:[%s724 + $0x10] sm:$0xff]
        %v728 = vld [vmem:[%s724 + $0x18] sm:$0xff]
        %v729 = vld [vmem:[%s724 + $0x20] sm:$0xff]
        %v730 = vld [vmem:[%s724 + $0x28] sm:$0xff]
        %v731 = vld [vmem:[%s724 + $0x30] sm:$0xff]
        %v732 = vld [vmem:[%s724 + $0x38] sm:$0xff]
        %v733 = vld [vmem:[%s724 + $0x40] sm:$0xff]
        %v734 = vld [vmem:[%s724 + $0x48] sm:$0xff]
        %v735 = vld [vmem:[%s724 + $0x50] sm:$0xff]
        %v736 = vld [vmem:[%s724 + $0x58] sm:$0xff]
        %v737 = vld [vmem:[%s724 + $0x60] sm:$0xff]
        %v738 = vld [vmem:[%s724 + $0x68] sm:$0xff]
        %v739 = vld [vmem:[%s724 + $0x70] sm:$0xff]
        %v740 = vld [vmem:[%s724 + $0x78] sm:$0xff]
        %741 = vmatprep.subr.mxu0 0.0
        %742 = vmatpush1.msra.mxu0 %v725
        %743 = vmatprep.subr.mxu0 0.0
        %744 = vmatpush1.msra.mxu0 %v726
        %745 = vmatprep.subr.mxu0 0.0
        %746 = vmatpush1.msra.mxu0 %v727
        %747 = vmatprep.subr.mxu0 0.0
        %748 = vmatpush1.msra.mxu0 %v728
        %749 = vmatprep.subr.mxu0 0.0
        %750 = vmatpush1.msra.mxu0 %v729
        %751 = vmatprep.subr.mxu0 0.0
        %752 = vmatpush1.msra.mxu0 %v730
        %753 = vmatprep.subr.mxu0 0.0
        %754 = vmatpush1.msra.mxu0 %v731
        %755 = vmatprep.subr.mxu0 0.0
        %756 = vmatpush1.msra.mxu0 %v732
        %757 = vmatprep.subr.mxu0 0.0
        %758 = vmatpush1.msra.mxu0 %v733
        %759 = vmatprep.subr.mxu0 0.0
        %760 = vmatpush1.msra.mxu0 %v734
        %761 = vmatprep.subr.mxu0 0.0
        %762 = vmatpush1.msra.mxu0 %v735
        %763 = vmatprep.subr.mxu0 0.0
        %764 = vmatpush1.msra.mxu0 %v736
        %765 = vmatprep.subr.mxu0 0.0
        %766 = vmatpush1.msra.mxu0 %v737
        %767 = vmatprep.subr.mxu0 0.0
        %768 = vmatpush1.msra.mxu0 %v738
        %769 = vmatprep.subr.mxu0 0.0
        %770 = vmatpush1.msra.mxu0 %v739
        %771 = vmatprep.subr.mxu0 0.0
        %772 = vmatpush1.msra.mxu0 %v740
        %773 = vmatprep.subr.mxu0 0.0
        %774 = vmatpush1.msra.mxu0 0.0
        %775 = vmatprep.subr.mxu0 0.0
        %776 = vmatpush1.msra.mxu0 0.0
        %777 = vmatprep.subr.mxu0 0.0
        %778 = vmatpush1.msra.mxu0 0.0
        %779 = vmatprep.subr.mxu0 0.0
        %780 = vmatpush1.msra.mxu0 0.0
        %781 = vmatprep.subr.mxu0 0.0
        %782 = vmatpush1.msra.mxu0 0.0
        %783 = vmatprep.subr.mxu0 0.0
        %784 = vmatpush1.msra.mxu0 0.0
        %785 = vmatprep.subr.mxu0 0.0
        %786 = vmatpush1.msra.mxu0 0.0
        %787 = vmatprep.subr.mxu0 0.0
        %788 = vmatpush1.msra.mxu0 0.0
        %789 = vmatprep.subr.mxu0 0.0
        %790 = vmatpush1.msra.mxu0 0.0
        %791 = vmatprep.subr.mxu0 0.0
        %792 = vmatpush1.msra.mxu0 0.0
        %793 = vmatprep.subr.mxu0 0.0
        %794 = vmatpush1.msra.mxu0 0.0
        %795 = vmatprep.subr.mxu0 0.0
        %796 = vmatpush1.msra.mxu0 0.0
        %797 = vmatprep.subr.mxu0 0.0
        %798 = vmatpush1.msra.mxu0 0.0
        %799 = vmatprep.subr.mxu0 0.0
        %800 = vmatpush1.msra.mxu0 0.0
        %801 = vmatprep.subr.mxu0 0.0
        %802 = vmatpush1.msra.mxu0 0.0
        %803 = vmatprep.subr.mxu0 0.0
        %804 = vmatpush1.msra.mxu0 0.0
        %805 = vmatprep.mubr.f32.mxu0 0.0
        %806 = vmatmul.mubr.f32.gmra.mrb[0].mxu0 %v720
        %v807 = vpop.f32.mrb[0].mxu0
        %v808 = vadd.f32 0.0, %v807
        %v809 = vpop.f32.mrb[0].mxu0
        %810 = vmatprep.mubr.f32.mxu0 0.0
        %811 = vmatmul.mubr.f32.gmra.mrb[0].mxu0 %v721
        %v812 = vpop.f32.mrb[0].mxu0
        %v813 = vadd.f32 0.0, %v812
        %v814 = vpop.f32.mrb[0].mxu0
        %815 = vmatprep.mubr.f32.mxu0 0.0
        %816 = vmatmul.mubr.f32.gmra.mrb[0].mxu0 %v722
        %v817 = vpop.f32.mrb[0].mxu0
        %v818 = vadd.f32 0.0, %v817
        %v819 = vpop.f32.mrb[0].mxu0
        %820 = vmatprep.mubr.f32.mxu0 0.0
        %821 = vmatmul.mubr.f32.gmra.mrb[0].mxu0 %v723
        %v822 = vpop.f32.mrb[0].mxu0
        %v823 = vadd.f32 0.0, %v822
        %v824 = vpop.f32.mrb[0].mxu0
        %825 = vdwg.mxu0
        %v826 = vadd.f32 %v716, %v808
        %v827 = vadd.f32 %v717, %v813
        %v828 = vadd.f32 %v718, %v818
        %v829 = vadd.f32 %v719, %v823
        %v830 = vld [vmem:[%s270] sm:$0x1]
        %v832 = vlaneseq
        %v833 = vshrl.u32 %v832, 7
        %v834 = vsub.s32 0, %v833
        %v835 = vrot.slane %v830, %v834
        %v837 = vadd.f32 %v826, %v835
        %v838 = vadd.f32 %v827, %v835
        %v839 = vadd.f32 %v828, %v835
        %v840 = vadd.f32 %v829, %v835
        %p841 = scmp.ne.s32.totalorder %s20, 14
        // Predicated region
        $region53: #{cnn_feature_extraction_forward.12} parent=43 // pred_check
          %p842 = pneg %p841
        $region54: #{cnn_feature_extraction_forward.12} parent=43 // pred_check_branch
          %844 = sbr.rel (%p842) target = $region56
        $region55: #{cnn_feature_extraction_forward.12} parent=43 // pred_region
          %845 = vst [vmem:[#allocation2 + $0x2] sm:$0xff] %v837
          %846 = vst [vmem:[#allocation2 + $0xa] sm:$0xff] %v838
          %847 = vst [vmem:[#allocation2 + $0x1a] sm:$0xff] %v839
          %848 = vst [vmem:[#allocation2 + $0x22] sm:$0xff] %v840
        $region56: #{cnn_feature_extraction_forward.12} parent=43 // pred_fallthru
          _
        %p849 = scmp.eq.s32.totalorder %s20, 14
        // Predicated region
        $region57: #{cnn_feature_extraction_forward.12} parent=43 // pred_check
          %p850 = pneg %p849
        $region58: #{cnn_feature_extraction_forward.12} parent=43 // pred_check_branch
          %852 = sbr.rel (%p850) target = $region60
        $region59: #{cnn_feature_extraction_forward.12} parent=43 // pred_region
          %v853 = vadd.f32 %v837, %v838
          %v854 = vadd.f32 %v853, %v839
          %v855 = vadd.f32 %v854, %v840
          %v856 = vrot.slane %v855, 4
          %v857 = vadd.f32 %v855, %v856
          %v858 = vrot.slane %v857, 2
          %v859 = vadd.f32 %v857, %v858
          %v860 = vrot.slane %v859, 1
          %v861 = vadd.f32 %v859, %v860
          %v862 = vld [vmem:[%s5] sm:$0xff]
          %v863 = vld [vmem:[%s5 + $0x8] sm:$0xff]
          %v864 = vld [vmem:[%s5 + $0x10] sm:$0xff]
          %v865 = vld [vmem:[%s5 + $0x18] sm:$0xff]
          %v866 = vld [vmem:[%s5 + $0x20] sm:$0xff]
          %v867 = vld [vmem:[%s5 + $0x28] sm:$0xff]
          %v868 = vld [vmem:[%s5 + $0x30] sm:$0xff]
          %v869 = vld [vmem:[%s5 + $0x38] sm:$0xff]
          %v870 = vld [vmem:[%s5 + $0x40] sm:$0xff]
          %v871 = vld [vmem:[%s5 + $0x48] sm:$0xff]
          %v872 = vld [vmem:[%s5 + $0x50] sm:$0xff]
          %v873 = vld [vmem:[%s5 + $0x58] sm:$0xff]
          %v874 = vld [vmem:[%s5 + $0x60] sm:$0xff]
          %v875 = vld [vmem:[%s5 + $0x68] sm:$0xff]
          %v876 = vld [vmem:[%s5 + $0x70] sm:$0xff]
          %v877 = vld [vmem:[%s5 + $0x78] sm:$0xff]
          %878 = vmatprep.subr.mxu0 0.0
          %879 = vmatpush1.msra.mxu0 %v862
          %880 = vmatprep.subr.mxu0 0.0
          %881 = vmatpush1.msra.mxu0 %v863
          %882 = vmatprep.subr.mxu0 0.0
          %883 = vmatpush1.msra.mxu0 %v864
          %884 = vmatprep.subr.mxu0 0.0
          %885 = vmatpush1.msra.mxu0 %v865
          %886 = vmatprep.subr.mxu0 0.0
          %887 = vmatpush1.msra.mxu0 %v866
          %888 = vmatprep.subr.mxu0 0.0
          %889 = vmatpush1.msra.mxu0 %v867
          %890 = vmatprep.subr.mxu0 0.0
          %891 = vmatpush1.msra.mxu0 %v868
          %892 = vmatprep.subr.mxu0 0.0
          %893 = vmatpush1.msra.mxu0 %v869
          %894 = vmatprep.subr.mxu0 0.0
          %895 = vmatpush1.msra.mxu0 %v870
          %896 = vmatprep.subr.mxu0 0.0
          %897 = vmatpush1.msra.mxu0 %v871
          %898 = vmatprep.subr.mxu0 0.0
          %899 = vmatpush1.msra.mxu0 %v872
          %900 = vmatprep.subr.mxu0 0.0
          %901 = vmatpush1.msra.mxu0 %v873
          %902 = vmatprep.subr.mxu0 0.0
          %903 = vmatpush1.msra.mxu0 %v874
          %904 = vmatprep.subr.mxu0 0.0
          %905 = vmatpush1.msra.mxu0 %v875
          %906 = vmatprep.subr.mxu0 0.0
          %907 = vmatpush1.msra.mxu0 %v876
          %908 = vmatprep.subr.mxu0 0.0
          %909 = vmatpush1.msra.mxu0 %v877
          %910 = vmatprep.subr.mxu0 0.0
          %911 = vmatpush1.msra.mxu0 0.0
          %912 = vmatprep.subr.mxu0 0.0
          %913 = vmatpush1.msra.mxu0 0.0
          %914 = vmatprep.subr.mxu0 0.0
          %915 = vmatpush1.msra.mxu0 0.0
          %916 = vmatprep.subr.mxu0 0.0
          %917 = vmatpush1.msra.mxu0 0.0
          %918 = vmatprep.subr.mxu0 0.0
          %919 = vmatpush1.msra.mxu0 0.0
          %920 = vmatprep.subr.mxu0 0.0
          %921 = vmatpush1.msra.mxu0 0.0
          %922 = vmatprep.subr.mxu0 0.0
          %923 = vmatpush1.msra.mxu0 0.0
          %924 = vmatprep.subr.mxu0 0.0
          %925 = vmatpush1.msra.mxu0 0.0
          %926 = vmatprep.subr.mxu0 0.0
          %927 = vmatpush1.msra.mxu0 0.0
          %928 = vmatprep.subr.mxu0 0.0
          %929 = vmatpush1.msra.mxu0 0.0
          %930 = vmatprep.subr.mxu0 0.0
          %931 = vmatpush1.msra.mxu0 0.0
          %932 = vmatprep.subr.mxu0 0.0
          %933 = vmatpush1.msra.mxu0 0.0
          %934 = vmatprep.subr.mxu0 0.0
          %935 = vmatpush1.msra.mxu0 0.0
          %936 = vmatprep.subr.mxu0 0.0
          %937 = vmatpush1.msra.mxu0 0.0
          %938 = vmatprep.subr.mxu0 0.0
          %939 = vmatpush1.msra.mxu0 0.0
          %940 = vmatprep.subr.mxu0 0.0
          %941 = vmatpush1.msra.mxu0 0.0
          %942 = vmatprep.mubr.f32.mxu0 0.0
          %943 = vmatmul.mubr.f32.gmra.mrb[0].mxu0 %v861
          %v944 = vpop.f32.mrb[0].mxu0
          %v945 = vadd.f32 0.0, %v944
          %v946 = vpop.f32.mrb[0].mxu0
          %947 = vdwg.mxu0
          %v948 = vmul.f32 %v945, 0.001953125
          %v949 = vlaneseq
          %v950 = vshrl.u32 %v949, 7
          %v951 = vsub.s32 0, %v950
          %v952 = vrot.slane %v948, %v951
          %v953 = vsub.f32 %v837, %v952
          %v954 = vsub.f32 %v838, %v952
          %v955 = vsub.f32 %v839, %v952
          %v956 = vsub.f32 %v840, %v952
          %v957 = vmul.f32 %v953, %v953
          %v958 = vmul.f32 %v954, %v954
          %v959 = vmul.f32 %v955, %v955
          %v960 = vmul.f32 %v956, %v956
          %v961 = vadd.f32 %v957, %v958
          %v962 = vadd.f32 %v961, %v959
          %v963 = vadd.f32 %v962, %v960
          %v964 = vrot.slane %v963, 4
          %v965 = vadd.f32 %v963, %v964
          %v966 = vrot.slane %v965, 2
          %v967 = vadd.f32 %v965, %v966
          %v968 = vrot.slane %v967, 1
          %v969 = vadd.f32 %v967, %v968
          %970 = vmatprep.subr.mxu0 0.0
          %971 = vmatpush1.msra.mxu0 %v862
          %972 = vmatprep.subr.mxu0 0.0
          %973 = vmatpush1.msra.mxu0 %v863
          %974 = vmatprep.subr.mxu0 0.0
          %975 = vmatpush1.msra.mxu0 %v864
          %976 = vmatprep.subr.mxu0 0.0
          %977 = vmatpush1.msra.mxu0 %v865
          %978 = vmatprep.subr.mxu0 0.0
          %979 = vmatpush1.msra.mxu0 %v866
          %980 = vmatprep.subr.mxu0 0.0
          %981 = vmatpush1.msra.mxu0 %v867
          %982 = vmatprep.subr.mxu0 0.0
          %983 = vmatpush1.msra.mxu0 %v868
          %984 = vmatprep.subr.mxu0 0.0
          %985 = vmatpush1.msra.mxu0 %v869
          %986 = vmatprep.subr.mxu0 0.0
          %987 = vmatpush1.msra.mxu0 %v870
          %988 = vmatprep.subr.mxu0 0.0
          %989 = vmatpush1.msra.mxu0 %v871
          %990 = vmatprep.subr.mxu0 0.0
          %991 = vmatpush1.msra.mxu0 %v872
          %992 = vmatprep.subr.mxu0 0.0
          %993 = vmatpush1.msra.mxu0 %v873
          %994 = vmatprep.subr.mxu0 0.0
          %995 = vmatpush1.msra.mxu0 %v874
          %996 = vmatprep.subr.mxu0 0.0
          %997 = vmatpush1.msra.mxu0 %v875
          %998 = vmatprep.subr.mxu0 0.0
          %999 = vmatpush1.msra.mxu0 %v876
          %1000 = vmatprep.subr.mxu0 0.0
          %1001 = vmatpush1.msra.mxu0 %v877
          %1002 = vmatprep.subr.mxu0 0.0
          %1003 = vmatpush1.msra.mxu0 0.0
          %1004 = vmatprep.subr.mxu0 0.0
          %1005 = vmatpush1.msra.mxu0 0.0
          %1006 = vmatprep.subr.mxu0 0.0
          %1007 = vmatpush1.msra.mxu0 0.0
          %1008 = vmatprep.subr.mxu0 0.0
          %1009 = vmatpush1.msra.mxu0 0.0
          %1010 = vmatprep.subr.mxu0 0.0
          %1011 = vmatpush1.msra.mxu0 0.0
          %1012 = vmatprep.subr.mxu0 0.0
          %1013 = vmatpush1.msra.mxu0 0.0
          %1014 = vmatprep.subr.mxu0 0.0
          %1015 = vmatpush1.msra.mxu0 0.0
          %1016 = vmatprep.subr.mxu0 0.0
          %1017 = vmatpush1.msra.mxu0 0.0
          %1018 = vmatprep.subr.mxu0 0.0
          %1019 = vmatpush1.msra.mxu0 0.0
          %1020 = vmatprep.subr.mxu0 0.0
          %1021 = vmatpush1.msra.mxu0 0.0
          %1022 = vmatprep.subr.mxu0 0.0
          %1023 = vmatpush1.msra.mxu0 0.0
          %1024 = vmatprep.subr.mxu0 0.0
          %1025 = vmatpush1.msra.mxu0 0.0
          %1026 = vmatprep.subr.mxu0 0.0
          %1027 = vmatpush1.msra.mxu0 0.0
          %1028 = vmatprep.subr.mxu0 0.0
          %1029 = vmatpush1.msra.mxu0 0.0
          %1030 = vmatprep.subr.mxu0 0.0
          %1031 = vmatpush1.msra.mxu0 0.0
          %1032 = vmatprep.subr.mxu0 0.0
          %1033 = vmatpush1.msra.mxu0 0.0
          %1034 = vmatprep.mubr.f32.mxu0 0.0
          %1035 = vmatmul.mubr.f32.gmra.mrb[0].mxu0 %v969
          %v1036 = vpop.f32.mrb[0].mxu0
          %v1037 = vadd.f32 0.0, %v1036
          %v1038 = vpop.f32.mrb[0].mxu0
          %1039 = vdwg.mxu0
          %v1040 = vmul.f32 %v1037, 0.001953125
          %v1041 = vld [vmem:[%s3] sm:$0x1]
          %v1042 = vadd.f32 %v1040, 1e-05
          %v1043 = vrsqrt.pop %v1042
          %v1044 = vmul.f32 %v1041, %v1043
          %v1046 = vlaneseq
          %v1047 = vshrl.u32 %v1046, 7
          %v1048 = vsub.s32 0, %v1047
          %v1049 = vrot.slane %v1044, %v1048
          %v1051 = vmul.f32 %v953, %v1049
          %v1052 = vmul.f32 %v954, %v1049
          %v1053 = vmul.f32 %v955, %v1049
          %v1054 = vmul.f32 %v956, %v1049
          %v1055 = vld [vmem:[%s4] sm:$0x1]
          %v1057 = vlaneseq
          %v1058 = vshrl.u32 %v1057, 7
          %v1059 = vsub.s32 0, %v1058
          %v1060 = vrot.slane %v1055, %v1059
          %v1062 = vadd.f32 %v1051, %v1060
          %v1063 = vadd.f32 %v1052, %v1060
          %v1064 = vadd.f32 %v1053, %v1060
          %v1065 = vadd.f32 %v1054, %v1060
          %v1066 = vmin.f32 %v1062, 0.0
          %v1067 = vmin.f32 %v1063, 0.0
          %v1068 = vmin.f32 %v1064, 0.0
          %v1069 = vmin.f32 %v1065, 0.0
          %v1070 = vmul.f32 %v1066, 1.442695
          %v1071 = vpow.pop %v1070
          %v1072 = vmul.f32 %v1067, 1.442695
          %v1073 = vpow.pop %v1072
          %v1074 = vmul.f32 %v1068, 1.442695
          %v1075 = vpow.pop %v1074
          %v1076 = vmul.f32 %v1069, 1.442695
          %v1077 = vpow.pop %v1076
          %v1078 = vsub.f32 %v1071, 1.0
          %v1079 = vsub.f32 %v1073, 1.0
          %v1080 = vsub.f32 %v1075, 1.0
          %v1081 = vsub.f32 %v1077, 1.0
          %v1082 = vmul.f32 %v1078, 1.6732632
          %v1083 = vmul.f32 %v1079, 1.6732632
          %v1084 = vmul.f32 %v1080, 1.6732632
          %v1085 = vmul.f32 %v1081, 1.6732632
          %vm1086 = vcmp.gt.f32.partialorder %v1062, 0.0
          %vm1087 = vcmp.gt.f32.partialorder %v1063, 0.0
          %vm1088 = vcmp.gt.f32.partialorder %v1064, 0.0
          %vm1089 = vcmp.gt.f32.partialorder %v1065, 0.0
          %v1090 = vsel %vm1086, %v1062, %v1082
          %v1091 = vsel %vm1087, %v1063, %v1083
          %v1092 = vsel %vm1088, %v1064, %v1084
          %v1093 = vsel %vm1089, %v1065, %v1085
          %v1094 = vmul.f32 %v1090, 1.050701
          %v1095 = vmul.f32 %v1091, 1.050701
          %v1096 = vmul.f32 %v1092, 1.050701
          %v1097 = vmul.f32 %v1093, 1.050701
          %1098 = vst [vmem:[%s6] sm:$0xff] %v1094
          %1099 = vst [vmem:[%s6 + $0x8] sm:$0xff] %v1095
          %1100 = vst [vmem:[%s6 + $0x10] sm:$0xff] %v1096
          %1101 = vst [vmem:[%s6 + $0x18] sm:$0xff] %v1097
        $region60: #{cnn_feature_extraction_forward.12} parent=43 // pred_fallthru
          _
        // Predicated region
        $region61: #{cnn_feature_extraction_forward.12} parent=43 // pred_check
          %p1102 = pneg %p169
        $region62: #{cnn_feature_extraction_forward.12} parent=43 // pred_check_branch
          %1104 = sbr.rel (%p1102) target = $region64
        $region63: #{cnn_feature_extraction_forward.12} parent=43 // pred_region
          _
        $region64: #{cnn_feature_extraction_forward.12} parent=43 // pred_fallthru
          _
        // Predicated region
        $region65: #{cnn_feature_extraction_forward.12} parent=43 // pred_check
          %p1105 = pneg %p169
        $region66: #{cnn_feature_extraction_forward.12} parent=43 // pred_check_branch
          %1107 = sbr.rel (%p1105) target = $region68
        $region67: #{cnn_feature_extraction_forward.12} parent=43 // pred_region
          _
        $region68: #{cnn_feature_extraction_forward.12} parent=43 // pred_fallthru
          _
      $region44: #{cnn_feature_extraction_forward.12} parent=5 // pred_fallthru
        _
      %p1108 = scmp.le.s32.totalorder 2, %s15
      // Predicated region
      $region69: #{cnn_feature_extraction_forward.12} parent=5 // pred_check
        %p1109 = pneg %p1108
      $region70: #{cnn_feature_extraction_forward.12} parent=5 // pred_check_branch
        %1111 = sbr.rel (%p1109) target = $region72
      $region71: #{cnn_feature_extraction_forward.12} parent=5 // pred_region
        %s1112 = ssub.s32 %s15, 2
      $region72: #{cnn_feature_extraction_forward.12} parent=5 // pred_fallthru
        _
    $region6: #{cnn_feature_extraction_forward.12} parent=1 // loop_footer
      %s19 = sadd.s32 1, %s15
    $region7: #{cnn_feature_extraction_forward.12} parent=1 // loop_footer_branch
      %14 = sbr.rel target = $region3
    $region8: #{cnn_feature_extraction_forward.12} parent=1 // loop_exit
      _
    %1113 = vsyncpa [#allocation4], 1
    %s1114 = scalar_lea.sflag [#allocation4], 1
    %1115 = vsyncpa %s1114, 1

// kernel: cnn_feature_extraction_forward.13
$region0: #{cnn_feature_extraction_forward.13}
  #allocation0 [shape = 'u32[]', space=smem, size = 0x4, offset = 0x4, fixed_abs, tag = 'smem constant byte address 0x4 - core index']
  #allocation1 [shape = 'u32[144,128]{1,0:T(1,128)}', space=vmem, size = 0x12000, scoped, tag = 'internal scratch']
  #allocation2 [shape = 'f32[2,22,128]{2,1,0:T(8,128)}', space=vmem, size = 0x6000, scoped, tag = 'scratch operand']
  %s0 = inlined_call_operand.vmem [shape: f32[2,16,128], index: 0, kind: input, shape index: {}]
  %s1 = inlined_call_operand.vmem [shape: f32[21,7,128,128], index: 1, kind: input, shape index: {}]
  %s2 = inlined_call_operand.vmem [shape: f32[21,1,128], index: 2, kind: input, shape index: {}]
  %s3 = inlined_call_operand.vmem [shape: f32[1,128], index: 3, kind: input, shape index: {}]
  %s4 = inlined_call_operand.vmem [shape: f32[1,128], index: 4, kind: input, shape index: {}]
  %s5 = inlined_call_operand.vmem [shape: f32[128,128], index: 5, kind: input, shape index: {}]
  %s6 = inlined_call_operand.vmem [shape: f32[32,128], index: 6, kind: output, shape index: {}]
  %s7 = sld [smem:[#allocation0]]
  $region69: #{cnn_feature_extraction_forward.13} parent=0
    _
  %s9 = ssub.s32 1, %s7
  %s10 = scalar_select 0, %s9, %s7
  loop: start=0, step=1, limit=23
  $region2: #{cnn_feature_extraction_forward.13} parent=0 // loop_pre_header
    _
  $region3: #{cnn_feature_extraction_forward.13} parent=0 // loop_header
    %s12 = sphi 0, %s16
    %p13 = scmp.ge.s32.totalorder %s12, 23
    %s20 = sphi 0, %s20
    %s22 = sphi 0, %s20
    %s23 = sphi 0, %s22
    %s37 = sphi 0, %s23
    %s43 = sphi 0, %s45
    %s46 = sphi 0, %s43
    %s47 = sphi 0, %s46
    %s63 = sphi 0, %s47
    %s69 = sphi 0, %s71
    %s72 = sphi 0, %s69
    %s73 = sphi 0, %s72
    %s89 = sphi 0, %s73
    %s93 = sphi 0, %s93
    %s95 = sphi 0, %s93
    %s96 = sphi 0, %s95
    %s110 = sphi 0, %s96
    %s114 = sphi 0, %s114
    %s116 = sphi 0, %s114
    %s117 = sphi 0, %s116
    %s131 = sphi 0, %s117
    %s135 = sphi 0, %s135
    %s137 = sphi 0, %s135
    %s138 = sphi 0, %s137
    %s152 = sphi 0, %s138
    %s156 = sphi 0, %s156
    %s158 = sphi 0, %s156
    %s159 = sphi 0, %s158
    %s173 = sphi 0, %s159
  $region4: #{cnn_feature_extraction_forward.13} parent=0 // loop_header_branch
    %15 = sbr.rel (%p13) target = $region8
  $region5: #{cnn_feature_extraction_forward.13} parent=0 // loop_body
    %s17 = ssub.s32 %s12, 1
    %s18 = ssub.s32 %s12, 2
    %s19 = sadd.s32 %s12, 1
    %s21 = sadd.s32 %s20, 1
    %p24 = scmp.eq.s32.totalorder %s12, 20
    %p25 = scmp.ne.s32.totalorder %s20, %s22
    %p26 = scmp.eq.s32.totalorder %s12, 0
    %p27 = por %p25, %p26
    %p28 = scmp.ne.s32.totalorder %s20, %s22
    %p29 = scmp.eq.s32.totalorder %s17, 20
    %p30 = por %p28, %p29
    %p31 = scmp.ne.s32.totalorder %s22, %s23
    %p32 = scmp.eq.s32.totalorder %s17, 0
    %p33 = por %p31, %p32
    %p34 = scmp.ne.s32.totalorder %s22, %s23
    %p35 = scmp.eq.s32.totalorder %s18, 20
    %p36 = por %p34, %p35
    %p38 = scmp.ne.s32.totalorder %s23, %s37
    %p39 = scmp.eq.s32.totalorder %s18, 0
    %p40 = por %p38, %p39
    %s41 = ssub.s32 %s12, %s19
    %p42 = scmp.eq.s32.totalorder %s41, 0
    %s44 = sadd.s32 %s43, 1
    %s45 = scalar_select %p42, %s43, %s44
    %p48 = pneg %p42
    %p49 = scmp.eq.s32.totalorder %s12, 20
    %p50 = por %p48, %p49
    %p51 = scmp.ne.s32.totalorder %s43, %s46
    %p52 = scmp.eq.s32.totalorder %s12, 0
    %p53 = por %p51, %p52
    %p54 = scmp.ne.s32.totalorder %s43, %s46
    %p55 = scmp.eq.s32.totalorder %s17, 20
    %p56 = por %p54, %p55
    %p57 = scmp.ne.s32.totalorder %s46, %s47
    %p58 = scmp.eq.s32.totalorder %s17, 0
    %p59 = por %p57, %p58
    %p60 = scmp.ne.s32.totalorder %s46, %s47
    %p61 = scmp.eq.s32.totalorder %s18, 20
    %p62 = por %p60, %p61
    %p64 = scmp.ne.s32.totalorder %s47, %s63
    %p65 = scmp.eq.s32.totalorder %s18, 0
    %p66 = por %p64, %p65
    %s67 = ssub.s32 %s12, %s19
    %p68 = scmp.eq.s32.totalorder %s67, 0
    %s70 = sadd.s32 %s69, 1
    %s71 = scalar_select %p68, %s69, %s70
    %p74 = pneg %p68
    %p75 = scmp.eq.s32.totalorder %s12, 20
    %p76 = por %p74, %p75
    %p77 = scmp.ne.s32.totalorder %s69, %s72
    %p78 = scmp.eq.s32.totalorder %s12, 0
    %p79 = por %p77, %p78
    %p80 = scmp.ne.s32.totalorder %s69, %s72
    %p81 = scmp.eq.s32.totalorder %s17, 20
    %p82 = por %p80, %p81
    %p83 = scmp.ne.s32.totalorder %s72, %s73
    %p84 = scmp.eq.s32.totalorder %s17, 0
    %p85 = por %p83, %p84
    %p86 = scmp.ne.s32.totalorder %s72, %s73
    %p87 = scmp.eq.s32.totalorder %s18, 20
    %p88 = por %p86, %p87
    %p90 = scmp.ne.s32.totalorder %s73, %s89
    %p91 = scmp.eq.s32.totalorder %s18, 0
    %p92 = por %p90, %p91
    %s94 = sadd.s32 %s93, 1
    %p97 = scmp.eq.s32.totalorder %s12, 20
    %p98 = scmp.ne.s32.totalorder %s93, %s95
    %p99 = scmp.eq.s32.totalorder %s12, 0
    %p100 = por %p98, %p99
    %p101 = scmp.ne.s32.totalorder %s93, %s95
    %p102 = scmp.eq.s32.totalorder %s17, 20
    %p103 = por %p101, %p102
    %p104 = scmp.ne.s32.totalorder %s95, %s96
    %p105 = scmp.eq.s32.totalorder %s17, 0
    %p106 = por %p104, %p105
    %p107 = scmp.ne.s32.totalorder %s95, %s96
    %p108 = scmp.eq.s32.totalorder %s18, 20
    %p109 = por %p107, %p108
    %p111 = scmp.ne.s32.totalorder %s96, %s110
    %p112 = scmp.eq.s32.totalorder %s18, 0
    %p113 = por %p111, %p112
    %s115 = sadd.s32 %s114, 1
    %p118 = scmp.eq.s32.totalorder %s12, 20
    %p119 = scmp.ne.s32.totalorder %s114, %s116
    %p120 = scmp.eq.s32.totalorder %s12, 0
    %p121 = por %p119, %p120
    %p122 = scmp.ne.s32.totalorder %s114, %s116
    %p123 = scmp.eq.s32.totalorder %s17, 20
    %p124 = por %p122, %p123
    %p125 = scmp.ne.s32.totalorder %s116, %s117
    %p126 = scmp.eq.s32.totalorder %s17, 0
    %p127 = por %p125, %p126
    %p128 = scmp.ne.s32.totalorder %s116, %s117
    %p129 = scmp.eq.s32.totalorder %s18, 20
    %p130 = por %p128, %p129
    %p132 = scmp.ne.s32.totalorder %s117, %s131
    %p133 = scmp.eq.s32.totalorder %s18, 0
    %p134 = por %p132, %p133
    %s136 = sadd.s32 %s135, 1
    %p139 = scmp.eq.s32.totalorder %s12, 20
    %p140 = scmp.ne.s32.totalorder %s135, %s137
    %p141 = scmp.eq.s32.totalorder %s12, 0
    %p142 = por %p140, %p141
    %p143 = scmp.ne.s32.totalorder %s135, %s137
    %p144 = scmp.eq.s32.totalorder %s17, 20
    %p145 = por %p143, %p144
    %p146 = scmp.ne.s32.totalorder %s137, %s138
    %p147 = scmp.eq.s32.totalorder %s17, 0
    %p148 = por %p146, %p147
    %p149 = scmp.ne.s32.totalorder %s137, %s138
    %p150 = scmp.eq.s32.totalorder %s18, 20
    %p151 = por %p149, %p150
    %p153 = scmp.ne.s32.totalorder %s138, %s152
    %p154 = scmp.eq.s32.totalorder %s18, 0
    %p155 = por %p153, %p154
    %s157 = sadd.s32 %s156, 1
    %p160 = scmp.eq.s32.totalorder %s12, 20
    %p161 = scmp.ne.s32.totalorder %s156, %s158
    %p162 = scmp.eq.s32.totalorder %s12, 0
    %p163 = por %p161, %p162
    %p164 = scmp.ne.s32.totalorder %s156, %s158
    %p165 = scmp.eq.s32.totalorder %s17, 20
    %p166 = por %p164, %p165
    %p167 = scmp.ne.s32.totalorder %s158, %s159
    %p168 = scmp.eq.s32.totalorder %s17, 0
    %p169 = por %p167, %p168
    %p170 = scmp.ne.s32.totalorder %s158, %s159
    %p171 = scmp.eq.s32.totalorder %s18, 20
    %p172 = por %p170, %p171
    %p174 = scmp.ne.s32.totalorder %s159, %s173
    %p175 = scmp.eq.s32.totalorder %s18, 0
    %p176 = por %p174, %p175
    %p177 = scmp.le.s32.totalorder 1, %s12
    %p178 = scmp.lt.s32.totalorder %s12, 22
    %p179 = pnand %p177, %p178
    %p180 = pneg %p179
    // Predicated region
    $region9: #{cnn_feature_extraction_forward.13} parent=5 // pred_check
      _
    $region10: #{cnn_feature_extraction_forward.13} parent=5 // pred_check_branch
      %182 = sbr.rel (%p179) target = $region12
    $region11: #{cnn_feature_extraction_forward.13} parent=5 // pred_region
      %s183 = ssub.s32 %s12, 1
      // Predicated region
      $region13: #{cnn_feature_extraction_forward.13} parent=11 // pred_check
        %p184 = pneg %p33
      $region14: #{cnn_feature_extraction_forward.13} parent=11 // pred_check_branch
        %186 = sbr.rel (%p184) target = $region16
      $region15: #{cnn_feature_extraction_forward.13} parent=11 // pred_region
        _
      $region16: #{cnn_feature_extraction_forward.13} parent=11 // pred_fallthru
        _
      // Predicated region
      $region17: #{cnn_feature_extraction_forward.13} parent=11 // pred_check
        %p187 = pneg %p106
      $region18: #{cnn_feature_extraction_forward.13} parent=11 // pred_check_branch
        %189 = sbr.rel (%p187) target = $region20
      $region19: #{cnn_feature_extraction_forward.13} parent=11 // pred_region
        _
      $region20: #{cnn_feature_extraction_forward.13} parent=11 // pred_fallthru
        _
      // Predicated region
      $region21: #{cnn_feature_extraction_forward.13} parent=11 // pred_check
        %p190 = pneg %p127
      $region22: #{cnn_feature_extraction_forward.13} parent=11 // pred_check_branch
        %192 = sbr.rel (%p190) target = $region24
      $region23: #{cnn_feature_extraction_forward.13} parent=11 // pred_region
        _
      $region24: #{cnn_feature_extraction_forward.13} parent=11 // pred_fallthru
        _
      // Predicated region
      $region25: #{cnn_feature_extraction_forward.13} parent=11 // pred_check
        %p193 = pneg %p148
      $region26: #{cnn_feature_extraction_forward.13} parent=11 // pred_check_branch
        %195 = sbr.rel (%p193) target = $region28
      $region27: #{cnn_feature_extraction_forward.13} parent=11 // pred_region
        _
      $region28: #{cnn_feature_extraction_forward.13} parent=11 // pred_fallthru
        _
    $region12: #{cnn_feature_extraction_forward.13} parent=5 // pred_fallthru
      _
    %p196 = scmp.lt.s32.totalorder %s12, 21
    // Predicated region
    $region29: #{cnn_feature_extraction_forward.13} parent=5 // pred_check
      %p197 = pneg %p196
    $region30: #{cnn_feature_extraction_forward.13} parent=5 // pred_check_branch
      %199 = sbr.rel (%p197) target = $region32
    $region31: #{cnn_feature_extraction_forward.13} parent=5 // pred_region
      // Predicated region
      $region33: #{cnn_feature_extraction_forward.13} parent=31 // pred_check
        %p200 = pneg %p53
      $region34: #{cnn_feature_extraction_forward.13} parent=31 // pred_check_branch
        %202 = sbr.rel (%p200) target = $region36
      $region35: #{cnn_feature_extraction_forward.13} parent=31 // pred_region
        %p203 = scmp.lt.s32.totalorder %s12, 20
        %s204 = scalar_select %p203, %s12, 20
        %s205 = smul.addr %s204, 112
        %s206 = smul.addr %s205, 8
        %s207 = scalar_lea.vmem %s1, %s206
      $region36: #{cnn_feature_extraction_forward.13} parent=31 // pred_fallthru
        _
      // Predicated region
      $region37: #{cnn_feature_extraction_forward.13} parent=31 // pred_check
        %p208 = pneg %p79
      $region38: #{cnn_feature_extraction_forward.13} parent=31 // pred_check_branch
        %210 = sbr.rel (%p208) target = $region40
      $region39: #{cnn_feature_extraction_forward.13} parent=31 // pred_region
        %p211 = scmp.lt.s32.totalorder %s12, 20
        %s212 = scalar_select %p211, %s12, 20
        %s213 = scalar_lea.vmem %s2, %s212
      $region40: #{cnn_feature_extraction_forward.13} parent=31 // pred_fallthru
        _
    $region32: #{cnn_feature_extraction_forward.13} parent=5 // pred_fallthru
      _
    %p214 = scmp.le.s32.totalorder 1, %s12
    %p215 = scmp.lt.s32.totalorder %s12, 22
    %p216 = pnand %p214, %p215
    %p217 = pneg %p216
    // Predicated region
    $region41: #{cnn_feature_extraction_forward.13} parent=5 // pred_check
      _
    $region42: #{cnn_feature_extraction_forward.13} parent=5 // pred_check_branch
      %219 = sbr.rel (%p216) target = $region44
    $region43: #{cnn_feature_extraction_forward.13} parent=5 // pred_region
      %s220 = ssub.s32 %s12, 1
      %p221 = pneg %p33
      %p222 = pneg %p30
      %p223 = scmp.lt.s32.totalorder %s17, 20
      %s224 = scalar_select %p223, %s17, 20
      %s225 = smul.addr %s224, 112
      %s226 = smul.addr %s225, 8
      %s227 = scalar_lea.vmem %s1, %s226
      %p228 = pneg %p59
      %p229 = pneg %p56
      %p230 = scmp.lt.s32.totalorder %s17, 20
      %s231 = scalar_select %p230, %s17, 20
      %s232 = scalar_lea.vmem %s2, %s231
      %p233 = pneg %p85
      %p234 = pneg %p82
      %p235 = pneg %p106
      %p236 = pneg %p103
      %p237 = pneg %p127
      %p238 = pneg %p124
      %p239 = pneg %p148
      %p240 = pneg %p145
      %p241 = pneg %p169
      %p242 = pneg %p166
      %p243 = scmp.lt.s32.totalorder %s17, 20
      %s244 = scalar_select %p243, %s17, 20
      %s245 = smul.addr %s244, 112
      %s246 = smul.addr %s245, 8
      %s247 = scalar_lea.vmem %s1, %s246
      %p248 = scmp.lt.s32.totalorder %s17, 20
      %s249 = scalar_select %p248, %s17, 20
      %s250 = scalar_lea.vmem %s2, %s249
      %p251 = scmp.eq.s32.totalorder %s17, 0
      // Predicated region
      $region45: #{cnn_feature_extraction_forward.13} parent=43 // pred_check
        %p252 = pneg %p251
      $region46: #{cnn_feature_extraction_forward.13} parent=43 // pred_check_branch
        %254 = sbr.rel (%p252) target = $region48
      $region47: #{cnn_feature_extraction_forward.13} parent=43 // pred_region
        %255 = vst [vmem:[#allocation2] sm:$0xff] 0.0
        %256 = vst [vmem:[#allocation2 + $0x8] sm:$0xff] 0.0
        %257 = vst [vmem:[#allocation2 + $0x10] sm:$0x3f] 0.0
        %258 = vst [vmem:[#allocation2 + $0x18] sm:$0xff] 0.0
        %259 = vst [vmem:[#allocation2 + $0x20] sm:$0xff] 0.0
        %260 = vst [vmem:[#allocation2 + $0x28] sm:$0x3f] 0.0
        %v261 = vld [vmem:[%s0] sm:$0xff]
        %v262 = vld [vmem:[%s0 + $0x8] sm:$0xff]
        %v263 = vld [vmem:[%s0 + $0x10] sm:$0xff]
        %v264 = vld [vmem:[%s0 + $0x18] sm:$0xff]
        %265 = vst [vmem:[#allocation2 + $0x3] sm:$0xff] %v261
        %266 = vst [vmem:[#allocation2 + $0xb] sm:$0xff] %v262
        %267 = vst [vmem:[#allocation2 + $0x1b] sm:$0xff] %v263
        %268 = vst [vmem:[#allocation2 + $0x23] sm:$0xff] %v264
      $region48: #{cnn_feature_extraction_forward.13} parent=43 // pred_fallthru
        _
      %v269 = vld [vmem:[#allocation2] sm:$0xff]
      %v270 = vld [vmem:[#allocation2 + $0x8] sm:$0xff]
      %v271 = vld [vmem:[#allocation2 + $0x18] sm:$0xff]
      %v272 = vld [vmem:[#allocation2 + $0x20] sm:$0xff]
      %v273 = vld [vmem:[%s247] sm:$0xff]
      %v274 = vld [vmem:[%s247 + $0x8] sm:$0xff]
      %v275 = vld [vmem:[%s247 + $0x10] sm:$0xff]
      %v276 = vld [vmem:[%s247 + $0x18] sm:$0xff]
      %v277 = vld [vmem:[%s247 + $0x20] sm:$0xff]
      %v278 = vld [vmem:[%s247 + $0x28] sm:$0xff]
      %v279 = vld [vmem:[%s247 + $0x30] sm:$0xff]
      %v280 = vld [vmem:[%s247 + $0x38] sm:$0xff]
      %v281 = vld [vmem:[%s247 + $0x40] sm:$0xff]
      %v282 = vld [vmem:[%s247 + $0x48] sm:$0xff]
      %v283 = vld [vmem:[%s247 + $0x50] sm:$0xff]
      %v284 = vld [vmem:[%s247 + $0x58] sm:$0xff]
      %v285 = vld [vmem:[%s247 + $0x60] sm:$0xff]
      %v286 = vld [vmem:[%s247 + $0x68] sm:$0xff]
      %v287 = vld [vmem:[%s247 + $0x70] sm:$0xff]
      %v288 = vld [vmem:[%s247 + $0x78] sm:$0xff]
      %v289 = vld [vmem:[#allocation2 + $0x1] sm:$0xff]
      %v290 = vld [vmem:[#allocation2 + $0x9] sm:$0xff]
      %v291 = vld [vmem:[#allocation2 + $0x19] sm:$0xff]
      %v292 = vld [vmem:[#allocation2 + $0x21] sm:$0xff]
      %s293 = scalar_lea.vmem %s247, 128
      %v294 = vld [vmem:[%s293] sm:$0xff]
      %v295 = vld [vmem:[%s293 + $0x8] sm:$0xff]
      %v296 = vld [vmem:[%s293 + $0x10] sm:$0xff]
      %v297 = vld [vmem:[%s293 + $0x18] sm:$0xff]
      %v298 = vld [vmem:[%s293 + $0x20] sm:$0xff]
      %v299 = vld [vmem:[%s293 + $0x28] sm:$0xff]
      %v300 = vld [vmem:[%s293 + $0x30] sm:$0xff]
      %v301 = vld [vmem:[%s293 + $0x38] sm:$0xff]
      %v302 = vld [vmem:[%s293 + $0x40] sm:$0xff]
      %v303 = vld [vmem:[%s293 + $0x48] sm:$0xff]
      %v304 = vld [vmem:[%s293 + $0x50] sm:$0xff]
      %v305 = vld [vmem:[%s293 + $0x58] sm:$0xff]
      %v306 = vld [vmem:[%s293 + $0x60] sm:$0xff]
      %v307 = vld [vmem:[%s293 + $0x68] sm:$0xff]
      %v308 = vld [vmem:[%s293 + $0x70] sm:$0xff]
      %v309 = vld [vmem:[%s293 + $0x78] sm:$0xff]
      %310 = vmatprep.subr.mxu0 0.0
      %311 = vmatpush1.msra.mxu0 %v294
      %312 = vmatprep.subr.mxu0 0.0
      %313 = vmatpush1.msra.mxu0 %v295
      %314 = vmatprep.subr.mxu0 0.0
      %315 = vmatpush1.msra.mxu0 %v296
      %316 = vmatprep.subr.mxu0 0.0
      %317 = vmatpush1.msra.mxu0 %v297
      %318 = vmatprep.subr.mxu0 0.0
      %319 = vmatpush1.msra.mxu0 %v298
      %320 = vmatprep.subr.mxu0 0.0
      %321 = vmatpush1.msra.mxu0 %v299
      %322 = vmatprep.subr.mxu0 0.0
      %323 = vmatpush1.msra.mxu0 %v300
      %324 = vmatprep.subr.mxu0 0.0
      %325 = vmatpush1.msra.mxu0 %v301
      %326 = vmatprep.subr.mxu0 0.0
      %327 = vmatpush1.msra.mxu0 %v302
      %328 = vmatprep.subr.mxu0 0.0
      %329 = vmatpush1.msra.mxu0 %v303
      %330 = vmatprep.subr.mxu0 0.0
      %331 = vmatpush1.msra.mxu0 %v304
      %332 = vmatprep.subr.mxu0 0.0
      %333 = vmatpush1.msra.mxu0 %v305
      %334 = vmatprep.subr.mxu0 0.0
      %335 = vmatpush1.msra.mxu0 %v306
      %336 = vmatprep.subr.mxu0 0.0
      %337 = vmatpush1.msra.mxu0 %v307
      %338 = vmatprep.subr.mxu0 0.0
      %339 = vmatpush1.msra.mxu0 %v308
      %340 = vmatprep.subr.mxu0 0.0
      %341 = vmatpush1.msra.mxu0 %v309
      %342 = vmatprep.subr.mxu0 0.0
      %343 = vmatpush1.msra.mxu0 0.0
      %344 = vmatprep.subr.mxu0 0.0
      %345 = vmatpush1.msra.mxu0 0.0
      %346 = vmatprep.subr.mxu0 0.0
      %347 = vmatpush1.msra.mxu0 0.0
      %348 = vmatprep.subr.mxu0 0.0
      %349 = vmatpush1.msra.mxu0 0.0
      %350 = vmatprep.subr.mxu0 0.0
      %351 = vmatpush1.msra.mxu0 0.0
      %352 = vmatprep.subr.mxu0 0.0
      %353 = vmatpush1.msra.mxu0 0.0
      %354 = vmatprep.subr.mxu0 0.0
      %355 = vmatpush1.msra.mxu0 0.0
      %356 = vmatprep.subr.mxu0 0.0
      %357 = vmatpush1.msra.mxu0 0.0
      %358 = vmatprep.subr.mxu0 0.0
      %359 = vmatpush1.msra.mxu0 0.0
      %360 = vmatprep.subr.mxu0 0.0
      %361 = vmatpush1.msra.mxu0 0.0
      %362 = vmatprep.subr.mxu0 0.0
      %363 = vmatpush1.msra.mxu0 0.0
      %364 = vmatprep.subr.mxu0 0.0
      %365 = vmatpush1.msra.mxu0 0.0
      %366 = vmatprep.subr.mxu0 0.0
      %367 = vmatpush1.msra.mxu0 0.0
      %368 = vmatprep.subr.mxu0 0.0
      %369 = vmatpush1.msra.mxu0 0.0
      %370 = vmatprep.subr.mxu0 0.0
      %371 = vmatpush1.msra.mxu0 0.0
      %372 = vmatprep.subr.mxu0 0.0
      %373 = vmatpush1.msra.mxu0 0.0
      %374 = vmatprep.mubr.f32.mxu0 0.0
      %375 = vmatmul.mubr.f32.gmra.mrb[0].mxu0 %v289
      %v376 = vpop.f32.mrb[0].mxu0
      %v377 = vadd.f32 0.0, %v376
      %v378 = vpop.f32.mrb[0].mxu0
      %379 = vmatprep.mubr.f32.mxu0 0.0
      %380 = vmatmul.mubr.f32.gmra.mrb[0].mxu0 %v290
      %v381 = vpop.f32.mrb[0].mxu0
      %v382 = vadd.f32 0.0, %v381
      %v383 = vpop.f32.mrb[0].mxu0
      %384 = vmatprep.mubr.f32.mxu0 0.0
      %385 = vmatmul.mubr.f32.gmra.mrb[0].mxu0 %v291
      %v386 = vpop.f32.mrb[0].mxu0
      %v387 = vadd.f32 0.0, %v386
      %v388 = vpop.f32.mrb[0].mxu0
      %389 = vmatprep.mubr.f32.mxu0 0.0
      %390 = vmatmul.mubr.f32.gmra.mrb[0].mxu0 %v292
      %v391 = vpop.f32.mrb[0].mxu0
      %v392 = vadd.f32 0.0, %v391
      %v393 = vpop.f32.mrb[0].mxu0
      %394 = vdwg.mxu0
      %395 = vmatprep.subr.mxu0 0.0
      %396 = vmatpush1.msra.mxu0 %v273
      %397 = vmatprep.subr.mxu0 0.0
      %398 = vmatpush1.msra.mxu0 %v274
      %399 = vmatprep.subr.mxu0 0.0
      %400 = vmatpush1.msra.mxu0 %v275
      %401 = vmatprep.subr.mxu0 0.0
      %402 = vmatpush1.msra.mxu0 %v276
      %403 = vmatprep.subr.mxu0 0.0
      %404 = vmatpush1.msra.mxu0 %v277
      %405 = vmatprep.subr.mxu0 0.0
      %406 = vmatpush1.msra.mxu0 %v278
      %407 = vmatprep.subr.mxu0 0.0
      %408 = vmatpush1.msra.mxu0 %v279
      %409 = vmatprep.subr.mxu0 0.0
      %410 = vmatpush1.msra.mxu0 %v280
      %411 = vmatprep.subr.mxu0 0.0
      %412 = vmatpush1.msra.mxu0 %v281
      %413 = vmatprep.subr.mxu0 0.0
      %414 = vmatpush1.msra.mxu0 %v282
      %415 = vmatprep.subr.mxu0 0.0
      %416 = vmatpush1.msra.mxu0 %v283
      %417 = vmatprep.subr.mxu0 0.0
      %418 = vmatpush1.msra.mxu0 %v284
      %419 = vmatprep.subr.mxu0 0.0
      %420 = vmatpush1.msra.mxu0 %v285
      %421 = vmatprep.subr.mxu0 0.0
      %422 = vmatpush1.msra.mxu0 %v286
      %423 = vmatprep.subr.mxu0 0.0
      %424 = vmatpush1.msra.mxu0 %v287
      %425 = vmatprep.subr.mxu0 0.0
      %426 = vmatpush1.msra.mxu0 %v288
      %427 = vmatprep.subr.mxu0 0.0
      %428 = vmatpush1.msra.mxu0 0.0
      %429 = vmatprep.subr.mxu0 0.0
      %430 = vmatpush1.msra.mxu0 0.0
      %431 = vmatprep.subr.mxu0 0.0
      %432 = vmatpush1.msra.mxu0 0.0
      %433 = vmatprep.subr.mxu0 0.0
      %434 = vmatpush1.msra.mxu0 0.0
      %435 = vmatprep.subr.mxu0 0.0
      %436 = vmatpush1.msra.mxu0 0.0
      %437 = vmatprep.subr.mxu0 0.0
      %438 = vmatpush1.msra.mxu0 0.0
      %439 = vmatprep.subr.mxu0 0.0
      %440 = vmatpush1.msra.mxu0 0.0
      %441 = vmatprep.subr.mxu0 0.0
      %442 = vmatpush1.msra.mxu0 0.0
      %443 = vmatprep.subr.mxu0 0.0
      %444 = vmatpush1.msra.mxu0 0.0
      %445 = vmatprep.subr.mxu0 0.0
      %446 = vmatpush1.msra.mxu0 0.0
      %447 = vmatprep.subr.mxu0 0.0
      %448 = vmatpush1.msra.mxu0 0.0
      %449 = vmatprep.subr.mxu0 0.0
      %450 = vmatpush1.msra.mxu0 0.0
      %451 = vmatprep.subr.mxu0 0.0
      %452 = vmatpush1.msra.mxu0 0.0
      %453 = vmatprep.subr.mxu0 0.0
      %454 = vmatpush1.msra.mxu0 0.0
      %455 = vmatprep.subr.mxu0 0.0
      %456 = vmatpush1.msra.mxu0 0.0
      %457 = vmatprep.subr.mxu0 0.0
      %458 = vmatpush1.msra.mxu0 0.0
      %459 = vmatprep.mubr.f32.mxu0 0.0
      %460 = vmatmul.mubr.f32.gmra.mrb[0].mxu0 %v269
      %v461 = vpop.f32.mrb[0].mxu0
      %v462 = vadd.f32 %v377, %v461
      %v463 = vpop.f32.mrb[0].mxu0
      %464 = vmatprep.mubr.f32.mxu0 0.0
      %465 = vmatmul.mubr.f32.gmra.mrb[0].mxu0 %v270
      %v466 = vpop.f32.mrb[0].mxu0
      %v467 = vadd.f32 %v382, %v466
      %v468 = vpop.f32.mrb[0].mxu0
      %469 = vmatprep.mubr.f32.mxu0 0.0
      %470 = vmatmul.mubr.f32.gmra.mrb[0].mxu0 %v271
      %v471 = vpop.f32.mrb[0].mxu0
      %v472 = vadd.f32 %v387, %v471
      %v473 = vpop.f32.mrb[0].mxu0
      %474 = vmatprep.mubr.f32.mxu0 0.0
      %475 = vmatmul.mubr.f32.gmra.mrb[0].mxu0 %v272
      %v476 = vpop.f32.mrb[0].mxu0
      %v477 = vadd.f32 %v392, %v476
      %v478 = vpop.f32.mrb[0].mxu0
      %479 = vdwg.mxu0
      %v480 = vld [vmem:[#allocation2 + $0x2] sm:$0xff]
      %v481 = vld [vmem:[#allocation2 + $0xa] sm:$0xff]
      %v482 = vld [vmem:[#allocation2 + $0x1a] sm:$0xff]
      %v483 = vld [vmem:[#allocation2 + $0x22] sm:$0xff]
      %s484 = scalar_lea.vmem %s247, 256
      %v485 = vld [vmem:[%s484] sm:$0xff]
      %v486 = vld [vmem:[%s484 + $0x8] sm:$0xff]
      %v487 = vld [vmem:[%s484 + $0x10] sm:$0xff]
      %v488 = vld [vmem:[%s484 + $0x18] sm:$0xff]
      %v489 = vld [vmem:[%s484 + $0x20] sm:$0xff]
      %v490 = vld [vmem:[%s484 + $0x28] sm:$0xff]
      %v491 = vld [vmem:[%s484 + $0x30] sm:$0xff]
      %v492 = vld [vmem:[%s484 + $0x38] sm:$0xff]
      %v493 = vld [vmem:[%s484 + $0x40] sm:$0xff]
      %v494 = vld [vmem:[%s484 + $0x48] sm:$0xff]
      %v495 = vld [vmem:[%s484 + $0x50] sm:$0xff]
      %v496 = vld [vmem:[%s484 + $0x58] sm:$0xff]
      %v497 = vld [vmem:[%s484 + $0x60] sm:$0xff]
      %v498 = vld [vmem:[%s484 + $0x68] sm:$0xff]
      %v499 = vld [vmem:[%s484 + $0x70] sm:$0xff]
      %v500 = vld [vmem:[%s484 + $0x78] sm:$0xff]
      %501 = vmatprep.subr.mxu0 0.0
      %502 = vmatpush1.msra.mxu0 %v485
      %503 = vmatprep.subr.mxu0 0.0
      %504 = vmatpush1.msra.mxu0 %v486
      %505 = vmatprep.subr.mxu0 0.0
      %506 = vmatpush1.msra.mxu0 %v487
      %507 = vmatprep.subr.mxu0 0.0
      %508 = vmatpush1.msra.mxu0 %v488
      %509 = vmatprep.subr.mxu0 0.0
      %510 = vmatpush1.msra.mxu0 %v489
      %511 = vmatprep.subr.mxu0 0.0
      %512 = vmatpush1.msra.mxu0 %v490
      %513 = vmatprep.subr.mxu0 0.0
      %514 = vmatpush1.msra.mxu0 %v491
      %515 = vmatprep.subr.mxu0 0.0
      %516 = vmatpush1.msra.mxu0 %v492
      %517 = vmatprep.subr.mxu0 0.0
      %518 = vmatpush1.msra.mxu0 %v493
      %519 = vmatprep.subr.mxu0 0.0
      %520 = vmatpush1.msra.mxu0 %v494
      %521 = vmatprep.subr.mxu0 0.0
      %522 = vmatpush1.msra.mxu0 %v495
      %523 = vmatprep.subr.mxu0 0.0
      %524 = vmatpush1.msra.mxu0 %v496
      %525 = vmatprep.subr.mxu0 0.0
      %526 = vmatpush1.msra.mxu0 %v497
      %527 = vmatprep.subr.mxu0 0.0
      %528 = vmatpush1.msra.mxu0 %v498
      %529 = vmatprep.subr.mxu0 0.0
      %530 = vmatpush1.msra.mxu0 %v499
      %531 = vmatprep.subr.mxu0 0.0
      %532 = vmatpush1.msra.mxu0 %v500
      %533 = vmatprep.subr.mxu0 0.0
      %534 = vmatpush1.msra.mxu0 0.0
      %535 = vmatprep.subr.mxu0 0.0
      %536 = vmatpush1.msra.mxu0 0.0
      %537 = vmatprep.subr.mxu0 0.0
      %538 = vmatpush1.msra.mxu0 0.0
      %539 = vmatprep.subr.mxu0 0.0
      %540 = vmatpush1.msra.mxu0 0.0
      %541 = vmatprep.subr.mxu0 0.0
      %542 = vmatpush1.msra.mxu0 0.0
      %543 = vmatprep.subr.mxu0 0.0
      %544 = vmatpush1.msra.mxu0 0.0
      %545 = vmatprep.subr.mxu0 0.0
      %546 = vmatpush1.msra.mxu0 0.0
      %547 = vmatprep.subr.mxu0 0.0
      %548 = vmatpush1.msra.mxu0 0.0
      %549 = vmatprep.subr.mxu0 0.0
      %550 = vmatpush1.msra.mxu0 0.0
      %551 = vmatprep.subr.mxu0 0.0
      %552 = vmatpush1.msra.mxu0 0.0
      %553 = vmatprep.subr.mxu0 0.0
      %554 = vmatpush1.msra.mxu0 0.0
      %555 = vmatprep.subr.mxu0 0.0
      %556 = vmatpush1.msra.mxu0 0.0
      %557 = vmatprep.subr.mxu0 0.0
      %558 = vmatpush1.msra.mxu0 0.0
      %559 = vmatprep.subr.mxu0 0.0
      %560 = vmatpush1.msra.mxu0 0.0
      %561 = vmatprep.subr.mxu0 0.0
      %562 = vmatpush1.msra.mxu0 0.0
      %563 = vmatprep.subr.mxu0 0.0
      %564 = vmatpush1.msra.mxu0 0.0
      %565 = vmatprep.mubr.f32.mxu0 0.0
      %566 = vmatmul.mubr.f32.gmra.mrb[0].mxu0 %v480
      %v567 = vpop.f32.mrb[0].mxu0
      %v568 = vadd.f32 0.0, %v567
      %v569 = vpop.f32.mrb[0].mxu0
      %570 = vmatprep.mubr.f32.mxu0 0.0
      %571 = vmatmul.mubr.f32.gmra.mrb[0].mxu0 %v481
      %v572 = vpop.f32.mrb[0].mxu0
      %v573 = vadd.f32 0.0, %v572
      %v574 = vpop.f32.mrb[0].mxu0
      %575 = vmatprep.mubr.f32.mxu0 0.0
      %576 = vmatmul.mubr.f32.gmra.mrb[0].mxu0 %v482
      %v577 = vpop.f32.mrb[0].mxu0
      %v578 = vadd.f32 0.0, %v577
      %v579 = vpop.f32.mrb[0].mxu0
      %580 = vmatprep.mubr.f32.mxu0 0.0
      %581 = vmatmul.mubr.f32.gmra.mrb[0].mxu0 %v483
      %v582 = vpop.f32.mrb[0].mxu0
      %v583 = vadd.f32 0.0, %v582
      %v584 = vpop.f32.mrb[0].mxu0
      %585 = vdwg.mxu0
      %v586 = vadd.f32 %v462, %v568
      %v587 = vadd.f32 %v467, %v573
      %v588 = vadd.f32 %v472, %v578
      %v589 = vadd.f32 %v477, %v583
      %v590 = vld [vmem:[#allocation2 + $0x3] sm:$0xff]
      %v591 = vld [vmem:[#allocation2 + $0xb] sm:$0xff]
      %v592 = vld [vmem:[#allocation2 + $0x1b] sm:$0xff]
      %v593 = vld [vmem:[#allocation2 + $0x23] sm:$0xff]
      %s594 = scalar_lea.vmem %s247, 384
      %v595 = vld [vmem:[%s594] sm:$0xff]
      %v596 = vld [vmem:[%s594 + $0x8] sm:$0xff]
      %v597 = vld [vmem:[%s594 + $0x10] sm:$0xff]
      %v598 = vld [vmem:[%s594 + $0x18] sm:$0xff]
      %v599 = vld [vmem:[%s594 + $0x20] sm:$0xff]
      %v600 = vld [vmem:[%s594 + $0x28] sm:$0xff]
      %v601 = vld [vmem:[%s594 + $0x30] sm:$0xff]
      %v602 = vld [vmem:[%s594 + $0x38] sm:$0xff]
      %v603 = vld [vmem:[%s594 + $0x40] sm:$0xff]
      %v604 = vld [vmem:[%s594 + $0x48] sm:$0xff]
      %v605 = vld [vmem:[%s594 + $0x50] sm:$0xff]
      %v606 = vld [vmem:[%s594 + $0x58] sm:$0xff]
      %v607 = vld [vmem:[%s594 + $0x60] sm:$0xff]
      %v608 = vld [vmem:[%s594 + $0x68] sm:$0xff]
      %v609 = vld [vmem:[%s594 + $0x70] sm:$0xff]
      %v610 = vld [vmem:[%s594 + $0x78] sm:$0xff]
      %611 = vmatprep.subr.mxu0 0.0
      %612 = vmatpush1.msra.mxu0 %v595
      %613 = vmatprep.subr.mxu0 0.0
      %614 = vmatpush1.msra.mxu0 %v596
      %615 = vmatprep.subr.mxu0 0.0
      %616 = vmatpush1.msra.mxu0 %v597
      %617 = vmatprep.subr.mxu0 0.0
      %618 = vmatpush1.msra.mxu0 %v598
      %619 = vmatprep.subr.mxu0 0.0
      %620 = vmatpush1.msra.mxu0 %v599
      %621 = vmatprep.subr.mxu0 0.0
      %622 = vmatpush1.msra.mxu0 %v600
      %623 = vmatprep.subr.mxu0 0.0
      %624 = vmatpush1.msra.mxu0 %v601
      %625 = vmatprep.subr.mxu0 0.0
      %626 = vmatpush1.msra.mxu0 %v602
      %627 = vmatprep.subr.mxu0 0.0
      %628 = vmatpush1.msra.mxu0 %v603
      %629 = vmatprep.subr.mxu0 0.0
      %630 = vmatpush1.msra.mxu0 %v604
      %631 = vmatprep.subr.mxu0 0.0
      %632 = vmatpush1.msra.mxu0 %v605
      %633 = vmatprep.subr.mxu0 0.0
      %634 = vmatpush1.msra.mxu0 %v606
      %635 = vmatprep.subr.mxu0 0.0
      %636 = vmatpush1.msra.mxu0 %v607
      %637 = vmatprep.subr.mxu0 0.0
      %638 = vmatpush1.msra.mxu0 %v608
      %639 = vmatprep.subr.mxu0 0.0
      %640 = vmatpush1.msra.mxu0 %v609
      %641 = vmatprep.subr.mxu0 0.0
      %642 = vmatpush1.msra.mxu0 %v610
      %643 = vmatprep.subr.mxu0 0.0
      %644 = vmatpush1.msra.mxu0 0.0
      %645 = vmatprep.subr.mxu0 0.0
      %646 = vmatpush1.msra.mxu0 0.0
      %647 = vmatprep.subr.mxu0 0.0
      %648 = vmatpush1.msra.mxu0 0.0
      %649 = vmatprep.subr.mxu0 0.0
      %650 = vmatpush1.msra.mxu0 0.0
      %651 = vmatprep.subr.mxu0 0.0
      %652 = vmatpush1.msra.mxu0 0.0
      %653 = vmatprep.subr.mxu0 0.0
      %654 = vmatpush1.msra.mxu0 0.0
      %655 = vmatprep.subr.mxu0 0.0
      %656 = vmatpush1.msra.mxu0 0.0
      %657 = vmatprep.subr.mxu0 0.0
      %658 = vmatpush1.msra.mxu0 0.0
      %659 = vmatprep.subr.mxu0 0.0
      %660 = vmatpush1.msra.mxu0 0.0
      %661 = vmatprep.subr.mxu0 0.0
      %662 = vmatpush1.msra.mxu0 0.0
      %663 = vmatprep.subr.mxu0 0.0
      %664 = vmatpush1.msra.mxu0 0.0
      %665 = vmatprep.subr.mxu0 0.0
      %666 = vmatpush1.msra.mxu0 0.0
      %667 = vmatprep.subr.mxu0 0.0
      %668 = vmatpush1.msra.mxu0 0.0
      %669 = vmatprep.subr.mxu0 0.0
      %670 = vmatpush1.msra.mxu0 0.0
      %671 = vmatprep.subr.mxu0 0.0
      %672 = vmatpush1.msra.mxu0 0.0
      %673 = vmatprep.subr.mxu0 0.0
      %674 = vmatpush1.msra.mxu0 0.0
      %675 = vmatprep.mubr.f32.mxu0 0.0
      %676 = vmatmul.mubr.f32.gmra.mrb[0].mxu0 %v590
      %v677 = vpop.f32.mrb[0].mxu0
      %v678 = vadd.f32 0.0, %v677
      %v679 = vpop.f32.mrb[0].mxu0
      %680 = vmatprep.mubr.f32.mxu0 0.0
      %681 = vmatmul.mubr.f32.gmra.mrb[0].mxu0 %v591
      %v682 = vpop.f32.mrb[0].mxu0
      %v683 = vadd.f32 0.0, %v682
      %v684 = vpop.f32.mrb[0].mxu0
      %685 = vmatprep.mubr.f32.mxu0 0.0
      %686 = vmatmul.mubr.f32.gmra.mrb[0].mxu0 %v592
      %v687 = vpop.f32.mrb[0].mxu0
      %v688 = vadd.f32 0.0, %v687
      %v689 = vpop.f32.mrb[0].mxu0
      %690 = vmatprep.mubr.f32.mxu0 0.0
      %691 = vmatmul.mubr.f32.gmra.mrb[0].mxu0 %v593
      %v692 = vpop.f32.mrb[0].mxu0
      %v693 = vadd.f32 0.0, %v692
      %v694 = vpop.f32.mrb[0].mxu0
      %695 = vdwg.mxu0
      %v696 = vadd.f32 %v586, %v678
      %v697 = vadd.f32 %v587, %v683
      %v698 = vadd.f32 %v588, %v688
      %v699 = vadd.f32 %v589, %v693
      %v700 = vld [vmem:[#allocation2 + $0x4] sm:$0xff]
      %v701 = vld [vmem:[#allocation2 + $0xc] sm:$0xff]
      %v702 = vld [vmem:[#allocation2 + $0x1c] sm:$0xff]
      %v703 = vld [vmem:[#allocation2 + $0x24] sm:$0xff]
      %s704 = scalar_lea.vmem %s247, 512
      %v705 = vld [vmem:[%s704] sm:$0xff]
      %v706 = vld [vmem:[%s704 + $0x8] sm:$0xff]
      %v707 = vld [vmem:[%s704 + $0x10] sm:$0xff]
      %v708 = vld [vmem:[%s704 + $0x18] sm:$0xff]
      %v709 = vld [vmem:[%s704 + $0x20] sm:$0xff]
      %v710 = vld [vmem:[%s704 + $0x28] sm:$0xff]
      %v711 = vld [vmem:[%s704 + $0x30] sm:$0xff]
      %v712 = vld [vmem:[%s704 + $0x38] sm:$0xff]
      %v713 = vld [vmem:[%s704 + $0x40] sm:$0xff]
      %v714 = vld [vmem:[%s704 + $0x48] sm:$0xff]
      %v715 = vld [vmem:[%s704 + $0x50] sm:$0xff]
      %v716 = vld [vmem:[%s704 + $0x58] sm:$0xff]
      %v717 = vld [vmem:[%s704 + $0x60] sm:$0xff]
      %v718 = vld [vmem:[%s704 + $0x68] sm:$0xff]
      %v719 = vld [vmem:[%s704 + $0x70] sm:$0xff]
      %v720 = vld [vmem:[%s704 + $0x78] sm:$0xff]
      %721 = vmatprep.subr.mxu0 0.0
      %722 = vmatpush1.msra.mxu0 %v705
      %723 = vmatprep.subr.mxu0 0.0
      %724 = vmatpush1.msra.mxu0 %v706
      %725 = vmatprep.subr.mxu0 0.0
      %726 = vmatpush1.msra.mxu0 %v707
      %727 = vmatprep.subr.mxu0 0.0
      %728 = vmatpush1.msra.mxu0 %v708
      %729 = vmatprep.subr.mxu0 0.0
      %730 = vmatpush1.msra.mxu0 %v709
      %731 = vmatprep.subr.mxu0 0.0
      %732 = vmatpush1.msra.mxu0 %v710
      %733 = vmatprep.subr.mxu0 0.0
      %734 = vmatpush1.msra.mxu0 %v711
      %735 = vmatprep.subr.mxu0 0.0
      %736 = vmatpush1.msra.mxu0 %v712
      %737 = vmatprep.subr.mxu0 0.0
      %738 = vmatpush1.msra.mxu0 %v713
      %739 = vmatprep.subr.mxu0 0.0
      %740 = vmatpush1.msra.mxu0 %v714
      %741 = vmatprep.subr.mxu0 0.0
      %742 = vmatpush1.msra.mxu0 %v715
      %743 = vmatprep.subr.mxu0 0.0
      %744 = vmatpush1.msra.mxu0 %v716
      %745 = vmatprep.subr.mxu0 0.0
      %746 = vmatpush1.msra.mxu0 %v717
      %747 = vmatprep.subr.mxu0 0.0
      %748 = vmatpush1.msra.mxu0 %v718
      %749 = vmatprep.subr.mxu0 0.0
      %750 = vmatpush1.msra.mxu0 %v719
      %751 = vmatprep.subr.mxu0 0.0
      %752 = vmatpush1.msra.mxu0 %v720
      %753 = vmatprep.subr.mxu0 0.0
      %754 = vmatpush1.msra.mxu0 0.0
      %755 = vmatprep.subr.mxu0 0.0
      %756 = vmatpush1.msra.mxu0 0.0
      %757 = vmatprep.subr.mxu0 0.0
      %758 = vmatpush1.msra.mxu0 0.0
      %759 = vmatprep.subr.mxu0 0.0
      %760 = vmatpush1.msra.mxu0 0.0
      %761 = vmatprep.subr.mxu0 0.0
      %762 = vmatpush1.msra.mxu0 0.0
      %763 = vmatprep.subr.mxu0 0.0
      %764 = vmatpush1.msra.mxu0 0.0
      %765 = vmatprep.subr.mxu0 0.0
      %766 = vmatpush1.msra.mxu0 0.0
      %767 = vmatprep.subr.mxu0 0.0
      %768 = vmatpush1.msra.mxu0 0.0
      %769 = vmatprep.subr.mxu0 0.0
      %770 = vmatpush1.msra.mxu0 0.0
      %771 = vmatprep.subr.mxu0 0.0
      %772 = vmatpush1.msra.mxu0 0.0
      %773 = vmatprep.subr.mxu0 0.0
      %774 = vmatpush1.msra.mxu0 0.0
      %775 = vmatprep.subr.mxu0 0.0
      %776 = vmatpush1.msra.mxu0 0.0
      %777 = vmatprep.subr.mxu0 0.0
      %778 = vmatpush1.msra.mxu0 0.0
      %779 = vmatprep.subr.mxu0 0.0
      %780 = vmatpush1.msra.mxu0 0.0
      %781 = vmatprep.subr.mxu0 0.0
      %782 = vmatpush1.msra.mxu0 0.0
      %783 = vmatprep.subr.mxu0 0.0
      %784 = vmatpush1.msra.mxu0 0.0
      %785 = vmatprep.mubr.f32.mxu0 0.0
      %786 = vmatmul.mubr.f32.gmra.mrb[0].mxu0 %v700
      %v787 = vpop.f32.mrb[0].mxu0
      %v788 = vadd.f32 0.0, %v787
      %v789 = vpop.f32.mrb[0].mxu0
      %790 = vmatprep.mubr.f32.mxu0 0.0
      %791 = vmatmul.mubr.f32.gmra.mrb[0].mxu0 %v701
      %v792 = vpop.f32.mrb[0].mxu0
      %v793 = vadd.f32 0.0, %v792
      %v794 = vpop.f32.mrb[0].mxu0
      %795 = vmatprep.mubr.f32.mxu0 0.0
      %796 = vmatmul.mubr.f32.gmra.mrb[0].mxu0 %v702
      %v797 = vpop.f32.mrb[0].mxu0
      %v798 = vadd.f32 0.0, %v797
      %v799 = vpop.f32.mrb[0].mxu0
      %800 = vmatprep.mubr.f32.mxu0 0.0
      %801 = vmatmul.mubr.f32.gmra.mrb[0].mxu0 %v703
      %v802 = vpop.f32.mrb[0].mxu0
      %v803 = vadd.f32 0.0, %v802
      %v804 = vpop.f32.mrb[0].mxu0
      %805 = vdwg.mxu0
      %v806 = vadd.f32 %v696, %v788
      %v807 = vadd.f32 %v697, %v793
      %v808 = vadd.f32 %v698, %v798
      %v809 = vadd.f32 %v699, %v803
      %v810 = vld [vmem:[#allocation2 + $0x5] sm:$0xff]
      %v811 = vld [vmem:[#allocation2 + $0xd] sm:$0xff]
      %v812 = vld [vmem:[#allocation2 + $0x1d] sm:$0xff]
      %v813 = vld [vmem:[#allocation2 + $0x25] sm:$0xff]
      %s814 = scalar_lea.vmem %s247, 640
      %v815 = vld [vmem:[%s814] sm:$0xff]
      %v816 = vld [vmem:[%s814 + $0x8] sm:$0xff]
      %v817 = vld [vmem:[%s814 + $0x10] sm:$0xff]
      %v818 = vld [vmem:[%s814 + $0x18] sm:$0xff]
      %v819 = vld [vmem:[%s814 + $0x20] sm:$0xff]
      %v820 = vld [vmem:[%s814 + $0x28] sm:$0xff]
      %v821 = vld [vmem:[%s814 + $0x30] sm:$0xff]
      %v822 = vld [vmem:[%s814 + $0x38] sm:$0xff]
      %v823 = vld [vmem:[%s814 + $0x40] sm:$0xff]
      %v824 = vld [vmem:[%s814 + $0x48] sm:$0xff]
      %v825 = vld [vmem:[%s814 + $0x50] sm:$0xff]
      %v826 = vld [vmem:[%s814 + $0x58] sm:$0xff]
      %v827 = vld [vmem:[%s814 + $0x60] sm:$0xff]
      %v828 = vld [vmem:[%s814 + $0x68] sm:$0xff]
      %v829 = vld [vmem:[%s814 + $0x70] sm:$0xff]
      %v830 = vld [vmem:[%s814 + $0x78] sm:$0xff]
      %831 = vmatprep.subr.mxu0 0.0
      %832 = vmatpush1.msra.mxu0 %v815
      %833 = vmatprep.subr.mxu0 0.0
      %834 = vmatpush1.msra.mxu0 %v816
      %835 = vmatprep.subr.mxu0 0.0
      %836 = vmatpush1.msra.mxu0 %v817
      %837 = vmatprep.subr.mxu0 0.0
      %838 = vmatpush1.msra.mxu0 %v818
      %839 = vmatprep.subr.mxu0 0.0
      %840 = vmatpush1.msra.mxu0 %v819
      %841 = vmatprep.subr.mxu0 0.0
      %842 = vmatpush1.msra.mxu0 %v820
      %843 = vmatprep.subr.mxu0 0.0
      %844 = vmatpush1.msra.mxu0 %v821
      %845 = vmatprep.subr.mxu0 0.0
      %846 = vmatpush1.msra.mxu0 %v822
      %847 = vmatprep.subr.mxu0 0.0
      %848 = vmatpush1.msra.mxu0 %v823
      %849 = vmatprep.subr.mxu0 0.0
      %850 = vmatpush1.msra.mxu0 %v824
      %851 = vmatprep.subr.mxu0 0.0
      %852 = vmatpush1.msra.mxu0 %v825
      %853 = vmatprep.subr.mxu0 0.0
      %854 = vmatpush1.msra.mxu0 %v826
      %855 = vmatprep.subr.mxu0 0.0
      %856 = vmatpush1.msra.mxu0 %v827
      %857 = vmatprep.subr.mxu0 0.0
      %858 = vmatpush1.msra.mxu0 %v828
      %859 = vmatprep.subr.mxu0 0.0
      %860 = vmatpush1.msra.mxu0 %v829
      %861 = vmatprep.subr.mxu0 0.0
      %862 = vmatpush1.msra.mxu0 %v830
      %863 = vmatprep.subr.mxu0 0.0
      %864 = vmatpush1.msra.mxu0 0.0
      %865 = vmatprep.subr.mxu0 0.0
      %866 = vmatpush1.msra.mxu0 0.0
      %867 = vmatprep.subr.mxu0 0.0
      %868 = vmatpush1.msra.mxu0 0.0
      %869 = vmatprep.subr.mxu0 0.0
      %870 = vmatpush1.msra.mxu0 0.0
      %871 = vmatprep.subr.mxu0 0.0
      %872 = vmatpush1.msra.mxu0 0.0
      %873 = vmatprep.subr.mxu0 0.0
      %874 = vmatpush1.msra.mxu0 0.0
      %875 = vmatprep.subr.mxu0 0.0
      %876 = vmatpush1.msra.mxu0 0.0
      %877 = vmatprep.subr.mxu0 0.0
      %878 = vmatpush1.msra.mxu0 0.0
      %879 = vmatprep.subr.mxu0 0.0
      %880 = vmatpush1.msra.mxu0 0.0
      %881 = vmatprep.subr.mxu0 0.0
      %882 = vmatpush1.msra.mxu0 0.0
      %883 = vmatprep.subr.mxu0 0.0
      %884 = vmatpush1.msra.mxu0 0.0
      %885 = vmatprep.subr.mxu0 0.0
      %886 = vmatpush1.msra.mxu0 0.0
      %887 = vmatprep.subr.mxu0 0.0
      %888 = vmatpush1.msra.mxu0 0.0
      %889 = vmatprep.subr.mxu0 0.0
      %890 = vmatpush1.msra.mxu0 0.0
      %891 = vmatprep.subr.mxu0 0.0
      %892 = vmatpush1.msra.mxu0 0.0
      %893 = vmatprep.subr.mxu0 0.0
      %894 = vmatpush1.msra.mxu0 0.0
      %895 = vmatprep.mubr.f32.mxu0 0.0
      %896 = vmatmul.mubr.f32.gmra.mrb[0].mxu0 %v810
      %v897 = vpop.f32.mrb[0].mxu0
      %v898 = vadd.f32 0.0, %v897
      %v899 = vpop.f32.mrb[0].mxu0
      %900 = vmatprep.mubr.f32.mxu0 0.0
      %901 = vmatmul.mubr.f32.gmra.mrb[0].mxu0 %v811
      %v902 = vpop.f32.mrb[0].mxu0
      %v903 = vadd.f32 0.0, %v902
      %v904 = vpop.f32.mrb[0].mxu0
      %905 = vmatprep.mubr.f32.mxu0 0.0
      %906 = vmatmul.mubr.f32.gmra.mrb[0].mxu0 %v812
      %v907 = vpop.f32.mrb[0].mxu0
      %v908 = vadd.f32 0.0, %v907
      %v909 = vpop.f32.mrb[0].mxu0
      %910 = vmatprep.mubr.f32.mxu0 0.0
      %911 = vmatmul.mubr.f32.gmra.mrb[0].mxu0 %v813
      %v912 = vpop.f32.mrb[0].mxu0
      %v913 = vadd.f32 0.0, %v912
      %v914 = vpop.f32.mrb[0].mxu0
      %915 = vdwg.mxu0
      %v916 = vadd.f32 %v806, %v898
      %v917 = vadd.f32 %v807, %v903
      %v918 = vadd.f32 %v808, %v908
      %v919 = vadd.f32 %v809, %v913
      %v920 = vld [vmem:[#allocation2 + $0x6] sm:$0xff]
      %v921 = vld [vmem:[#allocation2 + $0xe] sm:$0xff]
      %v922 = vld [vmem:[#allocation2 + $0x1e] sm:$0xff]
      %v923 = vld [vmem:[#allocation2 + $0x26] sm:$0xff]
      %s924 = scalar_lea.vmem %s247, 768
      %v925 = vld [vmem:[%s924] sm:$0xff]
      %v926 = vld [vmem:[%s924 + $0x8] sm:$0xff]
      %v927 = vld [vmem:[%s924 + $0x10] sm:$0xff]
      %v928 = vld [vmem:[%s924 + $0x18] sm:$0xff]
      %v929 = vld [vmem:[%s924 + $0x20] sm:$0xff]
      %v930 = vld [vmem:[%s924 + $0x28] sm:$0xff]
      %v931 = vld [vmem:[%s924 + $0x30] sm:$0xff]
      %v932 = vld [vmem:[%s924 + $0x38] sm:$0xff]
      %v933 = vld [vmem:[%s924 + $0x40] sm:$0xff]
      %v934 = vld [vmem:[%s924 + $0x48] sm:$0xff]
      %v935 = vld [vmem:[%s924 + $0x50] sm:$0xff]
      %v936 = vld [vmem:[%s924 + $0x58] sm:$0xff]
      %v937 = vld [vmem:[%s924 + $0x60] sm:$0xff]
      %v938 = vld [vmem:[%s924 + $0x68] sm:$0xff]
      %v939 = vld [vmem:[%s924 + $0x70] sm:$0xff]
      %v940 = vld [vmem:[%s924 + $0x78] sm:$0xff]
      %941 = vmatprep.subr.mxu0 0.0
      %942 = vmatpush1.msra.mxu0 %v925
      %943 = vmatprep.subr.mxu0 0.0
      %944 = vmatpush1.msra.mxu0 %v926
      %945 = vmatprep.subr.mxu0 0.0
      %946 = vmatpush1.msra.mxu0 %v927
      %947 = vmatprep.subr.mxu0 0.0
      %948 = vmatpush1.msra.mxu0 %v928
      %949 = vmatprep.subr.mxu0 0.0
      %950 = vmatpush1.msra.mxu0 %v929
      %951 = vmatprep.subr.mxu0 0.0
      %952 = vmatpush1.msra.mxu0 %v930
      %953 = vmatprep.subr.mxu0 0.0
      %954 = vmatpush1.msra.mxu0 %v931
      %955 = vmatprep.subr.mxu0 0.0
      %956 = vmatpush1.msra.mxu0 %v932
      %957 = vmatprep.subr.mxu0 0.0
      %958 = vmatpush1.msra.mxu0 %v933
      %959 = vmatprep.subr.mxu0 0.0
      %960 = vmatpush1.msra.mxu0 %v934
      %961 = vmatprep.subr.mxu0 0.0
      %962 = vmatpush1.msra.mxu0 %v935
      %963 = vmatprep.subr.mxu0 0.0
      %964 = vmatpush1.msra.mxu0 %v936
      %965 = vmatprep.subr.mxu0 0.0
      %966 = vmatpush1.msra.mxu0 %v937
      %967 = vmatprep.subr.mxu0 0.0
      %968 = vmatpush1.msra.mxu0 %v938
      %969 = vmatprep.subr.mxu0 0.0
      %970 = vmatpush1.msra.mxu0 %v939
      %971 = vmatprep.subr.mxu0 0.0
      %972 = vmatpush1.msra.mxu0 %v940
      %973 = vmatprep.subr.mxu0 0.0
      %974 = vmatpush1.msra.mxu0 0.0
      %975 = vmatprep.subr.mxu0 0.0
      %976 = vmatpush1.msra.mxu0 0.0
      %977 = vmatprep.subr.mxu0 0.0
      %978 = vmatpush1.msra.mxu0 0.0
      %979 = vmatprep.subr.mxu0 0.0
      %980 = vmatpush1.msra.mxu0 0.0
      %981 = vmatprep.subr.mxu0 0.0
      %982 = vmatpush1.msra.mxu0 0.0
      %983 = vmatprep.subr.mxu0 0.0
      %984 = vmatpush1.msra.mxu0 0.0
      %985 = vmatprep.subr.mxu0 0.0
      %986 = vmatpush1.msra.mxu0 0.0
      %987 = vmatprep.subr.mxu0 0.0
      %988 = vmatpush1.msra.mxu0 0.0
      %989 = vmatprep.subr.mxu0 0.0
      %990 = vmatpush1.msra.mxu0 0.0
      %991 = vmatprep.subr.mxu0 0.0
      %992 = vmatpush1.msra.mxu0 0.0
      %993 = vmatprep.subr.mxu0 0.0
      %994 = vmatpush1.msra.mxu0 0.0
      %995 = vmatprep.subr.mxu0 0.0
      %996 = vmatpush1.msra.mxu0 0.0
      %997 = vmatprep.subr.mxu0 0.0
      %998 = vmatpush1.msra.mxu0 0.0
      %999 = vmatprep.subr.mxu0 0.0
      %1000 = vmatpush1.msra.mxu0 0.0
      %1001 = vmatprep.subr.mxu0 0.0
      %1002 = vmatpush1.msra.mxu0 0.0
      %1003 = vmatprep.subr.mxu0 0.0
      %1004 = vmatpush1.msra.mxu0 0.0
      %1005 = vmatprep.mubr.f32.mxu0 0.0
      %1006 = vmatmul.mubr.f32.gmra.mrb[0].mxu0 %v920
      %v1007 = vpop.f32.mrb[0].mxu0
      %v1008 = vadd.f32 0.0, %v1007
      %v1009 = vpop.f32.mrb[0].mxu0
      %1010 = vmatprep.mubr.f32.mxu0 0.0
      %1011 = vmatmul.mubr.f32.gmra.mrb[0].mxu0 %v921
      %v1012 = vpop.f32.mrb[0].mxu0
      %v1013 = vadd.f32 0.0, %v1012
      %v1014 = vpop.f32.mrb[0].mxu0
      %1015 = vmatprep.mubr.f32.mxu0 0.0
      %1016 = vmatmul.mubr.f32.gmra.mrb[0].mxu0 %v922
      %v1017 = vpop.f32.mrb[0].mxu0
      %v1018 = vadd.f32 0.0, %v1017
      %v1019 = vpop.f32.mrb[0].mxu0
      %1020 = vmatprep.mubr.f32.mxu0 0.0
      %1021 = vmatmul.mubr.f32.gmra.mrb[0].mxu0 %v923
      %v1022 = vpop.f32.mrb[0].mxu0
      %v1023 = vadd.f32 0.0, %v1022
      %v1024 = vpop.f32.mrb[0].mxu0
      %1025 = vdwg.mxu0
      %v1026 = vadd.f32 %v916, %v1008
      %v1027 = vadd.f32 %v917, %v1013
      %v1028 = vadd.f32 %v918, %v1018
      %v1029 = vadd.f32 %v919, %v1023
      %v1030 = vld [vmem:[%s250] sm:$0x1]
      %v1032 = vlaneseq
      %v1033 = vshrl.u32 %v1032, 7
      %v1034 = vsub.s32 0, %v1033
      %v1035 = vrot.slane %v1030, %v1034
      %v1037 = vadd.f32 %v1026, %v1035
      %v1038 = vadd.f32 %v1027, %v1035
      %v1039 = vadd.f32 %v1028, %v1035
      %v1040 = vadd.f32 %v1029, %v1035
      %p1041 = scmp.ne.s32.totalorder %s17, 20
      // Predicated region
      $region49: #{cnn_feature_extraction_forward.13} parent=43 // pred_check
        %p1042 = pneg %p1041
      $region50: #{cnn_feature_extraction_forward.13} parent=43 // pred_check_branch
        %1044 = sbr.rel (%p1042) target = $region52
      $region51: #{cnn_feature_extraction_forward.13} parent=43 // pred_region
        %1045 = vst [vmem:[#allocation2 + $0x3] sm:$0xff] %v1037
        %1046 = vst [vmem:[#allocation2 + $0xb] sm:$0xff] %v1038
        %1047 = vst [vmem:[#allocation2 + $0x1b] sm:$0xff] %v1039
        %1048 = vst [vmem:[#allocation2 + $0x23] sm:$0xff] %v1040
      $region52: #{cnn_feature_extraction_forward.13} parent=43 // pred_fallthru
        _
      %p1049 = scmp.eq.s32.totalorder %s17, 20
      // Predicated region
      $region53: #{cnn_feature_extraction_forward.13} parent=43 // pred_check
        %p1050 = pneg %p1049
      $region54: #{cnn_feature_extraction_forward.13} parent=43 // pred_check_branch
        %1052 = sbr.rel (%p1050) target = $region56
      $region55: #{cnn_feature_extraction_forward.13} parent=43 // pred_region
        %v1053 = vadd.f32 %v1037, %v1038
        %v1054 = vadd.f32 %v1053, %v1039
        %v1055 = vadd.f32 %v1054, %v1040
        %v1056 = vrot.slane %v1055, 4
        %v1057 = vadd.f32 %v1055, %v1056
        %v1058 = vrot.slane %v1057, 2
        %v1059 = vadd.f32 %v1057, %v1058
        %v1060 = vrot.slane %v1059, 1
        %v1061 = vadd.f32 %v1059, %v1060
        %v1062 = vld [vmem:[%s5] sm:$0xff]
        %v1063 = vld [vmem:[%s5 + $0x8] sm:$0xff]
        %v1064 = vld [vmem:[%s5 + $0x10] sm:$0xff]
        %v1065 = vld [vmem:[%s5 + $0x18] sm:$0xff]
        %v1066 = vld [vmem:[%s5 + $0x20] sm:$0xff]
        %v1067 = vld [vmem:[%s5 + $0x28] sm:$0xff]
        %v1068 = vld [vmem:[%s5 + $0x30] sm:$0xff]
        %v1069 = vld [vmem:[%s5 + $0x38] sm:$0xff]
        %v1070 = vld [vmem:[%s5 + $0x40] sm:$0xff]
        %v1071 = vld [vmem:[%s5 + $0x48] sm:$0xff]
        %v1072 = vld [vmem:[%s5 + $0x50] sm:$0xff]
        %v1073 = vld [vmem:[%s5 + $0x58] sm:$0xff]
        %v1074 = vld [vmem:[%s5 + $0x60] sm:$0xff]
        %v1075 = vld [vmem:[%s5 + $0x68] sm:$0xff]
        %v1076 = vld [vmem:[%s5 + $0x70] sm:$0xff]
        %v1077 = vld [vmem:[%s5 + $0x78] sm:$0xff]
        %1078 = vmatprep.subr.mxu0 0.0
        %1079 = vmatpush1.msra.mxu0 %v1062
        %1080 = vmatprep.subr.mxu0 0.0
        %1081 = vmatpush1.msra.mxu0 %v1063
        %1082 = vmatprep.subr.mxu0 0.0
        %1083 = vmatpush1.msra.mxu0 %v1064
        %1084 = vmatprep.subr.mxu0 0.0
        %1085 = vmatpush1.msra.mxu0 %v1065
        %1086 = vmatprep.subr.mxu0 0.0
        %1087 = vmatpush1.msra.mxu0 %v1066
        %1088 = vmatprep.subr.mxu0 0.0
        %1089 = vmatpush1.msra.mxu0 %v1067
        %1090 = vmatprep.subr.mxu0 0.0
        %1091 = vmatpush1.msra.mxu0 %v1068
        %1092 = vmatprep.subr.mxu0 0.0
        %1093 = vmatpush1.msra.mxu0 %v1069
        %1094 = vmatprep.subr.mxu0 0.0
        %1095 = vmatpush1.msra.mxu0 %v1070
        %1096 = vmatprep.subr.mxu0 0.0
        %1097 = vmatpush1.msra.mxu0 %v1071
        %1098 = vmatprep.subr.mxu0 0.0
        %1099 = vmatpush1.msra.mxu0 %v1072
        %1100 = vmatprep.subr.mxu0 0.0
        %1101 = vmatpush1.msra.mxu0 %v1073
        %1102 = vmatprep.subr.mxu0 0.0
        %1103 = vmatpush1.msra.mxu0 %v1074
        %1104 = vmatprep.subr.mxu0 0.0
        %1105 = vmatpush1.msra.mxu0 %v1075
        %1106 = vmatprep.subr.mxu0 0.0
        %1107 = vmatpush1.msra.mxu0 %v1076
        %1108 = vmatprep.subr.mxu0 0.0
        %1109 = vmatpush1.msra.mxu0 %v1077
        %1110 = vmatprep.subr.mxu0 0.0
        %1111 = vmatpush1.msra.mxu0 0.0
        %1112 = vmatprep.subr.mxu0 0.0
        %1113 = vmatpush1.msra.mxu0 0.0
        %1114 = vmatprep.subr.mxu0 0.0
        %1115 = vmatpush1.msra.mxu0 0.0
        %1116 = vmatprep.subr.mxu0 0.0
        %1117 = vmatpush1.msra.mxu0 0.0
        %1118 = vmatprep.subr.mxu0 0.0
        %1119 = vmatpush1.msra.mxu0 0.0
        %1120 = vmatprep.subr.mxu0 0.0
        %1121 = vmatpush1.msra.mxu0 0.0
        %1122 = vmatprep.subr.mxu0 0.0
        %1123 = vmatpush1.msra.mxu0 0.0
        %1124 = vmatprep.subr.mxu0 0.0
        %1125 = vmatpush1.msra.mxu0 0.0
        %1126 = vmatprep.subr.mxu0 0.0
        %1127 = vmatpush1.msra.mxu0 0.0
        %1128 = vmatprep.subr.mxu0 0.0
        %1129 = vmatpush1.msra.mxu0 0.0
        %1130 = vmatprep.subr.mxu0 0.0
        %1131 = vmatpush1.msra.mxu0 0.0
        %1132 = vmatprep.subr.mxu0 0.0
        %1133 = vmatpush1.msra.mxu0 0.0
        %1134 = vmatprep.subr.mxu0 0.0
        %1135 = vmatpush1.msra.mxu0 0.0
        %1136 = vmatprep.subr.mxu0 0.0
        %1137 = vmatpush1.msra.mxu0 0.0
        %1138 = vmatprep.subr.mxu0 0.0
        %1139 = vmatpush1.msra.mxu0 0.0
        %1140 = vmatprep.subr.mxu0 0.0
        %1141 = vmatpush1.msra.mxu0 0.0
        %1142 = vmatprep.mubr.f32.mxu0 0.0
        %1143 = vmatmul.mubr.f32.gmra.mrb[0].mxu0 %v1061
        %v1144 = vpop.f32.mrb[0].mxu0
        %v1145 = vadd.f32 0.0, %v1144
        %v1146 = vpop.f32.mrb[0].mxu0
        %1147 = vdwg.mxu0
        %v1148 = vmul.f32 %v1145, 0.001953125
        %v1149 = vlaneseq
        %v1150 = vshrl.u32 %v1149, 7
        %v1151 = vsub.s32 0, %v1150
        %v1152 = vrot.slane %v1148, %v1151
        %v1153 = vsub.f32 %v1037, %v1152
        %v1154 = vsub.f32 %v1038, %v1152
        %v1155 = vsub.f32 %v1039, %v1152
        %v1156 = vsub.f32 %v1040, %v1152
        %v1157 = vmul.f32 %v1153, %v1153
        %v1158 = vmul.f32 %v1154, %v1154
        %v1159 = vmul.f32 %v1155, %v1155
        %v1160 = vmul.f32 %v1156, %v1156
        %v1161 = vadd.f32 %v1157, %v1158
        %v1162 = vadd.f32 %v1161, %v1159
        %v1163 = vadd.f32 %v1162, %v1160
        %v1164 = vrot.slane %v1163, 4
        %v1165 = vadd.f32 %v1163, %v1164
        %v1166 = vrot.slane %v1165, 2
        %v1167 = vadd.f32 %v1165, %v1166
        %v1168 = vrot.slane %v1167, 1
        %v1169 = vadd.f32 %v1167, %v1168
        %1170 = vmatprep.subr.mxu0 0.0
        %1171 = vmatpush1.msra.mxu0 %v1062
        %1172 = vmatprep.subr.mxu0 0.0
        %1173 = vmatpush1.msra.mxu0 %v1063
        %1174 = vmatprep.subr.mxu0 0.0
        %1175 = vmatpush1.msra.mxu0 %v1064
        %1176 = vmatprep.subr.mxu0 0.0
        %1177 = vmatpush1.msra.mxu0 %v1065
        %1178 = vmatprep.subr.mxu0 0.0
        %1179 = vmatpush1.msra.mxu0 %v1066
        %1180 = vmatprep.subr.mxu0 0.0
        %1181 = vmatpush1.msra.mxu0 %v1067
        %1182 = vmatprep.subr.mxu0 0.0
        %1183 = vmatpush1.msra.mxu0 %v1068
        %1184 = vmatprep.subr.mxu0 0.0
        %1185 = vmatpush1.msra.mxu0 %v1069
        %1186 = vmatprep.subr.mxu0 0.0
        %1187 = vmatpush1.msra.mxu0 %v1070
        %1188 = vmatprep.subr.mxu0 0.0
        %1189 = vmatpush1.msra.mxu0 %v1071
        %1190 = vmatprep.subr.mxu0 0.0
        %1191 = vmatpush1.msra.mxu0 %v1072
        %1192 = vmatprep.subr.mxu0 0.0
        %1193 = vmatpush1.msra.mxu0 %v1073
        %1194 = vmatprep.subr.mxu0 0.0
        %1195 = vmatpush1.msra.mxu0 %v1074
        %1196 = vmatprep.subr.mxu0 0.0
        %1197 = vmatpush1.msra.mxu0 %v1075
        %1198 = vmatprep.subr.mxu0 0.0
        %1199 = vmatpush1.msra.mxu0 %v1076
        %1200 = vmatprep.subr.mxu0 0.0
        %1201 = vmatpush1.msra.mxu0 %v1077
        %1202 = vmatprep.subr.mxu0 0.0
        %1203 = vmatpush1.msra.mxu0 0.0
        %1204 = vmatprep.subr.mxu0 0.0
        %1205 = vmatpush1.msra.mxu0 0.0
        %1206 = vmatprep.subr.mxu0 0.0
        %1207 = vmatpush1.msra.mxu0 0.0
        %1208 = vmatprep.subr.mxu0 0.0
        %1209 = vmatpush1.msra.mxu0 0.0
        %1210 = vmatprep.subr.mxu0 0.0
        %1211 = vmatpush1.msra.mxu0 0.0
        %1212 = vmatprep.subr.mxu0 0.0
        %1213 = vmatpush1.msra.mxu0 0.0
        %1214 = vmatprep.subr.mxu0 0.0
        %1215 = vmatpush1.msra.mxu0 0.0
        %1216 = vmatprep.subr.mxu0 0.0
        %1217 = vmatpush1.msra.mxu0 0.0
        %1218 = vmatprep.subr.mxu0 0.0
        %1219 = vmatpush1.msra.mxu0 0.0
        %1220 = vmatprep.subr.mxu0 0.0
        %1221 = vmatpush1.msra.mxu0 0.0
        %1222 = vmatprep.subr.mxu0 0.0
        %1223 = vmatpush1.msra.mxu0 0.0
        %1224 = vmatprep.subr.mxu0 0.0
        %1225 = vmatpush1.msra.mxu0 0.0
        %1226 = vmatprep.subr.mxu0 0.0
        %1227 = vmatpush1.msra.mxu0 0.0
        %1228 = vmatprep.subr.mxu0 0.0
        %1229 = vmatpush1.msra.mxu0 0.0
        %1230 = vmatprep.subr.mxu0 0.0
        %1231 = vmatpush1.msra.mxu0 0.0
        %1232 = vmatprep.subr.mxu0 0.0
        %1233 = vmatpush1.msra.mxu0 0.0
        %1234 = vmatprep.mubr.f32.mxu0 0.0
        %1235 = vmatmul.mubr.f32.gmra.mrb[0].mxu0 %v1169
        %v1236 = vpop.f32.mrb[0].mxu0
        %v1237 = vadd.f32 0.0, %v1236
        %v1238 = vpop.f32.mrb[0].mxu0
        %1239 = vdwg.mxu0
        %v1240 = vmul.f32 %v1237, 0.001953125
        %v1241 = vld [vmem:[%s3] sm:$0x1]
        %v1242 = vadd.f32 %v1240, 1e-05
        %v1243 = vrsqrt.pop %v1242
        %v1244 = vmul.f32 %v1241, %v1243
        %v1246 = vlaneseq
        %v1247 = vshrl.u32 %v1246, 7
        %v1248 = vsub.s32 0, %v1247
        %v1249 = vrot.slane %v1244, %v1248
        %v1251 = vmul.f32 %v1153, %v1249
        %v1252 = vmul.f32 %v1154, %v1249
        %v1253 = vmul.f32 %v1155, %v1249
        %v1254 = vmul.f32 %v1156, %v1249
        %v1255 = vld [vmem:[%s4] sm:$0x1]
        %v1257 = vlaneseq
        %v1258 = vshrl.u32 %v1257, 7
        %v1259 = vsub.s32 0, %v1258
        %v1260 = vrot.slane %v1255, %v1259
        %v1262 = vadd.f32 %v1251, %v1260
        %v1263 = vadd.f32 %v1252, %v1260
        %v1264 = vadd.f32 %v1253, %v1260
        %v1265 = vadd.f32 %v1254, %v1260
        %v1266 = vmin.f32 %v1262, 0.0
        %v1267 = vmin.f32 %v1263, 0.0
        %v1268 = vmin.f32 %v1264, 0.0
        %v1269 = vmin.f32 %v1265, 0.0
        %v1270 = vmul.f32 %v1266, 1.442695
        %v1271 = vpow.pop %v1270
        %v1272 = vmul.f32 %v1267, 1.442695
        %v1273 = vpow.pop %v1272
        %v1274 = vmul.f32 %v1268, 1.442695
        %v1275 = vpow.pop %v1274
        %v1276 = vmul.f32 %v1269, 1.442695
        %v1277 = vpow.pop %v1276
        %v1278 = vsub.f32 %v1271, 1.0
        %v1279 = vsub.f32 %v1273, 1.0
        %v1280 = vsub.f32 %v1275, 1.0
        %v1281 = vsub.f32 %v1277, 1.0
        %v1282 = vmul.f32 %v1278, 1.6732632
        %v1283 = vmul.f32 %v1279, 1.6732632
        %v1284 = vmul.f32 %v1280, 1.6732632
        %v1285 = vmul.f32 %v1281, 1.6732632
        %vm1286 = vcmp.gt.f32.partialorder %v1262, 0.0
        %vm1287 = vcmp.gt.f32.partialorder %v1263, 0.0
        %vm1288 = vcmp.gt.f32.partialorder %v1264, 0.0
        %vm1289 = vcmp.gt.f32.partialorder %v1265, 0.0
        %v1290 = vsel %vm1286, %v1262, %v1282
        %v1291 = vsel %vm1287, %v1263, %v1283
        %v1292 = vsel %vm1288, %v1264, %v1284
        %v1293 = vsel %vm1289, %v1265, %v1285
        %v1294 = vmul.f32 %v1290, 1.050701
        %v1295 = vmul.f32 %v1291, 1.050701
        %v1296 = vmul.f32 %v1292, 1.050701
        %v1297 = vmul.f32 %v1293, 1.050701
        %1298 = vst [vmem:[%s6] sm:$0xff] %v1294
        %1299 = vst [vmem:[%s6 + $0x8] sm:$0xff] %v1295
        %1300 = vst [vmem:[%s6 + $0x10] sm:$0xff] %v1296
        %1301 = vst [vmem:[%s6 + $0x18] sm:$0xff] %v1297
      $region56: #{cnn_feature_extraction_forward.13} parent=43 // pred_fallthru
        _
      // Predicated region
      $region57: #{cnn_feature_extraction_forward.13} parent=43 // pred_check
        %p1302 = pneg %p166
      $region58: #{cnn_feature_extraction_forward.13} parent=43 // pred_check_branch
        %1304 = sbr.rel (%p1302) target = $region60
      $region59: #{cnn_feature_extraction_forward.13} parent=43 // pred_region
        _
      $region60: #{cnn_feature_extraction_forward.13} parent=43 // pred_fallthru
        _
      // Predicated region
      $region61: #{cnn_feature_extraction_forward.13} parent=43 // pred_check
        %p1305 = pneg %p166
      $region62: #{cnn_feature_extraction_forward.13} parent=43 // pred_check_branch
        %1307 = sbr.rel (%p1305) target = $region64
      $region63: #{cnn_feature_extraction_forward.13} parent=43 // pred_region
        _
      $region64: #{cnn_feature_extraction_forward.13} parent=43 // pred_fallthru
        _
    $region44: #{cnn_feature_extraction_forward.13} parent=5 // pred_fallthru
      _
    %p1308 = scmp.le.s32.totalorder 2, %s12
    // Predicated region
    $region65: #{cnn_feature_extraction_forward.13} parent=5 // pred_check
      %p1309 = pneg %p1308
    $region66: #{cnn_feature_extraction_forward.13} parent=5 // pred_check_branch
      %1311 = sbr.rel (%p1309) target = $region68
    $region67: #{cnn_feature_extraction_forward.13} parent=5 // pred_region
      %s1312 = ssub.s32 %s12, 2
    $region68: #{cnn_feature_extraction_forward.13} parent=5 // pred_fallthru
      _
  $region6: #{cnn_feature_extraction_forward.13} parent=0 // loop_footer
    %s16 = sadd.s32 1, %s12
  $region7: #{cnn_feature_extraction_forward.13} parent=0 // loop_footer_branch
    %11 = sbr.rel target = $region3
  $region8: #{cnn_feature_extraction_forward.13} parent=0 // loop_exit
    _

</llo_original>
